<compile_context>
chip_gen: v7x
topology: tpu7x:2x2x1
jax: 0.10.0
libtpu: 0.0.40
codegen_flags: <defaults>
</compile_context>

<pallas_src>
import numpy as np
import jax
import jax.numpy as jnp
from jax import lax
from jax.experimental import pallas as pl
from jax.experimental.pallas import tpu as pltpu


def _round_up(x, m):
    return (x + m - 1) // m * m


# ----------------------------------------------------------------------------
# Fused FMBlock kernel (lane-packed layout: (HW/P, P*C))
# ----------------------------------------------------------------------------
def _make_fmblock_kernel(H, W, C, ks, hid, cm, P):
    HW = H * W
    HWp = HW // P                      # packed rows
    PC = P * C
    Pcm = P * cm
    pad_dw = ks // 2
    pad_max = max(pad_dw, 1)           # tail conv is always 3x3
    hp = pad_max * (W + 1)             # halo rows needed above/below
    hp_off = _round_up(hp, 8)          # 8-aligned start row of the image
    prows = _round_up(hp_off + HWp + hp, 8)

    def kernel(x_ref, a_ref, lnw_ref, mw1_ref, mb1_ref, mw2_ref, mwe_ref,
               mbm_ref, dwd_ref, dwb_ref, cw1_ref, cb1_ref, cw2_ref, cb2_ref,
               o_ref, pbuf):
        f32 = jnp.float32
        x0 = x_ref[...].astype(f32)                      # (HWp, P*C)
        A = a_ref[...]                                   # block-diag 1/C ones

        # Hoisted W-boundary masks (column is identical across packed slots
        # because HWp is a multiple of W).
        colr = lax.broadcasted_iota(jnp.int32, (HWp, 1), 0) % W
        masks = {}
        for b in range(-pad_max, pad_max + 1):
            if b != 0:
                ok = jnp.logical_and(colr + b >= 0, colr + b < W)
                masks[b] = ok.astype(f32)

        def put_halo(y):
            # Interior rows (fully overwritten every call).
            pbuf[pl.ds(hp_off, HWp), :] = y
            # Top halo: slot q <- slot q-1 of the last hp rows; slot 0 = 0
            # (pixels above the image).
            pbuf[pl.ds(hp_off - hp, hp), 0:C] = jnp.zeros((hp, C), f32)
            if P > 1:
                pbuf[pl.ds(hp_off - hp, hp), C:PC] = y[HWp - hp:HWp, 0:(P - 1) * C]
            # Bottom halo: slot q <- slot q+1 of the first hp rows; last slot = 0.
            pbuf[pl.ds(hp_off + HWp, hp), (P - 1) * C:PC] = jnp.zeros((hp, C), f32)
            if P > 1:
                pbuf[pl.ds(hp_off + HWp, hp), 0:(P - 1) * C] = y[0:hp, C:PC]

        def taps(pad):
            out = []
            for a in range(-pad, pad + 1):
                for b in range(-pad, pad + 1):
                    s = pbuf[pl.ds(hp_off + a * W + b, HWp), :]
                    if b != 0:
                        s = s * masks[b]        # zero column-wrapped pixels
                    out.append(s)
            return out

        def layernorm(y, lnw):
            # Segmented (per-pixel) mean / E[x^2] via block-diag matmul (MXU).
            mu = jnp.dot(y, A, preferred_element_type=f32)
            ey2 = jnp.dot(y * y, A, preferred_element_type=f32)
            var = ey2 - mu * mu
            return (y - mu) * lax.rsqrt(var + 1e-5) * lnw

        def norm_mlp(y, lnw, w1, b1, w2, we, bm):
            z = layernorm(y, lnw)
            h = jnp.dot(z, w1, preferred_element_type=f32) + b1
            h = h * jax.nn.sigmoid(h)                      # SiLU
            # fc2 (with channel shuffle folded in) + shuffled pass-through half.
            out = (jnp.dot(h, w2, preferred_element_type=f32)
                   + jnp.dot(z, we, preferred_element_type=f32) + bm)
            return out + y                                 # residual

        def dwconv(y, layer):
            put_halo(y)
            acc = jnp.zeros((HWp, PC), f32)
            for t, s in enumerate(taps(pad_dw)):
                acc = acc + jnp.dot(s, dwd_ref[layer, t],
                                    preferred_element_type=f32)
            return acc + dwb_ref[layer]

        y = x0
        for layer in range(2):                             # two SMLayers
            y = norm_mlp(y, lnw_ref[layer, 0], mw1_ref[layer, 0],
                         mb1_ref[layer, 0], mw2_ref[layer, 0],
                         mwe_ref[layer, 0], mbm_ref[layer, 0])
            y = dwconv(y, layer)
            y = norm_mlp(y, lnw_ref[layer, 1], mw1_ref[layer, 1],
                         mb1_ref[layer, 1], mw2_ref[layer, 1],
                         mwe_ref[layer, 1], mbm_ref[layer, 1])
        y = y + x0                                         # FMBlock residual

        # Tail: 3x3 conv (C -> C+16) as 9 accumulate matmuls, SiLU, 1x1, res.
        put_halo(y)
        acc = jnp.zeros((HWp, Pcm), f32)
        for t, s in enumerate(taps(1)):
            acc = acc + jnp.dot(s, cw1_ref[t], preferred_element_type=f32)
        h = acc + cb1_ref[...]
        h = h * jax.nn.sigmoid(h)                          # SiLU
        out = (jnp.dot(h, cw2_ref[...], preferred_element_type=f32)
               + cb2_ref[...] + y)
        o_ref[...] = out.astype(o_ref.dtype)               # lane-dense store

    return kernel, prows


# ----------------------------------------------------------------------------
# Wrapper (parameter folding + pallas_call)
# ----------------------------------------------------------------------------
def shuffle_matrices(c):
    """Permutation matrices for rearrange '(g d) -> (d g)' with g=8."""
    d = c // 8
    perm = np.array([g * d + dd for dd in range(d) for g in range(8)])
    p = np.zeros((c, c), dtype=np.float32)
    p[perm, np.arange(c)] = 1.0
    return jnp.asarray(p[:c // 2, :]), jnp.asarray(p[c // 2:, :])


def fmblock_pallas(x, params, ks):
    B, H, W, C = x.shape
    C2 = C // 2
    hid = params["sm0"]["m1_w1"].shape[1]
    cm = params["c1_w"].shape[-1]

    # Pixel-packing factor: P pixels share a row so activations are P*C lanes.
    P = 1
    if 128 % C == 0:
        P = 128 // C
        while P > 1 and H % P != 0:
            P //= 2
    HW = H * W
    HWp = HW // P
    PC, Pcm = P * C, P * cm

    eyeP = jnp.eye(P, dtype=jnp.float32)

    def bd(w):                                    # block-diag over pixel slots
        return jnp.kron(eyeP, w.astype(jnp.float32))

    def tilev(v):                                 # (n,) -> (1, P*n)
        return jnp.tile(v.astype(jnp.float32).reshape(1, -1), (1, P))

    ptop, pbot = shuffle_matrices(C)
    A = bd(jnp.ones((C, C), jnp.float32) / C)     # segmented-mean matrix

    def prep_mlp(w1, b1, w2, b2):
        w1f = jnp.concatenate([w1, jnp.zeros((C - C2, hid), jnp.float32)], 0)
        we = jnp.concatenate([jnp.zeros((C2, C), jnp.float32), pbot], 0)
        return bd(w1f), tilev(b1), bd(w2 @ ptop), bd(we), tilev(b2 @ ptop)

    lnw, mw1, mb1, mw2, mwe, mbm, dwd, dwb = [], [], [], [], [], [], [], []
    for name in ("sm0", "sm1"):
        p = params[name]
        lnw.append(jnp.stack([tilev(p["ln1_w"]), tilev(p["ln2_w"])]))
        packs = [prep_mlp(p["m1_w1"], p["m1_b1"], p["m1_w2"], p["m1_b2"]),
                 prep_mlp(p["m2_w1"], p["m2_b1"], p["m2_w2"], p["m2_b2"])]
        mw1.append(jnp.stack([q[0] for q in packs]))
        mb1.append(jnp.stack([q[1] for q in packs]))
        mw2.append(jnp.stack([q[2] for q in packs]))
        mwe.append(jnp.stack([q[3] for q in packs]))
        mbm.append(jnp.stack([q[4] for q in packs]))
        w = p["dw_w"].reshape(ks * ks, C)
        dwd.append(jnp.stack([bd(jnp.diag(w[t])) for t in range(ks * ks)]))
        dwb.append(tilev(p["dw_b"]))
    lnw = jnp.stack(lnw)       # (2, 2, 1, PC)
    mw1 = jnp.stack(mw1)       # (2, 2, PC, P*hid)
    mb1 = jnp.stack(mb1)       # (2, 2, 1, P*hid)
    mw2 = jnp.stack(mw2)       # (2, 2, P*hid, PC)
    mwe = jnp.stack(mwe)       # (2, 2, PC, PC)
    mbm = jnp.stack(mbm)       # (2, 2, 1, PC)
    dwd = jnp.stack(dwd)       # (2, ks*ks, PC, PC)
    dwb = jnp.stack(dwb)       # (2, 1, PC)

    c1 = params["c1_w"].reshape(9, C, cm)
    cw1 = jnp.stack([bd(c1[t]) for t in range(9)])    # (9, PC, P*cm)
    cb1 = tilev(params["c1_b"])                       # (1, P*cm)
    cw2 = bd(params["c2_w"])                          # (P*cm, PC)
    cb2 = tilev(params["c2_b"])                       # (1, PC)

    kernel, prows = _make_fmblock_kernel(H, W, C, ks, hid, cm, P)

    def full(arr):
        nd = arr.ndim
        return pl.BlockSpec(arr.shape, lambda b: (0,) * nd)

    weights = (A, lnw, mw1, mb1, mw2, mwe, mbm, dwd, dwb, cw1, cb1, cw2, cb2)

    # Pack P pixels (one from each quarter of the flattened image) per row.
    xp = x.reshape(B, P, HWp, C).transpose(0, 2, 1, 3).reshape(B, HWp, PC)

    out = pl.pallas_call(
        kernel,
        out_shape=jax.ShapeDtypeStruct((B, HWp, PC), x.dtype),
        grid=(B,),
        in_specs=[pl.BlockSpec((None, HWp, PC), lambda b: (b, 0, 0))]
                 + [full(wt) for wt in weights],
        out_specs=pl.BlockSpec((None, HWp, PC), lambda b: (b, 0, 0)),
        scratch_shapes=[pltpu.VMEM((prows, PC), jnp.float32)],
        compiler_params=pltpu.CompilerParams(
            dimension_semantics=("parallel",),
            vmem_limit_bytes=32 * 1024 * 1024),
    )(xp, *weights)

    out = out.reshape(B, HWp, P, C).transpose(0, 2, 1, 3).reshape(B, H, W, C)
    return out


# ----------------------------------------------------------------------------
# Pure-JAX reference (mirrors the PyTorch module, NHWC)
# ----------------------------------------------------------------------------
def ref_layernorm(x, w):
    mu = jnp.mean(x, axis=-1, keepdims=True)
    var = jnp.mean((x - mu) ** 2, axis=-1, keepdims=True)
    return (x - mu) / jnp.sqrt(var + 1e-5) * w


def ref_split_mlp(x, w1, b1, w2, b2):
    c = x.shape[-1]
    x1, x2 = x[..., :c // 2], x[..., c // 2:]
    h = x1 @ w1 + b1
    h = h * jax.nn.sigmoid(h)
    x1 = h @ w2 + b2
    z = jnp.concatenate([x1, x2], axis=-1)
    b, hh, ww, _ = z.shape
    z = z.reshape(b, hh, ww, 8, c // 8).transpose(0, 1, 2, 4, 3).reshape(b, hh, ww, c)
    return z


def ref_dwconv(x, w, bias):
    ks = w.shape[0]
    pad = ks // 2
    h, ww = x.shape[1:3]
    xp = jnp.pad(x, ((0, 0), (pad, pad), (pad, pad), (0, 0)))
    out = jnp.zeros_like(x)
    for dh in range(ks):
        for dw in range(ks):
            out = out + xp[:, dh:dh + h, dw:dw + ww, :] * w[dh, dw]
    return out + bias


def ref_conv3x3(x, w, bias):
    h, ww = x.shape[1:3]
    xp = jnp.pad(x, ((0, 0), (1, 1), (1, 1), (0, 0)))
    out = None
    for dh in range(3):
        for dw in range(3):
            t = jnp.einsum("bhwc,cd->bhwd", xp[:, dh:dh + h, dw:dw + ww, :], w[dh, dw])
            out = t if out is None else out + t
    return out + bias


def ref_sm_layer(x, p):
    x = ref_split_mlp(ref_layernorm(x, p["ln1_w"]),
                      p["m1_w1"], p["m1_b1"], p["m1_w2"], p["m1_b2"]) + x
    x = ref_dwconv(x, p["dw_w"], p["dw_b"])
    x = ref_split_mlp(ref_layernorm(x, p["ln2_w"]),
                      p["m2_w1"], p["m2_b1"], p["m2_w2"], p["m2_b2"]) + x
    return x


def ref_fmblock(x, params):
    y = ref_sm_layer(ref_sm_layer(x, params["sm0"]), params["sm1"]) + x
    z = ref_conv3x3(y, params["c1_w"], params["c1_b"])
    z = z * jax.nn.sigmoid(z)
    z = jnp.einsum("bhwd,dc->bhwc", z, params["c2_w"]) + params["c2_b"]
    return z + y


# ----------------------------------------------------------------------------
# Deterministic parameter init
# ----------------------------------------------------------------------------
def init_params(key, c, ks, mlp_ratio=2):
    hid = (c // 2) * mlp_ratio
    cm = c + 16
    keys = iter(jax.random.split(key, 40))

    def nrm(shape, scale=0.2):
        return jax.random.normal(next(keys), shape, jnp.float32) * scale

    def sm():
        return dict(
            ln1_w=1.0 + nrm((c,), 0.1),
            ln2_w=1.0 + nrm((c,), 0.1),
            dw_w=nrm((ks, ks, c)),
            dw_b=nrm((c,), 0.05),
            m1_w1=nrm((c // 2, hid)),
            m1_b1=nrm((hid,), 0.05),
            m1_w2=nrm((hid, c // 2)),
            m1_b2=nrm((c // 2,), 0.05),
            m2_w1=nrm((c // 2, hid)),
            m2_b1=nrm((hid,), 0.05),
            m2_w2=nrm((hid, c // 2)),
            m2_b2=nrm((c // 2,), 0.05),
        )

    return dict(
        sm0=sm(), sm1=sm(),
        c1_w=nrm((3, 3, c, cm)),
        c1_b=nrm((cm,), 0.05),
        c2_w=nrm((cm, c)),
        c2_b=nrm((c,), 0.05),
    )


if __name__ == "__main__":
    B, C, H, W = 2, 32, 16, 16   # dim must be divisible by 8 for the shuffle
    KS = 3

    key = jax.random.PRNGKey(0)
    kp, kx = jax.random.split(key)
    params = init_params(kp, C, KS)

    x_nchw = jax.random.normal(kx, (B, C, H, W), jnp.float32)
    x = jnp.transpose(x_nchw, (0, 2, 3, 1))  # NCHW -> NHWC

    out = fmblock_pallas(x, params, KS)
    out = jax.block_until_ready(out)

    ref = ref_fmblock(x, params)
    err = float(jnp.max(jnp.abs(out - ref)))
    if not np.isfinite(err) or err > 5e-3:
        raise AssertionError(f"Pallas FMBlock mismatch: max abs err = {err}")

    print("KERNEL_OK")
</pallas_src>

<mosaic_0001>
module attributes {stable_mosaic.version = 11 : i64} {
  func.func @kernel(%arg0: i32, %arg1: memref<1x64x128xf32, #tpu.memory_space<vmem>>, %arg2: memref<128x128xf32, #tpu.memory_space<vmem>>, %arg3: memref<2x2x1x128xf32, #tpu.memory_space<vmem>>, %arg4: memref<2x2x128x128xf32, #tpu.memory_space<vmem>>, %arg5: memref<2x2x1x128xf32, #tpu.memory_space<vmem>>, %arg6: memref<2x2x128x128xf32, #tpu.memory_space<vmem>>, %arg7: memref<2x2x128x128xf32, #tpu.memory_space<vmem>>, %arg8: memref<2x2x1x128xf32, #tpu.memory_space<vmem>>, %arg9: memref<2x9x128x128xf32, #tpu.memory_space<vmem>>, %arg10: memref<2x1x128xf32, #tpu.memory_space<vmem>>, %arg11: memref<9x128x192xf32, #tpu.memory_space<vmem>>, %arg12: memref<1x192xf32, #tpu.memory_space<vmem>>, %arg13: memref<192x128xf32, #tpu.memory_space<vmem>>, %arg14: memref<1x128xf32, #tpu.memory_space<vmem>>, %arg15: memref<1x64x128xf32, #tpu.memory_space<vmem>>, %arg16: memref<112x128xf32, #tpu.memory_space<vmem>>) attributes {dimension_semantics = [#tpu.dimension_semantics<parallel>], iteration_bounds = array<i64: 2>, scalar_prefetch = 0 : i64, scratch_operands = 1 : i64, tpu.core_type = #tpu.core_type<tc>, window_params = [{transform_indices = @transform_0, window_bounds = array<i64: 1, 64, 128>}, {pipeline_mode = #tpu.pipeline_mode<synchronous>, transform_indices = @transform_1, window_bounds = array<i64: 128, 128>}, {pipeline_mode = #tpu.pipeline_mode<synchronous>, transform_indices = @transform_2, window_bounds = array<i64: 2, 2, 1, 128>}, {pipeline_mode = #tpu.pipeline_mode<synchronous>, transform_indices = @transform_3, window_bounds = array<i64: 2, 2, 128, 128>}, {pipeline_mode = #tpu.pipeline_mode<synchronous>, transform_indices = @transform_4, window_bounds = array<i64: 2, 2, 1, 128>}, {pipeline_mode = #tpu.pipeline_mode<synchronous>, transform_indices = @transform_5, window_bounds = array<i64: 2, 2, 128, 128>}, {pipeline_mode = #tpu.pipeline_mode<synchronous>, transform_indices = @transform_6, window_bounds = array<i64: 2, 2, 128, 128>}, {pipeline_mode = #tpu.pipeline_mode<synchronous>, transform_indices = @transform_7, window_bounds = array<i64: 2, 2, 1, 128>}, {pipeline_mode = #tpu.pipeline_mode<synchronous>, transform_indices = @transform_8, window_bounds = array<i64: 2, 9, 128, 128>}, {pipeline_mode = #tpu.pipeline_mode<synchronous>, transform_indices = @transform_9, window_bounds = array<i64: 2, 1, 128>}, {pipeline_mode = #tpu.pipeline_mode<synchronous>, transform_indices = @transform_10, window_bounds = array<i64: 9, 128, 192>}, {pipeline_mode = #tpu.pipeline_mode<synchronous>, transform_indices = @transform_11, window_bounds = array<i64: 1, 192>}, {pipeline_mode = #tpu.pipeline_mode<synchronous>, transform_indices = @transform_12, window_bounds = array<i64: 192, 128>}, {pipeline_mode = #tpu.pipeline_mode<synchronous>, transform_indices = @transform_13, window_bounds = array<i64: 1, 128>}, {transform_indices = @transform_14, window_bounds = array<i64: 1, 64, 128>}]} {
    %c0 = arith.constant 0 : index
    %c0_0 = arith.constant 0 : index
    %c0_1 = arith.constant 0 : index
    %0 = vector.load %arg1[%c0, %c0_0, %c0_1] : memref<1x64x128xf32, #tpu.memory_space<vmem>>, vector<1x64x128xf32>
    %1 = vector.shape_cast %0 : vector<1x64x128xf32> to vector<64x128xf32>
    %c0_2 = arith.constant 0 : index
    %c0_3 = arith.constant 0 : index
    %2 = vector.load %arg2[%c0_2, %c0_3] : memref<128x128xf32, #tpu.memory_space<vmem>>, vector<128x128xf32>
    %3 = tpu.iota {dimensions = array<i32: 0>} : vector<64x1xi32>
    %c16_i32 = arith.constant 16 : i32
    %c0_i32 = arith.constant 0 : i32
    %4 = arith.cmpi eq, %c16_i32, %c0_i32 : i32
    %c1_i32 = arith.constant 1 : i32
    %5 = arith.select %4, %c1_i32, %c16_i32 : i32
    %6 = vector.broadcast %5 : i32 to vector<64x1xi32>
    %7 = arith.remsi %3, %6 : vector<64x1xi32>
    %c0_i32_4 = arith.constant 0 : i32
    %8 = vector.broadcast %c0_i32_4 : i32 to vector<64x1xi32>
    %9 = arith.cmpi ne, %7, %8 : vector<64x1xi32>
    %c0_i32_5 = arith.constant 0 : i32
    %10 = vector.broadcast %c0_i32_5 : i32 to vector<64x1xi32>
    %11 = arith.cmpi slt, %7, %10 : vector<64x1xi32>
    %c0_i32_6 = arith.constant 0 : i32
    %12 = arith.cmpi slt, %5, %c0_i32_6 : i32
    %13 = vector.broadcast %12 : i1 to vector<64x1xi1>
    %14 = vector.broadcast %13 : vector<64x1xi1> to vector<64x1xi1>
    %15 = arith.xori %11, %14 : vector<64x1xi1>
    %16 = arith.andi %15, %9 : vector<64x1xi1>
    %17 = vector.broadcast %5 : i32 to vector<64x1xi32>
    %18 = arith.addi %7, %17 : vector<64x1xi32>
    %19 = arith.select %16, %18, %7 : vector<64x1xi1>, vector<64x1xi32>
    %c-1_i32 = arith.constant -1 : i32
    %20 = vector.broadcast %c-1_i32 : i32 to vector<64x1xi32>
    %21 = arith.addi %19, %20 : vector<64x1xi32>
    %c0_i32_7 = arith.constant 0 : i32
    %22 = vector.broadcast %c0_i32_7 : i32 to vector<64x1xi32>
    %23 = arith.cmpi sge, %21, %22 : vector<64x1xi32>
    %c-1_i32_8 = arith.constant -1 : i32
    %24 = vector.broadcast %c-1_i32_8 : i32 to vector<64x1xi32>
    %25 = arith.addi %19, %24 : vector<64x1xi32>
    %c16_i32_9 = arith.constant 16 : i32
    %26 = vector.broadcast %c16_i32_9 : i32 to vector<64x1xi32>
    %27 = arith.cmpi slt, %25, %26 : vector<64x1xi32>
    %28 = arith.andi %23, %27 : vector<64x1xi1>
    %29 = arith.extui %28 : vector<64x1xi1> to vector<64x1xi32>
    %30 = arith.sitofp %29 : vector<64x1xi32> to vector<64x1xf32>
    %c1_i32_10 = arith.constant 1 : i32
    %31 = vector.broadcast %c1_i32_10 : i32 to vector<64x1xi32>
    %32 = arith.addi %19, %31 : vector<64x1xi32>
    %c0_i32_11 = arith.constant 0 : i32
    %33 = vector.broadcast %c0_i32_11 : i32 to vector<64x1xi32>
    %34 = arith.cmpi sge, %32, %33 : vector<64x1xi32>
    %c1_i32_12 = arith.constant 1 : i32
    %35 = vector.broadcast %c1_i32_12 : i32 to vector<64x1xi32>
    %36 = arith.addi %19, %35 : vector<64x1xi32>
    %c16_i32_13 = arith.constant 16 : i32
    %37 = vector.broadcast %c16_i32_13 : i32 to vector<64x1xi32>
    %38 = arith.cmpi slt, %36, %37 : vector<64x1xi32>
    %39 = arith.andi %34, %38 : vector<64x1xi1>
    %40 = arith.extui %39 : vector<64x1xi1> to vector<64x1xi32>
    %41 = arith.sitofp %40 : vector<64x1xi32> to vector<64x1xf32>
    %c0_14 = arith.constant 0 : index
    %c0_15 = arith.constant 0 : index
    %c0_16 = arith.constant 0 : index
    %c0_17 = arith.constant 0 : index
    %42 = vector.load %arg3[%c0_14, %c0_15, %c0_16, %c0_17] : memref<2x2x1x128xf32, #tpu.memory_space<vmem>>, vector<1x1x1x128xf32>
    %43 = vector.shape_cast %42 : vector<1x1x1x128xf32> to vector<1x128xf32>
    %c0_18 = arith.constant 0 : index
    %c0_19 = arith.constant 0 : index
    %c0_20 = arith.constant 0 : index
    %c0_21 = arith.constant 0 : index
    %44 = vector.load %arg4[%c0_18, %c0_19, %c0_20, %c0_21] : memref<2x2x128x128xf32, #tpu.memory_space<vmem>>, vector<1x1x128x128xf32>
    %45 = vector.shape_cast %44 : vector<1x1x128x128xf32> to vector<128x128xf32>
    %c0_22 = arith.constant 0 : index
    %c0_23 = arith.constant 0 : index
    %c0_24 = arith.constant 0 : index
    %c0_25 = arith.constant 0 : index
    %46 = vector.load %arg5[%c0_22, %c0_23, %c0_24, %c0_25] : memref<2x2x1x128xf32, #tpu.memory_space<vmem>>, vector<1x1x1x128xf32>
    %47 = vector.shape_cast %46 : vector<1x1x1x128xf32> to vector<1x128xf32>
    %c0_26 = arith.constant 0 : index
    %c0_27 = arith.constant 0 : index
    %c0_28 = arith.constant 0 : index
    %c0_29 = arith.constant 0 : index
    %48 = vector.load %arg6[%c0_26, %c0_27, %c0_28, %c0_29] : memref<2x2x128x128xf32, #tpu.memory_space<vmem>>, vector<1x1x128x128xf32>
    %49 = vector.shape_cast %48 : vector<1x1x128x128xf32> to vector<128x128xf32>
    %c0_30 = arith.constant 0 : index
    %c0_31 = arith.constant 0 : index
    %c0_32 = arith.constant 0 : index
    %c0_33 = arith.constant 0 : index
    %50 = vector.load %arg7[%c0_30, %c0_31, %c0_32, %c0_33] : memref<2x2x128x128xf32, #tpu.memory_space<vmem>>, vector<1x1x128x128xf32>
    %51 = vector.shape_cast %50 : vector<1x1x128x128xf32> to vector<128x128xf32>
    %c0_34 = arith.constant 0 : index
    %c0_35 = arith.constant 0 : index
    %c0_36 = arith.constant 0 : index
    %c0_37 = arith.constant 0 : index
    %52 = vector.load %arg8[%c0_34, %c0_35, %c0_36, %c0_37] : memref<2x2x1x128xf32, #tpu.memory_space<vmem>>, vector<1x1x1x128xf32>
    %53 = vector.shape_cast %52 : vector<1x1x1x128xf32> to vector<1x128xf32>
    %cst = arith.constant dense<0.000000e+00> : vector<64x128xf32>
    %54 = tpu.matmul %1, %2, %cst {dimension_numbers = #tpu.dot_dimension_numbers<[1], [0], [0], [1], [0, 0, 1, 1], [], []>} : vector<64x128xf32>, vector<128x128xf32>, vector<64x128xf32> -> vector<64x128xf32>
    %55 = arith.mulf %1, %1 : vector<64x128xf32>
    %cst_38 = arith.constant dense<0.000000e+00> : vector<64x128xf32>
    %56 = tpu.matmul %55, %2, %cst_38 {dimension_numbers = #tpu.dot_dimension_numbers<[1], [0], [0], [1], [0, 0, 1, 1], [], []>} : vector<64x128xf32>, vector<128x128xf32>, vector<64x128xf32> -> vector<64x128xf32>
    %57 = arith.mulf %54, %54 : vector<64x128xf32>
    %58 = arith.subf %56, %57 : vector<64x128xf32>
    %59 = arith.subf %1, %54 : vector<64x128xf32>
    %cst_39 = arith.constant 9.99999974E-6 : f32
    %60 = vector.broadcast %cst_39 : f32 to vector<64x128xf32>
    %61 = arith.addf %58, %60 : vector<64x128xf32>
    %62 = math.rsqrt %61 : vector<64x128xf32>
    %63 = arith.mulf %59, %62 : vector<64x128xf32>
    %64 = vector.broadcast %43 : vector<1x128xf32> to vector<64x128xf32>
    %65 = arith.mulf %63, %64 : vector<64x128xf32>
    %cst_40 = arith.constant dense<0.000000e+00> : vector<64x128xf32>
    %66 = tpu.matmul %65, %45, %cst_40 {dimension_numbers = #tpu.dot_dimension_numbers<[1], [0], [0], [1], [0, 0, 1, 1], [], []>} : vector<64x128xf32>, vector<128x128xf32>, vector<64x128xf32> -> vector<64x128xf32>
    %67 = vector.broadcast %47 : vector<1x128xf32> to vector<64x128xf32>
    %68 = arith.addf %66, %67 : vector<64x128xf32>
    %69 = arith.negf %68 : vector<64x128xf32>
    %70 = math.exp %69 : vector<64x128xf32>
    %cst_41 = arith.constant 1.000000e+00 : f32
    %71 = vector.broadcast %cst_41 : f32 to vector<64x128xf32>
    %72 = arith.addf %71, %70 : vector<64x128xf32>
    %73 = arith.divf %71, %72 : vector<64x128xf32>
    %74 = arith.mulf %68, %73 : vector<64x128xf32>
    %cst_42 = arith.constant dense<0.000000e+00> : vector<64x128xf32>
    %75 = tpu.matmul %74, %49, %cst_42 {dimension_numbers = #tpu.dot_dimension_numbers<[1], [0], [0], [1], [0, 0, 1, 1], [], []>} : vector<64x128xf32>, vector<128x128xf32>, vector<64x128xf32> -> vector<64x128xf32>
    %cst_43 = arith.constant dense<0.000000e+00> : vector<64x128xf32>
    %76 = tpu.matmul %65, %51, %cst_43 {dimension_numbers = #tpu.dot_dimension_numbers<[1], [0], [0], [1], [0, 0, 1, 1], [], []>} : vector<64x128xf32>, vector<128x128xf32>, vector<64x128xf32> -> vector<64x128xf32>
    %77 = arith.addf %75, %76 : vector<64x128xf32>
    %78 = vector.broadcast %53 : vector<1x128xf32> to vector<64x128xf32>
    %79 = arith.addf %77, %78 : vector<64x128xf32>
    %80 = arith.addf %79, %1 : vector<64x128xf32>
    %c24 = arith.constant 24 : index
    %c0_44 = arith.constant 0 : index
    %81 = vector.load %arg16[%c24, %c0_44] : memref<112x128xf32, #tpu.memory_space<vmem>>, vector<64x128xf32>
    tpu.vector_store %arg16[%c24, %c0_44], %80 {strides = array<i32>} : memref<112x128xf32, #tpu.memory_space<vmem>>, vector<64x128xf32>,
    %cst_45 = arith.constant 0.000000e+00 : f32
    %82 = vector.broadcast %cst_45 : f32 to vector<17x32xf32>
    %c7 = arith.constant 7 : index
    %c0_46 = arith.constant 0 : index
    %83 = vector.load %arg16[%c7, %c0_46] : memref<112x128xf32, #tpu.memory_space<vmem>>, vector<17x32xf32>
    tpu.vector_store %arg16[%c7, %c0_46], %82 {strides = array<i32>} : memref<112x128xf32, #tpu.memory_space<vmem>>, vector<17x32xf32>,
    %84 = vector.extract_strided_slice %80 {offsets = [47, 0], sizes = [17, 96], strides = [1, 1]} : vector<64x128xf32> to vector<17x96xf32>
    %c7_47 = arith.constant 7 : index
    %c32 = arith.constant 32 : index
    %85 = vector.load %arg16[%c7_47, %c32] : memref<112x128xf32, #tpu.memory_space<vmem>>, vector<17x96xf32>
    tpu.vector_store %arg16[%c7_47, %c32], %84 {strides = array<i32>} : memref<112x128xf32, #tpu.memory_space<vmem>>, vector<17x96xf32>,
    %cst_48 = arith.constant 0.000000e+00 : f32
    %86 = vector.broadcast %cst_48 : f32 to vector<17x32xf32>
    %c88 = arith.constant 88 : index
    %c96 = arith.constant 96 : index
    %87 = vector.load %arg16[%c88, %c96] : memref<112x128xf32, #tpu.memory_space<vmem>>, vector<17x32xf32>
    tpu.vector_store %arg16[%c88, %c96], %86 {strides = array<i32>} : memref<112x128xf32, #tpu.memory_space<vmem>>, vector<17x32xf32>,
    %88 = vector.extract_strided_slice %80 {offsets = [0, 32], sizes = [17, 96], strides = [1, 1]} : vector<64x128xf32> to vector<17x96xf32>
    %c88_49 = arith.constant 88 : index
    %c0_50 = arith.constant 0 : index
    %89 = vector.load %arg16[%c88_49, %c0_50] : memref<112x128xf32, #tpu.memory_space<vmem>>, vector<17x96xf32>
    tpu.vector_store %arg16[%c88_49, %c0_50], %88 {strides = array<i32>} : memref<112x128xf32, #tpu.memory_space<vmem>>, vector<17x96xf32>,
    %cst_51 = arith.constant 0.000000e+00 : f32
    %90 = vector.broadcast %cst_51 : f32 to vector<64x128xf32>
    %c7_52 = arith.constant 7 : index
    %c0_53 = arith.constant 0 : index
    %91 = vector.load %arg16[%c7_52, %c0_53] : memref<112x128xf32, #tpu.memory_space<vmem>>, vector<64x128xf32>
    %92 = vector.broadcast %30 : vector<64x1xf32> to vector<64x128xf32>
    %93 = arith.mulf %91, %92 : vector<64x128xf32>
    %c8 = arith.constant 8 : index
    %c0_54 = arith.constant 0 : index
    %94 = vector.load %arg16[%c8, %c0_54] : memref<112x128xf32, #tpu.memory_space<vmem>>, vector<64x128xf32>
    %c9 = arith.constant 9 : index
    %c0_55 = arith.constant 0 : index
    %95 = vector.load %arg16[%c9, %c0_55] : memref<112x128xf32, #tpu.memory_space<vmem>>, vector<64x128xf32>
    %96 = vector.broadcast %41 : vector<64x1xf32> to vector<64x128xf32>
    %97 = arith.mulf %95, %96 : vector<64x128xf32>
    %c23 = arith.constant 23 : index
    %c0_56 = arith.constant 0 : index
    %98 = vector.load %arg16[%c23, %c0_56] : memref<112x128xf32, #tpu.memory_space<vmem>>, vector<64x128xf32>
    %99 = vector.broadcast %30 : vector<64x1xf32> to vector<64x128xf32>
    %100 = arith.mulf %98, %99 : vector<64x128xf32>
    %c24_57 = arith.constant 24 : index
    %c0_58 = arith.constant 0 : index
    %101 = vector.load %arg16[%c24_57, %c0_58] : memref<112x128xf32, #tpu.memory_space<vmem>>, vector<64x128xf32>
    %c25 = arith.constant 25 : index
    %c0_59 = arith.constant 0 : index
    %102 = vector.load %arg16[%c25, %c0_59] : memref<112x128xf32, #tpu.memory_space<vmem>>, vector<64x128xf32>
    %103 = vector.broadcast %41 : vector<64x1xf32> to vector<64x128xf32>
    %104 = arith.mulf %102, %103 : vector<64x128xf32>
    %c39 = arith.constant 39 : index
    %c0_60 = arith.constant 0 : index
    %105 = vector.load %arg16[%c39, %c0_60] : memref<112x128xf32, #tpu.memory_space<vmem>>, vector<64x128xf32>
    %106 = vector.broadcast %30 : vector<64x1xf32> to vector<64x128xf32>
    %107 = arith.mulf %105, %106 : vector<64x128xf32>
    %c40 = arith.constant 40 : index
    %c0_61 = arith.constant 0 : index
    %108 = vector.load %arg16[%c40, %c0_61] : memref<112x128xf32, #tpu.memory_space<vmem>>, vector<64x128xf32>
    %c41 = arith.constant 41 : index
    %c0_62 = arith.constant 0 : index
    %109 = vector.load %arg16[%c41, %c0_62] : memref<112x128xf32, #tpu.memory_space<vmem>>, vector<64x128xf32>
    %110 = vector.broadcast %41 : vector<64x1xf32> to vector<64x128xf32>
    %111 = arith.mulf %109, %110 : vector<64x128xf32>
    %c0_63 = arith.constant 0 : index
    %c0_64 = arith.constant 0 : index
    %c0_65 = arith.constant 0 : index
    %c0_66 = arith.constant 0 : index
    %112 = vector.load %arg9[%c0_63, %c0_64, %c0_65, %c0_66] : memref<2x9x128x128xf32, #tpu.memory_space<vmem>>, vector<1x1x128x128xf32>
    %113 = vector.shape_cast %112 : vector<1x1x128x128xf32> to vector<128x128xf32>
    %cst_67 = arith.constant dense<0.000000e+00> : vector<64x128xf32>
    %114 = tpu.matmul %93, %113, %cst_67 {dimension_numbers = #tpu.dot_dimension_numbers<[1], [0], [0], [1], [0, 0, 1, 1], [], []>} : vector<64x128xf32>, vector<128x128xf32>, vector<64x128xf32> -> vector<64x128xf32>
    %115 = arith.addf %90, %114 : vector<64x128xf32>
    %c0_68 = arith.constant 0 : index
    %c1 = arith.constant 1 : index
    %c0_69 = arith.constant 0 : index
    %c0_70 = arith.constant 0 : index
    %116 = vector.load %arg9[%c0_68, %c1, %c0_69, %c0_70] : memref<2x9x128x128xf32, #tpu.memory_space<vmem>>, vector<1x1x128x128xf32>
    %117 = vector.shape_cast %116 : vector<1x1x128x128xf32> to vector<128x128xf32>
    %cst_71 = arith.constant dense<0.000000e+00> : vector<64x128xf32>
    %118 = tpu.matmul %94, %117, %cst_71 {dimension_numbers = #tpu.dot_dimension_numbers<[1], [0], [0], [1], [0, 0, 1, 1], [], []>} : vector<64x128xf32>, vector<128x128xf32>, vector<64x128xf32> -> vector<64x128xf32>
    %119 = arith.addf %115, %118 : vector<64x128xf32>
    %c0_72 = arith.constant 0 : index
    %c2 = arith.constant 2 : index
    %c0_73 = arith.constant 0 : index
    %c0_74 = arith.constant 0 : index
    %120 = vector.load %arg9[%c0_72, %c2, %c0_73, %c0_74] : memref<2x9x128x128xf32, #tpu.memory_space<vmem>>, vector<1x1x128x128xf32>
    %121 = vector.shape_cast %120 : vector<1x1x128x128xf32> to vector<128x128xf32>
    %cst_75 = arith.constant dense<0.000000e+00> : vector<64x128xf32>
    %122 = tpu.matmul %97, %121, %cst_75 {dimension_numbers = #tpu.dot_dimension_numbers<[1], [0], [0], [1], [0, 0, 1, 1], [], []>} : vector<64x128xf32>, vector<128x128xf32>, vector<64x128xf32> -> vector<64x128xf32>
    %123 = arith.addf %119, %122 : vector<64x128xf32>
    %c0_76 = arith.constant 0 : index
    %c3 = arith.constant 3 : index
    %c0_77 = arith.constant 0 : index
    %c0_78 = arith.constant 0 : index
    %124 = vector.load %arg9[%c0_76, %c3, %c0_77, %c0_78] : memref<2x9x128x128xf32, #tpu.memory_space<vmem>>, vector<1x1x128x128xf32>
    %125 = vector.shape_cast %124 : vector<1x1x128x128xf32> to vector<128x128xf32>
    %cst_79 = arith.constant dense<0.000000e+00> : vector<64x128xf32>
    %126 = tpu.matmul %100, %125, %cst_79 {dimension_numbers = #tpu.dot_dimension_numbers<[1], [0], [0], [1], [0, 0, 1, 1], [], []>} : vector<64x128xf32>, vector<128x128xf32>, vector<64x128xf32> -> vector<64x128xf32>
    %127 = arith.addf %123, %126 : vector<64x128xf32>
    %c0_80 = arith.constant 0 : index
    %c4 = arith.constant 4 : index
    %c0_81 = arith.constant 0 : index
    %c0_82 = arith.constant 0 : index
    %128 = vector.load %arg9[%c0_80, %c4, %c0_81, %c0_82] : memref<2x9x128x128xf32, #tpu.memory_space<vmem>>, vector<1x1x128x128xf32>
    %129 = vector.shape_cast %128 : vector<1x1x128x128xf32> to vector<128x128xf32>
    %cst_83 = arith.constant dense<0.000000e+00> : vector<64x128xf32>
    %130 = tpu.matmul %101, %129, %cst_83 {dimension_numbers = #tpu.dot_dimension_numbers<[1], [0], [0], [1], [0, 0, 1, 1], [], []>} : vector<64x128xf32>, vector<128x128xf32>, vector<64x128xf32> -> vector<64x128xf32>
    %131 = arith.addf %127, %130 : vector<64x128xf32>
    %c0_84 = arith.constant 0 : index
    %c5 = arith.constant 5 : index
    %c0_85 = arith.constant 0 : index
    %c0_86 = arith.constant 0 : index
    %132 = vector.load %arg9[%c0_84, %c5, %c0_85, %c0_86] : memref<2x9x128x128xf32, #tpu.memory_space<vmem>>, vector<1x1x128x128xf32>
    %133 = vector.shape_cast %132 : vector<1x1x128x128xf32> to vector<128x128xf32>
    %cst_87 = arith.constant dense<0.000000e+00> : vector<64x128xf32>
    %134 = tpu.matmul %104, %133, %cst_87 {dimension_numbers = #tpu.dot_dimension_numbers<[1], [0], [0], [1], [0, 0, 1, 1], [], []>} : vector<64x128xf32>, vector<128x128xf32>, vector<64x128xf32> -> vector<64x128xf32>
    %135 = arith.addf %131, %134 : vector<64x128xf32>
    %c0_88 = arith.constant 0 : index
    %c6 = arith.constant 6 : index
    %c0_89 = arith.constant 0 : index
    %c0_90 = arith.constant 0 : index
    %136 = vector.load %arg9[%c0_88, %c6, %c0_89, %c0_90] : memref<2x9x128x128xf32, #tpu.memory_space<vmem>>, vector<1x1x128x128xf32>
    %137 = vector.shape_cast %136 : vector<1x1x128x128xf32> to vector<128x128xf32>
    %cst_91 = arith.constant dense<0.000000e+00> : vector<64x128xf32>
    %138 = tpu.matmul %107, %137, %cst_91 {dimension_numbers = #tpu.dot_dimension_numbers<[1], [0], [0], [1], [0, 0, 1, 1], [], []>} : vector<64x128xf32>, vector<128x128xf32>, vector<64x128xf32> -> vector<64x128xf32>
    %139 = arith.addf %135, %138 : vector<64x128xf32>
    %c0_92 = arith.constant 0 : index
    %c7_93 = arith.constant 7 : index
    %c0_94 = arith.constant 0 : index
    %c0_95 = arith.constant 0 : index
    %140 = vector.load %arg9[%c0_92, %c7_93, %c0_94, %c0_95] : memref<2x9x128x128xf32, #tpu.memory_space<vmem>>, vector<1x1x128x128xf32>
    %141 = vector.shape_cast %140 : vector<1x1x128x128xf32> to vector<128x128xf32>
    %cst_96 = arith.constant dense<0.000000e+00> : vector<64x128xf32>
    %142 = tpu.matmul %108, %141, %cst_96 {dimension_numbers = #tpu.dot_dimension_numbers<[1], [0], [0], [1], [0, 0, 1, 1], [], []>} : vector<64x128xf32>, vector<128x128xf32>, vector<64x128xf32> -> vector<64x128xf32>
    %143 = arith.addf %139, %142 : vector<64x128xf32>
    %c0_97 = arith.constant 0 : index
    %c8_98 = arith.constant 8 : index
    %c0_99 = arith.constant 0 : index
    %c0_100 = arith.constant 0 : index
    %144 = vector.load %arg9[%c0_97, %c8_98, %c0_99, %c0_100] : memref<2x9x128x128xf32, #tpu.memory_space<vmem>>, vector<1x1x128x128xf32>
    %145 = vector.shape_cast %144 : vector<1x1x128x128xf32> to vector<128x128xf32>
    %cst_101 = arith.constant dense<0.000000e+00> : vector<64x128xf32>
    %146 = tpu.matmul %111, %145, %cst_101 {dimension_numbers = #tpu.dot_dimension_numbers<[1], [0], [0], [1], [0, 0, 1, 1], [], []>} : vector<64x128xf32>, vector<128x128xf32>, vector<64x128xf32> -> vector<64x128xf32>
    %147 = arith.addf %143, %146 : vector<64x128xf32>
    %c0_102 = arith.constant 0 : index
    %c0_103 = arith.constant 0 : index
    %c0_104 = arith.constant 0 : index
    %148 = vector.load %arg10[%c0_102, %c0_103, %c0_104] : memref<2x1x128xf32, #tpu.memory_space<vmem>>, vector<1x1x128xf32>
    %149 = vector.shape_cast %148 : vector<1x1x128xf32> to vector<1x128xf32>
    %150 = vector.broadcast %149 : vector<1x128xf32> to vector<64x128xf32>
    %151 = arith.addf %147, %150 : vector<64x128xf32>
    %c0_105 = arith.constant 0 : index
    %c1_106 = arith.constant 1 : index
    %c0_107 = arith.constant 0 : index
    %c0_108 = arith.constant 0 : index
    %152 = vector.load %arg3[%c0_105, %c1_106, %c0_107, %c0_108] : memref<2x2x1x128xf32, #tpu.memory_space<vmem>>, vector<1x1x1x128xf32>
    %153 = vector.shape_cast %152 : vector<1x1x1x128xf32> to vector<1x128xf32>
    %c0_109 = arith.constant 0 : index
    %c1_110 = arith.constant 1 : index
    %c0_111 = arith.constant 0 : index
    %c0_112 = arith.constant 0 : index
    %154 = vector.load %arg4[%c0_109, %c1_110, %c0_111, %c0_112] : memref<2x2x128x128xf32, #tpu.memory_space<vmem>>, vector<1x1x128x128xf32>
    %155 = vector.shape_cast %154 : vector<1x1x128x128xf32> to vector<128x128xf32>
    %c0_113 = arith.constant 0 : index
    %c1_114 = arith.constant 1 : index
    %c0_115 = arith.constant 0 : index
    %c0_116 = arith.constant 0 : index
    %156 = vector.load %arg5[%c0_113, %c1_114, %c0_115, %c0_116] : memref<2x2x1x128xf32, #tpu.memory_space<vmem>>, vector<1x1x1x128xf32>
    %157 = vector.shape_cast %156 : vector<1x1x1x128xf32> to vector<1x128xf32>
    %c0_117 = arith.constant 0 : index
    %c1_118 = arith.constant 1 : index
    %c0_119 = arith.constant 0 : index
    %c0_120 = arith.constant 0 : index
    %158 = vector.load %arg6[%c0_117, %c1_118, %c0_119, %c0_120] : memref<2x2x128x128xf32, #tpu.memory_space<vmem>>, vector<1x1x128x128xf32>
    %159 = vector.shape_cast %158 : vector<1x1x128x128xf32> to vector<128x128xf32>
    %c0_121 = arith.constant 0 : index
    %c1_122 = arith.constant 1 : index
    %c0_123 = arith.constant 0 : index
    %c0_124 = arith.constant 0 : index
    %160 = vector.load %arg7[%c0_121, %c1_122, %c0_123, %c0_124] : memref<2x2x128x128xf32, #tpu.memory_space<vmem>>, vector<1x1x128x128xf32>
    %161 = vector.shape_cast %160 : vector<1x1x128x128xf32> to vector<128x128xf32>
    %c0_125 = arith.constant 0 : index
    %c1_126 = arith.constant 1 : index
    %c0_127 = arith.constant 0 : index
    %c0_128 = arith.constant 0 : index
    %162 = vector.load %arg8[%c0_125, %c1_126, %c0_127, %c0_128] : memref<2x2x1x128xf32, #tpu.memory_space<vmem>>, vector<1x1x1x128xf32>
    %163 = vector.shape_cast %162 : vector<1x1x1x128xf32> to vector<1x128xf32>
    %cst_129 = arith.constant dense<0.000000e+00> : vector<64x128xf32>
    %164 = tpu.matmul %151, %2, %cst_129 {dimension_numbers = #tpu.dot_dimension_numbers<[1], [0], [0], [1], [0, 0, 1, 1], [], []>} : vector<64x128xf32>, vector<128x128xf32>, vector<64x128xf32> -> vector<64x128xf32>
    %165 = arith.mulf %151, %151 : vector<64x128xf32>
    %cst_130 = arith.constant dense<0.000000e+00> : vector<64x128xf32>
    %166 = tpu.matmul %165, %2, %cst_130 {dimension_numbers = #tpu.dot_dimension_numbers<[1], [0], [0], [1], [0, 0, 1, 1], [], []>} : vector<64x128xf32>, vector<128x128xf32>, vector<64x128xf32> -> vector<64x128xf32>
    %167 = arith.mulf %164, %164 : vector<64x128xf32>
    %168 = arith.subf %166, %167 : vector<64x128xf32>
    %169 = arith.subf %151, %164 : vector<64x128xf32>
    %cst_131 = arith.constant 9.99999974E-6 : f32
    %170 = vector.broadcast %cst_131 : f32 to vector<64x128xf32>
    %171 = arith.addf %168, %170 : vector<64x128xf32>
    %172 = math.rsqrt %171 : vector<64x128xf32>
    %173 = arith.mulf %169, %172 : vector<64x128xf32>
    %174 = vector.broadcast %153 : vector<1x128xf32> to vector<64x128xf32>
    %175 = arith.mulf %173, %174 : vector<64x128xf32>
    %cst_132 = arith.constant dense<0.000000e+00> : vector<64x128xf32>
    %176 = tpu.matmul %175, %155, %cst_132 {dimension_numbers = #tpu.dot_dimension_numbers<[1], [0], [0], [1], [0, 0, 1, 1], [], []>} : vector<64x128xf32>, vector<128x128xf32>, vector<64x128xf32> -> vector<64x128xf32>
    %177 = vector.broadcast %157 : vector<1x128xf32> to vector<64x128xf32>
    %178 = arith.addf %176, %177 : vector<64x128xf32>
    %179 = arith.negf %178 : vector<64x128xf32>
    %180 = math.exp %179 : vector<64x128xf32>
    %cst_133 = arith.constant 1.000000e+00 : f32
    %181 = vector.broadcast %cst_133 : f32 to vector<64x128xf32>
    %182 = arith.addf %181, %180 : vector<64x128xf32>
    %183 = arith.divf %181, %182 : vector<64x128xf32>
    %184 = arith.mulf %178, %183 : vector<64x128xf32>
    %cst_134 = arith.constant dense<0.000000e+00> : vector<64x128xf32>
    %185 = tpu.matmul %184, %159, %cst_134 {dimension_numbers = #tpu.dot_dimension_numbers<[1], [0], [0], [1], [0, 0, 1, 1], [], []>} : vector<64x128xf32>, vector<128x128xf32>, vector<64x128xf32> -> vector<64x128xf32>
    %cst_135 = arith.constant dense<0.000000e+00> : vector<64x128xf32>
    %186 = tpu.matmul %175, %161, %cst_135 {dimension_numbers = #tpu.dot_dimension_numbers<[1], [0], [0], [1], [0, 0, 1, 1], [], []>} : vector<64x128xf32>, vector<128x128xf32>, vector<64x128xf32> -> vector<64x128xf32>
    %187 = arith.addf %185, %186 : vector<64x128xf32>
    %188 = vector.broadcast %163 : vector<1x128xf32> to vector<64x128xf32>
    %189 = arith.addf %187, %188 : vector<64x128xf32>
    %190 = arith.addf %189, %151 : vector<64x128xf32>
    %c1_136 = arith.constant 1 : index
    %c0_137 = arith.constant 0 : index
    %c0_138 = arith.constant 0 : index
    %c0_139 = arith.constant 0 : index
    %191 = vector.load %arg3[%c1_136, %c0_137, %c0_138, %c0_139] : memref<2x2x1x128xf32, #tpu.memory_space<vmem>>, vector<1x1x1x128xf32>
    %192 = vector.shape_cast %191 : vector<1x1x1x128xf32> to vector<1x128xf32>
    %c1_140 = arith.constant 1 : index
    %c0_141 = arith.constant 0 : index
    %c0_142 = arith.constant 0 : index
    %c0_143 = arith.constant 0 : index
    %193 = vector.load %arg4[%c1_140, %c0_141, %c0_142, %c0_143] : memref<2x2x128x128xf32, #tpu.memory_space<vmem>>, vector<1x1x128x128xf32>
    %194 = vector.shape_cast %193 : vector<1x1x128x128xf32> to vector<128x128xf32>
    %c1_144 = arith.constant 1 : index
    %c0_145 = arith.constant 0 : index
    %c0_146 = arith.constant 0 : index
    %c0_147 = arith.constant 0 : index
    %195 = vector.load %arg5[%c1_144, %c0_145, %c0_146, %c0_147] : memref<2x2x1x128xf32, #tpu.memory_space<vmem>>, vector<1x1x1x128xf32>
    %196 = vector.shape_cast %195 : vector<1x1x1x128xf32> to vector<1x128xf32>
    %c1_148 = arith.constant 1 : index
    %c0_149 = arith.constant 0 : index
    %c0_150 = arith.constant 0 : index
    %c0_151 = arith.constant 0 : index
    %197 = vector.load %arg6[%c1_148, %c0_149, %c0_150, %c0_151] : memref<2x2x128x128xf32, #tpu.memory_space<vmem>>, vector<1x1x128x128xf32>
    %198 = vector.shape_cast %197 : vector<1x1x128x128xf32> to vector<128x128xf32>
    %c1_152 = arith.constant 1 : index
    %c0_153 = arith.constant 0 : index
    %c0_154 = arith.constant 0 : index
    %c0_155 = arith.constant 0 : index
    %199 = vector.load %arg7[%c1_152, %c0_153, %c0_154, %c0_155] : memref<2x2x128x128xf32, #tpu.memory_space<vmem>>, vector<1x1x128x128xf32>
    %200 = vector.shape_cast %199 : vector<1x1x128x128xf32> to vector<128x128xf32>
    %c1_156 = arith.constant 1 : index
    %c0_157 = arith.constant 0 : index
    %c0_158 = arith.constant 0 : index
    %c0_159 = arith.constant 0 : index
    %201 = vector.load %arg8[%c1_156, %c0_157, %c0_158, %c0_159] : memref<2x2x1x128xf32, #tpu.memory_space<vmem>>, vector<1x1x1x128xf32>
    %202 = vector.shape_cast %201 : vector<1x1x1x128xf32> to vector<1x128xf32>
    %cst_160 = arith.constant dense<0.000000e+00> : vector<64x128xf32>
    %203 = tpu.matmul %190, %2, %cst_160 {dimension_numbers = #tpu.dot_dimension_numbers<[1], [0], [0], [1], [0, 0, 1, 1], [], []>} : vector<64x128xf32>, vector<128x128xf32>, vector<64x128xf32> -> vector<64x128xf32>
    %204 = arith.mulf %190, %190 : vector<64x128xf32>
    %cst_161 = arith.constant dense<0.000000e+00> : vector<64x128xf32>
    %205 = tpu.matmul %204, %2, %cst_161 {dimension_numbers = #tpu.dot_dimension_numbers<[1], [0], [0], [1], [0, 0, 1, 1], [], []>} : vector<64x128xf32>, vector<128x128xf32>, vector<64x128xf32> -> vector<64x128xf32>
    %206 = arith.mulf %203, %203 : vector<64x128xf32>
    %207 = arith.subf %205, %206 : vector<64x128xf32>
    %208 = arith.subf %190, %203 : vector<64x128xf32>
    %cst_162 = arith.constant 9.99999974E-6 : f32
    %209 = vector.broadcast %cst_162 : f32 to vector<64x128xf32>
    %210 = arith.addf %207, %209 : vector<64x128xf32>
    %211 = math.rsqrt %210 : vector<64x128xf32>
    %212 = arith.mulf %208, %211 : vector<64x128xf32>
    %213 = vector.broadcast %192 : vector<1x128xf32> to vector<64x128xf32>
    %214 = arith.mulf %212, %213 : vector<64x128xf32>
    %cst_163 = arith.constant dense<0.000000e+00> : vector<64x128xf32>
    %215 = tpu.matmul %214, %194, %cst_163 {dimension_numbers = #tpu.dot_dimension_numbers<[1], [0], [0], [1], [0, 0, 1, 1], [], []>} : vector<64x128xf32>, vector<128x128xf32>, vector<64x128xf32> -> vector<64x128xf32>
    %216 = vector.broadcast %196 : vector<1x128xf32> to vector<64x128xf32>
    %217 = arith.addf %215, %216 : vector<64x128xf32>
    %218 = arith.negf %217 : vector<64x128xf32>
    %219 = math.exp %218 : vector<64x128xf32>
    %cst_164 = arith.constant 1.000000e+00 : f32
    %220 = vector.broadcast %cst_164 : f32 to vector<64x128xf32>
    %221 = arith.addf %220, %219 : vector<64x128xf32>
    %222 = arith.divf %220, %221 : vector<64x128xf32>
    %223 = arith.mulf %217, %222 : vector<64x128xf32>
    %cst_165 = arith.constant dense<0.000000e+00> : vector<64x128xf32>
    %224 = tpu.matmul %223, %198, %cst_165 {dimension_numbers = #tpu.dot_dimension_numbers<[1], [0], [0], [1], [0, 0, 1, 1], [], []>} : vector<64x128xf32>, vector<128x128xf32>, vector<64x128xf32> -> vector<64x128xf32>
    %cst_166 = arith.constant dense<0.000000e+00> : vector<64x128xf32>
    %225 = tpu.matmul %214, %200, %cst_166 {dimension_numbers = #tpu.dot_dimension_numbers<[1], [0], [0], [1], [0, 0, 1, 1], [], []>} : vector<64x128xf32>, vector<128x128xf32>, vector<64x128xf32> -> vector<64x128xf32>
    %226 = arith.addf %224, %225 : vector<64x128xf32>
    %227 = vector.broadcast %202 : vector<1x128xf32> to vector<64x128xf32>
    %228 = arith.addf %226, %227 : vector<64x128xf32>
    %229 = arith.addf %228, %190 : vector<64x128xf32>
    %c24_167 = arith.constant 24 : index
    %c0_168 = arith.constant 0 : index
    %230 = vector.load %arg16[%c24_167, %c0_168] : memref<112x128xf32, #tpu.memory_space<vmem>>, vector<64x128xf32>
    tpu.vector_store %arg16[%c24_167, %c0_168], %229 {strides = array<i32>} : memref<112x128xf32, #tpu.memory_space<vmem>>, vector<64x128xf32>,
    %cst_169 = arith.constant 0.000000e+00 : f32
    %231 = vector.broadcast %cst_169 : f32 to vector<17x32xf32>
    %c7_170 = arith.constant 7 : index
    %c0_171 = arith.constant 0 : index
    %232 = vector.load %arg16[%c7_170, %c0_171] : memref<112x128xf32, #tpu.memory_space<vmem>>, vector<17x32xf32>
    tpu.vector_store %arg16[%c7_170, %c0_171], %231 {strides = array<i32>} : memref<112x128xf32, #tpu.memory_space<vmem>>, vector<17x32xf32>,
    %233 = vector.extract_strided_slice %229 {offsets = [47, 0], sizes = [17, 96], strides = [1, 1]} : vector<64x128xf32> to vector<17x96xf32>
    %c7_172 = arith.constant 7 : index
    %c32_173 = arith.constant 32 : index
    %234 = vector.load %arg16[%c7_172, %c32_173] : memref<112x128xf32, #tpu.memory_space<vmem>>, vector<17x96xf32>
    tpu.vector_store %arg16[%c7_172, %c32_173], %233 {strides = array<i32>} : memref<112x128xf32, #tpu.memory_space<vmem>>, vector<17x96xf32>,
    %cst_174 = arith.constant 0.000000e+00 : f32
    %235 = vector.broadcast %cst_174 : f32 to vector<17x32xf32>
    %c88_175 = arith.constant 88 : index
    %c96_176 = arith.constant 96 : index
    %236 = vector.load %arg16[%c88_175, %c96_176] : memref<112x128xf32, #tpu.memory_space<vmem>>, vector<17x32xf32>
    tpu.vector_store %arg16[%c88_175, %c96_176], %235 {strides = array<i32>} : memref<112x128xf32, #tpu.memory_space<vmem>>, vector<17x32xf32>,
    %237 = vector.extract_strided_slice %229 {offsets = [0, 32], sizes = [17, 96], strides = [1, 1]} : vector<64x128xf32> to vector<17x96xf32>
    %c88_177 = arith.constant 88 : index
    %c0_178 = arith.constant 0 : index
    %238 = vector.load %arg16[%c88_177, %c0_178] : memref<112x128xf32, #tpu.memory_space<vmem>>, vector<17x96xf32>
    tpu.vector_store %arg16[%c88_177, %c0_178], %237 {strides = array<i32>} : memref<112x128xf32, #tpu.memory_space<vmem>>, vector<17x96xf32>,
    %cst_179 = arith.constant 0.000000e+00 : f32
    %239 = vector.broadcast %cst_179 : f32 to vector<64x128xf32>
    %c7_180 = arith.constant 7 : index
    %c0_181 = arith.constant 0 : index
    %240 = vector.load %arg16[%c7_180, %c0_181] : memref<112x128xf32, #tpu.memory_space<vmem>>, vector<64x128xf32>
    %241 = vector.broadcast %30 : vector<64x1xf32> to vector<64x128xf32>
    %242 = arith.mulf %240, %241 : vector<64x128xf32>
    %c8_182 = arith.constant 8 : index
    %c0_183 = arith.constant 0 : index
    %243 = vector.load %arg16[%c8_182, %c0_183] : memref<112x128xf32, #tpu.memory_space<vmem>>, vector<64x128xf32>
    %c9_184 = arith.constant 9 : index
    %c0_185 = arith.constant 0 : index
    %244 = vector.load %arg16[%c9_184, %c0_185] : memref<112x128xf32, #tpu.memory_space<vmem>>, vector<64x128xf32>
    %245 = vector.broadcast %41 : vector<64x1xf32> to vector<64x128xf32>
    %246 = arith.mulf %244, %245 : vector<64x128xf32>
    %c23_186 = arith.constant 23 : index
    %c0_187 = arith.constant 0 : index
    %247 = vector.load %arg16[%c23_186, %c0_187] : memref<112x128xf32, #tpu.memory_space<vmem>>, vector<64x128xf32>
    %248 = vector.broadcast %30 : vector<64x1xf32> to vector<64x128xf32>
    %249 = arith.mulf %247, %248 : vector<64x128xf32>
    %c24_188 = arith.constant 24 : index
    %c0_189 = arith.constant 0 : index
    %250 = vector.load %arg16[%c24_188, %c0_189] : memref<112x128xf32, #tpu.memory_space<vmem>>, vector<64x128xf32>
    %c25_190 = arith.constant 25 : index
    %c0_191 = arith.constant 0 : index
    %251 = vector.load %arg16[%c25_190, %c0_191] : memref<112x128xf32, #tpu.memory_space<vmem>>, vector<64x128xf32>
    %252 = vector.broadcast %41 : vector<64x1xf32> to vector<64x128xf32>
    %253 = arith.mulf %251, %252 : vector<64x128xf32>
    %c39_192 = arith.constant 39 : index
    %c0_193 = arith.constant 0 : index
    %254 = vector.load %arg16[%c39_192, %c0_193] : memref<112x128xf32, #tpu.memory_space<vmem>>, vector<64x128xf32>
    %255 = vector.broadcast %30 : vector<64x1xf32> to vector<64x128xf32>
    %256 = arith.mulf %254, %255 : vector<64x128xf32>
    %c40_194 = arith.constant 40 : index
    %c0_195 = arith.constant 0 : index
    %257 = vector.load %arg16[%c40_194, %c0_195] : memref<112x128xf32, #tpu.memory_space<vmem>>, vector<64x128xf32>
    %c41_196 = arith.constant 41 : index
    %c0_197 = arith.constant 0 : index
    %258 = vector.load %arg16[%c41_196, %c0_197] : memref<112x128xf32, #tpu.memory_space<vmem>>, vector<64x128xf32>
    %259 = vector.broadcast %41 : vector<64x1xf32> to vector<64x128xf32>
    %260 = arith.mulf %258, %259 : vector<64x128xf32>
    %c1_198 = arith.constant 1 : index
    %c0_199 = arith.constant 0 : index
    %c0_200 = arith.constant 0 : index
    %c0_201 = arith.constant 0 : index
    %261 = vector.load %arg9[%c1_198, %c0_199, %c0_200, %c0_201] : memref<2x9x128x128xf32, #tpu.memory_space<vmem>>, vector<1x1x128x128xf32>
    %262 = vector.shape_cast %261 : vector<1x1x128x128xf32> to vector<128x128xf32>
    %cst_202 = arith.constant dense<0.000000e+00> : vector<64x128xf32>
    %263 = tpu.matmul %242, %262, %cst_202 {dimension_numbers = #tpu.dot_dimension_numbers<[1], [0], [0], [1], [0, 0, 1, 1], [], []>} : vector<64x128xf32>, vector<128x128xf32>, vector<64x128xf32> -> vector<64x128xf32>
    %264 = arith.addf %239, %263 : vector<64x128xf32>
    %c1_203 = arith.constant 1 : index
    %c1_204 = arith.constant 1 : index
    %c0_205 = arith.constant 0 : index
    %c0_206 = arith.constant 0 : index
    %265 = vector.load %arg9[%c1_203, %c1_204, %c0_205, %c0_206] : memref<2x9x128x128xf32, #tpu.memory_space<vmem>>, vector<1x1x128x128xf32>
    %266 = vector.shape_cast %265 : vector<1x1x128x128xf32> to vector<128x128xf32>
    %cst_207 = arith.constant dense<0.000000e+00> : vector<64x128xf32>
    %267 = tpu.matmul %243, %266, %cst_207 {dimension_numbers = #tpu.dot_dimension_numbers<[1], [0], [0], [1], [0, 0, 1, 1], [], []>} : vector<64x128xf32>, vector<128x128xf32>, vector<64x128xf32> -> vector<64x128xf32>
    %268 = arith.addf %264, %267 : vector<64x128xf32>
    %c1_208 = arith.constant 1 : index
    %c2_209 = arith.constant 2 : index
    %c0_210 = arith.constant 0 : index
    %c0_211 = arith.constant 0 : index
    %269 = vector.load %arg9[%c1_208, %c2_209, %c0_210, %c0_211] : memref<2x9x128x128xf32, #tpu.memory_space<vmem>>, vector<1x1x128x128xf32>
    %270 = vector.shape_cast %269 : vector<1x1x128x128xf32> to vector<128x128xf32>
    %cst_212 = arith.constant dense<0.000000e+00> : vector<64x128xf32>
    %271 = tpu.matmul %246, %270, %cst_212 {dimension_numbers = #tpu.dot_dimension_numbers<[1], [0], [0], [1], [0, 0, 1, 1], [], []>} : vector<64x128xf32>, vector<128x128xf32>, vector<64x128xf32> -> vector<64x128xf32>
    %272 = arith.addf %268, %271 : vector<64x128xf32>
    %c1_213 = arith.constant 1 : index
    %c3_214 = arith.constant 3 : index
    %c0_215 = arith.constant 0 : index
    %c0_216 = arith.constant 0 : index
    %273 = vector.load %arg9[%c1_213, %c3_214, %c0_215, %c0_216] : memref<2x9x128x128xf32, #tpu.memory_space<vmem>>, vector<1x1x128x128xf32>
    %274 = vector.shape_cast %273 : vector<1x1x128x128xf32> to vector<128x128xf32>
    %cst_217 = arith.constant dense<0.000000e+00> : vector<64x128xf32>
    %275 = tpu.matmul %249, %274, %cst_217 {dimension_numbers = #tpu.dot_dimension_numbers<[1], [0], [0], [1], [0, 0, 1, 1], [], []>} : vector<64x128xf32>, vector<128x128xf32>, vector<64x128xf32> -> vector<64x128xf32>
    %276 = arith.addf %272, %275 : vector<64x128xf32>
    %c1_218 = arith.constant 1 : index
    %c4_219 = arith.constant 4 : index
    %c0_220 = arith.constant 0 : index
    %c0_221 = arith.constant 0 : index
    %277 = vector.load %arg9[%c1_218, %c4_219, %c0_220, %c0_221] : memref<2x9x128x128xf32, #tpu.memory_space<vmem>>, vector<1x1x128x128xf32>
    %278 = vector.shape_cast %277 : vector<1x1x128x128xf32> to vector<128x128xf32>
    %cst_222 = arith.constant dense<0.000000e+00> : vector<64x128xf32>
    %279 = tpu.matmul %250, %278, %cst_222 {dimension_numbers = #tpu.dot_dimension_numbers<[1], [0], [0], [1], [0, 0, 1, 1], [], []>} : vector<64x128xf32>, vector<128x128xf32>, vector<64x128xf32> -> vector<64x128xf32>
    %280 = arith.addf %276, %279 : vector<64x128xf32>
    %c1_223 = arith.constant 1 : index
    %c5_224 = arith.constant 5 : index
    %c0_225 = arith.constant 0 : index
    %c0_226 = arith.constant 0 : index
    %281 = vector.load %arg9[%c1_223, %c5_224, %c0_225, %c0_226] : memref<2x9x128x128xf32, #tpu.memory_space<vmem>>, vector<1x1x128x128xf32>
    %282 = vector.shape_cast %281 : vector<1x1x128x128xf32> to vector<128x128xf32>
    %cst_227 = arith.constant dense<0.000000e+00> : vector<64x128xf32>
    %283 = tpu.matmul %253, %282, %cst_227 {dimension_numbers = #tpu.dot_dimension_numbers<[1], [0], [0], [1], [0, 0, 1, 1], [], []>} : vector<64x128xf32>, vector<128x128xf32>, vector<64x128xf32> -> vector<64x128xf32>
    %284 = arith.addf %280, %283 : vector<64x128xf32>
    %c1_228 = arith.constant 1 : index
    %c6_229 = arith.constant 6 : index
    %c0_230 = arith.constant 0 : index
    %c0_231 = arith.constant 0 : index
    %285 = vector.load %arg9[%c1_228, %c6_229, %c0_230, %c0_231] : memref<2x9x128x128xf32, #tpu.memory_space<vmem>>, vector<1x1x128x128xf32>
    %286 = vector.shape_cast %285 : vector<1x1x128x128xf32> to vector<128x128xf32>
    %cst_232 = arith.constant dense<0.000000e+00> : vector<64x128xf32>
    %287 = tpu.matmul %256, %286, %cst_232 {dimension_numbers = #tpu.dot_dimension_numbers<[1], [0], [0], [1], [0, 0, 1, 1], [], []>} : vector<64x128xf32>, vector<128x128xf32>, vector<64x128xf32> -> vector<64x128xf32>
    %288 = arith.addf %284, %287 : vector<64x128xf32>
    %c1_233 = arith.constant 1 : index
    %c7_234 = arith.constant 7 : index
    %c0_235 = arith.constant 0 : index
    %c0_236 = arith.constant 0 : index
    %289 = vector.load %arg9[%c1_233, %c7_234, %c0_235, %c0_236] : memref<2x9x128x128xf32, #tpu.memory_space<vmem>>, vector<1x1x128x128xf32>
    %290 = vector.shape_cast %289 : vector<1x1x128x128xf32> to vector<128x128xf32>
    %cst_237 = arith.constant dense<0.000000e+00> : vector<64x128xf32>
    %291 = tpu.matmul %257, %290, %cst_237 {dimension_numbers = #tpu.dot_dimension_numbers<[1], [0], [0], [1], [0, 0, 1, 1], [], []>} : vector<64x128xf32>, vector<128x128xf32>, vector<64x128xf32> -> vector<64x128xf32>
    %292 = arith.addf %288, %291 : vector<64x128xf32>
    %c1_238 = arith.constant 1 : index
    %c8_239 = arith.constant 8 : index
    %c0_240 = arith.constant 0 : index
    %c0_241 = arith.constant 0 : index
    %293 = vector.load %arg9[%c1_238, %c8_239, %c0_240, %c0_241] : memref<2x9x128x128xf32, #tpu.memory_space<vmem>>, vector<1x1x128x128xf32>
    %294 = vector.shape_cast %293 : vector<1x1x128x128xf32> to vector<128x128xf32>
    %cst_242 = arith.constant dense<0.000000e+00> : vector<64x128xf32>
    %295 = tpu.matmul %260, %294, %cst_242 {dimension_numbers = #tpu.dot_dimension_numbers<[1], [0], [0], [1], [0, 0, 1, 1], [], []>} : vector<64x128xf32>, vector<128x128xf32>, vector<64x128xf32> -> vector<64x128xf32>
    %296 = arith.addf %292, %295 : vector<64x128xf32>
    %c1_243 = arith.constant 1 : index
    %c0_244 = arith.constant 0 : index
    %c0_245 = arith.constant 0 : index
    %297 = vector.load %arg10[%c1_243, %c0_244, %c0_245] : memref<2x1x128xf32, #tpu.memory_space<vmem>>, vector<1x1x128xf32>
    %298 = vector.shape_cast %297 : vector<1x1x128xf32> to vector<1x128xf32>
    %299 = vector.broadcast %298 : vector<1x128xf32> to vector<64x128xf32>
    %300 = arith.addf %296, %299 : vector<64x128xf32>
    %c1_246 = arith.constant 1 : index
    %c1_247 = arith.constant 1 : index
    %c0_248 = arith.constant 0 : index
    %c0_249 = arith.constant 0 : index
    %301 = vector.load %arg3[%c1_246, %c1_247, %c0_248, %c0_249] : memref<2x2x1x128xf32, #tpu.memory_space<vmem>>, vector<1x1x1x128xf32>
    %302 = vector.shape_cast %301 : vector<1x1x1x128xf32> to vector<1x128xf32>
    %c1_250 = arith.constant 1 : index
    %c1_251 = arith.constant 1 : index
    %c0_252 = arith.constant 0 : index
    %c0_253 = arith.constant 0 : index
    %303 = vector.load %arg4[%c1_250, %c1_251, %c0_252, %c0_253] : memref<2x2x128x128xf32, #tpu.memory_space<vmem>>, vector<1x1x128x128xf32>
    %304 = vector.shape_cast %303 : vector<1x1x128x128xf32> to vector<128x128xf32>
    %c1_254 = arith.constant 1 : index
    %c1_255 = arith.constant 1 : index
    %c0_256 = arith.constant 0 : index
    %c0_257 = arith.constant 0 : index
    %305 = vector.load %arg5[%c1_254, %c1_255, %c0_256, %c0_257] : memref<2x2x1x128xf32, #tpu.memory_space<vmem>>, vector<1x1x1x128xf32>
    %306 = vector.shape_cast %305 : vector<1x1x1x128xf32> to vector<1x128xf32>
    %c1_258 = arith.constant 1 : index
    %c1_259 = arith.constant 1 : index
    %c0_260 = arith.constant 0 : index
    %c0_261 = arith.constant 0 : index
    %307 = vector.load %arg6[%c1_258, %c1_259, %c0_260, %c0_261] : memref<2x2x128x128xf32, #tpu.memory_space<vmem>>, vector<1x1x128x128xf32>
    %308 = vector.shape_cast %307 : vector<1x1x128x128xf32> to vector<128x128xf32>
    %c1_262 = arith.constant 1 : index
    %c1_263 = arith.constant 1 : index
    %c0_264 = arith.constant 0 : index
    %c0_265 = arith.constant 0 : index
    %309 = vector.load %arg7[%c1_262, %c1_263, %c0_264, %c0_265] : memref<2x2x128x128xf32, #tpu.memory_space<vmem>>, vector<1x1x128x128xf32>
    %310 = vector.shape_cast %309 : vector<1x1x128x128xf32> to vector<128x128xf32>
    %c1_266 = arith.constant 1 : index
    %c1_267 = arith.constant 1 : index
    %c0_268 = arith.constant 0 : index
    %c0_269 = arith.constant 0 : index
    %311 = vector.load %arg8[%c1_266, %c1_267, %c0_268, %c0_269] : memref<2x2x1x128xf32, #tpu.memory_space<vmem>>, vector<1x1x1x128xf32>
    %312 = vector.shape_cast %311 : vector<1x1x1x128xf32> to vector<1x128xf32>
    %cst_270 = arith.constant dense<0.000000e+00> : vector<64x128xf32>
    %313 = tpu.matmul %300, %2, %cst_270 {dimension_numbers = #tpu.dot_dimension_numbers<[1], [0], [0], [1], [0, 0, 1, 1], [], []>} : vector<64x128xf32>, vector<128x128xf32>, vector<64x128xf32> -> vector<64x128xf32>
    %314 = arith.mulf %300, %300 : vector<64x128xf32>
    %cst_271 = arith.constant dense<0.000000e+00> : vector<64x128xf32>
    %315 = tpu.matmul %314, %2, %cst_271 {dimension_numbers = #tpu.dot_dimension_numbers<[1], [0], [0], [1], [0, 0, 1, 1], [], []>} : vector<64x128xf32>, vector<128x128xf32>, vector<64x128xf32> -> vector<64x128xf32>
    %316 = arith.mulf %313, %313 : vector<64x128xf32>
    %317 = arith.subf %315, %316 : vector<64x128xf32>
    %318 = arith.subf %300, %313 : vector<64x128xf32>
    %cst_272 = arith.constant 9.99999974E-6 : f32
    %319 = vector.broadcast %cst_272 : f32 to vector<64x128xf32>
    %320 = arith.addf %317, %319 : vector<64x128xf32>
    %321 = math.rsqrt %320 : vector<64x128xf32>
    %322 = arith.mulf %318, %321 : vector<64x128xf32>
    %323 = vector.broadcast %302 : vector<1x128xf32> to vector<64x128xf32>
    %324 = arith.mulf %322, %323 : vector<64x128xf32>
    %cst_273 = arith.constant dense<0.000000e+00> : vector<64x128xf32>
    %325 = tpu.matmul %324, %304, %cst_273 {dimension_numbers = #tpu.dot_dimension_numbers<[1], [0], [0], [1], [0, 0, 1, 1], [], []>} : vector<64x128xf32>, vector<128x128xf32>, vector<64x128xf32> -> vector<64x128xf32>
    %326 = vector.broadcast %306 : vector<1x128xf32> to vector<64x128xf32>
    %327 = arith.addf %325, %326 : vector<64x128xf32>
    %328 = arith.negf %327 : vector<64x128xf32>
    %329 = math.exp %328 : vector<64x128xf32>
    %cst_274 = arith.constant 1.000000e+00 : f32
    %330 = vector.broadcast %cst_274 : f32 to vector<64x128xf32>
    %331 = arith.addf %330, %329 : vector<64x128xf32>
    %332 = arith.divf %330, %331 : vector<64x128xf32>
    %333 = arith.mulf %327, %332 : vector<64x128xf32>
    %cst_275 = arith.constant dense<0.000000e+00> : vector<64x128xf32>
    %334 = tpu.matmul %333, %308, %cst_275 {dimension_numbers = #tpu.dot_dimension_numbers<[1], [0], [0], [1], [0, 0, 1, 1], [], []>} : vector<64x128xf32>, vector<128x128xf32>, vector<64x128xf32> -> vector<64x128xf32>
    %cst_276 = arith.constant dense<0.000000e+00> : vector<64x128xf32>
    %335 = tpu.matmul %324, %310, %cst_276 {dimension_numbers = #tpu.dot_dimension_numbers<[1], [0], [0], [1], [0, 0, 1, 1], [], []>} : vector<64x128xf32>, vector<128x128xf32>, vector<64x128xf32> -> vector<64x128xf32>
    %336 = arith.addf %334, %335 : vector<64x128xf32>
    %337 = vector.broadcast %312 : vector<1x128xf32> to vector<64x128xf32>
    %338 = arith.addf %336, %337 : vector<64x128xf32>
    %339 = arith.addf %338, %300 : vector<64x128xf32>
    %340 = arith.addf %339, %1 : vector<64x128xf32>
    %c24_277 = arith.constant 24 : index
    %c0_278 = arith.constant 0 : index
    %341 = vector.load %arg16[%c24_277, %c0_278] : memref<112x128xf32, #tpu.memory_space<vmem>>, vector<64x128xf32>
    tpu.vector_store %arg16[%c24_277, %c0_278], %340 {strides = array<i32>} : memref<112x128xf32, #tpu.memory_space<vmem>>, vector<64x128xf32>,
    %cst_279 = arith.constant 0.000000e+00 : f32
    %342 = vector.broadcast %cst_279 : f32 to vector<17x32xf32>
    %c7_280 = arith.constant 7 : index
    %c0_281 = arith.constant 0 : index
    %343 = vector.load %arg16[%c7_280, %c0_281] : memref<112x128xf32, #tpu.memory_space<vmem>>, vector<17x32xf32>
    tpu.vector_store %arg16[%c7_280, %c0_281], %342 {strides = array<i32>} : memref<112x128xf32, #tpu.memory_space<vmem>>, vector<17x32xf32>,
    %344 = vector.extract_strided_slice %340 {offsets = [47, 0], sizes = [17, 96], strides = [1, 1]} : vector<64x128xf32> to vector<17x96xf32>
    %c7_282 = arith.constant 7 : index
    %c32_283 = arith.constant 32 : index
    %345 = vector.load %arg16[%c7_282, %c32_283] : memref<112x128xf32, #tpu.memory_space<vmem>>, vector<17x96xf32>
    tpu.vector_store %arg16[%c7_282, %c32_283], %344 {strides = array<i32>} : memref<112x128xf32, #tpu.memory_space<vmem>>, vector<17x96xf32>,
    %cst_284 = arith.constant 0.000000e+00 : f32
    %346 = vector.broadcast %cst_284 : f32 to vector<17x32xf32>
    %c88_285 = arith.constant 88 : index
    %c96_286 = arith.constant 96 : index
    %347 = vector.load %arg16[%c88_285, %c96_286] : memref<112x128xf32, #tpu.memory_space<vmem>>, vector<17x32xf32>
    tpu.vector_store %arg16[%c88_285, %c96_286], %346 {strides = array<i32>} : memref<112x128xf32, #tpu.memory_space<vmem>>, vector<17x32xf32>,
    %348 = vector.extract_strided_slice %340 {offsets = [0, 32], sizes = [17, 96], strides = [1, 1]} : vector<64x128xf32> to vector<17x96xf32>
    %c88_287 = arith.constant 88 : index
    %c0_288 = arith.constant 0 : index
    %349 = vector.load %arg16[%c88_287, %c0_288] : memref<112x128xf32, #tpu.memory_space<vmem>>, vector<17x96xf32>
    tpu.vector_store %arg16[%c88_287, %c0_288], %348 {strides = array<i32>} : memref<112x128xf32, #tpu.memory_space<vmem>>, vector<17x96xf32>,
    %cst_289 = arith.constant 0.000000e+00 : f32
    %350 = vector.broadcast %cst_289 : f32 to vector<64x192xf32>
    %c7_290 = arith.constant 7 : index
    %c0_291 = arith.constant 0 : index
    %351 = vector.load %arg16[%c7_290, %c0_291] : memref<112x128xf32, #tpu.memory_space<vmem>>, vector<64x128xf32>
    %352 = vector.broadcast %30 : vector<64x1xf32> to vector<64x128xf32>
    %353 = arith.mulf %351, %352 : vector<64x128xf32>
    %c8_292 = arith.constant 8 : index
    %c0_293 = arith.constant 0 : index
    %354 = vector.load %arg16[%c8_292, %c0_293] : memref<112x128xf32, #tpu.memory_space<vmem>>, vector<64x128xf32>
    %c9_294 = arith.constant 9 : index
    %c0_295 = arith.constant 0 : index
    %355 = vector.load %arg16[%c9_294, %c0_295] : memref<112x128xf32, #tpu.memory_space<vmem>>, vector<64x128xf32>
    %356 = vector.broadcast %41 : vector<64x1xf32> to vector<64x128xf32>
    %357 = arith.mulf %355, %356 : vector<64x128xf32>
    %c23_296 = arith.constant 23 : index
    %c0_297 = arith.constant 0 : index
    %358 = vector.load %arg16[%c23_296, %c0_297] : memref<112x128xf32, #tpu.memory_space<vmem>>, vector<64x128xf32>
    %359 = vector.broadcast %30 : vector<64x1xf32> to vector<64x128xf32>
    %360 = arith.mulf %358, %359 : vector<64x128xf32>
    %c24_298 = arith.constant 24 : index
    %c0_299 = arith.constant 0 : index
    %361 = vector.load %arg16[%c24_298, %c0_299] : memref<112x128xf32, #tpu.memory_space<vmem>>, vector<64x128xf32>
    %c25_300 = arith.constant 25 : index
    %c0_301 = arith.constant 0 : index
    %362 = vector.load %arg16[%c25_300, %c0_301] : memref<112x128xf32, #tpu.memory_space<vmem>>, vector<64x128xf32>
    %363 = vector.broadcast %41 : vector<64x1xf32> to vector<64x128xf32>
    %364 = arith.mulf %362, %363 : vector<64x128xf32>
    %c39_302 = arith.constant 39 : index
    %c0_303 = arith.constant 0 : index
    %365 = vector.load %arg16[%c39_302, %c0_303] : memref<112x128xf32, #tpu.memory_space<vmem>>, vector<64x128xf32>
    %366 = vector.broadcast %30 : vector<64x1xf32> to vector<64x128xf32>
    %367 = arith.mulf %365, %366 : vector<64x128xf32>
    %c40_304 = arith.constant 40 : index
    %c0_305 = arith.constant 0 : index
    %368 = vector.load %arg16[%c40_304, %c0_305] : memref<112x128xf32, #tpu.memory_space<vmem>>, vector<64x128xf32>
    %c41_306 = arith.constant 41 : index
    %c0_307 = arith.constant 0 : index
    %369 = vector.load %arg16[%c41_306, %c0_307] : memref<112x128xf32, #tpu.memory_space<vmem>>, vector<64x128xf32>
    %370 = vector.broadcast %41 : vector<64x1xf32> to vector<64x128xf32>
    %371 = arith.mulf %369, %370 : vector<64x128xf32>
    %c0_308 = arith.constant 0 : index
    %c0_309 = arith.constant 0 : index
    %c0_310 = arith.constant 0 : index
    %372 = vector.load %arg11[%c0_308, %c0_309, %c0_310] : memref<9x128x192xf32, #tpu.memory_space<vmem>>, vector<1x128x192xf32>
    %373 = vector.shape_cast %372 : vector<1x128x192xf32> to vector<128x192xf32>
    %cst_311 = arith.constant dense<0.000000e+00> : vector<64x192xf32>
    %374 = tpu.matmul %353, %373, %cst_311 {dimension_numbers = #tpu.dot_dimension_numbers<[1], [0], [0], [1], [0, 0, 1, 1], [], []>} : vector<64x128xf32>, vector<128x192xf32>, vector<64x192xf32> -> vector<64x192xf32>
    %375 = arith.addf %350, %374 : vector<64x192xf32>
    %c1_312 = arith.constant 1 : index
    %c0_313 = arith.constant 0 : index
    %c0_314 = arith.constant 0 : index
    %376 = vector.load %arg11[%c1_312, %c0_313, %c0_314] : memref<9x128x192xf32, #tpu.memory_space<vmem>>, vector<1x128x192xf32>
    %377 = vector.shape_cast %376 : vector<1x128x192xf32> to vector<128x192xf32>
    %cst_315 = arith.constant dense<0.000000e+00> : vector<64x192xf32>
    %378 = tpu.matmul %354, %377, %cst_315 {dimension_numbers = #tpu.dot_dimension_numbers<[1], [0], [0], [1], [0, 0, 1, 1], [], []>} : vector<64x128xf32>, vector<128x192xf32>, vector<64x192xf32> -> vector<64x192xf32>
    %379 = arith.addf %375, %378 : vector<64x192xf32>
    %c2_316 = arith.constant 2 : index
    %c0_317 = arith.constant 0 : index
    %c0_318 = arith.constant 0 : index
    %380 = vector.load %arg11[%c2_316, %c0_317, %c0_318] : memref<9x128x192xf32, #tpu.memory_space<vmem>>, vector<1x128x192xf32>
    %381 = vector.shape_cast %380 : vector<1x128x192xf32> to vector<128x192xf32>
    %cst_319 = arith.constant dense<0.000000e+00> : vector<64x192xf32>
    %382 = tpu.matmul %357, %381, %cst_319 {dimension_numbers = #tpu.dot_dimension_numbers<[1], [0], [0], [1], [0, 0, 1, 1], [], []>} : vector<64x128xf32>, vector<128x192xf32>, vector<64x192xf32> -> vector<64x192xf32>
    %383 = arith.addf %379, %382 : vector<64x192xf32>
    %c3_320 = arith.constant 3 : index
    %c0_321 = arith.constant 0 : index
    %c0_322 = arith.constant 0 : index
    %384 = vector.load %arg11[%c3_320, %c0_321, %c0_322] : memref<9x128x192xf32, #tpu.memory_space<vmem>>, vector<1x128x192xf32>
    %385 = vector.shape_cast %384 : vector<1x128x192xf32> to vector<128x192xf32>
    %cst_323 = arith.constant dense<0.000000e+00> : vector<64x192xf32>
    %386 = tpu.matmul %360, %385, %cst_323 {dimension_numbers = #tpu.dot_dimension_numbers<[1], [0], [0], [1], [0, 0, 1, 1], [], []>} : vector<64x128xf32>, vector<128x192xf32>, vector<64x192xf32> -> vector<64x192xf32>
    %387 = arith.addf %383, %386 : vector<64x192xf32>
    %c4_324 = arith.constant 4 : index
    %c0_325 = arith.constant 0 : index
    %c0_326 = arith.constant 0 : index
    %388 = vector.load %arg11[%c4_324, %c0_325, %c0_326] : memref<9x128x192xf32, #tpu.memory_space<vmem>>, vector<1x128x192xf32>
    %389 = vector.shape_cast %388 : vector<1x128x192xf32> to vector<128x192xf32>
    %cst_327 = arith.constant dense<0.000000e+00> : vector<64x192xf32>
    %390 = tpu.matmul %361, %389, %cst_327 {dimension_numbers = #tpu.dot_dimension_numbers<[1], [0], [0], [1], [0, 0, 1, 1], [], []>} : vector<64x128xf32>, vector<128x192xf32>, vector<64x192xf32> -> vector<64x192xf32>
    %391 = arith.addf %387, %390 : vector<64x192xf32>
    %c5_328 = arith.constant 5 : index
    %c0_329 = arith.constant 0 : index
    %c0_330 = arith.constant 0 : index
    %392 = vector.load %arg11[%c5_328, %c0_329, %c0_330] : memref<9x128x192xf32, #tpu.memory_space<vmem>>, vector<1x128x192xf32>
    %393 = vector.shape_cast %392 : vector<1x128x192xf32> to vector<128x192xf32>
    %cst_331 = arith.constant dense<0.000000e+00> : vector<64x192xf32>
    %394 = tpu.matmul %364, %393, %cst_331 {dimension_numbers = #tpu.dot_dimension_numbers<[1], [0], [0], [1], [0, 0, 1, 1], [], []>} : vector<64x128xf32>, vector<128x192xf32>, vector<64x192xf32> -> vector<64x192xf32>
    %395 = arith.addf %391, %394 : vector<64x192xf32>
    %c6_332 = arith.constant 6 : index
    %c0_333 = arith.constant 0 : index
    %c0_334 = arith.constant 0 : index
    %396 = vector.load %arg11[%c6_332, %c0_333, %c0_334] : memref<9x128x192xf32, #tpu.memory_space<vmem>>, vector<1x128x192xf32>
    %397 = vector.shape_cast %396 : vector<1x128x192xf32> to vector<128x192xf32>
    %cst_335 = arith.constant dense<0.000000e+00> : vector<64x192xf32>
    %398 = tpu.matmul %367, %397, %cst_335 {dimension_numbers = #tpu.dot_dimension_numbers<[1], [0], [0], [1], [0, 0, 1, 1], [], []>} : vector<64x128xf32>, vector<128x192xf32>, vector<64x192xf32> -> vector<64x192xf32>
    %399 = arith.addf %395, %398 : vector<64x192xf32>
    %c7_336 = arith.constant 7 : index
    %c0_337 = arith.constant 0 : index
    %c0_338 = arith.constant 0 : index
    %400 = vector.load %arg11[%c7_336, %c0_337, %c0_338] : memref<9x128x192xf32, #tpu.memory_space<vmem>>, vector<1x128x192xf32>
    %401 = vector.shape_cast %400 : vector<1x128x192xf32> to vector<128x192xf32>
    %cst_339 = arith.constant dense<0.000000e+00> : vector<64x192xf32>
    %402 = tpu.matmul %368, %401, %cst_339 {dimension_numbers = #tpu.dot_dimension_numbers<[1], [0], [0], [1], [0, 0, 1, 1], [], []>} : vector<64x128xf32>, vector<128x192xf32>, vector<64x192xf32> -> vector<64x192xf32>
    %403 = arith.addf %399, %402 : vector<64x192xf32>
    %c8_340 = arith.constant 8 : index
    %c0_341 = arith.constant 0 : index
    %c0_342 = arith.constant 0 : index
    %404 = vector.load %arg11[%c8_340, %c0_341, %c0_342] : memref<9x128x192xf32, #tpu.memory_space<vmem>>, vector<1x128x192xf32>
    %405 = vector.shape_cast %404 : vector<1x128x192xf32> to vector<128x192xf32>
    %cst_343 = arith.constant dense<0.000000e+00> : vector<64x192xf32>
    %406 = tpu.matmul %371, %405, %cst_343 {dimension_numbers = #tpu.dot_dimension_numbers<[1], [0], [0], [1], [0, 0, 1, 1], [], []>} : vector<64x128xf32>, vector<128x192xf32>, vector<64x192xf32> -> vector<64x192xf32>
    %407 = arith.addf %403, %406 : vector<64x192xf32>
    %c0_344 = arith.constant 0 : index
    %c0_345 = arith.constant 0 : index
    %408 = vector.load %arg12[%c0_344, %c0_345] : memref<1x192xf32, #tpu.memory_space<vmem>>, vector<1x192xf32>
    %409 = vector.broadcast %408 : vector<1x192xf32> to vector<64x192xf32>
    %410 = arith.addf %407, %409 : vector<64x192xf32>
    %411 = arith.negf %410 : vector<64x192xf32>
    %412 = math.exp %411 : vector<64x192xf32>
    %cst_346 = arith.constant 1.000000e+00 : f32
    %413 = vector.broadcast %cst_346 : f32 to vector<64x192xf32>
    %414 = arith.addf %413, %412 : vector<64x192xf32>
    %415 = arith.divf %413, %414 : vector<64x192xf32>
    %416 = arith.mulf %410, %415 : vector<64x192xf32>
    %c0_347 = arith.constant 0 : index
    %c0_348 = arith.constant 0 : index
    %417 = vector.load %arg13[%c0_347, %c0_348] : memref<192x128xf32, #tpu.memory_space<vmem>>, vector<192x128xf32>
    %cst_349 = arith.constant dense<0.000000e+00> : vector<64x128xf32>
    %418 = tpu.matmul %416, %417, %cst_349 {dimension_numbers = #tpu.dot_dimension_numbers<[1], [0], [0], [1], [0, 0, 1, 1], [], []>} : vector<64x192xf32>, vector<192x128xf32>, vector<64x128xf32> -> vector<64x128xf32>
    %c0_350 = arith.constant 0 : index
    %c0_351 = arith.constant 0 : index
    %419 = vector.load %arg14[%c0_350, %c0_351] : memref<1x128xf32, #tpu.memory_space<vmem>>, vector<1x128xf32>
    %420 = vector.broadcast %419 : vector<1x128xf32> to vector<64x128xf32>
    %421 = arith.addf %418, %420 : vector<64x128xf32>
    %422 = arith.addf %421, %340 : vector<64x128xf32>
    %c0_352 = arith.constant 0 : index
    %c0_353 = arith.constant 0 : index
    %c0_354 = arith.constant 0 : index
    %423 = vector.load %arg15[%c0_352, %c0_353, %c0_354] : memref<1x64x128xf32, #tpu.memory_space<vmem>>, vector<1x64x128xf32>
    %424 = vector.shape_cast %423 : vector<1x64x128xf32> to vector<64x128xf32>
    %425 = vector.shape_cast %422 : vector<64x128xf32> to vector<1x64x128xf32>
    tpu.vector_store %arg15[%c0_352, %c0_353, %c0_354], %425 {strides = array<i32>} : memref<1x64x128xf32, #tpu.memory_space<vmem>>, vector<1x64x128xf32>,
    return
  }
  func.func @transform_0(%arg0: i32) -> (i32, i32, i32) {
    %c0_i32 = arith.constant 0 : i32
    %c0_i32_0 = arith.constant 0 : i32
    %c0_i32_1 = arith.constant 0 : i32
    return %arg0, %c0_i32, %c0_i32_0 : i32, i32, i32
  }
  func.func @transform_1(%arg0: i32) -> (i32, i32) {
    %c0_i32 = arith.constant 0 : i32
    %c0_i32_0 = arith.constant 0 : i32
    %c0_i32_1 = arith.constant 0 : i32
    return %c0_i32, %c0_i32_0 : i32, i32
  }
  func.func @transform_2(%arg0: i32) -> (i32, i32, i32, i32) {
    %c0_i32 = arith.constant 0 : i32
    %c0_i32_0 = arith.constant 0 : i32
    %c0_i32_1 = arith.constant 0 : i32
    %c0_i32_2 = arith.constant 0 : i32
    %c0_i32_3 = arith.constant 0 : i32
    return %c0_i32, %c0_i32_0, %c0_i32_1, %c0_i32_2 : i32, i32, i32, i32
  }
  func.func @transform_3(%arg0: i32) -> (i32, i32, i32, i32) {
    %c0_i32 = arith.constant 0 : i32
    %c0_i32_0 = arith.constant 0 : i32
    %c0_i32_1 = arith.constant 0 : i32
    %c0_i32_2 = arith.constant 0 : i32
    %c0_i32_3 = arith.constant 0 : i32
    return %c0_i32, %c0_i32_0, %c0_i32_1, %c0_i32_2 : i32, i32, i32, i32
  }
  func.func @transform_4(%arg0: i32) -> (i32, i32, i32, i32) {
    %c0_i32 = arith.constant 0 : i32
    %c0_i32_0 = arith.constant 0 : i32
    %c0_i32_1 = arith.constant 0 : i32
    %c0_i32_2 = arith.constant 0 : i32
    %c0_i32_3 = arith.constant 0 : i32
    return %c0_i32, %c0_i32_0, %c0_i32_1, %c0_i32_2 : i32, i32, i32, i32
  }
  func.func @transform_5(%arg0: i32) -> (i32, i32, i32, i32) {
    %c0_i32 = arith.constant 0 : i32
    %c0_i32_0 = arith.constant 0 : i32
    %c0_i32_1 = arith.constant 0 : i32
    %c0_i32_2 = arith.constant 0 : i32
    %c0_i32_3 = arith.constant 0 : i32
    return %c0_i32, %c0_i32_0, %c0_i32_1, %c0_i32_2 : i32, i32, i32, i32
  }
  func.func @transform_6(%arg0: i32) -> (i32, i32, i32, i32) {
    %c0_i32 = arith.constant 0 : i32
    %c0_i32_0 = arith.constant 0 : i32
    %c0_i32_1 = arith.constant 0 : i32
    %c0_i32_2 = arith.constant 0 : i32
    %c0_i32_3 = arith.constant 0 : i32
    return %c0_i32, %c0_i32_0, %c0_i32_1, %c0_i32_2 : i32, i32, i32, i32
  }
  func.func @transform_7(%arg0: i32) -> (i32, i32, i32, i32) {
    %c0_i32 = arith.constant 0 : i32
    %c0_i32_0 = arith.constant 0 : i32
    %c0_i32_1 = arith.constant 0 : i32
    %c0_i32_2 = arith.constant 0 : i32
    %c0_i32_3 = arith.constant 0 : i32
    return %c0_i32, %c0_i32_0, %c0_i32_1, %c0_i32_2 : i32, i32, i32, i32
  }
  func.func @transform_8(%arg0: i32) -> (i32, i32, i32, i32) {
    %c0_i32 = arith.constant 0 : i32
    %c0_i32_0 = arith.constant 0 : i32
    %c0_i32_1 = arith.constant 0 : i32
    %c0_i32_2 = arith.constant 0 : i32
    %c0_i32_3 = arith.constant 0 : i32
    return %c0_i32, %c0_i32_0, %c0_i32_1, %c0_i32_2 : i32, i32, i32, i32
  }
  func.func @transform_9(%arg0: i32) -> (i32, i32, i32) {
    %c0_i32 = arith.constant 0 : i32
    %c0_i32_0 = arith.constant 0 : i32
    %c0_i32_1 = arith.constant 0 : i32
    %c0_i32_2 = arith.constant 0 : i32
    return %c0_i32, %c0_i32_0, %c0_i32_1 : i32, i32, i32
  }
  func.func @transform_10(%arg0: i32) -> (i32, i32, i32) {
    %c0_i32 = arith.constant 0 : i32
    %c0_i32_0 = arith.constant 0 : i32
    %c0_i32_1 = arith.constant 0 : i32
    %c0_i32_2 = arith.constant 0 : i32
    return %c0_i32, %c0_i32_0, %c0_i32_1 : i32, i32, i32
  }
  func.func @transform_11(%arg0: i32) -> (i32, i32) {
    %c0_i32 = arith.constant 0 : i32
    %c0_i32_0 = arith.constant 0 : i32
    %c0_i32_1 = arith.constant 0 : i32
    return %c0_i32, %c0_i32_0 : i32, i32
  }
  func.func @transform_12(%arg0: i32) -> (i32, i32) {
    %c0_i32 = arith.constant 0 : i32
    %c0_i32_0 = arith.constant 0 : i32
    %c0_i32_1 = arith.constant 0 : i32
    return %c0_i32, %c0_i32_0 : i32, i32
  }
  func.func @transform_13(%arg0: i32) -> (i32, i32) {
    %c0_i32 = arith.constant 0 : i32
    %c0_i32_0 = arith.constant 0 : i32
    %c0_i32_1 = arith.constant 0 : i32
    return %c0_i32, %c0_i32_0 : i32, i32
  }
  func.func @transform_14(%arg0: i32) -> (i32, i32, i32) {
    %c0_i32 = arith.constant 0 : i32
    %c0_i32_0 = arith.constant 0 : i32
    %c0_i32_1 = arith.constant 0 : i32
    return %arg0, %c0_i32, %c0_i32_0 : i32, i32, i32
  }
}

</mosaic_0001>

<llo_original>
// kernel: tpu_custom_call.1
$region0: #{tpu_custom_call.1}
  #allocation0 [shape = 'u32[]', space=smem, size = 0x4, offset = 0x4, fixed_abs, tag = 'smem constant byte address 0x4 - core index']
  #allocation1 [shape = 'u32[144,128]{1,0:T(1,128)}', space=vmem, size = 0x12000, scoped, tag = 'internal scratch']
  #allocation2 [shape = 'f32[112,128]{1,0:T(8,128)}', space=vmem, size = 0xe000, scoped, tag = 'scratch operand']
  %s0 = inlined_call_operand.hbm [shape: f32[2,64,128], index: 0, kind: input, shape index: {}]
  %s1 = inlined_call_operand.hbm [shape: f32[128,128], index: 1, kind: input, shape index: {}]
  %s2 = inlined_call_operand.vmem [shape: f32[2,2,1,128], index: 2, kind: input, shape index: {}]
  %s3 = inlined_call_operand.vmem [shape: f32[2,2,128,128], index: 3, kind: input, shape index: {}]
  %s4 = inlined_call_operand.vmem [shape: f32[2,2,1,128], index: 4, kind: input, shape index: {}]
  %s5 = inlined_call_operand.vmem [shape: f32[2,2,128,128], index: 5, kind: input, shape index: {}]
  %s6 = inlined_call_operand.vmem [shape: f32[2,2,128,128], index: 6, kind: input, shape index: {}]
  %s7 = inlined_call_operand.vmem [shape: f32[2,2,1,128], index: 7, kind: input, shape index: {}]
  %s8 = inlined_call_operand.vmem [shape: f32[2,9,128,128], index: 8, kind: input, shape index: {}]
  %s9 = inlined_call_operand.vmem [shape: f32[2,1,128], index: 9, kind: input, shape index: {}]
  %s10 = inlined_call_operand.vmem [shape: f32[9,128,192], index: 10, kind: input, shape index: {}]
  %s11 = inlined_call_operand.vmem [shape: f32[1,192], index: 11, kind: input, shape index: {}]
  %s12 = inlined_call_operand.vmem [shape: f32[192,128], index: 12, kind: input, shape index: {}]
  %s13 = inlined_call_operand.vmem [shape: f32[1,128], index: 13, kind: input, shape index: {}]
  %s14 = inlined_call_operand.hbm [shape: f32[2,64,128], index: 14, kind: output, shape index: {}]
  %s15 = sld [smem:[#allocation0]]
  $region97: #{tpu_custom_call.1} parent=0
    _
  %s17 = ssub.s32 1, %s15
  %s18 = scalar_select 0, %s17, %s15
  $region1: #{tpu_custom_call.1} parent=0
    #allocation3 [shape = 'u8[65536]{0}', space=vmem, size = 0x10000, scoped, tag = 'input window, operand 0']
    #allocation4 [shape = 's32[2]{0}', space=sflag, size = 0x8, scoped, tag = 'scoped memory for tpu_custom_call.1']
    #allocation5 [shape = 's32[2]{0}', space=sflag, size = 0x8, scoped, tag = 'scoped memory for tpu_custom_call.1']
    #allocation6 [shape = 'u8[65536]{0}', space=vmem, size = 0x10000, scoped, tag = 'input window, operand 1, single buffered']
    #allocation7 [shape = 's32[1]{0}', space=sflag, size = 0x4, scoped, tag = 'scoped memory for tpu_custom_call.1']
    #allocation8 [shape = 'u8[65536]{0}', space=vmem, size = 0x10000, scoped, tag = 'output window, operand 0']
    %19 = vsyncpa [#allocation4], 0
    %s20 = scalar_lea.sflag [#allocation4], 1
    %21 = vsyncpa %s20, 0
    %22 = vsyncpa [#allocation7], 0
    %23 = vsyncpa [#allocation5], 0
    %s24 = scalar_lea.sflag [#allocation5], 1
    %25 = vsyncpa %s24, 0
    loop: start=0, step=1, limit=4
    $region2: #{tpu_custom_call.1} parent=1 // loop_pre_header
      _
    $region3: #{tpu_custom_call.1} parent=1 // loop_header
      %s27 = sphi 0, %s31
      %p28 = scmp.ge.s32.totalorder %s27, 4
      %s37 = sphi 0, %s39
      %s40 = sphi 0, %s37
      %s41 = sphi 0, %s40
      %s57 = sphi 0, %s41
      %s61 = sphi 0, %s61
      %s63 = sphi 0, %s61
      %s64 = sphi 0, %s63
      %s78 = sphi 0, %s64
      %s82 = sphi 0, %s82
      %s84 = sphi 0, %s82
      %s85 = sphi 0, %s84
      %s99 = sphi 0, %s85
      %s103 = sphi 0, %s103
      %s105 = sphi 0, %s103
      %s106 = sphi 0, %s105
      %s120 = sphi 0, %s106
      %s124 = sphi 0, %s124
      %s126 = sphi 0, %s124
      %s127 = sphi 0, %s126
      %s141 = sphi 0, %s127
      %s145 = sphi 0, %s145
      %s147 = sphi 0, %s145
      %s148 = sphi 0, %s147
      %s162 = sphi 0, %s148
      %s166 = sphi 0, %s166
      %s168 = sphi 0, %s166
      %s169 = sphi 0, %s168
      %s183 = sphi 0, %s169
      %s187 = sphi 0, %s187
      %s189 = sphi 0, %s187
      %s190 = sphi 0, %s189
      %s204 = sphi 0, %s190
      %s208 = sphi 0, %s208
      %s210 = sphi 0, %s208
      %s211 = sphi 0, %s210
      %s225 = sphi 0, %s211
      %s229 = sphi 0, %s229
      %s231 = sphi 0, %s229
      %s232 = sphi 0, %s231
      %s246 = sphi 0, %s232
      %s250 = sphi 0, %s250
      %s252 = sphi 0, %s250
      %s253 = sphi 0, %s252
      %s267 = sphi 0, %s253
      %s271 = sphi 0, %s271
      %s273 = sphi 0, %s271
      %s274 = sphi 0, %s273
      %s288 = sphi 0, %s274
      %s292 = sphi 0, %s292
      %s294 = sphi 0, %s292
      %s295 = sphi 0, %s294
      %s309 = sphi 0, %s295
      %s313 = sphi 0, %s313
      %s315 = sphi 0, %s313
      %s316 = sphi 0, %s315
      %s330 = sphi 0, %s316
      %s336 = sphi 0, %s338
      %s339 = sphi 0, %s336
      %s340 = sphi 0, %s339
      %s356 = sphi 0, %s340
    $region4: #{tpu_custom_call.1} parent=1 // loop_header_branch
      %30 = sbr.rel (%p28) target = $region8
    $region5: #{tpu_custom_call.1} parent=1 // loop_body
      %s32 = ssub.s32 %s27, 1
      %s33 = ssub.s32 %s27, 2
      %s34 = sadd.s32 %s27, 1
      %s35 = ssub.s32 %s27, %s34
      %p36 = scmp.eq.s32.totalorder %s35, 0
      %s38 = sadd.s32 %s37, 1
      %s39 = scalar_select %p36, %s37, %s38
      %p42 = pneg %p36
      %p43 = scmp.eq.s32.totalorder %s27, 1
      %p44 = por %p42, %p43
      %p45 = scmp.ne.s32.totalorder %s37, %s40
      %p46 = scmp.eq.s32.totalorder %s27, 0
      %p47 = por %p45, %p46
      %p48 = scmp.ne.s32.totalorder %s37, %s40
      %p49 = scmp.eq.s32.totalorder %s32, 1
      %p50 = por %p48, %p49
      %p51 = scmp.ne.s32.totalorder %s40, %s41
      %p52 = scmp.eq.s32.totalorder %s32, 0
      %p53 = por %p51, %p52
      %p54 = scmp.ne.s32.totalorder %s40, %s41
      %p55 = scmp.eq.s32.totalorder %s33, 1
      %p56 = por %p54, %p55
      %p58 = scmp.ne.s32.totalorder %s41, %s57
      %p59 = scmp.eq.s32.totalorder %s33, 0
      %p60 = por %p58, %p59
      %s62 = sadd.s32 %s61, 1
      %p65 = scmp.eq.s32.totalorder %s27, 1
      %p66 = scmp.ne.s32.totalorder %s61, %s63
      %p67 = scmp.eq.s32.totalorder %s27, 0
      %p68 = por %p66, %p67
      %p69 = scmp.ne.s32.totalorder %s61, %s63
      %p70 = scmp.eq.s32.totalorder %s32, 1
      %p71 = por %p69, %p70
      %p72 = scmp.ne.s32.totalorder %s63, %s64
      %p73 = scmp.eq.s32.totalorder %s32, 0
      %p74 = por %p72, %p73
      %p75 = scmp.ne.s32.totalorder %s63, %s64
      %p76 = scmp.eq.s32.totalorder %s33, 1
      %p77 = por %p75, %p76
      %p79 = scmp.ne.s32.totalorder %s64, %s78
      %p80 = scmp.eq.s32.totalorder %s33, 0
      %p81 = por %p79, %p80
      %s83 = sadd.s32 %s82, 1
      %p86 = scmp.eq.s32.totalorder %s27, 1
      %p87 = scmp.ne.s32.totalorder %s82, %s84
      %p88 = scmp.eq.s32.totalorder %s27, 0
      %p89 = por %p87, %p88
      %p90 = scmp.ne.s32.totalorder %s82, %s84
      %p91 = scmp.eq.s32.totalorder %s32, 1
      %p92 = por %p90, %p91
      %p93 = scmp.ne.s32.totalorder %s84, %s85
      %p94 = scmp.eq.s32.totalorder %s32, 0
      %p95 = por %p93, %p94
      %p96 = scmp.ne.s32.totalorder %s84, %s85
      %p97 = scmp.eq.s32.totalorder %s33, 1
      %p98 = por %p96, %p97
      %p100 = scmp.ne.s32.totalorder %s85, %s99
      %p101 = scmp.eq.s32.totalorder %s33, 0
      %p102 = por %p100, %p101
      %s104 = sadd.s32 %s103, 1
      %p107 = scmp.eq.s32.totalorder %s27, 1
      %p108 = scmp.ne.s32.totalorder %s103, %s105
      %p109 = scmp.eq.s32.totalorder %s27, 0
      %p110 = por %p108, %p109
      %p111 = scmp.ne.s32.totalorder %s103, %s105
      %p112 = scmp.eq.s32.totalorder %s32, 1
      %p113 = por %p111, %p112
      %p114 = scmp.ne.s32.totalorder %s105, %s106
      %p115 = scmp.eq.s32.totalorder %s32, 0
      %p116 = por %p114, %p115
      %p117 = scmp.ne.s32.totalorder %s105, %s106
      %p118 = scmp.eq.s32.totalorder %s33, 1
      %p119 = por %p117, %p118
      %p121 = scmp.ne.s32.totalorder %s106, %s120
      %p122 = scmp.eq.s32.totalorder %s33, 0
      %p123 = por %p121, %p122
      %s125 = sadd.s32 %s124, 1
      %p128 = scmp.eq.s32.totalorder %s27, 1
      %p129 = scmp.ne.s32.totalorder %s124, %s126
      %p130 = scmp.eq.s32.totalorder %s27, 0
      %p131 = por %p129, %p130
      %p132 = scmp.ne.s32.totalorder %s124, %s126
      %p133 = scmp.eq.s32.totalorder %s32, 1
      %p134 = por %p132, %p133
      %p135 = scmp.ne.s32.totalorder %s126, %s127
      %p136 = scmp.eq.s32.totalorder %s32, 0
      %p137 = por %p135, %p136
      %p138 = scmp.ne.s32.totalorder %s126, %s127
      %p139 = scmp.eq.s32.totalorder %s33, 1
      %p140 = por %p138, %p139
      %p142 = scmp.ne.s32.totalorder %s127, %s141
      %p143 = scmp.eq.s32.totalorder %s33, 0
      %p144 = por %p142, %p143
      %s146 = sadd.s32 %s145, 1
      %p149 = scmp.eq.s32.totalorder %s27, 1
      %p150 = scmp.ne.s32.totalorder %s145, %s147
      %p151 = scmp.eq.s32.totalorder %s27, 0
      %p152 = por %p150, %p151
      %p153 = scmp.ne.s32.totalorder %s145, %s147
      %p154 = scmp.eq.s32.totalorder %s32, 1
      %p155 = por %p153, %p154
      %p156 = scmp.ne.s32.totalorder %s147, %s148
      %p157 = scmp.eq.s32.totalorder %s32, 0
      %p158 = por %p156, %p157
      %p159 = scmp.ne.s32.totalorder %s147, %s148
      %p160 = scmp.eq.s32.totalorder %s33, 1
      %p161 = por %p159, %p160
      %p163 = scmp.ne.s32.totalorder %s148, %s162
      %p164 = scmp.eq.s32.totalorder %s33, 0
      %p165 = por %p163, %p164
      %s167 = sadd.s32 %s166, 1
      %p170 = scmp.eq.s32.totalorder %s27, 1
      %p171 = scmp.ne.s32.totalorder %s166, %s168
      %p172 = scmp.eq.s32.totalorder %s27, 0
      %p173 = por %p171, %p172
      %p174 = scmp.ne.s32.totalorder %s166, %s168
      %p175 = scmp.eq.s32.totalorder %s32, 1
      %p176 = por %p174, %p175
      %p177 = scmp.ne.s32.totalorder %s168, %s169
      %p178 = scmp.eq.s32.totalorder %s32, 0
      %p179 = por %p177, %p178
      %p180 = scmp.ne.s32.totalorder %s168, %s169
      %p181 = scmp.eq.s32.totalorder %s33, 1
      %p182 = por %p180, %p181
      %p184 = scmp.ne.s32.totalorder %s169, %s183
      %p185 = scmp.eq.s32.totalorder %s33, 0
      %p186 = por %p184, %p185
      %s188 = sadd.s32 %s187, 1
      %p191 = scmp.eq.s32.totalorder %s27, 1
      %p192 = scmp.ne.s32.totalorder %s187, %s189
      %p193 = scmp.eq.s32.totalorder %s27, 0
      %p194 = por %p192, %p193
      %p195 = scmp.ne.s32.totalorder %s187, %s189
      %p196 = scmp.eq.s32.totalorder %s32, 1
      %p197 = por %p195, %p196
      %p198 = scmp.ne.s32.totalorder %s189, %s190
      %p199 = scmp.eq.s32.totalorder %s32, 0
      %p200 = por %p198, %p199
      %p201 = scmp.ne.s32.totalorder %s189, %s190
      %p202 = scmp.eq.s32.totalorder %s33, 1
      %p203 = por %p201, %p202
      %p205 = scmp.ne.s32.totalorder %s190, %s204
      %p206 = scmp.eq.s32.totalorder %s33, 0
      %p207 = por %p205, %p206
      %s209 = sadd.s32 %s208, 1
      %p212 = scmp.eq.s32.totalorder %s27, 1
      %p213 = scmp.ne.s32.totalorder %s208, %s210
      %p214 = scmp.eq.s32.totalorder %s27, 0
      %p215 = por %p213, %p214
      %p216 = scmp.ne.s32.totalorder %s208, %s210
      %p217 = scmp.eq.s32.totalorder %s32, 1
      %p218 = por %p216, %p217
      %p219 = scmp.ne.s32.totalorder %s210, %s211
      %p220 = scmp.eq.s32.totalorder %s32, 0
      %p221 = por %p219, %p220
      %p222 = scmp.ne.s32.totalorder %s210, %s211
      %p223 = scmp.eq.s32.totalorder %s33, 1
      %p224 = por %p222, %p223
      %p226 = scmp.ne.s32.totalorder %s211, %s225
      %p227 = scmp.eq.s32.totalorder %s33, 0
      %p228 = por %p226, %p227
      %s230 = sadd.s32 %s229, 1
      %p233 = scmp.eq.s32.totalorder %s27, 1
      %p234 = scmp.ne.s32.totalorder %s229, %s231
      %p235 = scmp.eq.s32.totalorder %s27, 0
      %p236 = por %p234, %p235
      %p237 = scmp.ne.s32.totalorder %s229, %s231
      %p238 = scmp.eq.s32.totalorder %s32, 1
      %p239 = por %p237, %p238
      %p240 = scmp.ne.s32.totalorder %s231, %s232
      %p241 = scmp.eq.s32.totalorder %s32, 0
      %p242 = por %p240, %p241
      %p243 = scmp.ne.s32.totalorder %s231, %s232
      %p244 = scmp.eq.s32.totalorder %s33, 1
      %p245 = por %p243, %p244
      %p247 = scmp.ne.s32.totalorder %s232, %s246
      %p248 = scmp.eq.s32.totalorder %s33, 0
      %p249 = por %p247, %p248
      %s251 = sadd.s32 %s250, 1
      %p254 = scmp.eq.s32.totalorder %s27, 1
      %p255 = scmp.ne.s32.totalorder %s250, %s252
      %p256 = scmp.eq.s32.totalorder %s27, 0
      %p257 = por %p255, %p256
      %p258 = scmp.ne.s32.totalorder %s250, %s252
      %p259 = scmp.eq.s32.totalorder %s32, 1
      %p260 = por %p258, %p259
      %p261 = scmp.ne.s32.totalorder %s252, %s253
      %p262 = scmp.eq.s32.totalorder %s32, 0
      %p263 = por %p261, %p262
      %p264 = scmp.ne.s32.totalorder %s252, %s253
      %p265 = scmp.eq.s32.totalorder %s33, 1
      %p266 = por %p264, %p265
      %p268 = scmp.ne.s32.totalorder %s253, %s267
      %p269 = scmp.eq.s32.totalorder %s33, 0
      %p270 = por %p268, %p269
      %s272 = sadd.s32 %s271, 1
      %p275 = scmp.eq.s32.totalorder %s27, 1
      %p276 = scmp.ne.s32.totalorder %s271, %s273
      %p277 = scmp.eq.s32.totalorder %s27, 0
      %p278 = por %p276, %p277
      %p279 = scmp.ne.s32.totalorder %s271, %s273
      %p280 = scmp.eq.s32.totalorder %s32, 1
      %p281 = por %p279, %p280
      %p282 = scmp.ne.s32.totalorder %s273, %s274
      %p283 = scmp.eq.s32.totalorder %s32, 0
      %p284 = por %p282, %p283
      %p285 = scmp.ne.s32.totalorder %s273, %s274
      %p286 = scmp.eq.s32.totalorder %s33, 1
      %p287 = por %p285, %p286
      %p289 = scmp.ne.s32.totalorder %s274, %s288
      %p290 = scmp.eq.s32.totalorder %s33, 0
      %p291 = por %p289, %p290
      %s293 = sadd.s32 %s292, 1
      %p296 = scmp.eq.s32.totalorder %s27, 1
      %p297 = scmp.ne.s32.totalorder %s292, %s294
      %p298 = scmp.eq.s32.totalorder %s27, 0
      %p299 = por %p297, %p298
      %p300 = scmp.ne.s32.totalorder %s292, %s294
      %p301 = scmp.eq.s32.totalorder %s32, 1
      %p302 = por %p300, %p301
      %p303 = scmp.ne.s32.totalorder %s294, %s295
      %p304 = scmp.eq.s32.totalorder %s32, 0
      %p305 = por %p303, %p304
      %p306 = scmp.ne.s32.totalorder %s294, %s295
      %p307 = scmp.eq.s32.totalorder %s33, 1
      %p308 = por %p306, %p307
      %p310 = scmp.ne.s32.totalorder %s295, %s309
      %p311 = scmp.eq.s32.totalorder %s33, 0
      %p312 = por %p310, %p311
      %s314 = sadd.s32 %s313, 1
      %p317 = scmp.eq.s32.totalorder %s27, 1
      %p318 = scmp.ne.s32.totalorder %s313, %s315
      %p319 = scmp.eq.s32.totalorder %s27, 0
      %p320 = por %p318, %p319
      %p321 = scmp.ne.s32.totalorder %s313, %s315
      %p322 = scmp.eq.s32.totalorder %s32, 1
      %p323 = por %p321, %p322
      %p324 = scmp.ne.s32.totalorder %s315, %s316
      %p325 = scmp.eq.s32.totalorder %s32, 0
      %p326 = por %p324, %p325
      %p327 = scmp.ne.s32.totalorder %s315, %s316
      %p328 = scmp.eq.s32.totalorder %s33, 1
      %p329 = por %p327, %p328
      %p331 = scmp.ne.s32.totalorder %s316, %s330
      %p332 = scmp.eq.s32.totalorder %s33, 0
      %p333 = por %p331, %p332
      %s334 = ssub.s32 %s27, %s34
      %p335 = scmp.eq.s32.totalorder %s334, 0
      %s337 = sadd.s32 %s336, 1
      %s338 = scalar_select %p335, %s336, %s337
      %p341 = pneg %p335
      %p342 = scmp.eq.s32.totalorder %s27, 1
      %p343 = por %p341, %p342
      %p344 = scmp.ne.s32.totalorder %s336, %s339
      %p345 = scmp.eq.s32.totalorder %s27, 0
      %p346 = por %p344, %p345
      %p347 = scmp.ne.s32.totalorder %s336, %s339
      %p348 = scmp.eq.s32.totalorder %s32, 1
      %p349 = por %p347, %p348
      %p350 = scmp.ne.s32.totalorder %s339, %s340
      %p351 = scmp.eq.s32.totalorder %s32, 0
      %p352 = por %p350, %p351
      %p353 = scmp.ne.s32.totalorder %s339, %s340
      %p354 = scmp.eq.s32.totalorder %s33, 1
      %p355 = por %p353, %p354
      %p357 = scmp.ne.s32.totalorder %s340, %s356
      %p358 = scmp.eq.s32.totalorder %s33, 0
      %p359 = por %p357, %p358
      %p360 = scmp.le.s32.totalorder 1, %s27
      %p361 = scmp.lt.s32.totalorder %s27, 3
      %p362 = pnand %p360, %p361
      %p363 = pneg %p362
      // Predicated region
      $region9: #{tpu_custom_call.1} parent=5 // pred_check
        _
      $region10: #{tpu_custom_call.1} parent=5 // pred_check_branch
        %365 = sbr.rel (%p362) target = $region12
      $region11: #{tpu_custom_call.1} parent=5 // pred_region
        %s366 = ssub.s32 %s27, 1
        // Predicated region
        $region13: #{tpu_custom_call.1} parent=11 // pred_check
          %p367 = pneg %p74
        $region14: #{tpu_custom_call.1} parent=11 // pred_check_branch
          %369 = sbr.rel (%p367) target = $region16
        $region15: #{tpu_custom_call.1} parent=11 // pred_region
          %s371 = ssub.s32 2048, 2048
          %372 = vsyncadd [#allocation7], %s371
          %s373 = sshll.u32 [#allocation6], 4
          %s374 = int_to_ptr.vmem [resolvable:$true] %s373
          %379 = dma.hbm_to_vmem [thread:$0]  %s1, 2048, %s374, [#allocation7], 128, 128, 8
        $region16: #{tpu_custom_call.1} parent=11 // pred_fallthru
          _
        // Predicated region
        $region17: #{tpu_custom_call.1} parent=11 // pred_check
          %p380 = pneg %p95
        $region18: #{tpu_custom_call.1} parent=11 // pred_check_branch
          %382 = sbr.rel (%p380) target = $region20
        $region19: #{tpu_custom_call.1} parent=11 // pred_region
          _
        $region20: #{tpu_custom_call.1} parent=11 // pred_fallthru
          _
        // Predicated region
        $region21: #{tpu_custom_call.1} parent=11 // pred_check
          %p383 = pneg %p116
        $region22: #{tpu_custom_call.1} parent=11 // pred_check_branch
          %385 = sbr.rel (%p383) target = $region24
        $region23: #{tpu_custom_call.1} parent=11 // pred_region
          _
        $region24: #{tpu_custom_call.1} parent=11 // pred_fallthru
          _
        // Predicated region
        $region25: #{tpu_custom_call.1} parent=11 // pred_check
          %p386 = pneg %p137
        $region26: #{tpu_custom_call.1} parent=11 // pred_check_branch
          %388 = sbr.rel (%p386) target = $region28
        $region27: #{tpu_custom_call.1} parent=11 // pred_region
          _
        $region28: #{tpu_custom_call.1} parent=11 // pred_fallthru
          _
        // Predicated region
        $region29: #{tpu_custom_call.1} parent=11 // pred_check
          %p389 = pneg %p158
        $region30: #{tpu_custom_call.1} parent=11 // pred_check_branch
          %391 = sbr.rel (%p389) target = $region32
        $region31: #{tpu_custom_call.1} parent=11 // pred_region
          _
        $region32: #{tpu_custom_call.1} parent=11 // pred_fallthru
          _
        // Predicated region
        $region33: #{tpu_custom_call.1} parent=11 // pred_check
          %p392 = pneg %p179
        $region34: #{tpu_custom_call.1} parent=11 // pred_check_branch
          %394 = sbr.rel (%p392) target = $region36
        $region35: #{tpu_custom_call.1} parent=11 // pred_region
          _
        $region36: #{tpu_custom_call.1} parent=11 // pred_fallthru
          _
        // Predicated region
        $region37: #{tpu_custom_call.1} parent=11 // pred_check
          %p395 = pneg %p200
        $region38: #{tpu_custom_call.1} parent=11 // pred_check_branch
          %397 = sbr.rel (%p395) target = $region40
        $region39: #{tpu_custom_call.1} parent=11 // pred_region
          _
        $region40: #{tpu_custom_call.1} parent=11 // pred_fallthru
          _
        // Predicated region
        $region41: #{tpu_custom_call.1} parent=11 // pred_check
          %p398 = pneg %p221
        $region42: #{tpu_custom_call.1} parent=11 // pred_check_branch
          %400 = sbr.rel (%p398) target = $region44
        $region43: #{tpu_custom_call.1} parent=11 // pred_region
          _
        $region44: #{tpu_custom_call.1} parent=11 // pred_fallthru
          _
        // Predicated region
        $region45: #{tpu_custom_call.1} parent=11 // pred_check
          %p401 = pneg %p242
        $region46: #{tpu_custom_call.1} parent=11 // pred_check_branch
          %403 = sbr.rel (%p401) target = $region48
        $region47: #{tpu_custom_call.1} parent=11 // pred_region
          _
        $region48: #{tpu_custom_call.1} parent=11 // pred_fallthru
          _
        // Predicated region
        $region49: #{tpu_custom_call.1} parent=11 // pred_check
          %p404 = pneg %p263
        $region50: #{tpu_custom_call.1} parent=11 // pred_check_branch
          %406 = sbr.rel (%p404) target = $region52
        $region51: #{tpu_custom_call.1} parent=11 // pred_region
          _
        $region52: #{tpu_custom_call.1} parent=11 // pred_fallthru
          _
        // Predicated region
        $region53: #{tpu_custom_call.1} parent=11 // pred_check
          %p407 = pneg %p284
        $region54: #{tpu_custom_call.1} parent=11 // pred_check_branch
          %409 = sbr.rel (%p407) target = $region56
        $region55: #{tpu_custom_call.1} parent=11 // pred_region
          _
        $region56: #{tpu_custom_call.1} parent=11 // pred_fallthru
          _
        // Predicated region
        $region57: #{tpu_custom_call.1} parent=11 // pred_check
          %p410 = pneg %p305
        $region58: #{tpu_custom_call.1} parent=11 // pred_check_branch
          %412 = sbr.rel (%p410) target = $region60
        $region59: #{tpu_custom_call.1} parent=11 // pred_region
          _
        $region60: #{tpu_custom_call.1} parent=11 // pred_fallthru
          _
        // Predicated region
        $region61: #{tpu_custom_call.1} parent=11 // pred_check
          %p413 = pneg %p326
        $region62: #{tpu_custom_call.1} parent=11 // pred_check_branch
          %415 = sbr.rel (%p413) target = $region64
        $region63: #{tpu_custom_call.1} parent=11 // pred_region
          _
        $region64: #{tpu_custom_call.1} parent=11 // pred_fallthru
          _
      $region12: #{tpu_custom_call.1} parent=5 // pred_fallthru
        _
      %p416 = scmp.lt.s32.totalorder %s27, 2
      // Predicated region
      $region65: #{tpu_custom_call.1} parent=5 // pred_check
        %p417 = pneg %p416
      $region66: #{tpu_custom_call.1} parent=5 // pred_check_branch
        %419 = sbr.rel (%p417) target = $region68
      $region67: #{tpu_custom_call.1} parent=5 // pred_region
        // Predicated region
        $region69: #{tpu_custom_call.1} parent=67 // pred_check
          %p420 = pneg %p47
        $region70: #{tpu_custom_call.1} parent=67 // pred_check_branch
          %422 = sbr.rel (%p420) target = $region72
        $region71: #{tpu_custom_call.1} parent=67 // pred_region
          %s423 = sand.u32 %s37, 1
          %s424 = scalar_lea.sflag [#allocation4], %s423
          %s425 = sand.u32 %s37, 1
          %s426 = smul.addr %s425, 64
          %s427 = scalar_lea.vmem [#allocation3], %s426
          %s429 = ssub.s32 1024, 1024
          %430 = vsyncadd %s424, %s429
          %s431 = smul.addr %s27, 8
          %s432 = smul.addr %s431, 128
          %s433 = scalar_lea.hbm %s0, %s432
          %s434 = sshll.u32 %s427, 4
          %s435 = int_to_ptr.vmem [resolvable:$true] %s434
          %440 = dma.hbm_to_vmem [thread:$0]  %s433, 1024, %s435, %s424, 128, 128, 8
        $region72: #{tpu_custom_call.1} parent=67 // pred_fallthru
          _
      $region68: #{tpu_custom_call.1} parent=5 // pred_fallthru
        _
      %p441 = scmp.le.s32.totalorder 1, %s27
      %p442 = scmp.lt.s32.totalorder %s27, 3
      %p443 = pnand %p441, %p442
      %p444 = pneg %p443
      // Predicated region
      $region73: #{tpu_custom_call.1} parent=5 // pred_check
        _
      $region74: #{tpu_custom_call.1} parent=5 // pred_check_branch
        %446 = sbr.rel (%p443) target = $region76
      $region75: #{tpu_custom_call.1} parent=5 // pred_region
        %s447 = ssub.s32 %s27, 1
        %s448 = sand.u32 %s40, 1
        %s449 = scalar_lea.sflag [#allocation4], %s448
        %s450 = sand.u32 %s40, 1
        %s451 = smul.addr %s450, 64
        %s452 = scalar_lea.vmem [#allocation3], %s451
        // Predicated region
        $region77: #{tpu_custom_call.1} parent=75 // pred_check
          %p453 = pneg %p53
        $region78: #{tpu_custom_call.1} parent=75 // pred_check_branch
          %455 = sbr.rel (%p453) target = $region80
        $region79: #{tpu_custom_call.1} parent=75 // pred_region
          %456 = dma.done %s449, 1024
        $region80: #{tpu_custom_call.1} parent=75 // pred_fallthru
          _
        // Predicated region
        $region81: #{tpu_custom_call.1} parent=75 // pred_check
          %p457 = pneg %p74
        $region82: #{tpu_custom_call.1} parent=75 // pred_check_branch
          %459 = sbr.rel (%p457) target = $region84
        $region83: #{tpu_custom_call.1} parent=75 // pred_region
          %460 = dma.done [#allocation7], 2048
        $region84: #{tpu_custom_call.1} parent=75 // pred_fallthru
          _
        %s461 = sand.u32 %s40, 1
        %s462 = scalar_lea.sflag [#allocation4], %s461
        %s463 = sand.u32 %s40, 1
        %s464 = smul.addr %s463, 64
        %s465 = scalar_lea.vmem [#allocation3], %s464
        %p466 = pneg %p53
        %p467 = pneg %p50
        %p468 = pneg %p74
        %p469 = pneg %p71
        %p470 = pneg %p95
        %p471 = pneg %p92
        %p472 = pneg %p116
        %p473 = pneg %p113
        %p474 = pneg %p137
        %p475 = pneg %p134
        %p476 = pneg %p158
        %p477 = pneg %p155
        %p478 = pneg %p179
        %p479 = pneg %p176
        %p480 = pneg %p200
        %p481 = pneg %p197
        %p482 = pneg %p221
        %p483 = pneg %p218
        %p484 = pneg %p242
        %p485 = pneg %p239
        %p486 = pneg %p263
        %p487 = pneg %p260
        %p488 = pneg %p284
        %p489 = pneg %p281
        %p490 = pneg %p305
        %p491 = pneg %p302
        %p492 = pneg %p326
        %p493 = pneg %p323
        %p494 = pneg %p352
        %p495 = pneg %p349
        %s496 = sand.u32 %s339, 1
        %s497 = scalar_lea.sflag [#allocation5], %s496
        %s498 = sand.u32 %s339, 1
        %s499 = smul.addr %s498, 64
        %s500 = scalar_lea.vmem [#allocation8], %s499
        %v501 = vld [vmem:[%s452] sm:$0xff]
        %v502 = vld [vmem:[%s452 + $0x8] sm:$0xff]
        %v503 = vld [vmem:[%s452 + $0x10] sm:$0xff]
        %v504 = vld [vmem:[%s452 + $0x18] sm:$0xff]
        %v505 = vld [vmem:[%s452 + $0x20] sm:$0xff]
        %v506 = vld [vmem:[%s452 + $0x28] sm:$0xff]
        %v507 = vld [vmem:[%s452 + $0x30] sm:$0xff]
        %v508 = vld [vmem:[%s452 + $0x38] sm:$0xff]
        %v509 = vld [vmem:[#allocation6] sm:$0xff]
        %v510 = vld [vmem:[#allocation6 + $0x8] sm:$0xff]
        %v511 = vld [vmem:[#allocation6 + $0x10] sm:$0xff]
        %v512 = vld [vmem:[#allocation6 + $0x18] sm:$0xff]
        %v513 = vld [vmem:[#allocation6 + $0x20] sm:$0xff]
        %v514 = vld [vmem:[#allocation6 + $0x28] sm:$0xff]
        %v515 = vld [vmem:[#allocation6 + $0x30] sm:$0xff]
        %v516 = vld [vmem:[#allocation6 + $0x38] sm:$0xff]
        %v517 = vld [vmem:[#allocation6 + $0x40] sm:$0xff]
        %v518 = vld [vmem:[#allocation6 + $0x48] sm:$0xff]
        %v519 = vld [vmem:[#allocation6 + $0x50] sm:$0xff]
        %v520 = vld [vmem:[#allocation6 + $0x58] sm:$0xff]
        %v521 = vld [vmem:[#allocation6 + $0x60] sm:$0xff]
        %v522 = vld [vmem:[#allocation6 + $0x68] sm:$0xff]
        %v523 = vld [vmem:[#allocation6 + $0x70] sm:$0xff]
        %v524 = vld [vmem:[#allocation6 + $0x78] sm:$0xff]
        %v525 = vlaneseq
        %v526 = vshrl.u32 %v525, 7
        %v527 = vadd.s32 %v526, 8
        %v528 = vadd.s32 %v526, 16
        %v529 = vadd.s32 %v526, 24
        %v530 = vadd.s32 %v526, 32
        %v531 = vadd.s32 %v526, 40
        %v532 = vadd.s32 %v526, 48
        %v533 = vadd.s32 %v526, 56
        %vm534 = vcmp.lt.s32.totalorder %v526, 0
        %v535 = vsub.s32 0, %v526
        %v536 = vsel %vm534, %v535, %v526
        %v537 = vshrl.u32 %v536, 4
        %v538 = vand.u32 %v536, 15
        %v539 = vsub.s32 0, %v538
        %v540 = vsel %vm534, %v539, %v538
        %vm541 = vcmp.lt.s32.totalorder %v527, 0
        %v542 = vsub.s32 0, %v527
        %v543 = vsel %vm541, %v542, %v527
        %v544 = vshrl.u32 %v543, 4
        %v545 = vand.u32 %v543, 15
        %v546 = vsub.s32 0, %v545
        %v547 = vsel %vm541, %v546, %v545
        %vm548 = vcmp.lt.s32.totalorder %v528, 0
        %v549 = vsub.s32 0, %v528
        %v550 = vsel %vm548, %v549, %v528
        %v551 = vshrl.u32 %v550, 4
        %v552 = vand.u32 %v550, 15
        %v553 = vsub.s32 0, %v552
        %v554 = vsel %vm548, %v553, %v552
        %vm555 = vcmp.lt.s32.totalorder %v529, 0
        %v556 = vsub.s32 0, %v529
        %v557 = vsel %vm555, %v556, %v529
        %v558 = vshrl.u32 %v557, 4
        %v559 = vand.u32 %v557, 15
        %v560 = vsub.s32 0, %v559
        %v561 = vsel %vm555, %v560, %v559
        %vm562 = vcmp.lt.s32.totalorder %v530, 0
        %v563 = vsub.s32 0, %v530
        %v564 = vsel %vm562, %v563, %v530
        %v565 = vshrl.u32 %v564, 4
        %v566 = vand.u32 %v564, 15
        %v567 = vsub.s32 0, %v566
        %v568 = vsel %vm562, %v567, %v566
        %vm569 = vcmp.lt.s32.totalorder %v531, 0
        %v570 = vsub.s32 0, %v531
        %v571 = vsel %vm569, %v570, %v531
        %v572 = vshrl.u32 %v571, 4
        %v573 = vand.u32 %v571, 15
        %v574 = vsub.s32 0, %v573
        %v575 = vsel %vm569, %v574, %v573
        %vm576 = vcmp.lt.s32.totalorder %v532, 0
        %v577 = vsub.s32 0, %v532
        %v578 = vsel %vm576, %v577, %v532
        %v579 = vshrl.u32 %v578, 4
        %v580 = vand.u32 %v578, 15
        %v581 = vsub.s32 0, %v580
        %v582 = vsel %vm576, %v581, %v580
        %vm583 = vcmp.lt.s32.totalorder %v533, 0
        %v584 = vsub.s32 0, %v533
        %v585 = vsel %vm583, %v584, %v533
        %v586 = vshrl.u32 %v585, 4
        %v587 = vand.u32 %v585, 15
        %v588 = vsub.s32 0, %v587
        %v589 = vsel %vm583, %v588, %v587
        %vm590 = vcmp.ne.s32.totalorder %v540, 0
        %vm591 = vcmp.ne.s32.totalorder %v547, 0
        %vm592 = vcmp.ne.s32.totalorder %v554, 0
        %vm593 = vcmp.ne.s32.totalorder %v561, 0
        %vm594 = vcmp.ne.s32.totalorder %v568, 0
        %vm595 = vcmp.ne.s32.totalorder %v575, 0
        %vm596 = vcmp.ne.s32.totalorder %v582, 0
        %vm597 = vcmp.ne.s32.totalorder %v589, 0
        %vm598 = vcmp.lt.s32.totalorder %v540, 0
        %vm599 = vcmp.lt.s32.totalorder %v547, 0
        %vm600 = vcmp.lt.s32.totalorder %v554, 0
        %vm601 = vcmp.lt.s32.totalorder %v561, 0
        %vm602 = vcmp.lt.s32.totalorder %v568, 0
        %vm603 = vcmp.lt.s32.totalorder %v575, 0
        %vm604 = vcmp.lt.s32.totalorder %v582, 0
        %vm605 = vcmp.lt.s32.totalorder %v589, 0
        %vm606 = vmand %vm598, %vm590
        %vm607 = vmand %vm599, %vm591
        %vm608 = vmand %vm600, %vm592
        %vm609 = vmand %vm601, %vm593
        %vm610 = vmand %vm602, %vm594
        %vm611 = vmand %vm603, %vm595
        %vm612 = vmand %vm604, %vm596
        %vm613 = vmand %vm605, %vm597
        %v614 = vadd.s32 %v540, 16
        %v615 = vadd.s32 %v547, 16
        %v616 = vadd.s32 %v554, 16
        %v617 = vadd.s32 %v561, 16
        %v618 = vadd.s32 %v568, 16
        %v619 = vadd.s32 %v575, 16
        %v620 = vadd.s32 %v582, 16
        %v621 = vadd.s32 %v589, 16
        %v622 = vsel %vm606, %v614, %v540
        %v623 = vsel %vm607, %v615, %v547
        %v624 = vsel %vm608, %v616, %v554
        %v625 = vsel %vm609, %v617, %v561
        %v626 = vsel %vm610, %v618, %v568
        %v627 = vsel %vm611, %v619, %v575
        %v628 = vsel %vm612, %v620, %v582
        %v629 = vsel %vm613, %v621, %v589
        %v630 = vadd.s32 %v622, 4294967295
        %v631 = vadd.s32 %v623, 4294967295
        %v632 = vadd.s32 %v624, 4294967295
        %v633 = vadd.s32 %v625, 4294967295
        %v634 = vadd.s32 %v626, 4294967295
        %v635 = vadd.s32 %v627, 4294967295
        %v636 = vadd.s32 %v628, 4294967295
        %v637 = vadd.s32 %v629, 4294967295
        %vm638 = vcmp.ge.s32.totalorder %v630, 0
        %vm639 = vcmp.ge.s32.totalorder %v631, 0
        %vm640 = vcmp.ge.s32.totalorder %v632, 0
        %vm641 = vcmp.ge.s32.totalorder %v633, 0
        %vm642 = vcmp.ge.s32.totalorder %v634, 0
        %vm643 = vcmp.ge.s32.totalorder %v635, 0
        %vm644 = vcmp.ge.s32.totalorder %v636, 0
        %vm645 = vcmp.ge.s32.totalorder %v637, 0
        %vm646 = vcmp.lt.s32.totalorder %v630, 16
        %vm647 = vcmp.lt.s32.totalorder %v631, 16
        %vm648 = vcmp.lt.s32.totalorder %v632, 16
        %vm649 = vcmp.lt.s32.totalorder %v633, 16
        %vm650 = vcmp.lt.s32.totalorder %v634, 16
        %vm651 = vcmp.lt.s32.totalorder %v635, 16
        %vm652 = vcmp.lt.s32.totalorder %v636, 16
        %vm653 = vcmp.lt.s32.totalorder %v637, 16
        %vm654 = vmand %vm638, %vm646
        %vm655 = vmand %vm639, %vm647
        %vm656 = vmand %vm640, %vm648
        %vm657 = vmand %vm641, %vm649
        %vm658 = vmand %vm642, %vm650
        %vm659 = vmand %vm643, %vm651
        %vm660 = vmand %vm644, %vm652
        %vm661 = vmand %vm645, %vm653
        %v662 = vsel %vm654, 1, 0
        %v663 = vsel %vm655, 1, 0
        %v664 = vsel %vm656, 1, 0
        %v665 = vsel %vm657, 1, 0
        %v666 = vsel %vm658, 1, 0
        %v667 = vsel %vm659, 1, 0
        %v668 = vsel %vm660, 1, 0
        %v669 = vsel %vm661, 1, 0
        %v670 = vcvt.s32.f32 %v662
        %v671 = vcvt.s32.f32 %v663
        %v672 = vcvt.s32.f32 %v664
        %v673 = vcvt.s32.f32 %v665
        %v674 = vcvt.s32.f32 %v666
        %v675 = vcvt.s32.f32 %v667
        %v676 = vcvt.s32.f32 %v668
        %v677 = vcvt.s32.f32 %v669
        %v678 = vadd.s32 %v622, 1
        %v679 = vadd.s32 %v623, 1
        %v680 = vadd.s32 %v624, 1
        %v681 = vadd.s32 %v625, 1
        %v682 = vadd.s32 %v626, 1
        %v683 = vadd.s32 %v627, 1
        %v684 = vadd.s32 %v628, 1
        %v685 = vadd.s32 %v629, 1
        %vm686 = vcmp.ge.s32.totalorder %v678, 0
        %vm687 = vcmp.ge.s32.totalorder %v679, 0
        %vm688 = vcmp.ge.s32.totalorder %v680, 0
        %vm689 = vcmp.ge.s32.totalorder %v681, 0
        %vm690 = vcmp.ge.s32.totalorder %v682, 0
        %vm691 = vcmp.ge.s32.totalorder %v683, 0
        %vm692 = vcmp.ge.s32.totalorder %v684, 0
        %vm693 = vcmp.ge.s32.totalorder %v685, 0
        %vm694 = vcmp.lt.s32.totalorder %v678, 16
        %vm695 = vcmp.lt.s32.totalorder %v679, 16
        %vm696 = vcmp.lt.s32.totalorder %v680, 16
        %vm697 = vcmp.lt.s32.totalorder %v681, 16
        %vm698 = vcmp.lt.s32.totalorder %v682, 16
        %vm699 = vcmp.lt.s32.totalorder %v683, 16
        %vm700 = vcmp.lt.s32.totalorder %v684, 16
        %vm701 = vcmp.lt.s32.totalorder %v685, 16
        %vm702 = vmand %vm686, %vm694
        %vm703 = vmand %vm687, %vm695
        %vm704 = vmand %vm688, %vm696
        %vm705 = vmand %vm689, %vm697
        %vm706 = vmand %vm690, %vm698
        %vm707 = vmand %vm691, %vm699
        %vm708 = vmand %vm692, %vm700
        %vm709 = vmand %vm693, %vm701
        %v710 = vsel %vm702, 1, 0
        %v711 = vsel %vm703, 1, 0
        %v712 = vsel %vm704, 1, 0
        %v713 = vsel %vm705, 1, 0
        %v714 = vsel %vm706, 1, 0
        %v715 = vsel %vm707, 1, 0
        %v716 = vsel %vm708, 1, 0
        %v717 = vsel %vm709, 1, 0
        %v718 = vcvt.s32.f32 %v710
        %v719 = vcvt.s32.f32 %v711
        %v720 = vcvt.s32.f32 %v712
        %v721 = vcvt.s32.f32 %v713
        %v722 = vcvt.s32.f32 %v714
        %v723 = vcvt.s32.f32 %v715
        %v724 = vcvt.s32.f32 %v716
        %v725 = vcvt.s32.f32 %v717
        %v726 = vld [vmem:[%s2] sm:$0x1]
        %v727 = vld [vmem:[%s3] sm:$0xff]
        %v728 = vld [vmem:[%s3 + $0x8] sm:$0xff]
        %v729 = vld [vmem:[%s3 + $0x10] sm:$0xff]
        %v730 = vld [vmem:[%s3 + $0x18] sm:$0xff]
        %v731 = vld [vmem:[%s3 + $0x20] sm:$0xff]
        %v732 = vld [vmem:[%s3 + $0x28] sm:$0xff]
        %v733 = vld [vmem:[%s3 + $0x30] sm:$0xff]
        %v734 = vld [vmem:[%s3 + $0x38] sm:$0xff]
        %v735 = vld [vmem:[%s3 + $0x40] sm:$0xff]
        %v736 = vld [vmem:[%s3 + $0x48] sm:$0xff]
        %v737 = vld [vmem:[%s3 + $0x50] sm:$0xff]
        %v738 = vld [vmem:[%s3 + $0x58] sm:$0xff]
        %v739 = vld [vmem:[%s3 + $0x60] sm:$0xff]
        %v740 = vld [vmem:[%s3 + $0x68] sm:$0xff]
        %v741 = vld [vmem:[%s3 + $0x70] sm:$0xff]
        %v742 = vld [vmem:[%s3 + $0x78] sm:$0xff]
        %v743 = vld [vmem:[%s4] sm:$0x1]
        %v744 = vld [vmem:[%s5] sm:$0xff]
        %v745 = vld [vmem:[%s5 + $0x8] sm:$0xff]
        %v746 = vld [vmem:[%s5 + $0x10] sm:$0xff]
        %v747 = vld [vmem:[%s5 + $0x18] sm:$0xff]
        %v748 = vld [vmem:[%s5 + $0x20] sm:$0xff]
        %v749 = vld [vmem:[%s5 + $0x28] sm:$0xff]
        %v750 = vld [vmem:[%s5 + $0x30] sm:$0xff]
        %v751 = vld [vmem:[%s5 + $0x38] sm:$0xff]
        %v752 = vld [vmem:[%s5 + $0x40] sm:$0xff]
        %v753 = vld [vmem:[%s5 + $0x48] sm:$0xff]
        %v754 = vld [vmem:[%s5 + $0x50] sm:$0xff]
        %v755 = vld [vmem:[%s5 + $0x58] sm:$0xff]
        %v756 = vld [vmem:[%s5 + $0x60] sm:$0xff]
        %v757 = vld [vmem:[%s5 + $0x68] sm:$0xff]
        %v758 = vld [vmem:[%s5 + $0x70] sm:$0xff]
        %v759 = vld [vmem:[%s5 + $0x78] sm:$0xff]
        %v760 = vld [vmem:[%s6] sm:$0xff]
        %v761 = vld [vmem:[%s6 + $0x8] sm:$0xff]
        %v762 = vld [vmem:[%s6 + $0x10] sm:$0xff]
        %v763 = vld [vmem:[%s6 + $0x18] sm:$0xff]
        %v764 = vld [vmem:[%s6 + $0x20] sm:$0xff]
        %v765 = vld [vmem:[%s6 + $0x28] sm:$0xff]
        %v766 = vld [vmem:[%s6 + $0x30] sm:$0xff]
        %v767 = vld [vmem:[%s6 + $0x38] sm:$0xff]
        %v768 = vld [vmem:[%s6 + $0x40] sm:$0xff]
        %v769 = vld [vmem:[%s6 + $0x48] sm:$0xff]
        %v770 = vld [vmem:[%s6 + $0x50] sm:$0xff]
        %v771 = vld [vmem:[%s6 + $0x58] sm:$0xff]
        %v772 = vld [vmem:[%s6 + $0x60] sm:$0xff]
        %v773 = vld [vmem:[%s6 + $0x68] sm:$0xff]
        %v774 = vld [vmem:[%s6 + $0x70] sm:$0xff]
        %v775 = vld [vmem:[%s6 + $0x78] sm:$0xff]
        %v776 = vld [vmem:[%s7] sm:$0x1]
        %777 = vmatprep.subr.mxu0 0.0
        %778 = vmatpush1.msra.mxu0 %v509
        %779 = vmatprep.subr.mxu0 0.0
        %780 = vmatpush1.msra.mxu0 %v510
        %781 = vmatprep.subr.mxu0 0.0
        %782 = vmatpush1.msra.mxu0 %v511
        %783 = vmatprep.subr.mxu0 0.0
        %784 = vmatpush1.msra.mxu0 %v512
        %785 = vmatprep.subr.mxu0 0.0
        %786 = vmatpush1.msra.mxu0 %v513
        %787 = vmatprep.subr.mxu0 0.0
        %788 = vmatpush1.msra.mxu0 %v514
        %789 = vmatprep.subr.mxu0 0.0
        %790 = vmatpush1.msra.mxu0 %v515
        %791 = vmatprep.subr.mxu0 0.0
        %792 = vmatpush1.msra.mxu0 %v516
        %793 = vmatprep.subr.mxu0 0.0
        %794 = vmatpush1.msra.mxu0 %v517
        %795 = vmatprep.subr.mxu0 0.0
        %796 = vmatpush1.msra.mxu0 %v518
        %797 = vmatprep.subr.mxu0 0.0
        %798 = vmatpush1.msra.mxu0 %v519
        %799 = vmatprep.subr.mxu0 0.0
        %800 = vmatpush1.msra.mxu0 %v520
        %801 = vmatprep.subr.mxu0 0.0
        %802 = vmatpush1.msra.mxu0 %v521
        %803 = vmatprep.subr.mxu0 0.0
        %804 = vmatpush1.msra.mxu0 %v522
        %805 = vmatprep.subr.mxu0 0.0
        %806 = vmatpush1.msra.mxu0 %v523
        %807 = vmatprep.subr.mxu0 0.0
        %808 = vmatpush1.msra.mxu0 %v524
        %809 = vmatprep.subr.mxu0 0.0
        %810 = vmatpush1.msra.mxu0 0.0
        %811 = vmatprep.subr.mxu0 0.0
        %812 = vmatpush1.msra.mxu0 0.0
        %813 = vmatprep.subr.mxu0 0.0
        %814 = vmatpush1.msra.mxu0 0.0
        %815 = vmatprep.subr.mxu0 0.0
        %816 = vmatpush1.msra.mxu0 0.0
        %817 = vmatprep.subr.mxu0 0.0
        %818 = vmatpush1.msra.mxu0 0.0
        %819 = vmatprep.subr.mxu0 0.0
        %820 = vmatpush1.msra.mxu0 0.0
        %821 = vmatprep.subr.mxu0 0.0
        %822 = vmatpush1.msra.mxu0 0.0
        %823 = vmatprep.subr.mxu0 0.0
        %824 = vmatpush1.msra.mxu0 0.0
        %825 = vmatprep.subr.mxu0 0.0
        %826 = vmatpush1.msra.mxu0 0.0
        %827 = vmatprep.subr.mxu0 0.0
        %828 = vmatpush1.msra.mxu0 0.0
        %829 = vmatprep.subr.mxu0 0.0
        %830 = vmatpush1.msra.mxu0 0.0
        %831 = vmatprep.subr.mxu0 0.0
        %832 = vmatpush1.msra.mxu0 0.0
        %833 = vmatprep.subr.mxu0 0.0
        %834 = vmatpush1.msra.mxu0 0.0
        %835 = vmatprep.subr.mxu0 0.0
        %836 = vmatpush1.msra.mxu0 0.0
        %837 = vmatprep.subr.mxu0 0.0
        %838 = vmatpush1.msra.mxu0 0.0
        %839 = vmatprep.subr.mxu0 0.0
        %840 = vmatpush1.msra.mxu0 0.0
        %841 = vmatprep.mubr.f32.mxu0 0.0
        %842 = vmatmul.mubr.f32.gmra.mrb[0].mxu0 %v501
        %v843 = vpop.f32.mrb[0].mxu0
        %v844 = vadd.f32 0.0, %v843
        %v845 = vpop.f32.mrb[0].mxu0
        %846 = vmatprep.mubr.f32.mxu0 0.0
        %847 = vmatmul.mubr.f32.gmra.mrb[0].mxu0 %v502
        %v848 = vpop.f32.mrb[0].mxu0
        %v849 = vadd.f32 0.0, %v848
        %v850 = vpop.f32.mrb[0].mxu0
        %851 = vmatprep.mubr.f32.mxu0 0.0
        %852 = vmatmul.mubr.f32.gmra.mrb[0].mxu0 %v503
        %v853 = vpop.f32.mrb[0].mxu0
        %v854 = vadd.f32 0.0, %v853
        %v855 = vpop.f32.mrb[0].mxu0
        %856 = vmatprep.mubr.f32.mxu0 0.0
        %857 = vmatmul.mubr.f32.gmra.mrb[0].mxu0 %v504
        %v858 = vpop.f32.mrb[0].mxu0
        %v859 = vadd.f32 0.0, %v858
        %v860 = vpop.f32.mrb[0].mxu0
        %861 = vmatprep.mubr.f32.mxu0 0.0
        %862 = vmatmul.mubr.f32.gmra.mrb[0].mxu0 %v505
        %v863 = vpop.f32.mrb[0].mxu0
        %v864 = vadd.f32 0.0, %v863
        %v865 = vpop.f32.mrb[0].mxu0
        %866 = vmatprep.mubr.f32.mxu0 0.0
        %867 = vmatmul.mubr.f32.gmra.mrb[0].mxu0 %v506
        %v868 = vpop.f32.mrb[0].mxu0
        %v869 = vadd.f32 0.0, %v868
        %v870 = vpop.f32.mrb[0].mxu0
        %871 = vmatprep.mubr.f32.mxu0 0.0
        %872 = vmatmul.mubr.f32.gmra.mrb[0].mxu0 %v507
        %v873 = vpop.f32.mrb[0].mxu0
        %v874 = vadd.f32 0.0, %v873
        %v875 = vpop.f32.mrb[0].mxu0
        %876 = vmatprep.mubr.f32.mxu0 0.0
        %877 = vmatmul.mubr.f32.gmra.mrb[0].mxu0 %v508
        %v878 = vpop.f32.mrb[0].mxu0
        %v879 = vadd.f32 0.0, %v878
        %v880 = vpop.f32.mrb[0].mxu0
        %881 = vdwg.mxu0
        %v882 = vmul.f32 %v501, %v501
        %v883 = vmul.f32 %v502, %v502
        %v884 = vmul.f32 %v503, %v503
        %v885 = vmul.f32 %v504, %v504
        %v886 = vmul.f32 %v505, %v505
        %v887 = vmul.f32 %v506, %v506
        %v888 = vmul.f32 %v507, %v507
        %v889 = vmul.f32 %v508, %v508
        %890 = vmatprep.subr.mxu0 0.0
        %891 = vmatpush1.msra.mxu0 %v509
        %892 = vmatprep.subr.mxu0 0.0
        %893 = vmatpush1.msra.mxu0 %v510
        %894 = vmatprep.subr.mxu0 0.0
        %895 = vmatpush1.msra.mxu0 %v511
        %896 = vmatprep.subr.mxu0 0.0
        %897 = vmatpush1.msra.mxu0 %v512
        %898 = vmatprep.subr.mxu0 0.0
        %899 = vmatpush1.msra.mxu0 %v513
        %900 = vmatprep.subr.mxu0 0.0
        %901 = vmatpush1.msra.mxu0 %v514
        %902 = vmatprep.subr.mxu0 0.0
        %903 = vmatpush1.msra.mxu0 %v515
        %904 = vmatprep.subr.mxu0 0.0
        %905 = vmatpush1.msra.mxu0 %v516
        %906 = vmatprep.subr.mxu0 0.0
        %907 = vmatpush1.msra.mxu0 %v517
        %908 = vmatprep.subr.mxu0 0.0
        %909 = vmatpush1.msra.mxu0 %v518
        %910 = vmatprep.subr.mxu0 0.0
        %911 = vmatpush1.msra.mxu0 %v519
        %912 = vmatprep.subr.mxu0 0.0
        %913 = vmatpush1.msra.mxu0 %v520
        %914 = vmatprep.subr.mxu0 0.0
        %915 = vmatpush1.msra.mxu0 %v521
        %916 = vmatprep.subr.mxu0 0.0
        %917 = vmatpush1.msra.mxu0 %v522
        %918 = vmatprep.subr.mxu0 0.0
        %919 = vmatpush1.msra.mxu0 %v523
        %920 = vmatprep.subr.mxu0 0.0
        %921 = vmatpush1.msra.mxu0 %v524
        %922 = vmatprep.subr.mxu0 0.0
        %923 = vmatpush1.msra.mxu0 0.0
        %924 = vmatprep.subr.mxu0 0.0
        %925 = vmatpush1.msra.mxu0 0.0
        %926 = vmatprep.subr.mxu0 0.0
        %927 = vmatpush1.msra.mxu0 0.0
        %928 = vmatprep.subr.mxu0 0.0
        %929 = vmatpush1.msra.mxu0 0.0
        %930 = vmatprep.subr.mxu0 0.0
        %931 = vmatpush1.msra.mxu0 0.0
        %932 = vmatprep.subr.mxu0 0.0
        %933 = vmatpush1.msra.mxu0 0.0
        %934 = vmatprep.subr.mxu0 0.0
        %935 = vmatpush1.msra.mxu0 0.0
        %936 = vmatprep.subr.mxu0 0.0
        %937 = vmatpush1.msra.mxu0 0.0
        %938 = vmatprep.subr.mxu0 0.0
        %939 = vmatpush1.msra.mxu0 0.0
        %940 = vmatprep.subr.mxu0 0.0
        %941 = vmatpush1.msra.mxu0 0.0
        %942 = vmatprep.subr.mxu0 0.0
        %943 = vmatpush1.msra.mxu0 0.0
        %944 = vmatprep.subr.mxu0 0.0
        %945 = vmatpush1.msra.mxu0 0.0
        %946 = vmatprep.subr.mxu0 0.0
        %947 = vmatpush1.msra.mxu0 0.0
        %948 = vmatprep.subr.mxu0 0.0
        %949 = vmatpush1.msra.mxu0 0.0
        %950 = vmatprep.subr.mxu0 0.0
        %951 = vmatpush1.msra.mxu0 0.0
        %952 = vmatprep.subr.mxu0 0.0
        %953 = vmatpush1.msra.mxu0 0.0
        %954 = vmatprep.mubr.f32.mxu0 0.0
        %955 = vmatmul.mubr.f32.gmra.mrb[0].mxu0 %v882
        %v956 = vpop.f32.mrb[0].mxu0
        %v957 = vadd.f32 0.0, %v956
        %v958 = vpop.f32.mrb[0].mxu0
        %959 = vmatprep.mubr.f32.mxu0 0.0
        %960 = vmatmul.mubr.f32.gmra.mrb[0].mxu0 %v883
        %v961 = vpop.f32.mrb[0].mxu0
        %v962 = vadd.f32 0.0, %v961
        %v963 = vpop.f32.mrb[0].mxu0
        %964 = vmatprep.mubr.f32.mxu0 0.0
        %965 = vmatmul.mubr.f32.gmra.mrb[0].mxu0 %v884
        %v966 = vpop.f32.mrb[0].mxu0
        %v967 = vadd.f32 0.0, %v966
        %v968 = vpop.f32.mrb[0].mxu0
        %969 = vmatprep.mubr.f32.mxu0 0.0
        %970 = vmatmul.mubr.f32.gmra.mrb[0].mxu0 %v885
        %v971 = vpop.f32.mrb[0].mxu0
        %v972 = vadd.f32 0.0, %v971
        %v973 = vpop.f32.mrb[0].mxu0
        %974 = vmatprep.mubr.f32.mxu0 0.0
        %975 = vmatmul.mubr.f32.gmra.mrb[0].mxu0 %v886
        %v976 = vpop.f32.mrb[0].mxu0
        %v977 = vadd.f32 0.0, %v976
        %v978 = vpop.f32.mrb[0].mxu0
        %979 = vmatprep.mubr.f32.mxu0 0.0
        %980 = vmatmul.mubr.f32.gmra.mrb[0].mxu0 %v887
        %v981 = vpop.f32.mrb[0].mxu0
        %v982 = vadd.f32 0.0, %v981
        %v983 = vpop.f32.mrb[0].mxu0
        %984 = vmatprep.mubr.f32.mxu0 0.0
        %985 = vmatmul.mubr.f32.gmra.mrb[0].mxu0 %v888
        %v986 = vpop.f32.mrb[0].mxu0
        %v987 = vadd.f32 0.0, %v986
        %v988 = vpop.f32.mrb[0].mxu0
        %989 = vmatprep.mubr.f32.mxu0 0.0
        %990 = vmatmul.mubr.f32.gmra.mrb[0].mxu0 %v889
        %v991 = vpop.f32.mrb[0].mxu0
        %v992 = vadd.f32 0.0, %v991
        %v993 = vpop.f32.mrb[0].mxu0
        %994 = vdwg.mxu0
        %v995 = vmul.f32 %v844, %v844
        %v996 = vmul.f32 %v849, %v849
        %v997 = vmul.f32 %v854, %v854
        %v998 = vmul.f32 %v859, %v859
        %v999 = vmul.f32 %v864, %v864
        %v1000 = vmul.f32 %v869, %v869
        %v1001 = vmul.f32 %v874, %v874
        %v1002 = vmul.f32 %v879, %v879
        %v1003 = vsub.f32 %v957, %v995
        %v1004 = vsub.f32 %v962, %v996
        %v1005 = vsub.f32 %v967, %v997
        %v1006 = vsub.f32 %v972, %v998
        %v1007 = vsub.f32 %v977, %v999
        %v1008 = vsub.f32 %v982, %v1000
        %v1009 = vsub.f32 %v987, %v1001
        %v1010 = vsub.f32 %v992, %v1002
        %v1011 = vsub.f32 %v501, %v844
        %v1012 = vsub.f32 %v502, %v849
        %v1013 = vsub.f32 %v503, %v854
        %v1014 = vsub.f32 %v504, %v859
        %v1015 = vsub.f32 %v505, %v864
        %v1016 = vsub.f32 %v506, %v869
        %v1017 = vsub.f32 %v507, %v874
        %v1018 = vsub.f32 %v508, %v879
        %v1019 = vadd.f32 %v1003, 1e-05
        %v1020 = vadd.f32 %v1004, 1e-05
        %v1021 = vadd.f32 %v1005, 1e-05
        %v1022 = vadd.f32 %v1006, 1e-05
        %v1023 = vadd.f32 %v1007, 1e-05
        %v1024 = vadd.f32 %v1008, 1e-05
        %v1025 = vadd.f32 %v1009, 1e-05
        %v1026 = vadd.f32 %v1010, 1e-05
        %v1027 = vrsqrt.pop %v1019
        %v1028 = vrsqrt.pop %v1020
        %v1029 = vrsqrt.pop %v1021
        %v1030 = vrsqrt.pop %v1022
        %v1031 = vrsqrt.pop %v1023
        %v1032 = vrsqrt.pop %v1024
        %v1033 = vrsqrt.pop %v1025
        %v1034 = vrsqrt.pop %v1026
        %v1035 = vmul.f32 %v1011, %v1027
        %v1036 = vmul.f32 %v1012, %v1028
        %v1037 = vmul.f32 %v1013, %v1029
        %v1038 = vmul.f32 %v1014, %v1030
        %v1039 = vmul.f32 %v1015, %v1031
        %v1040 = vmul.f32 %v1016, %v1032
        %v1041 = vmul.f32 %v1017, %v1033
        %v1042 = vmul.f32 %v1018, %v1034
        %v1044 = vlaneseq
        %v1045 = vshrl.u32 %v1044, 7
        %v1046 = vsub.s32 0, %v1045
        %v1047 = vrot.slane %v726, %v1046
        %v1049 = vmul.f32 %v1035, %v1047
        %v1050 = vmul.f32 %v1036, %v1047
        %v1051 = vmul.f32 %v1037, %v1047
        %v1052 = vmul.f32 %v1038, %v1047
        %v1053 = vmul.f32 %v1039, %v1047
        %v1054 = vmul.f32 %v1040, %v1047
        %v1055 = vmul.f32 %v1041, %v1047
        %v1056 = vmul.f32 %v1042, %v1047
        %v1058 = vlaneseq
        %v1059 = vshrl.u32 %v1058, 7
        %v1060 = vsub.s32 0, %v1059
        %v1061 = vrot.slane %v743, %v1060
        %1063 = vmatprep.subr.mxu0 0.0
        %1064 = vmatpush1.msra.mxu0 %v727
        %1065 = vmatprep.subr.mxu0 0.0
        %1066 = vmatpush1.msra.mxu0 %v728
        %1067 = vmatprep.subr.mxu0 0.0
        %1068 = vmatpush1.msra.mxu0 %v729
        %1069 = vmatprep.subr.mxu0 0.0
        %1070 = vmatpush1.msra.mxu0 %v730
        %1071 = vmatprep.subr.mxu0 0.0
        %1072 = vmatpush1.msra.mxu0 %v731
        %1073 = vmatprep.subr.mxu0 0.0
        %1074 = vmatpush1.msra.mxu0 %v732
        %1075 = vmatprep.subr.mxu0 0.0
        %1076 = vmatpush1.msra.mxu0 %v733
        %1077 = vmatprep.subr.mxu0 0.0
        %1078 = vmatpush1.msra.mxu0 %v734
        %1079 = vmatprep.subr.mxu0 0.0
        %1080 = vmatpush1.msra.mxu0 %v735
        %1081 = vmatprep.subr.mxu0 0.0
        %1082 = vmatpush1.msra.mxu0 %v736
        %1083 = vmatprep.subr.mxu0 0.0
        %1084 = vmatpush1.msra.mxu0 %v737
        %1085 = vmatprep.subr.mxu0 0.0
        %1086 = vmatpush1.msra.mxu0 %v738
        %1087 = vmatprep.subr.mxu0 0.0
        %1088 = vmatpush1.msra.mxu0 %v739
        %1089 = vmatprep.subr.mxu0 0.0
        %1090 = vmatpush1.msra.mxu0 %v740
        %1091 = vmatprep.subr.mxu0 0.0
        %1092 = vmatpush1.msra.mxu0 %v741
        %1093 = vmatprep.subr.mxu0 0.0
        %1094 = vmatpush1.msra.mxu0 %v742
        %1095 = vmatprep.subr.mxu0 0.0
        %1096 = vmatpush1.msra.mxu0 0.0
        %1097 = vmatprep.subr.mxu0 0.0
        %1098 = vmatpush1.msra.mxu0 0.0
        %1099 = vmatprep.subr.mxu0 0.0
        %1100 = vmatpush1.msra.mxu0 0.0
        %1101 = vmatprep.subr.mxu0 0.0
        %1102 = vmatpush1.msra.mxu0 0.0
        %1103 = vmatprep.subr.mxu0 0.0
        %1104 = vmatpush1.msra.mxu0 0.0
        %1105 = vmatprep.subr.mxu0 0.0
        %1106 = vmatpush1.msra.mxu0 0.0
        %1107 = vmatprep.subr.mxu0 0.0
        %1108 = vmatpush1.msra.mxu0 0.0
        %1109 = vmatprep.subr.mxu0 0.0
        %1110 = vmatpush1.msra.mxu0 0.0
        %1111 = vmatprep.subr.mxu0 0.0
        %1112 = vmatpush1.msra.mxu0 0.0
        %1113 = vmatprep.subr.mxu0 0.0
        %1114 = vmatpush1.msra.mxu0 0.0
        %1115 = vmatprep.subr.mxu0 0.0
        %1116 = vmatpush1.msra.mxu0 0.0
        %1117 = vmatprep.subr.mxu0 0.0
        %1118 = vmatpush1.msra.mxu0 0.0
        %1119 = vmatprep.subr.mxu0 0.0
        %1120 = vmatpush1.msra.mxu0 0.0
        %1121 = vmatprep.subr.mxu0 0.0
        %1122 = vmatpush1.msra.mxu0 0.0
        %1123 = vmatprep.subr.mxu0 0.0
        %1124 = vmatpush1.msra.mxu0 0.0
        %1125 = vmatprep.subr.mxu0 0.0
        %1126 = vmatpush1.msra.mxu0 0.0
        %1127 = vmatprep.mubr.f32.mxu0 0.0
        %1128 = vmatmul.mubr.f32.gmra.mrb[0].mxu0 %v1049
        %v1129 = vpop.f32.mrb[0].mxu0
        %v1130 = vadd.f32 %v1061, %v1129
        %v1131 = vpop.f32.mrb[0].mxu0
        %1132 = vmatprep.mubr.f32.mxu0 0.0
        %1133 = vmatmul.mubr.f32.gmra.mrb[0].mxu0 %v1050
        %v1134 = vpop.f32.mrb[0].mxu0
        %v1135 = vadd.f32 %v1061, %v1134
        %v1136 = vpop.f32.mrb[0].mxu0
        %1137 = vmatprep.mubr.f32.mxu0 0.0
        %1138 = vmatmul.mubr.f32.gmra.mrb[0].mxu0 %v1051
        %v1139 = vpop.f32.mrb[0].mxu0
        %v1140 = vadd.f32 %v1061, %v1139
        %v1141 = vpop.f32.mrb[0].mxu0
        %1142 = vmatprep.mubr.f32.mxu0 0.0
        %1143 = vmatmul.mubr.f32.gmra.mrb[0].mxu0 %v1052
        %v1144 = vpop.f32.mrb[0].mxu0
        %v1145 = vadd.f32 %v1061, %v1144
        %v1146 = vpop.f32.mrb[0].mxu0
        %1147 = vmatprep.mubr.f32.mxu0 0.0
        %1148 = vmatmul.mubr.f32.gmra.mrb[0].mxu0 %v1053
        %v1149 = vpop.f32.mrb[0].mxu0
        %v1150 = vadd.f32 %v1061, %v1149
        %v1151 = vpop.f32.mrb[0].mxu0
        %1152 = vmatprep.mubr.f32.mxu0 0.0
        %1153 = vmatmul.mubr.f32.gmra.mrb[0].mxu0 %v1054
        %v1154 = vpop.f32.mrb[0].mxu0
        %v1155 = vadd.f32 %v1061, %v1154
        %v1156 = vpop.f32.mrb[0].mxu0
        %1157 = vmatprep.mubr.f32.mxu0 0.0
        %1158 = vmatmul.mubr.f32.gmra.mrb[0].mxu0 %v1055
        %v1159 = vpop.f32.mrb[0].mxu0
        %v1160 = vadd.f32 %v1061, %v1159
        %v1161 = vpop.f32.mrb[0].mxu0
        %1162 = vmatprep.mubr.f32.mxu0 0.0
        %1163 = vmatmul.mubr.f32.gmra.mrb[0].mxu0 %v1056
        %v1164 = vpop.f32.mrb[0].mxu0
        %v1165 = vadd.f32 %v1061, %v1164
        %v1166 = vpop.f32.mrb[0].mxu0
        %1167 = vdwg.mxu0
        %v1168 = vxor.u32 %v1130, 2147483648
        %v1169 = vxor.u32 %v1135, 2147483648
        %v1170 = vxor.u32 %v1140, 2147483648
        %v1171 = vxor.u32 %v1145, 2147483648
        %v1172 = vxor.u32 %v1150, 2147483648
        %v1173 = vxor.u32 %v1155, 2147483648
        %v1174 = vxor.u32 %v1160, 2147483648
        %v1175 = vxor.u32 %v1165, 2147483648
        %v1176 = vmul.f32 %v1168, 1.442695
        %v1177 = vpow.pop %v1176
        %v1178 = vmul.f32 %v1169, 1.442695
        %v1179 = vpow.pop %v1178
        %v1180 = vmul.f32 %v1170, 1.442695
        %v1181 = vpow.pop %v1180
        %v1182 = vmul.f32 %v1171, 1.442695
        %v1183 = vpow.pop %v1182
        %v1184 = vmul.f32 %v1172, 1.442695
        %v1185 = vpow.pop %v1184
        %v1186 = vmul.f32 %v1173, 1.442695
        %v1187 = vpow.pop %v1186
        %v1188 = vmul.f32 %v1174, 1.442695
        %v1189 = vpow.pop %v1188
        %v1190 = vmul.f32 %v1175, 1.442695
        %v1191 = vpow.pop %v1190
        %v1192 = vadd.f32 %v1177, 1.0
        %v1193 = vadd.f32 %v1179, 1.0
        %v1194 = vadd.f32 %v1181, 1.0
        %v1195 = vadd.f32 %v1183, 1.0
        %v1196 = vadd.f32 %v1185, 1.0
        %v1197 = vadd.f32 %v1187, 1.0
        %v1198 = vadd.f32 %v1189, 1.0
        %v1199 = vadd.f32 %v1191, 1.0
        %v1200 = vrcp.pop %v1192
        %v1201 = vmul.f32 1.0, %v1200
        %v1202 = vrcp.pop %v1193
        %v1203 = vmul.f32 1.0, %v1202
        %v1204 = vrcp.pop %v1194
        %v1205 = vmul.f32 1.0, %v1204
        %v1206 = vrcp.pop %v1195
        %v1207 = vmul.f32 1.0, %v1206
        %v1208 = vrcp.pop %v1196
        %v1209 = vmul.f32 1.0, %v1208
        %v1210 = vrcp.pop %v1197
        %v1211 = vmul.f32 1.0, %v1210
        %v1212 = vrcp.pop %v1198
        %v1213 = vmul.f32 1.0, %v1212
        %v1214 = vrcp.pop %v1199
        %v1215 = vmul.f32 1.0, %v1214
        %v1216 = vmul.f32 %v1130, %v1201
        %v1217 = vmul.f32 %v1135, %v1203
        %v1218 = vmul.f32 %v1140, %v1205
        %v1219 = vmul.f32 %v1145, %v1207
        %v1220 = vmul.f32 %v1150, %v1209
        %v1221 = vmul.f32 %v1155, %v1211
        %v1222 = vmul.f32 %v1160, %v1213
        %v1223 = vmul.f32 %v1165, %v1215
        %1224 = vmatprep.subr.mxu0 0.0
        %1225 = vmatpush1.msra.mxu0 %v760
        %1226 = vmatprep.subr.mxu0 0.0
        %1227 = vmatpush1.msra.mxu0 %v761
        %1228 = vmatprep.subr.mxu0 0.0
        %1229 = vmatpush1.msra.mxu0 %v762
        %1230 = vmatprep.subr.mxu0 0.0
        %1231 = vmatpush1.msra.mxu0 %v763
        %1232 = vmatprep.subr.mxu0 0.0
        %1233 = vmatpush1.msra.mxu0 %v764
        %1234 = vmatprep.subr.mxu0 0.0
        %1235 = vmatpush1.msra.mxu0 %v765
        %1236 = vmatprep.subr.mxu0 0.0
        %1237 = vmatpush1.msra.mxu0 %v766
        %1238 = vmatprep.subr.mxu0 0.0
        %1239 = vmatpush1.msra.mxu0 %v767
        %1240 = vmatprep.subr.mxu0 0.0
        %1241 = vmatpush1.msra.mxu0 %v768
        %1242 = vmatprep.subr.mxu0 0.0
        %1243 = vmatpush1.msra.mxu0 %v769
        %1244 = vmatprep.subr.mxu0 0.0
        %1245 = vmatpush1.msra.mxu0 %v770
        %1246 = vmatprep.subr.mxu0 0.0
        %1247 = vmatpush1.msra.mxu0 %v771
        %1248 = vmatprep.subr.mxu0 0.0
        %1249 = vmatpush1.msra.mxu0 %v772
        %1250 = vmatprep.subr.mxu0 0.0
        %1251 = vmatpush1.msra.mxu0 %v773
        %1252 = vmatprep.subr.mxu0 0.0
        %1253 = vmatpush1.msra.mxu0 %v774
        %1254 = vmatprep.subr.mxu0 0.0
        %1255 = vmatpush1.msra.mxu0 %v775
        %1256 = vmatprep.subr.mxu0 0.0
        %1257 = vmatpush1.msra.mxu0 0.0
        %1258 = vmatprep.subr.mxu0 0.0
        %1259 = vmatpush1.msra.mxu0 0.0
        %1260 = vmatprep.subr.mxu0 0.0
        %1261 = vmatpush1.msra.mxu0 0.0
        %1262 = vmatprep.subr.mxu0 0.0
        %1263 = vmatpush1.msra.mxu0 0.0
        %1264 = vmatprep.subr.mxu0 0.0
        %1265 = vmatpush1.msra.mxu0 0.0
        %1266 = vmatprep.subr.mxu0 0.0
        %1267 = vmatpush1.msra.mxu0 0.0
        %1268 = vmatprep.subr.mxu0 0.0
        %1269 = vmatpush1.msra.mxu0 0.0
        %1270 = vmatprep.subr.mxu0 0.0
        %1271 = vmatpush1.msra.mxu0 0.0
        %1272 = vmatprep.subr.mxu0 0.0
        %1273 = vmatpush1.msra.mxu0 0.0
        %1274 = vmatprep.subr.mxu0 0.0
        %1275 = vmatpush1.msra.mxu0 0.0
        %1276 = vmatprep.subr.mxu0 0.0
        %1277 = vmatpush1.msra.mxu0 0.0
        %1278 = vmatprep.subr.mxu0 0.0
        %1279 = vmatpush1.msra.mxu0 0.0
        %1280 = vmatprep.subr.mxu0 0.0
        %1281 = vmatpush1.msra.mxu0 0.0
        %1282 = vmatprep.subr.mxu0 0.0
        %1283 = vmatpush1.msra.mxu0 0.0
        %1284 = vmatprep.subr.mxu0 0.0
        %1285 = vmatpush1.msra.mxu0 0.0
        %1286 = vmatprep.subr.mxu0 0.0
        %1287 = vmatpush1.msra.mxu0 0.0
        %1288 = vmatprep.mubr.f32.mxu0 0.0
        %1289 = vmatmul.mubr.f32.gmra.mrb[0].mxu0 %v1049
        %v1290 = vpop.f32.mrb[0].mxu0
        %v1291 = vadd.f32 0.0, %v1290
        %v1292 = vpop.f32.mrb[0].mxu0
        %1293 = vmatprep.mubr.f32.mxu0 0.0
        %1294 = vmatmul.mubr.f32.gmra.mrb[0].mxu0 %v1050
        %v1295 = vpop.f32.mrb[0].mxu0
        %v1296 = vadd.f32 0.0, %v1295
        %v1297 = vpop.f32.mrb[0].mxu0
        %1298 = vmatprep.mubr.f32.mxu0 0.0
        %1299 = vmatmul.mubr.f32.gmra.mrb[0].mxu0 %v1051
        %v1300 = vpop.f32.mrb[0].mxu0
        %v1301 = vadd.f32 0.0, %v1300
        %v1302 = vpop.f32.mrb[0].mxu0
        %1303 = vmatprep.mubr.f32.mxu0 0.0
        %1304 = vmatmul.mubr.f32.gmra.mrb[0].mxu0 %v1052
        %v1305 = vpop.f32.mrb[0].mxu0
        %v1306 = vadd.f32 0.0, %v1305
        %v1307 = vpop.f32.mrb[0].mxu0
        %1308 = vmatprep.mubr.f32.mxu0 0.0
        %1309 = vmatmul.mubr.f32.gmra.mrb[0].mxu0 %v1053
        %v1310 = vpop.f32.mrb[0].mxu0
        %v1311 = vadd.f32 0.0, %v1310
        %v1312 = vpop.f32.mrb[0].mxu0
        %1313 = vmatprep.mubr.f32.mxu0 0.0
        %1314 = vmatmul.mubr.f32.gmra.mrb[0].mxu0 %v1054
        %v1315 = vpop.f32.mrb[0].mxu0
        %v1316 = vadd.f32 0.0, %v1315
        %v1317 = vpop.f32.mrb[0].mxu0
        %1318 = vmatprep.mubr.f32.mxu0 0.0
        %1319 = vmatmul.mubr.f32.gmra.mrb[0].mxu0 %v1055
        %v1320 = vpop.f32.mrb[0].mxu0
        %v1321 = vadd.f32 0.0, %v1320
        %v1322 = vpop.f32.mrb[0].mxu0
        %1323 = vmatprep.mubr.f32.mxu0 0.0
        %1324 = vmatmul.mubr.f32.gmra.mrb[0].mxu0 %v1056
        %v1325 = vpop.f32.mrb[0].mxu0
        %v1326 = vadd.f32 0.0, %v1325
        %v1327 = vpop.f32.mrb[0].mxu0
        %1328 = vdwg.mxu0
        %1329 = vmatprep.subr.mxu0 0.0
        %1330 = vmatpush1.msra.mxu0 %v744
        %1331 = vmatprep.subr.mxu0 0.0
        %1332 = vmatpush1.msra.mxu0 %v745
        %1333 = vmatprep.subr.mxu0 0.0
        %1334 = vmatpush1.msra.mxu0 %v746
        %1335 = vmatprep.subr.mxu0 0.0
        %1336 = vmatpush1.msra.mxu0 %v747
        %1337 = vmatprep.subr.mxu0 0.0
        %1338 = vmatpush1.msra.mxu0 %v748
        %1339 = vmatprep.subr.mxu0 0.0
        %1340 = vmatpush1.msra.mxu0 %v749
        %1341 = vmatprep.subr.mxu0 0.0
        %1342 = vmatpush1.msra.mxu0 %v750
        %1343 = vmatprep.subr.mxu0 0.0
        %1344 = vmatpush1.msra.mxu0 %v751
        %1345 = vmatprep.subr.mxu0 0.0
        %1346 = vmatpush1.msra.mxu0 %v752
        %1347 = vmatprep.subr.mxu0 0.0
        %1348 = vmatpush1.msra.mxu0 %v753
        %1349 = vmatprep.subr.mxu0 0.0
        %1350 = vmatpush1.msra.mxu0 %v754
        %1351 = vmatprep.subr.mxu0 0.0
        %1352 = vmatpush1.msra.mxu0 %v755
        %1353 = vmatprep.subr.mxu0 0.0
        %1354 = vmatpush1.msra.mxu0 %v756
        %1355 = vmatprep.subr.mxu0 0.0
        %1356 = vmatpush1.msra.mxu0 %v757
        %1357 = vmatprep.subr.mxu0 0.0
        %1358 = vmatpush1.msra.mxu0 %v758
        %1359 = vmatprep.subr.mxu0 0.0
        %1360 = vmatpush1.msra.mxu0 %v759
        %1361 = vmatprep.subr.mxu0 0.0
        %1362 = vmatpush1.msra.mxu0 0.0
        %1363 = vmatprep.subr.mxu0 0.0
        %1364 = vmatpush1.msra.mxu0 0.0
        %1365 = vmatprep.subr.mxu0 0.0
        %1366 = vmatpush1.msra.mxu0 0.0
        %1367 = vmatprep.subr.mxu0 0.0
        %1368 = vmatpush1.msra.mxu0 0.0
        %1369 = vmatprep.subr.mxu0 0.0
        %1370 = vmatpush1.msra.mxu0 0.0
        %1371 = vmatprep.subr.mxu0 0.0
        %1372 = vmatpush1.msra.mxu0 0.0
        %1373 = vmatprep.subr.mxu0 0.0
        %1374 = vmatpush1.msra.mxu0 0.0
        %1375 = vmatprep.subr.mxu0 0.0
        %1376 = vmatpush1.msra.mxu0 0.0
        %1377 = vmatprep.subr.mxu0 0.0
        %1378 = vmatpush1.msra.mxu0 0.0
        %1379 = vmatprep.subr.mxu0 0.0
        %1380 = vmatpush1.msra.mxu0 0.0
        %1381 = vmatprep.subr.mxu0 0.0
        %1382 = vmatpush1.msra.mxu0 0.0
        %1383 = vmatprep.subr.mxu0 0.0
        %1384 = vmatpush1.msra.mxu0 0.0
        %1385 = vmatprep.subr.mxu0 0.0
        %1386 = vmatpush1.msra.mxu0 0.0
        %1387 = vmatprep.subr.mxu0 0.0
        %1388 = vmatpush1.msra.mxu0 0.0
        %1389 = vmatprep.subr.mxu0 0.0
        %1390 = vmatpush1.msra.mxu0 0.0
        %1391 = vmatprep.subr.mxu0 0.0
        %1392 = vmatpush1.msra.mxu0 0.0
        %1393 = vmatprep.mubr.f32.mxu0 0.0
        %1394 = vmatmul.mubr.f32.gmra.mrb[0].mxu0 %v1216
        %v1395 = vpop.f32.mrb[0].mxu0
        %v1396 = vadd.f32 %v1291, %v1395
        %v1397 = vpop.f32.mrb[0].mxu0
        %1398 = vmatprep.mubr.f32.mxu0 0.0
        %1399 = vmatmul.mubr.f32.gmra.mrb[0].mxu0 %v1217
        %v1400 = vpop.f32.mrb[0].mxu0
        %v1401 = vadd.f32 %v1296, %v1400
        %v1402 = vpop.f32.mrb[0].mxu0
        %1403 = vmatprep.mubr.f32.mxu0 0.0
        %1404 = vmatmul.mubr.f32.gmra.mrb[0].mxu0 %v1218
        %v1405 = vpop.f32.mrb[0].mxu0
        %v1406 = vadd.f32 %v1301, %v1405
        %v1407 = vpop.f32.mrb[0].mxu0
        %1408 = vmatprep.mubr.f32.mxu0 0.0
        %1409 = vmatmul.mubr.f32.gmra.mrb[0].mxu0 %v1219
        %v1410 = vpop.f32.mrb[0].mxu0
        %v1411 = vadd.f32 %v1306, %v1410
        %v1412 = vpop.f32.mrb[0].mxu0
        %1413 = vmatprep.mubr.f32.mxu0 0.0
        %1414 = vmatmul.mubr.f32.gmra.mrb[0].mxu0 %v1220
        %v1415 = vpop.f32.mrb[0].mxu0
        %v1416 = vadd.f32 %v1311, %v1415
        %v1417 = vpop.f32.mrb[0].mxu0
        %1418 = vmatprep.mubr.f32.mxu0 0.0
        %1419 = vmatmul.mubr.f32.gmra.mrb[0].mxu0 %v1221
        %v1420 = vpop.f32.mrb[0].mxu0
        %v1421 = vadd.f32 %v1316, %v1420
        %v1422 = vpop.f32.mrb[0].mxu0
        %1423 = vmatprep.mubr.f32.mxu0 0.0
        %1424 = vmatmul.mubr.f32.gmra.mrb[0].mxu0 %v1222
        %v1425 = vpop.f32.mrb[0].mxu0
        %v1426 = vadd.f32 %v1321, %v1425
        %v1427 = vpop.f32.mrb[0].mxu0
        %1428 = vmatprep.mubr.f32.mxu0 0.0
        %1429 = vmatmul.mubr.f32.gmra.mrb[0].mxu0 %v1223
        %v1430 = vpop.f32.mrb[0].mxu0
        %v1431 = vadd.f32 %v1326, %v1430
        %v1432 = vpop.f32.mrb[0].mxu0
        %1433 = vdwg.mxu0
        %v1435 = vlaneseq
        %v1436 = vshrl.u32 %v1435, 7
        %v1437 = vsub.s32 0, %v1436
        %v1438 = vrot.slane %v776, %v1437
        %v1440 = vadd.f32 %v1396, %v1438
        %v1441 = vadd.f32 %v1401, %v1438
        %v1442 = vadd.f32 %v1406, %v1438
        %v1443 = vadd.f32 %v1411, %v1438
        %v1444 = vadd.f32 %v1416, %v1438
        %v1445 = vadd.f32 %v1421, %v1438
        %v1446 = vadd.f32 %v1426, %v1438
        %v1447 = vadd.f32 %v1431, %v1438
        %v1448 = vadd.f32 %v1440, %v501
        %v1449 = vadd.f32 %v1441, %v502
        %v1450 = vadd.f32 %v1442, %v503
        %v1451 = vadd.f32 %v1443, %v504
        %v1452 = vadd.f32 %v1444, %v505
        %v1453 = vadd.f32 %v1445, %v506
        %v1454 = vadd.f32 %v1446, %v507
        %v1455 = vadd.f32 %v1447, %v508
        %1456 = vst [vmem:[#allocation2 + $0x18] sm:$0xff] %v1448
        %1457 = vst [vmem:[#allocation2 + $0x20] sm:$0xff] %v1449
        %1458 = vst [vmem:[#allocation2 + $0x28] sm:$0xff] %v1450
        %1459 = vst [vmem:[#allocation2 + $0x30] sm:$0xff] %v1451
        %1460 = vst [vmem:[#allocation2 + $0x38] sm:$0xff] %v1452
        %1461 = vst [vmem:[#allocation2 + $0x40] sm:$0xff] %v1453
        %1462 = vst [vmem:[#allocation2 + $0x48] sm:$0xff] %v1454
        %1463 = vst [vmem:[#allocation2 + $0x50] sm:$0xff] %v1455
        %vm1464 = vcmask 261120
        %1465 = vst.msk [vmem:[#allocation2 + $0x7] sm:$0xff] %vm1464, 0.0
        %1466 = vst.msk [vmem:[#allocation2 + $0xf] sm:$0xff] %vm1464, 0.0
        %vm1467 = vcmask 253952
        %1468 = vst.msk [vmem:[#allocation2 + $0x17] sm:$0x1] %vm1467, 0.0
        %1472 = vrot.lane.b32.xlu0 %v1453, 32
        %v1473 = vpop.permute.xlu0 %1472
        %1474 = vrot.lane.b32.xlu0 %v1454, 32
        %v1475 = vpop.permute.xlu0 %1474
        %1476 = vrot.lane.b32.xlu0 %v1455, 32
        %v1477 = vpop.permute.xlu0 %1476
        %vm1481 = vcmask 1047815
        %1482 = vst.msk [vmem:[#allocation2] sm:$0x80] %vm1481, %v1473
        %vm1483 = vcmask 1047808
        %1484 = vst.msk [vmem:[#allocation2 + $0x8] sm:$0xff] %vm1483, %v1475
        %1485 = vst.msk [vmem:[#allocation2 + $0x10] sm:$0xff] %vm1483, %v1477
        %vm1486 = vcmask 1048320
        %1487 = vst.msk [vmem:[#allocation2 + $0x58] sm:$0xff] %vm1486, 0.0
        %1488 = vst.msk [vmem:[#allocation2 + $0x60] sm:$0xff] %vm1486, 0.0
        %vm1489 = vcmask 1041152
        %1490 = vst.msk [vmem:[#allocation2 + $0x68] sm:$0x1] %vm1489, 0.0
        %1494 = vrot.lane.b32.xlu0 %v1448, 96
        %v1495 = vpop.permute.xlu0 %1494
        %1496 = vrot.lane.b32.xlu0 %v1449, 96
        %v1497 = vpop.permute.xlu0 %1496
        %1498 = vrot.lane.b32.xlu0 %v1450, 96
        %v1499 = vpop.permute.xlu0 %1498
        %vm1503 = vcmask 785408
        %1504 = vst.msk [vmem:[#allocation2 + $0x58] sm:$0xff] %vm1503, %v1495
        %1505 = vst.msk [vmem:[#allocation2 + $0x60] sm:$0xff] %vm1503, %v1497
        %vm1506 = vcmask 778240
        %1507 = vst.msk [vmem:[#allocation2 + $0x68] sm:$0x1] %vm1506, %v1499
        %v1508 = vld [vmem:[#allocation2 + $0x7] sm:$0xff]
        %v1509 = vld [vmem:[#allocation2 + $0xf] sm:$0xff]
        %v1510 = vld [vmem:[#allocation2 + $0x17] sm:$0xff]
        %v1511 = vld [vmem:[#allocation2 + $0x1f] sm:$0xff]
        %v1512 = vld [vmem:[#allocation2 + $0x27] sm:$0xff]
        %v1513 = vld [vmem:[#allocation2 + $0x2f] sm:$0xff]
        %v1514 = vld [vmem:[#allocation2 + $0x37] sm:$0xff]
        %v1515 = vld [vmem:[#allocation2 + $0x3f] sm:$0xff]
        %v1516 = vmul.f32 %v1508, %v670
        %v1517 = vmul.f32 %v1509, %v671
        %v1518 = vmul.f32 %v1510, %v672
        %v1519 = vmul.f32 %v1511, %v673
        %v1520 = vmul.f32 %v1512, %v674
        %v1521 = vmul.f32 %v1513, %v675
        %v1522 = vmul.f32 %v1514, %v676
        %v1523 = vmul.f32 %v1515, %v677
        %v1524 = vld [vmem:[#allocation2 + $0x8] sm:$0xff]
        %v1525 = vld [vmem:[#allocation2 + $0x10] sm:$0xff]
        %v1526 = vld [vmem:[#allocation2 + $0x18] sm:$0xff]
        %v1527 = vld [vmem:[#allocation2 + $0x20] sm:$0xff]
        %v1528 = vld [vmem:[#allocation2 + $0x28] sm:$0xff]
        %v1529 = vld [vmem:[#allocation2 + $0x30] sm:$0xff]
        %v1530 = vld [vmem:[#allocation2 + $0x38] sm:$0xff]
        %v1531 = vld [vmem:[#allocation2 + $0x40] sm:$0xff]
        %v1532 = vld [vmem:[#allocation2 + $0x9] sm:$0xff]
        %v1533 = vld [vmem:[#allocation2 + $0x11] sm:$0xff]
        %v1534 = vld [vmem:[#allocation2 + $0x19] sm:$0xff]
        %v1535 = vld [vmem:[#allocation2 + $0x21] sm:$0xff]
        %v1536 = vld [vmem:[#allocation2 + $0x29] sm:$0xff]
        %v1537 = vld [vmem:[#allocation2 + $0x31] sm:$0xff]
        %v1538 = vld [vmem:[#allocation2 + $0x39] sm:$0xff]
        %v1539 = vld [vmem:[#allocation2 + $0x41] sm:$0xff]
        %v1540 = vmul.f32 %v1532, %v718
        %v1541 = vmul.f32 %v1533, %v719
        %v1542 = vmul.f32 %v1534, %v720
        %v1543 = vmul.f32 %v1535, %v721
        %v1544 = vmul.f32 %v1536, %v722
        %v1545 = vmul.f32 %v1537, %v723
        %v1546 = vmul.f32 %v1538, %v724
        %v1547 = vmul.f32 %v1539, %v725
        %v1548 = vld [vmem:[#allocation2 + $0x47] sm:$0xff]
        %v1549 = vld [vmem:[#allocation2 + $0x4f] sm:$0xff]
        %v1550 = vmul.f32 %v1510, %v670
        %v1551 = vmul.f32 %v1511, %v671
        %v1552 = vmul.f32 %v1512, %v672
        %v1553 = vmul.f32 %v1513, %v673
        %v1554 = vmul.f32 %v1514, %v674
        %v1555 = vmul.f32 %v1515, %v675
        %v1556 = vmul.f32 %v1548, %v676
        %v1557 = vmul.f32 %v1549, %v677
        %v1558 = vld [vmem:[#allocation2 + $0x48] sm:$0xff]
        %v1559 = vld [vmem:[#allocation2 + $0x50] sm:$0xff]
        %v1560 = vld [vmem:[#allocation2 + $0x49] sm:$0xff]
        %v1561 = vld [vmem:[#allocation2 + $0x51] sm:$0xff]
        %v1562 = vmul.f32 %v1534, %v718
        %v1563 = vmul.f32 %v1535, %v719
        %v1564 = vmul.f32 %v1536, %v720
        %v1565 = vmul.f32 %v1537, %v721
        %v1566 = vmul.f32 %v1538, %v722
        %v1567 = vmul.f32 %v1539, %v723
        %v1568 = vmul.f32 %v1560, %v724
        %v1569 = vmul.f32 %v1561, %v725
        %v1570 = vld [vmem:[#allocation2 + $0x57] sm:$0xff]
        %v1571 = vld [vmem:[#allocation2 + $0x5f] sm:$0xff]
        %v1572 = vmul.f32 %v1512, %v670
        %v1573 = vmul.f32 %v1513, %v671
        %v1574 = vmul.f32 %v1514, %v672
        %v1575 = vmul.f32 %v1515, %v673
        %v1576 = vmul.f32 %v1548, %v674
        %v1577 = vmul.f32 %v1549, %v675
        %v1578 = vmul.f32 %v1570, %v676
        %v1579 = vmul.f32 %v1571, %v677
        %v1580 = vld [vmem:[#allocation2 + $0x58] sm:$0xff]
        %v1581 = vld [vmem:[#allocation2 + $0x60] sm:$0xff]
        %v1582 = vld [vmem:[#allocation2 + $0x59] sm:$0xff]
        %v1583 = vld [vmem:[#allocation2 + $0x61] sm:$0xff]
        %v1584 = vmul.f32 %v1536, %v718
        %v1585 = vmul.f32 %v1537, %v719
        %v1586 = vmul.f32 %v1538, %v720
        %v1587 = vmul.f32 %v1539, %v721
        %v1588 = vmul.f32 %v1560, %v722
        %v1589 = vmul.f32 %v1561, %v723
        %v1590 = vmul.f32 %v1582, %v724
        %v1591 = vmul.f32 %v1583, %v725
        %v1592 = vld [vmem:[%s8] sm:$0xff]
        %v1593 = vld [vmem:[%s8 + $0x8] sm:$0xff]
        %v1594 = vld [vmem:[%s8 + $0x10] sm:$0xff]
        %v1595 = vld [vmem:[%s8 + $0x18] sm:$0xff]
        %v1596 = vld [vmem:[%s8 + $0x20] sm:$0xff]
        %v1597 = vld [vmem:[%s8 + $0x28] sm:$0xff]
        %v1598 = vld [vmem:[%s8 + $0x30] sm:$0xff]
        %v1599 = vld [vmem:[%s8 + $0x38] sm:$0xff]
        %v1600 = vld [vmem:[%s8 + $0x40] sm:$0xff]
        %v1601 = vld [vmem:[%s8 + $0x48] sm:$0xff]
        %v1602 = vld [vmem:[%s8 + $0x50] sm:$0xff]
        %v1603 = vld [vmem:[%s8 + $0x58] sm:$0xff]
        %v1604 = vld [vmem:[%s8 + $0x60] sm:$0xff]
        %v1605 = vld [vmem:[%s8 + $0x68] sm:$0xff]
        %v1606 = vld [vmem:[%s8 + $0x70] sm:$0xff]
        %v1607 = vld [vmem:[%s8 + $0x78] sm:$0xff]
        %s1608 = scalar_lea.vmem %s8, 128
        %v1609 = vld [vmem:[%s1608] sm:$0xff]
        %v1610 = vld [vmem:[%s1608 + $0x8] sm:$0xff]
        %v1611 = vld [vmem:[%s1608 + $0x10] sm:$0xff]
        %v1612 = vld [vmem:[%s1608 + $0x18] sm:$0xff]
        %v1613 = vld [vmem:[%s1608 + $0x20] sm:$0xff]
        %v1614 = vld [vmem:[%s1608 + $0x28] sm:$0xff]
        %v1615 = vld [vmem:[%s1608 + $0x30] sm:$0xff]
        %v1616 = vld [vmem:[%s1608 + $0x38] sm:$0xff]
        %v1617 = vld [vmem:[%s1608 + $0x40] sm:$0xff]
        %v1618 = vld [vmem:[%s1608 + $0x48] sm:$0xff]
        %v1619 = vld [vmem:[%s1608 + $0x50] sm:$0xff]
        %v1620 = vld [vmem:[%s1608 + $0x58] sm:$0xff]
        %v1621 = vld [vmem:[%s1608 + $0x60] sm:$0xff]
        %v1622 = vld [vmem:[%s1608 + $0x68] sm:$0xff]
        %v1623 = vld [vmem:[%s1608 + $0x70] sm:$0xff]
        %v1624 = vld [vmem:[%s1608 + $0x78] sm:$0xff]
        %1625 = vmatprep.subr.mxu0 0.0
        %1626 = vmatpush1.msra.mxu0 %v1609
        %1627 = vmatprep.subr.mxu0 0.0
        %1628 = vmatpush1.msra.mxu0 %v1610
        %1629 = vmatprep.subr.mxu0 0.0
        %1630 = vmatpush1.msra.mxu0 %v1611
        %1631 = vmatprep.subr.mxu0 0.0
        %1632 = vmatpush1.msra.mxu0 %v1612
        %1633 = vmatprep.subr.mxu0 0.0
        %1634 = vmatpush1.msra.mxu0 %v1613
        %1635 = vmatprep.subr.mxu0 0.0
        %1636 = vmatpush1.msra.mxu0 %v1614
        %1637 = vmatprep.subr.mxu0 0.0
        %1638 = vmatpush1.msra.mxu0 %v1615
        %1639 = vmatprep.subr.mxu0 0.0
        %1640 = vmatpush1.msra.mxu0 %v1616
        %1641 = vmatprep.subr.mxu0 0.0
        %1642 = vmatpush1.msra.mxu0 %v1617
        %1643 = vmatprep.subr.mxu0 0.0
        %1644 = vmatpush1.msra.mxu0 %v1618
        %1645 = vmatprep.subr.mxu0 0.0
        %1646 = vmatpush1.msra.mxu0 %v1619
        %1647 = vmatprep.subr.mxu0 0.0
        %1648 = vmatpush1.msra.mxu0 %v1620
        %1649 = vmatprep.subr.mxu0 0.0
        %1650 = vmatpush1.msra.mxu0 %v1621
        %1651 = vmatprep.subr.mxu0 0.0
        %1652 = vmatpush1.msra.mxu0 %v1622
        %1653 = vmatprep.subr.mxu0 0.0
        %1654 = vmatpush1.msra.mxu0 %v1623
        %1655 = vmatprep.subr.mxu0 0.0
        %1656 = vmatpush1.msra.mxu0 %v1624
        %1657 = vmatprep.subr.mxu0 0.0
        %1658 = vmatpush1.msra.mxu0 0.0
        %1659 = vmatprep.subr.mxu0 0.0
        %1660 = vmatpush1.msra.mxu0 0.0
        %1661 = vmatprep.subr.mxu0 0.0
        %1662 = vmatpush1.msra.mxu0 0.0
        %1663 = vmatprep.subr.mxu0 0.0
        %1664 = vmatpush1.msra.mxu0 0.0
        %1665 = vmatprep.subr.mxu0 0.0
        %1666 = vmatpush1.msra.mxu0 0.0
        %1667 = vmatprep.subr.mxu0 0.0
        %1668 = vmatpush1.msra.mxu0 0.0
        %1669 = vmatprep.subr.mxu0 0.0
        %1670 = vmatpush1.msra.mxu0 0.0
        %1671 = vmatprep.subr.mxu0 0.0
        %1672 = vmatpush1.msra.mxu0 0.0
        %1673 = vmatprep.subr.mxu0 0.0
        %1674 = vmatpush1.msra.mxu0 0.0
        %1675 = vmatprep.subr.mxu0 0.0
        %1676 = vmatpush1.msra.mxu0 0.0
        %1677 = vmatprep.subr.mxu0 0.0
        %1678 = vmatpush1.msra.mxu0 0.0
        %1679 = vmatprep.subr.mxu0 0.0
        %1680 = vmatpush1.msra.mxu0 0.0
        %1681 = vmatprep.subr.mxu0 0.0
        %1682 = vmatpush1.msra.mxu0 0.0
        %1683 = vmatprep.subr.mxu0 0.0
        %1684 = vmatpush1.msra.mxu0 0.0
        %1685 = vmatprep.subr.mxu0 0.0
        %1686 = vmatpush1.msra.mxu0 0.0
        %1687 = vmatprep.subr.mxu0 0.0
        %1688 = vmatpush1.msra.mxu0 0.0
        %1689 = vmatprep.mubr.f32.mxu0 0.0
        %1690 = vmatmul.mubr.f32.gmra.mrb[0].mxu0 %v1524
        %v1691 = vpop.f32.mrb[0].mxu0
        %v1692 = vadd.f32 0.0, %v1691
        %v1693 = vpop.f32.mrb[0].mxu0
        %1694 = vmatprep.mubr.f32.mxu0 0.0
        %1695 = vmatmul.mubr.f32.gmra.mrb[0].mxu0 %v1525
        %v1696 = vpop.f32.mrb[0].mxu0
        %v1697 = vadd.f32 0.0, %v1696
        %v1698 = vpop.f32.mrb[0].mxu0
        %1699 = vmatprep.mubr.f32.mxu0 0.0
        %1700 = vmatmul.mubr.f32.gmra.mrb[0].mxu0 %v1526
        %v1701 = vpop.f32.mrb[0].mxu0
        %v1702 = vadd.f32 0.0, %v1701
        %v1703 = vpop.f32.mrb[0].mxu0
        %1704 = vmatprep.mubr.f32.mxu0 0.0
        %1705 = vmatmul.mubr.f32.gmra.mrb[0].mxu0 %v1527
        %v1706 = vpop.f32.mrb[0].mxu0
        %v1707 = vadd.f32 0.0, %v1706
        %v1708 = vpop.f32.mrb[0].mxu0
        %1709 = vmatprep.mubr.f32.mxu0 0.0
        %1710 = vmatmul.mubr.f32.gmra.mrb[0].mxu0 %v1528
        %v1711 = vpop.f32.mrb[0].mxu0
        %v1712 = vadd.f32 0.0, %v1711
        %v1713 = vpop.f32.mrb[0].mxu0
        %1714 = vmatprep.mubr.f32.mxu0 0.0
        %1715 = vmatmul.mubr.f32.gmra.mrb[0].mxu0 %v1529
        %v1716 = vpop.f32.mrb[0].mxu0
        %v1717 = vadd.f32 0.0, %v1716
        %v1718 = vpop.f32.mrb[0].mxu0
        %1719 = vmatprep.mubr.f32.mxu0 0.0
        %1720 = vmatmul.mubr.f32.gmra.mrb[0].mxu0 %v1530
        %v1721 = vpop.f32.mrb[0].mxu0
        %v1722 = vadd.f32 0.0, %v1721
        %v1723 = vpop.f32.mrb[0].mxu0
        %1724 = vmatprep.mubr.f32.mxu0 0.0
        %1725 = vmatmul.mubr.f32.gmra.mrb[0].mxu0 %v1531
        %v1726 = vpop.f32.mrb[0].mxu0
        %v1727 = vadd.f32 0.0, %v1726
        %v1728 = vpop.f32.mrb[0].mxu0
        %1729 = vdwg.mxu0
        %1730 = vmatprep.subr.mxu0 0.0
        %1731 = vmatpush1.msra.mxu0 %v1592
        %1732 = vmatprep.subr.mxu0 0.0
        %1733 = vmatpush1.msra.mxu0 %v1593
        %1734 = vmatprep.subr.mxu0 0.0
        %1735 = vmatpush1.msra.mxu0 %v1594
        %1736 = vmatprep.subr.mxu0 0.0
        %1737 = vmatpush1.msra.mxu0 %v1595
        %1738 = vmatprep.subr.mxu0 0.0
        %1739 = vmatpush1.msra.mxu0 %v1596
        %1740 = vmatprep.subr.mxu0 0.0
        %1741 = vmatpush1.msra.mxu0 %v1597
        %1742 = vmatprep.subr.mxu0 0.0
        %1743 = vmatpush1.msra.mxu0 %v1598
        %1744 = vmatprep.subr.mxu0 0.0
        %1745 = vmatpush1.msra.mxu0 %v1599
        %1746 = vmatprep.subr.mxu0 0.0
        %1747 = vmatpush1.msra.mxu0 %v1600
        %1748 = vmatprep.subr.mxu0 0.0
        %1749 = vmatpush1.msra.mxu0 %v1601
        %1750 = vmatprep.subr.mxu0 0.0
        %1751 = vmatpush1.msra.mxu0 %v1602
        %1752 = vmatprep.subr.mxu0 0.0
        %1753 = vmatpush1.msra.mxu0 %v1603
        %1754 = vmatprep.subr.mxu0 0.0
        %1755 = vmatpush1.msra.mxu0 %v1604
        %1756 = vmatprep.subr.mxu0 0.0
        %1757 = vmatpush1.msra.mxu0 %v1605
        %1758 = vmatprep.subr.mxu0 0.0
        %1759 = vmatpush1.msra.mxu0 %v1606
        %1760 = vmatprep.subr.mxu0 0.0
        %1761 = vmatpush1.msra.mxu0 %v1607
        %1762 = vmatprep.subr.mxu0 0.0
        %1763 = vmatpush1.msra.mxu0 0.0
        %1764 = vmatprep.subr.mxu0 0.0
        %1765 = vmatpush1.msra.mxu0 0.0
        %1766 = vmatprep.subr.mxu0 0.0
        %1767 = vmatpush1.msra.mxu0 0.0
        %1768 = vmatprep.subr.mxu0 0.0
        %1769 = vmatpush1.msra.mxu0 0.0
        %1770 = vmatprep.subr.mxu0 0.0
        %1771 = vmatpush1.msra.mxu0 0.0
        %1772 = vmatprep.subr.mxu0 0.0
        %1773 = vmatpush1.msra.mxu0 0.0
        %1774 = vmatprep.subr.mxu0 0.0
        %1775 = vmatpush1.msra.mxu0 0.0
        %1776 = vmatprep.subr.mxu0 0.0
        %1777 = vmatpush1.msra.mxu0 0.0
        %1778 = vmatprep.subr.mxu0 0.0
        %1779 = vmatpush1.msra.mxu0 0.0
        %1780 = vmatprep.subr.mxu0 0.0
        %1781 = vmatpush1.msra.mxu0 0.0
        %1782 = vmatprep.subr.mxu0 0.0
        %1783 = vmatpush1.msra.mxu0 0.0
        %1784 = vmatprep.subr.mxu0 0.0
        %1785 = vmatpush1.msra.mxu0 0.0
        %1786 = vmatprep.subr.mxu0 0.0
        %1787 = vmatpush1.msra.mxu0 0.0
        %1788 = vmatprep.subr.mxu0 0.0
        %1789 = vmatpush1.msra.mxu0 0.0
        %1790 = vmatprep.subr.mxu0 0.0
        %1791 = vmatpush1.msra.mxu0 0.0
        %1792 = vmatprep.subr.mxu0 0.0
        %1793 = vmatpush1.msra.mxu0 0.0
        %1794 = vmatprep.mubr.f32.mxu0 0.0
        %1795 = vmatmul.mubr.f32.gmra.mrb[0].mxu0 %v1516
        %v1796 = vpop.f32.mrb[0].mxu0
        %v1797 = vadd.f32 %v1692, %v1796
        %v1798 = vpop.f32.mrb[0].mxu0
        %1799 = vmatprep.mubr.f32.mxu0 0.0
        %1800 = vmatmul.mubr.f32.gmra.mrb[0].mxu0 %v1517
        %v1801 = vpop.f32.mrb[0].mxu0
        %v1802 = vadd.f32 %v1697, %v1801
        %v1803 = vpop.f32.mrb[0].mxu0
        %1804 = vmatprep.mubr.f32.mxu0 0.0
        %1805 = vmatmul.mubr.f32.gmra.mrb[0].mxu0 %v1518
        %v1806 = vpop.f32.mrb[0].mxu0
        %v1807 = vadd.f32 %v1702, %v1806
        %v1808 = vpop.f32.mrb[0].mxu0
        %1809 = vmatprep.mubr.f32.mxu0 0.0
        %1810 = vmatmul.mubr.f32.gmra.mrb[0].mxu0 %v1519
        %v1811 = vpop.f32.mrb[0].mxu0
        %v1812 = vadd.f32 %v1707, %v1811
        %v1813 = vpop.f32.mrb[0].mxu0
        %1814 = vmatprep.mubr.f32.mxu0 0.0
        %1815 = vmatmul.mubr.f32.gmra.mrb[0].mxu0 %v1520
        %v1816 = vpop.f32.mrb[0].mxu0
        %v1817 = vadd.f32 %v1712, %v1816
        %v1818 = vpop.f32.mrb[0].mxu0
        %1819 = vmatprep.mubr.f32.mxu0 0.0
        %1820 = vmatmul.mubr.f32.gmra.mrb[0].mxu0 %v1521
        %v1821 = vpop.f32.mrb[0].mxu0
        %v1822 = vadd.f32 %v1717, %v1821
        %v1823 = vpop.f32.mrb[0].mxu0
        %1824 = vmatprep.mubr.f32.mxu0 0.0
        %1825 = vmatmul.mubr.f32.gmra.mrb[0].mxu0 %v1522
        %v1826 = vpop.f32.mrb[0].mxu0
        %v1827 = vadd.f32 %v1722, %v1826
        %v1828 = vpop.f32.mrb[0].mxu0
        %1829 = vmatprep.mubr.f32.mxu0 0.0
        %1830 = vmatmul.mubr.f32.gmra.mrb[0].mxu0 %v1523
        %v1831 = vpop.f32.mrb[0].mxu0
        %v1832 = vadd.f32 %v1727, %v1831
        %v1833 = vpop.f32.mrb[0].mxu0
        %1834 = vdwg.mxu0
        %s1835 = scalar_lea.vmem %s8, 256
        %v1836 = vld [vmem:[%s1835] sm:$0xff]
        %v1837 = vld [vmem:[%s1835 + $0x8] sm:$0xff]
        %v1838 = vld [vmem:[%s1835 + $0x10] sm:$0xff]
        %v1839 = vld [vmem:[%s1835 + $0x18] sm:$0xff]
        %v1840 = vld [vmem:[%s1835 + $0x20] sm:$0xff]
        %v1841 = vld [vmem:[%s1835 + $0x28] sm:$0xff]
        %v1842 = vld [vmem:[%s1835 + $0x30] sm:$0xff]
        %v1843 = vld [vmem:[%s1835 + $0x38] sm:$0xff]
        %v1844 = vld [vmem:[%s1835 + $0x40] sm:$0xff]
        %v1845 = vld [vmem:[%s1835 + $0x48] sm:$0xff]
        %v1846 = vld [vmem:[%s1835 + $0x50] sm:$0xff]
        %v1847 = vld [vmem:[%s1835 + $0x58] sm:$0xff]
        %v1848 = vld [vmem:[%s1835 + $0x60] sm:$0xff]
        %v1849 = vld [vmem:[%s1835 + $0x68] sm:$0xff]
        %v1850 = vld [vmem:[%s1835 + $0x70] sm:$0xff]
        %v1851 = vld [vmem:[%s1835 + $0x78] sm:$0xff]
        %1852 = vmatprep.subr.mxu0 0.0
        %1853 = vmatpush1.msra.mxu0 %v1836
        %1854 = vmatprep.subr.mxu0 0.0
        %1855 = vmatpush1.msra.mxu0 %v1837
        %1856 = vmatprep.subr.mxu0 0.0
        %1857 = vmatpush1.msra.mxu0 %v1838
        %1858 = vmatprep.subr.mxu0 0.0
        %1859 = vmatpush1.msra.mxu0 %v1839
        %1860 = vmatprep.subr.mxu0 0.0
        %1861 = vmatpush1.msra.mxu0 %v1840
        %1862 = vmatprep.subr.mxu0 0.0
        %1863 = vmatpush1.msra.mxu0 %v1841
        %1864 = vmatprep.subr.mxu0 0.0
        %1865 = vmatpush1.msra.mxu0 %v1842
        %1866 = vmatprep.subr.mxu0 0.0
        %1867 = vmatpush1.msra.mxu0 %v1843
        %1868 = vmatprep.subr.mxu0 0.0
        %1869 = vmatpush1.msra.mxu0 %v1844
        %1870 = vmatprep.subr.mxu0 0.0
        %1871 = vmatpush1.msra.mxu0 %v1845
        %1872 = vmatprep.subr.mxu0 0.0
        %1873 = vmatpush1.msra.mxu0 %v1846
        %1874 = vmatprep.subr.mxu0 0.0
        %1875 = vmatpush1.msra.mxu0 %v1847
        %1876 = vmatprep.subr.mxu0 0.0
        %1877 = vmatpush1.msra.mxu0 %v1848
        %1878 = vmatprep.subr.mxu0 0.0
        %1879 = vmatpush1.msra.mxu0 %v1849
        %1880 = vmatprep.subr.mxu0 0.0
        %1881 = vmatpush1.msra.mxu0 %v1850
        %1882 = vmatprep.subr.mxu0 0.0
        %1883 = vmatpush1.msra.mxu0 %v1851
        %1884 = vmatprep.subr.mxu0 0.0
        %1885 = vmatpush1.msra.mxu0 0.0
        %1886 = vmatprep.subr.mxu0 0.0
        %1887 = vmatpush1.msra.mxu0 0.0
        %1888 = vmatprep.subr.mxu0 0.0
        %1889 = vmatpush1.msra.mxu0 0.0
        %1890 = vmatprep.subr.mxu0 0.0
        %1891 = vmatpush1.msra.mxu0 0.0
        %1892 = vmatprep.subr.mxu0 0.0
        %1893 = vmatpush1.msra.mxu0 0.0
        %1894 = vmatprep.subr.mxu0 0.0
        %1895 = vmatpush1.msra.mxu0 0.0
        %1896 = vmatprep.subr.mxu0 0.0
        %1897 = vmatpush1.msra.mxu0 0.0
        %1898 = vmatprep.subr.mxu0 0.0
        %1899 = vmatpush1.msra.mxu0 0.0
        %1900 = vmatprep.subr.mxu0 0.0
        %1901 = vmatpush1.msra.mxu0 0.0
        %1902 = vmatprep.subr.mxu0 0.0
        %1903 = vmatpush1.msra.mxu0 0.0
        %1904 = vmatprep.subr.mxu0 0.0
        %1905 = vmatpush1.msra.mxu0 0.0
        %1906 = vmatprep.subr.mxu0 0.0
        %1907 = vmatpush1.msra.mxu0 0.0
        %1908 = vmatprep.subr.mxu0 0.0
        %1909 = vmatpush1.msra.mxu0 0.0
        %1910 = vmatprep.subr.mxu0 0.0
        %1911 = vmatpush1.msra.mxu0 0.0
        %1912 = vmatprep.subr.mxu0 0.0
        %1913 = vmatpush1.msra.mxu0 0.0
        %1914 = vmatprep.subr.mxu0 0.0
        %1915 = vmatpush1.msra.mxu0 0.0
        %1916 = vmatprep.mubr.f32.mxu0 0.0
        %1917 = vmatmul.mubr.f32.gmra.mrb[0].mxu0 %v1540
        %v1918 = vpop.f32.mrb[0].mxu0
        %v1919 = vadd.f32 0.0, %v1918
        %v1920 = vpop.f32.mrb[0].mxu0
        %1921 = vmatprep.mubr.f32.mxu0 0.0
        %1922 = vmatmul.mubr.f32.gmra.mrb[0].mxu0 %v1541
        %v1923 = vpop.f32.mrb[0].mxu0
        %v1924 = vadd.f32 0.0, %v1923
        %v1925 = vpop.f32.mrb[0].mxu0
        %1926 = vmatprep.mubr.f32.mxu0 0.0
        %1927 = vmatmul.mubr.f32.gmra.mrb[0].mxu0 %v1542
        %v1928 = vpop.f32.mrb[0].mxu0
        %v1929 = vadd.f32 0.0, %v1928
        %v1930 = vpop.f32.mrb[0].mxu0
        %1931 = vmatprep.mubr.f32.mxu0 0.0
        %1932 = vmatmul.mubr.f32.gmra.mrb[0].mxu0 %v1543
        %v1933 = vpop.f32.mrb[0].mxu0
        %v1934 = vadd.f32 0.0, %v1933
        %v1935 = vpop.f32.mrb[0].mxu0
        %1936 = vmatprep.mubr.f32.mxu0 0.0
        %1937 = vmatmul.mubr.f32.gmra.mrb[0].mxu0 %v1544
        %v1938 = vpop.f32.mrb[0].mxu0
        %v1939 = vadd.f32 0.0, %v1938
        %v1940 = vpop.f32.mrb[0].mxu0
        %1941 = vmatprep.mubr.f32.mxu0 0.0
        %1942 = vmatmul.mubr.f32.gmra.mrb[0].mxu0 %v1545
        %v1943 = vpop.f32.mrb[0].mxu0
        %v1944 = vadd.f32 0.0, %v1943
        %v1945 = vpop.f32.mrb[0].mxu0
        %1946 = vmatprep.mubr.f32.mxu0 0.0
        %1947 = vmatmul.mubr.f32.gmra.mrb[0].mxu0 %v1546
        %v1948 = vpop.f32.mrb[0].mxu0
        %v1949 = vadd.f32 0.0, %v1948
        %v1950 = vpop.f32.mrb[0].mxu0
        %1951 = vmatprep.mubr.f32.mxu0 0.0
        %1952 = vmatmul.mubr.f32.gmra.mrb[0].mxu0 %v1547
        %v1953 = vpop.f32.mrb[0].mxu0
        %v1954 = vadd.f32 0.0, %v1953
        %v1955 = vpop.f32.mrb[0].mxu0
        %1956 = vdwg.mxu0
        %v1957 = vadd.f32 %v1797, %v1919
        %v1958 = vadd.f32 %v1802, %v1924
        %v1959 = vadd.f32 %v1807, %v1929
        %v1960 = vadd.f32 %v1812, %v1934
        %v1961 = vadd.f32 %v1817, %v1939
        %v1962 = vadd.f32 %v1822, %v1944
        %v1963 = vadd.f32 %v1827, %v1949
        %v1964 = vadd.f32 %v1832, %v1954
        %s1965 = scalar_lea.vmem %s8, 384
        %v1966 = vld [vmem:[%s1965] sm:$0xff]
        %v1967 = vld [vmem:[%s1965 + $0x8] sm:$0xff]
        %v1968 = vld [vmem:[%s1965 + $0x10] sm:$0xff]
        %v1969 = vld [vmem:[%s1965 + $0x18] sm:$0xff]
        %v1970 = vld [vmem:[%s1965 + $0x20] sm:$0xff]
        %v1971 = vld [vmem:[%s1965 + $0x28] sm:$0xff]
        %v1972 = vld [vmem:[%s1965 + $0x30] sm:$0xff]
        %v1973 = vld [vmem:[%s1965 + $0x38] sm:$0xff]
        %v1974 = vld [vmem:[%s1965 + $0x40] sm:$0xff]
        %v1975 = vld [vmem:[%s1965 + $0x48] sm:$0xff]
        %v1976 = vld [vmem:[%s1965 + $0x50] sm:$0xff]
        %v1977 = vld [vmem:[%s1965 + $0x58] sm:$0xff]
        %v1978 = vld [vmem:[%s1965 + $0x60] sm:$0xff]
        %v1979 = vld [vmem:[%s1965 + $0x68] sm:$0xff]
        %v1980 = vld [vmem:[%s1965 + $0x70] sm:$0xff]
        %v1981 = vld [vmem:[%s1965 + $0x78] sm:$0xff]
        %1982 = vmatprep.subr.mxu0 0.0
        %1983 = vmatpush1.msra.mxu0 %v1966
        %1984 = vmatprep.subr.mxu0 0.0
        %1985 = vmatpush1.msra.mxu0 %v1967
        %1986 = vmatprep.subr.mxu0 0.0
        %1987 = vmatpush1.msra.mxu0 %v1968
        %1988 = vmatprep.subr.mxu0 0.0
        %1989 = vmatpush1.msra.mxu0 %v1969
        %1990 = vmatprep.subr.mxu0 0.0
        %1991 = vmatpush1.msra.mxu0 %v1970
        %1992 = vmatprep.subr.mxu0 0.0
        %1993 = vmatpush1.msra.mxu0 %v1971
        %1994 = vmatprep.subr.mxu0 0.0
        %1995 = vmatpush1.msra.mxu0 %v1972
        %1996 = vmatprep.subr.mxu0 0.0
        %1997 = vmatpush1.msra.mxu0 %v1973
        %1998 = vmatprep.subr.mxu0 0.0
        %1999 = vmatpush1.msra.mxu0 %v1974
        %2000 = vmatprep.subr.mxu0 0.0
        %2001 = vmatpush1.msra.mxu0 %v1975
        %2002 = vmatprep.subr.mxu0 0.0
        %2003 = vmatpush1.msra.mxu0 %v1976
        %2004 = vmatprep.subr.mxu0 0.0
        %2005 = vmatpush1.msra.mxu0 %v1977
        %2006 = vmatprep.subr.mxu0 0.0
        %2007 = vmatpush1.msra.mxu0 %v1978
        %2008 = vmatprep.subr.mxu0 0.0
        %2009 = vmatpush1.msra.mxu0 %v1979
        %2010 = vmatprep.subr.mxu0 0.0
        %2011 = vmatpush1.msra.mxu0 %v1980
        %2012 = vmatprep.subr.mxu0 0.0
        %2013 = vmatpush1.msra.mxu0 %v1981
        %2014 = vmatprep.subr.mxu0 0.0
        %2015 = vmatpush1.msra.mxu0 0.0
        %2016 = vmatprep.subr.mxu0 0.0
        %2017 = vmatpush1.msra.mxu0 0.0
        %2018 = vmatprep.subr.mxu0 0.0
        %2019 = vmatpush1.msra.mxu0 0.0
        %2020 = vmatprep.subr.mxu0 0.0
        %2021 = vmatpush1.msra.mxu0 0.0
        %2022 = vmatprep.subr.mxu0 0.0
        %2023 = vmatpush1.msra.mxu0 0.0
        %2024 = vmatprep.subr.mxu0 0.0
        %2025 = vmatpush1.msra.mxu0 0.0
        %2026 = vmatprep.subr.mxu0 0.0
        %2027 = vmatpush1.msra.mxu0 0.0
        %2028 = vmatprep.subr.mxu0 0.0
        %2029 = vmatpush1.msra.mxu0 0.0
        %2030 = vmatprep.subr.mxu0 0.0
        %2031 = vmatpush1.msra.mxu0 0.0
        %2032 = vmatprep.subr.mxu0 0.0
        %2033 = vmatpush1.msra.mxu0 0.0
        %2034 = vmatprep.subr.mxu0 0.0
        %2035 = vmatpush1.msra.mxu0 0.0
        %2036 = vmatprep.subr.mxu0 0.0
        %2037 = vmatpush1.msra.mxu0 0.0
        %2038 = vmatprep.subr.mxu0 0.0
        %2039 = vmatpush1.msra.mxu0 0.0
        %2040 = vmatprep.subr.mxu0 0.0
        %2041 = vmatpush1.msra.mxu0 0.0
        %2042 = vmatprep.subr.mxu0 0.0
        %2043 = vmatpush1.msra.mxu0 0.0
        %2044 = vmatprep.subr.mxu0 0.0
        %2045 = vmatpush1.msra.mxu0 0.0
        %2046 = vmatprep.mubr.f32.mxu0 0.0
        %2047 = vmatmul.mubr.f32.gmra.mrb[0].mxu0 %v1550
        %v2048 = vpop.f32.mrb[0].mxu0
        %v2049 = vadd.f32 0.0, %v2048
        %v2050 = vpop.f32.mrb[0].mxu0
        %2051 = vmatprep.mubr.f32.mxu0 0.0
        %2052 = vmatmul.mubr.f32.gmra.mrb[0].mxu0 %v1551
        %v2053 = vpop.f32.mrb[0].mxu0
        %v2054 = vadd.f32 0.0, %v2053
        %v2055 = vpop.f32.mrb[0].mxu0
        %2056 = vmatprep.mubr.f32.mxu0 0.0
        %2057 = vmatmul.mubr.f32.gmra.mrb[0].mxu0 %v1552
        %v2058 = vpop.f32.mrb[0].mxu0
        %v2059 = vadd.f32 0.0, %v2058
        %v2060 = vpop.f32.mrb[0].mxu0
        %2061 = vmatprep.mubr.f32.mxu0 0.0
        %2062 = vmatmul.mubr.f32.gmra.mrb[0].mxu0 %v1553
        %v2063 = vpop.f32.mrb[0].mxu0
        %v2064 = vadd.f32 0.0, %v2063
        %v2065 = vpop.f32.mrb[0].mxu0
        %2066 = vmatprep.mubr.f32.mxu0 0.0
        %2067 = vmatmul.mubr.f32.gmra.mrb[0].mxu0 %v1554
        %v2068 = vpop.f32.mrb[0].mxu0
        %v2069 = vadd.f32 0.0, %v2068
        %v2070 = vpop.f32.mrb[0].mxu0
        %2071 = vmatprep.mubr.f32.mxu0 0.0
        %2072 = vmatmul.mubr.f32.gmra.mrb[0].mxu0 %v1555
        %v2073 = vpop.f32.mrb[0].mxu0
        %v2074 = vadd.f32 0.0, %v2073
        %v2075 = vpop.f32.mrb[0].mxu0
        %2076 = vmatprep.mubr.f32.mxu0 0.0
        %2077 = vmatmul.mubr.f32.gmra.mrb[0].mxu0 %v1556
        %v2078 = vpop.f32.mrb[0].mxu0
        %v2079 = vadd.f32 0.0, %v2078
        %v2080 = vpop.f32.mrb[0].mxu0
        %2081 = vmatprep.mubr.f32.mxu0 0.0
        %2082 = vmatmul.mubr.f32.gmra.mrb[0].mxu0 %v1557
        %v2083 = vpop.f32.mrb[0].mxu0
        %v2084 = vadd.f32 0.0, %v2083
        %v2085 = vpop.f32.mrb[0].mxu0
        %2086 = vdwg.mxu0
        %v2087 = vadd.f32 %v1957, %v2049
        %v2088 = vadd.f32 %v1958, %v2054
        %v2089 = vadd.f32 %v1959, %v2059
        %v2090 = vadd.f32 %v1960, %v2064
        %v2091 = vadd.f32 %v1961, %v2069
        %v2092 = vadd.f32 %v1962, %v2074
        %v2093 = vadd.f32 %v1963, %v2079
        %v2094 = vadd.f32 %v1964, %v2084
        %s2095 = scalar_lea.vmem %s8, 512
        %v2096 = vld [vmem:[%s2095] sm:$0xff]
        %v2097 = vld [vmem:[%s2095 + $0x8] sm:$0xff]
        %v2098 = vld [vmem:[%s2095 + $0x10] sm:$0xff]
        %v2099 = vld [vmem:[%s2095 + $0x18] sm:$0xff]
        %v2100 = vld [vmem:[%s2095 + $0x20] sm:$0xff]
        %v2101 = vld [vmem:[%s2095 + $0x28] sm:$0xff]
        %v2102 = vld [vmem:[%s2095 + $0x30] sm:$0xff]
        %v2103 = vld [vmem:[%s2095 + $0x38] sm:$0xff]
        %v2104 = vld [vmem:[%s2095 + $0x40] sm:$0xff]
        %v2105 = vld [vmem:[%s2095 + $0x48] sm:$0xff]
        %v2106 = vld [vmem:[%s2095 + $0x50] sm:$0xff]
        %v2107 = vld [vmem:[%s2095 + $0x58] sm:$0xff]
        %v2108 = vld [vmem:[%s2095 + $0x60] sm:$0xff]
        %v2109 = vld [vmem:[%s2095 + $0x68] sm:$0xff]
        %v2110 = vld [vmem:[%s2095 + $0x70] sm:$0xff]
        %v2111 = vld [vmem:[%s2095 + $0x78] sm:$0xff]
        %2112 = vmatprep.subr.mxu0 0.0
        %2113 = vmatpush1.msra.mxu0 %v2096
        %2114 = vmatprep.subr.mxu0 0.0
        %2115 = vmatpush1.msra.mxu0 %v2097
        %2116 = vmatprep.subr.mxu0 0.0
        %2117 = vmatpush1.msra.mxu0 %v2098
        %2118 = vmatprep.subr.mxu0 0.0
        %2119 = vmatpush1.msra.mxu0 %v2099
        %2120 = vmatprep.subr.mxu0 0.0
        %2121 = vmatpush1.msra.mxu0 %v2100
        %2122 = vmatprep.subr.mxu0 0.0
        %2123 = vmatpush1.msra.mxu0 %v2101
        %2124 = vmatprep.subr.mxu0 0.0
        %2125 = vmatpush1.msra.mxu0 %v2102
        %2126 = vmatprep.subr.mxu0 0.0
        %2127 = vmatpush1.msra.mxu0 %v2103
        %2128 = vmatprep.subr.mxu0 0.0
        %2129 = vmatpush1.msra.mxu0 %v2104
        %2130 = vmatprep.subr.mxu0 0.0
        %2131 = vmatpush1.msra.mxu0 %v2105
        %2132 = vmatprep.subr.mxu0 0.0
        %2133 = vmatpush1.msra.mxu0 %v2106
        %2134 = vmatprep.subr.mxu0 0.0
        %2135 = vmatpush1.msra.mxu0 %v2107
        %2136 = vmatprep.subr.mxu0 0.0
        %2137 = vmatpush1.msra.mxu0 %v2108
        %2138 = vmatprep.subr.mxu0 0.0
        %2139 = vmatpush1.msra.mxu0 %v2109
        %2140 = vmatprep.subr.mxu0 0.0
        %2141 = vmatpush1.msra.mxu0 %v2110
        %2142 = vmatprep.subr.mxu0 0.0
        %2143 = vmatpush1.msra.mxu0 %v2111
        %2144 = vmatprep.subr.mxu0 0.0
        %2145 = vmatpush1.msra.mxu0 0.0
        %2146 = vmatprep.subr.mxu0 0.0
        %2147 = vmatpush1.msra.mxu0 0.0
        %2148 = vmatprep.subr.mxu0 0.0
        %2149 = vmatpush1.msra.mxu0 0.0
        %2150 = vmatprep.subr.mxu0 0.0
        %2151 = vmatpush1.msra.mxu0 0.0
        %2152 = vmatprep.subr.mxu0 0.0
        %2153 = vmatpush1.msra.mxu0 0.0
        %2154 = vmatprep.subr.mxu0 0.0
        %2155 = vmatpush1.msra.mxu0 0.0
        %2156 = vmatprep.subr.mxu0 0.0
        %2157 = vmatpush1.msra.mxu0 0.0
        %2158 = vmatprep.subr.mxu0 0.0
        %2159 = vmatpush1.msra.mxu0 0.0
        %2160 = vmatprep.subr.mxu0 0.0
        %2161 = vmatpush1.msra.mxu0 0.0
        %2162 = vmatprep.subr.mxu0 0.0
        %2163 = vmatpush1.msra.mxu0 0.0
        %2164 = vmatprep.subr.mxu0 0.0
        %2165 = vmatpush1.msra.mxu0 0.0
        %2166 = vmatprep.subr.mxu0 0.0
        %2167 = vmatpush1.msra.mxu0 0.0
        %2168 = vmatprep.subr.mxu0 0.0
        %2169 = vmatpush1.msra.mxu0 0.0
        %2170 = vmatprep.subr.mxu0 0.0
        %2171 = vmatpush1.msra.mxu0 0.0
        %2172 = vmatprep.subr.mxu0 0.0
        %2173 = vmatpush1.msra.mxu0 0.0
        %2174 = vmatprep.subr.mxu0 0.0
        %2175 = vmatpush1.msra.mxu0 0.0
        %2176 = vmatprep.mubr.f32.mxu0 0.0
        %2177 = vmatmul.mubr.f32.gmra.mrb[0].mxu0 %v1526
        %v2178 = vpop.f32.mrb[0].mxu0
        %v2179 = vadd.f32 0.0, %v2178
        %v2180 = vpop.f32.mrb[0].mxu0
        %2181 = vmatprep.mubr.f32.mxu0 0.0
        %2182 = vmatmul.mubr.f32.gmra.mrb[0].mxu0 %v1527
        %v2183 = vpop.f32.mrb[0].mxu0
        %v2184 = vadd.f32 0.0, %v2183
        %v2185 = vpop.f32.mrb[0].mxu0
        %2186 = vmatprep.mubr.f32.mxu0 0.0
        %2187 = vmatmul.mubr.f32.gmra.mrb[0].mxu0 %v1528
        %v2188 = vpop.f32.mrb[0].mxu0
        %v2189 = vadd.f32 0.0, %v2188
        %v2190 = vpop.f32.mrb[0].mxu0
        %2191 = vmatprep.mubr.f32.mxu0 0.0
        %2192 = vmatmul.mubr.f32.gmra.mrb[0].mxu0 %v1529
        %v2193 = vpop.f32.mrb[0].mxu0
        %v2194 = vadd.f32 0.0, %v2193
        %v2195 = vpop.f32.mrb[0].mxu0
        %2196 = vmatprep.mubr.f32.mxu0 0.0
        %2197 = vmatmul.mubr.f32.gmra.mrb[0].mxu0 %v1530
        %v2198 = vpop.f32.mrb[0].mxu0
        %v2199 = vadd.f32 0.0, %v2198
        %v2200 = vpop.f32.mrb[0].mxu0
        %2201 = vmatprep.mubr.f32.mxu0 0.0
        %2202 = vmatmul.mubr.f32.gmra.mrb[0].mxu0 %v1531
        %v2203 = vpop.f32.mrb[0].mxu0
        %v2204 = vadd.f32 0.0, %v2203
        %v2205 = vpop.f32.mrb[0].mxu0
        %2206 = vmatprep.mubr.f32.mxu0 0.0
        %2207 = vmatmul.mubr.f32.gmra.mrb[0].mxu0 %v1558
        %v2208 = vpop.f32.mrb[0].mxu0
        %v2209 = vadd.f32 0.0, %v2208
        %v2210 = vpop.f32.mrb[0].mxu0
        %2211 = vmatprep.mubr.f32.mxu0 0.0
        %2212 = vmatmul.mubr.f32.gmra.mrb[0].mxu0 %v1559
        %v2213 = vpop.f32.mrb[0].mxu0
        %v2214 = vadd.f32 0.0, %v2213
        %v2215 = vpop.f32.mrb[0].mxu0
        %2216 = vdwg.mxu0
        %v2217 = vadd.f32 %v2087, %v2179
        %v2218 = vadd.f32 %v2088, %v2184
        %v2219 = vadd.f32 %v2089, %v2189
        %v2220 = vadd.f32 %v2090, %v2194
        %v2221 = vadd.f32 %v2091, %v2199
        %v2222 = vadd.f32 %v2092, %v2204
        %v2223 = vadd.f32 %v2093, %v2209
        %v2224 = vadd.f32 %v2094, %v2214
        %s2225 = scalar_lea.vmem %s8, 640
        %v2226 = vld [vmem:[%s2225] sm:$0xff]
        %v2227 = vld [vmem:[%s2225 + $0x8] sm:$0xff]
        %v2228 = vld [vmem:[%s2225 + $0x10] sm:$0xff]
        %v2229 = vld [vmem:[%s2225 + $0x18] sm:$0xff]
        %v2230 = vld [vmem:[%s2225 + $0x20] sm:$0xff]
        %v2231 = vld [vmem:[%s2225 + $0x28] sm:$0xff]
        %v2232 = vld [vmem:[%s2225 + $0x30] sm:$0xff]
        %v2233 = vld [vmem:[%s2225 + $0x38] sm:$0xff]
        %v2234 = vld [vmem:[%s2225 + $0x40] sm:$0xff]
        %v2235 = vld [vmem:[%s2225 + $0x48] sm:$0xff]
        %v2236 = vld [vmem:[%s2225 + $0x50] sm:$0xff]
        %v2237 = vld [vmem:[%s2225 + $0x58] sm:$0xff]
        %v2238 = vld [vmem:[%s2225 + $0x60] sm:$0xff]
        %v2239 = vld [vmem:[%s2225 + $0x68] sm:$0xff]
        %v2240 = vld [vmem:[%s2225 + $0x70] sm:$0xff]
        %v2241 = vld [vmem:[%s2225 + $0x78] sm:$0xff]
        %2242 = vmatprep.subr.mxu0 0.0
        %2243 = vmatpush1.msra.mxu0 %v2226
        %2244 = vmatprep.subr.mxu0 0.0
        %2245 = vmatpush1.msra.mxu0 %v2227
        %2246 = vmatprep.subr.mxu0 0.0
        %2247 = vmatpush1.msra.mxu0 %v2228
        %2248 = vmatprep.subr.mxu0 0.0
        %2249 = vmatpush1.msra.mxu0 %v2229
        %2250 = vmatprep.subr.mxu0 0.0
        %2251 = vmatpush1.msra.mxu0 %v2230
        %2252 = vmatprep.subr.mxu0 0.0
        %2253 = vmatpush1.msra.mxu0 %v2231
        %2254 = vmatprep.subr.mxu0 0.0
        %2255 = vmatpush1.msra.mxu0 %v2232
        %2256 = vmatprep.subr.mxu0 0.0
        %2257 = vmatpush1.msra.mxu0 %v2233
        %2258 = vmatprep.subr.mxu0 0.0
        %2259 = vmatpush1.msra.mxu0 %v2234
        %2260 = vmatprep.subr.mxu0 0.0
        %2261 = vmatpush1.msra.mxu0 %v2235
        %2262 = vmatprep.subr.mxu0 0.0
        %2263 = vmatpush1.msra.mxu0 %v2236
        %2264 = vmatprep.subr.mxu0 0.0
        %2265 = vmatpush1.msra.mxu0 %v2237
        %2266 = vmatprep.subr.mxu0 0.0
        %2267 = vmatpush1.msra.mxu0 %v2238
        %2268 = vmatprep.subr.mxu0 0.0
        %2269 = vmatpush1.msra.mxu0 %v2239
        %2270 = vmatprep.subr.mxu0 0.0
        %2271 = vmatpush1.msra.mxu0 %v2240
        %2272 = vmatprep.subr.mxu0 0.0
        %2273 = vmatpush1.msra.mxu0 %v2241
        %2274 = vmatprep.subr.mxu0 0.0
        %2275 = vmatpush1.msra.mxu0 0.0
        %2276 = vmatprep.subr.mxu0 0.0
        %2277 = vmatpush1.msra.mxu0 0.0
        %2278 = vmatprep.subr.mxu0 0.0
        %2279 = vmatpush1.msra.mxu0 0.0
        %2280 = vmatprep.subr.mxu0 0.0
        %2281 = vmatpush1.msra.mxu0 0.0
        %2282 = vmatprep.subr.mxu0 0.0
        %2283 = vmatpush1.msra.mxu0 0.0
        %2284 = vmatprep.subr.mxu0 0.0
        %2285 = vmatpush1.msra.mxu0 0.0
        %2286 = vmatprep.subr.mxu0 0.0
        %2287 = vmatpush1.msra.mxu0 0.0
        %2288 = vmatprep.subr.mxu0 0.0
        %2289 = vmatpush1.msra.mxu0 0.0
        %2290 = vmatprep.subr.mxu0 0.0
        %2291 = vmatpush1.msra.mxu0 0.0
        %2292 = vmatprep.subr.mxu0 0.0
        %2293 = vmatpush1.msra.mxu0 0.0
        %2294 = vmatprep.subr.mxu0 0.0
        %2295 = vmatpush1.msra.mxu0 0.0
        %2296 = vmatprep.subr.mxu0 0.0
        %2297 = vmatpush1.msra.mxu0 0.0
        %2298 = vmatprep.subr.mxu0 0.0
        %2299 = vmatpush1.msra.mxu0 0.0
        %2300 = vmatprep.subr.mxu0 0.0
        %2301 = vmatpush1.msra.mxu0 0.0
        %2302 = vmatprep.subr.mxu0 0.0
        %2303 = vmatpush1.msra.mxu0 0.0
        %2304 = vmatprep.subr.mxu0 0.0
        %2305 = vmatpush1.msra.mxu0 0.0
        %2306 = vmatprep.mubr.f32.mxu0 0.0
        %2307 = vmatmul.mubr.f32.gmra.mrb[0].mxu0 %v1562
        %v2308 = vpop.f32.mrb[0].mxu0
        %v2309 = vadd.f32 0.0, %v2308
        %v2310 = vpop.f32.mrb[0].mxu0
        %2311 = vmatprep.mubr.f32.mxu0 0.0
        %2312 = vmatmul.mubr.f32.gmra.mrb[0].mxu0 %v1563
        %v2313 = vpop.f32.mrb[0].mxu0
        %v2314 = vadd.f32 0.0, %v2313
        %v2315 = vpop.f32.mrb[0].mxu0
        %2316 = vmatprep.mubr.f32.mxu0 0.0
        %2317 = vmatmul.mubr.f32.gmra.mrb[0].mxu0 %v1564
        %v2318 = vpop.f32.mrb[0].mxu0
        %v2319 = vadd.f32 0.0, %v2318
        %v2320 = vpop.f32.mrb[0].mxu0
        %2321 = vmatprep.mubr.f32.mxu0 0.0
        %2322 = vmatmul.mubr.f32.gmra.mrb[0].mxu0 %v1565
        %v2323 = vpop.f32.mrb[0].mxu0
        %v2324 = vadd.f32 0.0, %v2323
        %v2325 = vpop.f32.mrb[0].mxu0
        %2326 = vmatprep.mubr.f32.mxu0 0.0
        %2327 = vmatmul.mubr.f32.gmra.mrb[0].mxu0 %v1566
        %v2328 = vpop.f32.mrb[0].mxu0
        %v2329 = vadd.f32 0.0, %v2328
        %v2330 = vpop.f32.mrb[0].mxu0
        %2331 = vmatprep.mubr.f32.mxu0 0.0
        %2332 = vmatmul.mubr.f32.gmra.mrb[0].mxu0 %v1567
        %v2333 = vpop.f32.mrb[0].mxu0
        %v2334 = vadd.f32 0.0, %v2333
        %v2335 = vpop.f32.mrb[0].mxu0
        %2336 = vmatprep.mubr.f32.mxu0 0.0
        %2337 = vmatmul.mubr.f32.gmra.mrb[0].mxu0 %v1568
        %v2338 = vpop.f32.mrb[0].mxu0
        %v2339 = vadd.f32 0.0, %v2338
        %v2340 = vpop.f32.mrb[0].mxu0
        %2341 = vmatprep.mubr.f32.mxu0 0.0
        %2342 = vmatmul.mubr.f32.gmra.mrb[0].mxu0 %v1569
        %v2343 = vpop.f32.mrb[0].mxu0
        %v2344 = vadd.f32 0.0, %v2343
        %v2345 = vpop.f32.mrb[0].mxu0
        %2346 = vdwg.mxu0
        %v2347 = vadd.f32 %v2217, %v2309
        %v2348 = vadd.f32 %v2218, %v2314
        %v2349 = vadd.f32 %v2219, %v2319
        %v2350 = vadd.f32 %v2220, %v2324
        %v2351 = vadd.f32 %v2221, %v2329
        %v2352 = vadd.f32 %v2222, %v2334
        %v2353 = vadd.f32 %v2223, %v2339
        %v2354 = vadd.f32 %v2224, %v2344
        %s2355 = scalar_lea.vmem %s8, 768
        %v2356 = vld [vmem:[%s2355] sm:$0xff]
        %v2357 = vld [vmem:[%s2355 + $0x8] sm:$0xff]
        %v2358 = vld [vmem:[%s2355 + $0x10] sm:$0xff]
        %v2359 = vld [vmem:[%s2355 + $0x18] sm:$0xff]
        %v2360 = vld [vmem:[%s2355 + $0x20] sm:$0xff]
        %v2361 = vld [vmem:[%s2355 + $0x28] sm:$0xff]
        %v2362 = vld [vmem:[%s2355 + $0x30] sm:$0xff]
        %v2363 = vld [vmem:[%s2355 + $0x38] sm:$0xff]
        %v2364 = vld [vmem:[%s2355 + $0x40] sm:$0xff]
        %v2365 = vld [vmem:[%s2355 + $0x48] sm:$0xff]
        %v2366 = vld [vmem:[%s2355 + $0x50] sm:$0xff]
        %v2367 = vld [vmem:[%s2355 + $0x58] sm:$0xff]
        %v2368 = vld [vmem:[%s2355 + $0x60] sm:$0xff]
        %v2369 = vld [vmem:[%s2355 + $0x68] sm:$0xff]
        %v2370 = vld [vmem:[%s2355 + $0x70] sm:$0xff]
        %v2371 = vld [vmem:[%s2355 + $0x78] sm:$0xff]
        %2372 = vmatprep.subr.mxu0 0.0
        %2373 = vmatpush1.msra.mxu0 %v2356
        %2374 = vmatprep.subr.mxu0 0.0
        %2375 = vmatpush1.msra.mxu0 %v2357
        %2376 = vmatprep.subr.mxu0 0.0
        %2377 = vmatpush1.msra.mxu0 %v2358
        %2378 = vmatprep.subr.mxu0 0.0
        %2379 = vmatpush1.msra.mxu0 %v2359
        %2380 = vmatprep.subr.mxu0 0.0
        %2381 = vmatpush1.msra.mxu0 %v2360
        %2382 = vmatprep.subr.mxu0 0.0
        %2383 = vmatpush1.msra.mxu0 %v2361
        %2384 = vmatprep.subr.mxu0 0.0
        %2385 = vmatpush1.msra.mxu0 %v2362
        %2386 = vmatprep.subr.mxu0 0.0
        %2387 = vmatpush1.msra.mxu0 %v2363
        %2388 = vmatprep.subr.mxu0 0.0
        %2389 = vmatpush1.msra.mxu0 %v2364
        %2390 = vmatprep.subr.mxu0 0.0
        %2391 = vmatpush1.msra.mxu0 %v2365
        %2392 = vmatprep.subr.mxu0 0.0
        %2393 = vmatpush1.msra.mxu0 %v2366
        %2394 = vmatprep.subr.mxu0 0.0
        %2395 = vmatpush1.msra.mxu0 %v2367
        %2396 = vmatprep.subr.mxu0 0.0
        %2397 = vmatpush1.msra.mxu0 %v2368
        %2398 = vmatprep.subr.mxu0 0.0
        %2399 = vmatpush1.msra.mxu0 %v2369
        %2400 = vmatprep.subr.mxu0 0.0
        %2401 = vmatpush1.msra.mxu0 %v2370
        %2402 = vmatprep.subr.mxu0 0.0
        %2403 = vmatpush1.msra.mxu0 %v2371
        %2404 = vmatprep.subr.mxu0 0.0
        %2405 = vmatpush1.msra.mxu0 0.0
        %2406 = vmatprep.subr.mxu0 0.0
        %2407 = vmatpush1.msra.mxu0 0.0
        %2408 = vmatprep.subr.mxu0 0.0
        %2409 = vmatpush1.msra.mxu0 0.0
        %2410 = vmatprep.subr.mxu0 0.0
        %2411 = vmatpush1.msra.mxu0 0.0
        %2412 = vmatprep.subr.mxu0 0.0
        %2413 = vmatpush1.msra.mxu0 0.0
        %2414 = vmatprep.subr.mxu0 0.0
        %2415 = vmatpush1.msra.mxu0 0.0
        %2416 = vmatprep.subr.mxu0 0.0
        %2417 = vmatpush1.msra.mxu0 0.0
        %2418 = vmatprep.subr.mxu0 0.0
        %2419 = vmatpush1.msra.mxu0 0.0
        %2420 = vmatprep.subr.mxu0 0.0
        %2421 = vmatpush1.msra.mxu0 0.0
        %2422 = vmatprep.subr.mxu0 0.0
        %2423 = vmatpush1.msra.mxu0 0.0
        %2424 = vmatprep.subr.mxu0 0.0
        %2425 = vmatpush1.msra.mxu0 0.0
        %2426 = vmatprep.subr.mxu0 0.0
        %2427 = vmatpush1.msra.mxu0 0.0
        %2428 = vmatprep.subr.mxu0 0.0
        %2429 = vmatpush1.msra.mxu0 0.0
        %2430 = vmatprep.subr.mxu0 0.0
        %2431 = vmatpush1.msra.mxu0 0.0
        %2432 = vmatprep.subr.mxu0 0.0
        %2433 = vmatpush1.msra.mxu0 0.0
        %2434 = vmatprep.subr.mxu0 0.0
        %2435 = vmatpush1.msra.mxu0 0.0
        %2436 = vmatprep.mubr.f32.mxu0 0.0
        %2437 = vmatmul.mubr.f32.gmra.mrb[0].mxu0 %v1572
        %v2438 = vpop.f32.mrb[0].mxu0
        %v2439 = vadd.f32 0.0, %v2438
        %v2440 = vpop.f32.mrb[0].mxu0
        %2441 = vmatprep.mubr.f32.mxu0 0.0
        %2442 = vmatmul.mubr.f32.gmra.mrb[0].mxu0 %v1573
        %v2443 = vpop.f32.mrb[0].mxu0
        %v2444 = vadd.f32 0.0, %v2443
        %v2445 = vpop.f32.mrb[0].mxu0
        %2446 = vmatprep.mubr.f32.mxu0 0.0
        %2447 = vmatmul.mubr.f32.gmra.mrb[0].mxu0 %v1574
        %v2448 = vpop.f32.mrb[0].mxu0
        %v2449 = vadd.f32 0.0, %v2448
        %v2450 = vpop.f32.mrb[0].mxu0
        %2451 = vmatprep.mubr.f32.mxu0 0.0
        %2452 = vmatmul.mubr.f32.gmra.mrb[0].mxu0 %v1575
        %v2453 = vpop.f32.mrb[0].mxu0
        %v2454 = vadd.f32 0.0, %v2453
        %v2455 = vpop.f32.mrb[0].mxu0
        %2456 = vmatprep.mubr.f32.mxu0 0.0
        %2457 = vmatmul.mubr.f32.gmra.mrb[0].mxu0 %v1576
        %v2458 = vpop.f32.mrb[0].mxu0
        %v2459 = vadd.f32 0.0, %v2458
        %v2460 = vpop.f32.mrb[0].mxu0
        %2461 = vmatprep.mubr.f32.mxu0 0.0
        %2462 = vmatmul.mubr.f32.gmra.mrb[0].mxu0 %v1577
        %v2463 = vpop.f32.mrb[0].mxu0
        %v2464 = vadd.f32 0.0, %v2463
        %v2465 = vpop.f32.mrb[0].mxu0
        %2466 = vmatprep.mubr.f32.mxu0 0.0
        %2467 = vmatmul.mubr.f32.gmra.mrb[0].mxu0 %v1578
        %v2468 = vpop.f32.mrb[0].mxu0
        %v2469 = vadd.f32 0.0, %v2468
        %v2470 = vpop.f32.mrb[0].mxu0
        %2471 = vmatprep.mubr.f32.mxu0 0.0
        %2472 = vmatmul.mubr.f32.gmra.mrb[0].mxu0 %v1579
        %v2473 = vpop.f32.mrb[0].mxu0
        %v2474 = vadd.f32 0.0, %v2473
        %v2475 = vpop.f32.mrb[0].mxu0
        %2476 = vdwg.mxu0
        %v2477 = vadd.f32 %v2347, %v2439
        %v2478 = vadd.f32 %v2348, %v2444
        %v2479 = vadd.f32 %v2349, %v2449
        %v2480 = vadd.f32 %v2350, %v2454
        %v2481 = vadd.f32 %v2351, %v2459
        %v2482 = vadd.f32 %v2352, %v2464
        %v2483 = vadd.f32 %v2353, %v2469
        %v2484 = vadd.f32 %v2354, %v2474
        %s2485 = scalar_lea.vmem %s8, 896
        %v2486 = vld [vmem:[%s2485] sm:$0xff]
        %v2487 = vld [vmem:[%s2485 + $0x8] sm:$0xff]
        %v2488 = vld [vmem:[%s2485 + $0x10] sm:$0xff]
        %v2489 = vld [vmem:[%s2485 + $0x18] sm:$0xff]
        %v2490 = vld [vmem:[%s2485 + $0x20] sm:$0xff]
        %v2491 = vld [vmem:[%s2485 + $0x28] sm:$0xff]
        %v2492 = vld [vmem:[%s2485 + $0x30] sm:$0xff]
        %v2493 = vld [vmem:[%s2485 + $0x38] sm:$0xff]
        %v2494 = vld [vmem:[%s2485 + $0x40] sm:$0xff]
        %v2495 = vld [vmem:[%s2485 + $0x48] sm:$0xff]
        %v2496 = vld [vmem:[%s2485 + $0x50] sm:$0xff]
        %v2497 = vld [vmem:[%s2485 + $0x58] sm:$0xff]
        %v2498 = vld [vmem:[%s2485 + $0x60] sm:$0xff]
        %v2499 = vld [vmem:[%s2485 + $0x68] sm:$0xff]
        %v2500 = vld [vmem:[%s2485 + $0x70] sm:$0xff]
        %v2501 = vld [vmem:[%s2485 + $0x78] sm:$0xff]
        %2502 = vmatprep.subr.mxu0 0.0
        %2503 = vmatpush1.msra.mxu0 %v2486
        %2504 = vmatprep.subr.mxu0 0.0
        %2505 = vmatpush1.msra.mxu0 %v2487
        %2506 = vmatprep.subr.mxu0 0.0
        %2507 = vmatpush1.msra.mxu0 %v2488
        %2508 = vmatprep.subr.mxu0 0.0
        %2509 = vmatpush1.msra.mxu0 %v2489
        %2510 = vmatprep.subr.mxu0 0.0
        %2511 = vmatpush1.msra.mxu0 %v2490
        %2512 = vmatprep.subr.mxu0 0.0
        %2513 = vmatpush1.msra.mxu0 %v2491
        %2514 = vmatprep.subr.mxu0 0.0
        %2515 = vmatpush1.msra.mxu0 %v2492
        %2516 = vmatprep.subr.mxu0 0.0
        %2517 = vmatpush1.msra.mxu0 %v2493
        %2518 = vmatprep.subr.mxu0 0.0
        %2519 = vmatpush1.msra.mxu0 %v2494
        %2520 = vmatprep.subr.mxu0 0.0
        %2521 = vmatpush1.msra.mxu0 %v2495
        %2522 = vmatprep.subr.mxu0 0.0
        %2523 = vmatpush1.msra.mxu0 %v2496
        %2524 = vmatprep.subr.mxu0 0.0
        %2525 = vmatpush1.msra.mxu0 %v2497
        %2526 = vmatprep.subr.mxu0 0.0
        %2527 = vmatpush1.msra.mxu0 %v2498
        %2528 = vmatprep.subr.mxu0 0.0
        %2529 = vmatpush1.msra.mxu0 %v2499
        %2530 = vmatprep.subr.mxu0 0.0
        %2531 = vmatpush1.msra.mxu0 %v2500
        %2532 = vmatprep.subr.mxu0 0.0
        %2533 = vmatpush1.msra.mxu0 %v2501
        %2534 = vmatprep.subr.mxu0 0.0
        %2535 = vmatpush1.msra.mxu0 0.0
        %2536 = vmatprep.subr.mxu0 0.0
        %2537 = vmatpush1.msra.mxu0 0.0
        %2538 = vmatprep.subr.mxu0 0.0
        %2539 = vmatpush1.msra.mxu0 0.0
        %2540 = vmatprep.subr.mxu0 0.0
        %2541 = vmatpush1.msra.mxu0 0.0
        %2542 = vmatprep.subr.mxu0 0.0
        %2543 = vmatpush1.msra.mxu0 0.0
        %2544 = vmatprep.subr.mxu0 0.0
        %2545 = vmatpush1.msra.mxu0 0.0
        %2546 = vmatprep.subr.mxu0 0.0
        %2547 = vmatpush1.msra.mxu0 0.0
        %2548 = vmatprep.subr.mxu0 0.0
        %2549 = vmatpush1.msra.mxu0 0.0
        %2550 = vmatprep.subr.mxu0 0.0
        %2551 = vmatpush1.msra.mxu0 0.0
        %2552 = vmatprep.subr.mxu0 0.0
        %2553 = vmatpush1.msra.mxu0 0.0
        %2554 = vmatprep.subr.mxu0 0.0
        %2555 = vmatpush1.msra.mxu0 0.0
        %2556 = vmatprep.subr.mxu0 0.0
        %2557 = vmatpush1.msra.mxu0 0.0
        %2558 = vmatprep.subr.mxu0 0.0
        %2559 = vmatpush1.msra.mxu0 0.0
        %2560 = vmatprep.subr.mxu0 0.0
        %2561 = vmatpush1.msra.mxu0 0.0
        %2562 = vmatprep.subr.mxu0 0.0
        %2563 = vmatpush1.msra.mxu0 0.0
        %2564 = vmatprep.subr.mxu0 0.0
        %2565 = vmatpush1.msra.mxu0 0.0
        %2566 = vmatprep.mubr.f32.mxu0 0.0
        %2567 = vmatmul.mubr.f32.gmra.mrb[0].mxu0 %v1528
        %v2568 = vpop.f32.mrb[0].mxu0
        %v2569 = vadd.f32 0.0, %v2568
        %v2570 = vpop.f32.mrb[0].mxu0
        %2571 = vmatprep.mubr.f32.mxu0 0.0
        %2572 = vmatmul.mubr.f32.gmra.mrb[0].mxu0 %v1529
        %v2573 = vpop.f32.mrb[0].mxu0
        %v2574 = vadd.f32 0.0, %v2573
        %v2575 = vpop.f32.mrb[0].mxu0
        %2576 = vmatprep.mubr.f32.mxu0 0.0
        %2577 = vmatmul.mubr.f32.gmra.mrb[0].mxu0 %v1530
        %v2578 = vpop.f32.mrb[0].mxu0
        %v2579 = vadd.f32 0.0, %v2578
        %v2580 = vpop.f32.mrb[0].mxu0
        %2581 = vmatprep.mubr.f32.mxu0 0.0
        %2582 = vmatmul.mubr.f32.gmra.mrb[0].mxu0 %v1531
        %v2583 = vpop.f32.mrb[0].mxu0
        %v2584 = vadd.f32 0.0, %v2583
        %v2585 = vpop.f32.mrb[0].mxu0
        %2586 = vmatprep.mubr.f32.mxu0 0.0
        %2587 = vmatmul.mubr.f32.gmra.mrb[0].mxu0 %v1558
        %v2588 = vpop.f32.mrb[0].mxu0
        %v2589 = vadd.f32 0.0, %v2588
        %v2590 = vpop.f32.mrb[0].mxu0
        %2591 = vmatprep.mubr.f32.mxu0 0.0
        %2592 = vmatmul.mubr.f32.gmra.mrb[0].mxu0 %v1559
        %v2593 = vpop.f32.mrb[0].mxu0
        %v2594 = vadd.f32 0.0, %v2593
        %v2595 = vpop.f32.mrb[0].mxu0
        %2596 = vmatprep.mubr.f32.mxu0 0.0
        %2597 = vmatmul.mubr.f32.gmra.mrb[0].mxu0 %v1580
        %v2598 = vpop.f32.mrb[0].mxu0
        %v2599 = vadd.f32 0.0, %v2598
        %v2600 = vpop.f32.mrb[0].mxu0
        %2601 = vmatprep.mubr.f32.mxu0 0.0
        %2602 = vmatmul.mubr.f32.gmra.mrb[0].mxu0 %v1581
        %v2603 = vpop.f32.mrb[0].mxu0
        %v2604 = vadd.f32 0.0, %v2603
        %v2605 = vpop.f32.mrb[0].mxu0
        %2606 = vdwg.mxu0
        %v2607 = vadd.f32 %v2477, %v2569
        %v2608 = vadd.f32 %v2478, %v2574
        %v2609 = vadd.f32 %v2479, %v2579
        %v2610 = vadd.f32 %v2480, %v2584
        %v2611 = vadd.f32 %v2481, %v2589
        %v2612 = vadd.f32 %v2482, %v2594
        %v2613 = vadd.f32 %v2483, %v2599
        %v2614 = vadd.f32 %v2484, %v2604
        %s2615 = scalar_lea.vmem %s8, 1024
        %v2616 = vld [vmem:[%s2615] sm:$0xff]
        %v2617 = vld [vmem:[%s2615 + $0x8] sm:$0xff]
        %v2618 = vld [vmem:[%s2615 + $0x10] sm:$0xff]
        %v2619 = vld [vmem:[%s2615 + $0x18] sm:$0xff]
        %v2620 = vld [vmem:[%s2615 + $0x20] sm:$0xff]
        %v2621 = vld [vmem:[%s2615 + $0x28] sm:$0xff]
        %v2622 = vld [vmem:[%s2615 + $0x30] sm:$0xff]
        %v2623 = vld [vmem:[%s2615 + $0x38] sm:$0xff]
        %v2624 = vld [vmem:[%s2615 + $0x40] sm:$0xff]
        %v2625 = vld [vmem:[%s2615 + $0x48] sm:$0xff]
        %v2626 = vld [vmem:[%s2615 + $0x50] sm:$0xff]
        %v2627 = vld [vmem:[%s2615 + $0x58] sm:$0xff]
        %v2628 = vld [vmem:[%s2615 + $0x60] sm:$0xff]
        %v2629 = vld [vmem:[%s2615 + $0x68] sm:$0xff]
        %v2630 = vld [vmem:[%s2615 + $0x70] sm:$0xff]
        %v2631 = vld [vmem:[%s2615 + $0x78] sm:$0xff]
        %2632 = vmatprep.subr.mxu0 0.0
        %2633 = vmatpush1.msra.mxu0 %v2616
        %2634 = vmatprep.subr.mxu0 0.0
        %2635 = vmatpush1.msra.mxu0 %v2617
        %2636 = vmatprep.subr.mxu0 0.0
        %2637 = vmatpush1.msra.mxu0 %v2618
        %2638 = vmatprep.subr.mxu0 0.0
        %2639 = vmatpush1.msra.mxu0 %v2619
        %2640 = vmatprep.subr.mxu0 0.0
        %2641 = vmatpush1.msra.mxu0 %v2620
        %2642 = vmatprep.subr.mxu0 0.0
        %2643 = vmatpush1.msra.mxu0 %v2621
        %2644 = vmatprep.subr.mxu0 0.0
        %2645 = vmatpush1.msra.mxu0 %v2622
        %2646 = vmatprep.subr.mxu0 0.0
        %2647 = vmatpush1.msra.mxu0 %v2623
        %2648 = vmatprep.subr.mxu0 0.0
        %2649 = vmatpush1.msra.mxu0 %v2624
        %2650 = vmatprep.subr.mxu0 0.0
        %2651 = vmatpush1.msra.mxu0 %v2625
        %2652 = vmatprep.subr.mxu0 0.0
        %2653 = vmatpush1.msra.mxu0 %v2626
        %2654 = vmatprep.subr.mxu0 0.0
        %2655 = vmatpush1.msra.mxu0 %v2627
        %2656 = vmatprep.subr.mxu0 0.0
        %2657 = vmatpush1.msra.mxu0 %v2628
        %2658 = vmatprep.subr.mxu0 0.0
        %2659 = vmatpush1.msra.mxu0 %v2629
        %2660 = vmatprep.subr.mxu0 0.0
        %2661 = vmatpush1.msra.mxu0 %v2630
        %2662 = vmatprep.subr.mxu0 0.0
        %2663 = vmatpush1.msra.mxu0 %v2631
        %2664 = vmatprep.subr.mxu0 0.0
        %2665 = vmatpush1.msra.mxu0 0.0
        %2666 = vmatprep.subr.mxu0 0.0
        %2667 = vmatpush1.msra.mxu0 0.0
        %2668 = vmatprep.subr.mxu0 0.0
        %2669 = vmatpush1.msra.mxu0 0.0
        %2670 = vmatprep.subr.mxu0 0.0
        %2671 = vmatpush1.msra.mxu0 0.0
        %2672 = vmatprep.subr.mxu0 0.0
        %2673 = vmatpush1.msra.mxu0 0.0
        %2674 = vmatprep.subr.mxu0 0.0
        %2675 = vmatpush1.msra.mxu0 0.0
        %2676 = vmatprep.subr.mxu0 0.0
        %2677 = vmatpush1.msra.mxu0 0.0
        %2678 = vmatprep.subr.mxu0 0.0
        %2679 = vmatpush1.msra.mxu0 0.0
        %2680 = vmatprep.subr.mxu0 0.0
        %2681 = vmatpush1.msra.mxu0 0.0
        %2682 = vmatprep.subr.mxu0 0.0
        %2683 = vmatpush1.msra.mxu0 0.0
        %2684 = vmatprep.subr.mxu0 0.0
        %2685 = vmatpush1.msra.mxu0 0.0
        %2686 = vmatprep.subr.mxu0 0.0
        %2687 = vmatpush1.msra.mxu0 0.0
        %2688 = vmatprep.subr.mxu0 0.0
        %2689 = vmatpush1.msra.mxu0 0.0
        %2690 = vmatprep.subr.mxu0 0.0
        %2691 = vmatpush1.msra.mxu0 0.0
        %2692 = vmatprep.subr.mxu0 0.0
        %2693 = vmatpush1.msra.mxu0 0.0
        %2694 = vmatprep.subr.mxu0 0.0
        %2695 = vmatpush1.msra.mxu0 0.0
        %2696 = vmatprep.mubr.f32.mxu0 0.0
        %2697 = vmatmul.mubr.f32.gmra.mrb[0].mxu0 %v1584
        %v2698 = vpop.f32.mrb[0].mxu0
        %v2699 = vadd.f32 0.0, %v2698
        %v2700 = vpop.f32.mrb[0].mxu0
        %2701 = vmatprep.mubr.f32.mxu0 0.0
        %2702 = vmatmul.mubr.f32.gmra.mrb[0].mxu0 %v1585
        %v2703 = vpop.f32.mrb[0].mxu0
        %v2704 = vadd.f32 0.0, %v2703
        %v2705 = vpop.f32.mrb[0].mxu0
        %2706 = vmatprep.mubr.f32.mxu0 0.0
        %2707 = vmatmul.mubr.f32.gmra.mrb[0].mxu0 %v1586
        %v2708 = vpop.f32.mrb[0].mxu0
        %v2709 = vadd.f32 0.0, %v2708
        %v2710 = vpop.f32.mrb[0].mxu0
        %2711 = vmatprep.mubr.f32.mxu0 0.0
        %2712 = vmatmul.mubr.f32.gmra.mrb[0].mxu0 %v1587
        %v2713 = vpop.f32.mrb[0].mxu0
        %v2714 = vadd.f32 0.0, %v2713
        %v2715 = vpop.f32.mrb[0].mxu0
        %2716 = vmatprep.mubr.f32.mxu0 0.0
        %2717 = vmatmul.mubr.f32.gmra.mrb[0].mxu0 %v1588
        %v2718 = vpop.f32.mrb[0].mxu0
        %v2719 = vadd.f32 0.0, %v2718
        %v2720 = vpop.f32.mrb[0].mxu0
        %2721 = vmatprep.mubr.f32.mxu0 0.0
        %2722 = vmatmul.mubr.f32.gmra.mrb[0].mxu0 %v1589
        %v2723 = vpop.f32.mrb[0].mxu0
        %v2724 = vadd.f32 0.0, %v2723
        %v2725 = vpop.f32.mrb[0].mxu0
        %2726 = vmatprep.mubr.f32.mxu0 0.0
        %2727 = vmatmul.mubr.f32.gmra.mrb[0].mxu0 %v1590
        %v2728 = vpop.f32.mrb[0].mxu0
        %v2729 = vadd.f32 0.0, %v2728
        %v2730 = vpop.f32.mrb[0].mxu0
        %2731 = vmatprep.mubr.f32.mxu0 0.0
        %2732 = vmatmul.mubr.f32.gmra.mrb[0].mxu0 %v1591
        %v2733 = vpop.f32.mrb[0].mxu0
        %v2734 = vadd.f32 0.0, %v2733
        %v2735 = vpop.f32.mrb[0].mxu0
        %2736 = vdwg.mxu0
        %v2737 = vadd.f32 %v2607, %v2699
        %v2738 = vadd.f32 %v2608, %v2704
        %v2739 = vadd.f32 %v2609, %v2709
        %v2740 = vadd.f32 %v2610, %v2714
        %v2741 = vadd.f32 %v2611, %v2719
        %v2742 = vadd.f32 %v2612, %v2724
        %v2743 = vadd.f32 %v2613, %v2729
        %v2744 = vadd.f32 %v2614, %v2734
        %v2745 = vld [vmem:[%s9] sm:$0x1]
        %v2747 = vlaneseq
        %v2748 = vshrl.u32 %v2747, 7
        %v2749 = vsub.s32 0, %v2748
        %v2750 = vrot.slane %v2745, %v2749
        %v2752 = vadd.f32 %v2737, %v2750
        %v2753 = vadd.f32 %v2738, %v2750
        %v2754 = vadd.f32 %v2739, %v2750
        %v2755 = vadd.f32 %v2740, %v2750
        %v2756 = vadd.f32 %v2741, %v2750
        %v2757 = vadd.f32 %v2742, %v2750
        %v2758 = vadd.f32 %v2743, %v2750
        %v2759 = vadd.f32 %v2744, %v2750
        %s2760 = scalar_lea.vmem %s2, 1
        %v2761 = vld [vmem:[%s2760] sm:$0x1]
        %s2762 = scalar_lea.vmem %s3, 128
        %v2763 = vld [vmem:[%s2762] sm:$0xff]
        %v2764 = vld [vmem:[%s2762 + $0x8] sm:$0xff]
        %v2765 = vld [vmem:[%s2762 + $0x10] sm:$0xff]
        %v2766 = vld [vmem:[%s2762 + $0x18] sm:$0xff]
        %v2767 = vld [vmem:[%s2762 + $0x20] sm:$0xff]
        %v2768 = vld [vmem:[%s2762 + $0x28] sm:$0xff]
        %v2769 = vld [vmem:[%s2762 + $0x30] sm:$0xff]
        %v2770 = vld [vmem:[%s2762 + $0x38] sm:$0xff]
        %v2771 = vld [vmem:[%s2762 + $0x40] sm:$0xff]
        %v2772 = vld [vmem:[%s2762 + $0x48] sm:$0xff]
        %v2773 = vld [vmem:[%s2762 + $0x50] sm:$0xff]
        %v2774 = vld [vmem:[%s2762 + $0x58] sm:$0xff]
        %v2775 = vld [vmem:[%s2762 + $0x60] sm:$0xff]
        %v2776 = vld [vmem:[%s2762 + $0x68] sm:$0xff]
        %v2777 = vld [vmem:[%s2762 + $0x70] sm:$0xff]
        %v2778 = vld [vmem:[%s2762 + $0x78] sm:$0xff]
        %s2779 = scalar_lea.vmem %s4, 1
        %v2780 = vld [vmem:[%s2779] sm:$0x1]
        %s2781 = scalar_lea.vmem %s5, 128
        %v2782 = vld [vmem:[%s2781] sm:$0xff]
        %v2783 = vld [vmem:[%s2781 + $0x8] sm:$0xff]
        %v2784 = vld [vmem:[%s2781 + $0x10] sm:$0xff]
        %v2785 = vld [vmem:[%s2781 + $0x18] sm:$0xff]
        %v2786 = vld [vmem:[%s2781 + $0x20] sm:$0xff]
        %v2787 = vld [vmem:[%s2781 + $0x28] sm:$0xff]
        %v2788 = vld [vmem:[%s2781 + $0x30] sm:$0xff]
        %v2789 = vld [vmem:[%s2781 + $0x38] sm:$0xff]
        %v2790 = vld [vmem:[%s2781 + $0x40] sm:$0xff]
        %v2791 = vld [vmem:[%s2781 + $0x48] sm:$0xff]
        %v2792 = vld [vmem:[%s2781 + $0x50] sm:$0xff]
        %v2793 = vld [vmem:[%s2781 + $0x58] sm:$0xff]
        %v2794 = vld [vmem:[%s2781 + $0x60] sm:$0xff]
        %v2795 = vld [vmem:[%s2781 + $0x68] sm:$0xff]
        %v2796 = vld [vmem:[%s2781 + $0x70] sm:$0xff]
        %v2797 = vld [vmem:[%s2781 + $0x78] sm:$0xff]
        %s2798 = scalar_lea.vmem %s6, 128
        %v2799 = vld [vmem:[%s2798] sm:$0xff]
        %v2800 = vld [vmem:[%s2798 + $0x8] sm:$0xff]
        %v2801 = vld [vmem:[%s2798 + $0x10] sm:$0xff]
        %v2802 = vld [vmem:[%s2798 + $0x18] sm:$0xff]
        %v2803 = vld [vmem:[%s2798 + $0x20] sm:$0xff]
        %v2804 = vld [vmem:[%s2798 + $0x28] sm:$0xff]
        %v2805 = vld [vmem:[%s2798 + $0x30] sm:$0xff]
        %v2806 = vld [vmem:[%s2798 + $0x38] sm:$0xff]
        %v2807 = vld [vmem:[%s2798 + $0x40] sm:$0xff]
        %v2808 = vld [vmem:[%s2798 + $0x48] sm:$0xff]
        %v2809 = vld [vmem:[%s2798 + $0x50] sm:$0xff]
        %v2810 = vld [vmem:[%s2798 + $0x58] sm:$0xff]
        %v2811 = vld [vmem:[%s2798 + $0x60] sm:$0xff]
        %v2812 = vld [vmem:[%s2798 + $0x68] sm:$0xff]
        %v2813 = vld [vmem:[%s2798 + $0x70] sm:$0xff]
        %v2814 = vld [vmem:[%s2798 + $0x78] sm:$0xff]
        %s2815 = scalar_lea.vmem %s7, 1
        %v2816 = vld [vmem:[%s2815] sm:$0x1]
        %2817 = vmatprep.subr.mxu0 0.0
        %2818 = vmatpush1.msra.mxu0 %v509
        %2819 = vmatprep.subr.mxu0 0.0
        %2820 = vmatpush1.msra.mxu0 %v510
        %2821 = vmatprep.subr.mxu0 0.0
        %2822 = vmatpush1.msra.mxu0 %v511
        %2823 = vmatprep.subr.mxu0 0.0
        %2824 = vmatpush1.msra.mxu0 %v512
        %2825 = vmatprep.subr.mxu0 0.0
        %2826 = vmatpush1.msra.mxu0 %v513
        %2827 = vmatprep.subr.mxu0 0.0
        %2828 = vmatpush1.msra.mxu0 %v514
        %2829 = vmatprep.subr.mxu0 0.0
        %2830 = vmatpush1.msra.mxu0 %v515
        %2831 = vmatprep.subr.mxu0 0.0
        %2832 = vmatpush1.msra.mxu0 %v516
        %2833 = vmatprep.subr.mxu0 0.0
        %2834 = vmatpush1.msra.mxu0 %v517
        %2835 = vmatprep.subr.mxu0 0.0
        %2836 = vmatpush1.msra.mxu0 %v518
        %2837 = vmatprep.subr.mxu0 0.0
        %2838 = vmatpush1.msra.mxu0 %v519
        %2839 = vmatprep.subr.mxu0 0.0
        %2840 = vmatpush1.msra.mxu0 %v520
        %2841 = vmatprep.subr.mxu0 0.0
        %2842 = vmatpush1.msra.mxu0 %v521
        %2843 = vmatprep.subr.mxu0 0.0
        %2844 = vmatpush1.msra.mxu0 %v522
        %2845 = vmatprep.subr.mxu0 0.0
        %2846 = vmatpush1.msra.mxu0 %v523
        %2847 = vmatprep.subr.mxu0 0.0
        %2848 = vmatpush1.msra.mxu0 %v524
        %2849 = vmatprep.subr.mxu0 0.0
        %2850 = vmatpush1.msra.mxu0 0.0
        %2851 = vmatprep.subr.mxu0 0.0
        %2852 = vmatpush1.msra.mxu0 0.0
        %2853 = vmatprep.subr.mxu0 0.0
        %2854 = vmatpush1.msra.mxu0 0.0
        %2855 = vmatprep.subr.mxu0 0.0
        %2856 = vmatpush1.msra.mxu0 0.0
        %2857 = vmatprep.subr.mxu0 0.0
        %2858 = vmatpush1.msra.mxu0 0.0
        %2859 = vmatprep.subr.mxu0 0.0
        %2860 = vmatpush1.msra.mxu0 0.0
        %2861 = vmatprep.subr.mxu0 0.0
        %2862 = vmatpush1.msra.mxu0 0.0
        %2863 = vmatprep.subr.mxu0 0.0
        %2864 = vmatpush1.msra.mxu0 0.0
        %2865 = vmatprep.subr.mxu0 0.0
        %2866 = vmatpush1.msra.mxu0 0.0
        %2867 = vmatprep.subr.mxu0 0.0
        %2868 = vmatpush1.msra.mxu0 0.0
        %2869 = vmatprep.subr.mxu0 0.0
        %2870 = vmatpush1.msra.mxu0 0.0
        %2871 = vmatprep.subr.mxu0 0.0
        %2872 = vmatpush1.msra.mxu0 0.0
        %2873 = vmatprep.subr.mxu0 0.0
        %2874 = vmatpush1.msra.mxu0 0.0
        %2875 = vmatprep.subr.mxu0 0.0
        %2876 = vmatpush1.msra.mxu0 0.0
        %2877 = vmatprep.subr.mxu0 0.0
        %2878 = vmatpush1.msra.mxu0 0.0
        %2879 = vmatprep.subr.mxu0 0.0
        %2880 = vmatpush1.msra.mxu0 0.0
        %2881 = vmatprep.mubr.f32.mxu0 0.0
        %2882 = vmatmul.mubr.f32.gmra.mrb[0].mxu0 %v2752
        %v2883 = vpop.f32.mrb[0].mxu0
        %v2884 = vadd.f32 0.0, %v2883
        %v2885 = vpop.f32.mrb[0].mxu0
        %2886 = vmatprep.mubr.f32.mxu0 0.0
        %2887 = vmatmul.mubr.f32.gmra.mrb[0].mxu0 %v2753
        %v2888 = vpop.f32.mrb[0].mxu0
        %v2889 = vadd.f32 0.0, %v2888
        %v2890 = vpop.f32.mrb[0].mxu0
        %2891 = vmatprep.mubr.f32.mxu0 0.0
        %2892 = vmatmul.mubr.f32.gmra.mrb[0].mxu0 %v2754
        %v2893 = vpop.f32.mrb[0].mxu0
        %v2894 = vadd.f32 0.0, %v2893
        %v2895 = vpop.f32.mrb[0].mxu0
        %2896 = vmatprep.mubr.f32.mxu0 0.0
        %2897 = vmatmul.mubr.f32.gmra.mrb[0].mxu0 %v2755
        %v2898 = vpop.f32.mrb[0].mxu0
        %v2899 = vadd.f32 0.0, %v2898
        %v2900 = vpop.f32.mrb[0].mxu0
        %2901 = vmatprep.mubr.f32.mxu0 0.0
        %2902 = vmatmul.mubr.f32.gmra.mrb[0].mxu0 %v2756
        %v2903 = vpop.f32.mrb[0].mxu0
        %v2904 = vadd.f32 0.0, %v2903
        %v2905 = vpop.f32.mrb[0].mxu0
        %2906 = vmatprep.mubr.f32.mxu0 0.0
        %2907 = vmatmul.mubr.f32.gmra.mrb[0].mxu0 %v2757
        %v2908 = vpop.f32.mrb[0].mxu0
        %v2909 = vadd.f32 0.0, %v2908
        %v2910 = vpop.f32.mrb[0].mxu0
        %2911 = vmatprep.mubr.f32.mxu0 0.0
        %2912 = vmatmul.mubr.f32.gmra.mrb[0].mxu0 %v2758
        %v2913 = vpop.f32.mrb[0].mxu0
        %v2914 = vadd.f32 0.0, %v2913
        %v2915 = vpop.f32.mrb[0].mxu0
        %2916 = vmatprep.mubr.f32.mxu0 0.0
        %2917 = vmatmul.mubr.f32.gmra.mrb[0].mxu0 %v2759
        %v2918 = vpop.f32.mrb[0].mxu0
        %v2919 = vadd.f32 0.0, %v2918
        %v2920 = vpop.f32.mrb[0].mxu0
        %2921 = vdwg.mxu0
        %v2922 = vmul.f32 %v2752, %v2752
        %v2923 = vmul.f32 %v2753, %v2753
        %v2924 = vmul.f32 %v2754, %v2754
        %v2925 = vmul.f32 %v2755, %v2755
        %v2926 = vmul.f32 %v2756, %v2756
        %v2927 = vmul.f32 %v2757, %v2757
        %v2928 = vmul.f32 %v2758, %v2758
        %v2929 = vmul.f32 %v2759, %v2759
        %2930 = vmatprep.subr.mxu0 0.0
        %2931 = vmatpush1.msra.mxu0 %v509
        %2932 = vmatprep.subr.mxu0 0.0
        %2933 = vmatpush1.msra.mxu0 %v510
        %2934 = vmatprep.subr.mxu0 0.0
        %2935 = vmatpush1.msra.mxu0 %v511
        %2936 = vmatprep.subr.mxu0 0.0
        %2937 = vmatpush1.msra.mxu0 %v512
        %2938 = vmatprep.subr.mxu0 0.0
        %2939 = vmatpush1.msra.mxu0 %v513
        %2940 = vmatprep.subr.mxu0 0.0
        %2941 = vmatpush1.msra.mxu0 %v514
        %2942 = vmatprep.subr.mxu0 0.0
        %2943 = vmatpush1.msra.mxu0 %v515
        %2944 = vmatprep.subr.mxu0 0.0
        %2945 = vmatpush1.msra.mxu0 %v516
        %2946 = vmatprep.subr.mxu0 0.0
        %2947 = vmatpush1.msra.mxu0 %v517
        %2948 = vmatprep.subr.mxu0 0.0
        %2949 = vmatpush1.msra.mxu0 %v518
        %2950 = vmatprep.subr.mxu0 0.0
        %2951 = vmatpush1.msra.mxu0 %v519
        %2952 = vmatprep.subr.mxu0 0.0
        %2953 = vmatpush1.msra.mxu0 %v520
        %2954 = vmatprep.subr.mxu0 0.0
        %2955 = vmatpush1.msra.mxu0 %v521
        %2956 = vmatprep.subr.mxu0 0.0
        %2957 = vmatpush1.msra.mxu0 %v522
        %2958 = vmatprep.subr.mxu0 0.0
        %2959 = vmatpush1.msra.mxu0 %v523
        %2960 = vmatprep.subr.mxu0 0.0
        %2961 = vmatpush1.msra.mxu0 %v524
        %2962 = vmatprep.subr.mxu0 0.0
        %2963 = vmatpush1.msra.mxu0 0.0
        %2964 = vmatprep.subr.mxu0 0.0
        %2965 = vmatpush1.msra.mxu0 0.0
        %2966 = vmatprep.subr.mxu0 0.0
        %2967 = vmatpush1.msra.mxu0 0.0
        %2968 = vmatprep.subr.mxu0 0.0
        %2969 = vmatpush1.msra.mxu0 0.0
        %2970 = vmatprep.subr.mxu0 0.0
        %2971 = vmatpush1.msra.mxu0 0.0
        %2972 = vmatprep.subr.mxu0 0.0
        %2973 = vmatpush1.msra.mxu0 0.0
        %2974 = vmatprep.subr.mxu0 0.0
        %2975 = vmatpush1.msra.mxu0 0.0
        %2976 = vmatprep.subr.mxu0 0.0
        %2977 = vmatpush1.msra.mxu0 0.0
        %2978 = vmatprep.subr.mxu0 0.0
        %2979 = vmatpush1.msra.mxu0 0.0
        %2980 = vmatprep.subr.mxu0 0.0
        %2981 = vmatpush1.msra.mxu0 0.0
        %2982 = vmatprep.subr.mxu0 0.0
        %2983 = vmatpush1.msra.mxu0 0.0
        %2984 = vmatprep.subr.mxu0 0.0
        %2985 = vmatpush1.msra.mxu0 0.0
        %2986 = vmatprep.subr.mxu0 0.0
        %2987 = vmatpush1.msra.mxu0 0.0
        %2988 = vmatprep.subr.mxu0 0.0
        %2989 = vmatpush1.msra.mxu0 0.0
        %2990 = vmatprep.subr.mxu0 0.0
        %2991 = vmatpush1.msra.mxu0 0.0
        %2992 = vmatprep.subr.mxu0 0.0
        %2993 = vmatpush1.msra.mxu0 0.0
        %2994 = vmatprep.mubr.f32.mxu0 0.0
        %2995 = vmatmul.mubr.f32.gmra.mrb[0].mxu0 %v2922
        %v2996 = vpop.f32.mrb[0].mxu0
        %v2997 = vadd.f32 0.0, %v2996
        %v2998 = vpop.f32.mrb[0].mxu0
        %2999 = vmatprep.mubr.f32.mxu0 0.0
        %3000 = vmatmul.mubr.f32.gmra.mrb[0].mxu0 %v2923
        %v3001 = vpop.f32.mrb[0].mxu0
        %v3002 = vadd.f32 0.0, %v3001
        %v3003 = vpop.f32.mrb[0].mxu0
        %3004 = vmatprep.mubr.f32.mxu0 0.0
        %3005 = vmatmul.mubr.f32.gmra.mrb[0].mxu0 %v2924
        %v3006 = vpop.f32.mrb[0].mxu0
        %v3007 = vadd.f32 0.0, %v3006
        %v3008 = vpop.f32.mrb[0].mxu0
        %3009 = vmatprep.mubr.f32.mxu0 0.0
        %3010 = vmatmul.mubr.f32.gmra.mrb[0].mxu0 %v2925
        %v3011 = vpop.f32.mrb[0].mxu0
        %v3012 = vadd.f32 0.0, %v3011
        %v3013 = vpop.f32.mrb[0].mxu0
        %3014 = vmatprep.mubr.f32.mxu0 0.0
        %3015 = vmatmul.mubr.f32.gmra.mrb[0].mxu0 %v2926
        %v3016 = vpop.f32.mrb[0].mxu0
        %v3017 = vadd.f32 0.0, %v3016
        %v3018 = vpop.f32.mrb[0].mxu0
        %3019 = vmatprep.mubr.f32.mxu0 0.0
        %3020 = vmatmul.mubr.f32.gmra.mrb[0].mxu0 %v2927
        %v3021 = vpop.f32.mrb[0].mxu0
        %v3022 = vadd.f32 0.0, %v3021
        %v3023 = vpop.f32.mrb[0].mxu0
        %3024 = vmatprep.mubr.f32.mxu0 0.0
        %3025 = vmatmul.mubr.f32.gmra.mrb[0].mxu0 %v2928
        %v3026 = vpop.f32.mrb[0].mxu0
        %v3027 = vadd.f32 0.0, %v3026
        %v3028 = vpop.f32.mrb[0].mxu0
        %3029 = vmatprep.mubr.f32.mxu0 0.0
        %3030 = vmatmul.mubr.f32.gmra.mrb[0].mxu0 %v2929
        %v3031 = vpop.f32.mrb[0].mxu0
        %v3032 = vadd.f32 0.0, %v3031
        %v3033 = vpop.f32.mrb[0].mxu0
        %3034 = vdwg.mxu0
        %v3035 = vmul.f32 %v2884, %v2884
        %v3036 = vmul.f32 %v2889, %v2889
        %v3037 = vmul.f32 %v2894, %v2894
        %v3038 = vmul.f32 %v2899, %v2899
        %v3039 = vmul.f32 %v2904, %v2904
        %v3040 = vmul.f32 %v2909, %v2909
        %v3041 = vmul.f32 %v2914, %v2914
        %v3042 = vmul.f32 %v2919, %v2919
        %v3043 = vsub.f32 %v2997, %v3035
        %v3044 = vsub.f32 %v3002, %v3036
        %v3045 = vsub.f32 %v3007, %v3037
        %v3046 = vsub.f32 %v3012, %v3038
        %v3047 = vsub.f32 %v3017, %v3039
        %v3048 = vsub.f32 %v3022, %v3040
        %v3049 = vsub.f32 %v3027, %v3041
        %v3050 = vsub.f32 %v3032, %v3042
        %v3051 = vsub.f32 %v2752, %v2884
        %v3052 = vsub.f32 %v2753, %v2889
        %v3053 = vsub.f32 %v2754, %v2894
        %v3054 = vsub.f32 %v2755, %v2899
        %v3055 = vsub.f32 %v2756, %v2904
        %v3056 = vsub.f32 %v2757, %v2909
        %v3057 = vsub.f32 %v2758, %v2914
        %v3058 = vsub.f32 %v2759, %v2919
        %v3059 = vadd.f32 %v3043, 1e-05
        %v3060 = vadd.f32 %v3044, 1e-05
        %v3061 = vadd.f32 %v3045, 1e-05
        %v3062 = vadd.f32 %v3046, 1e-05
        %v3063 = vadd.f32 %v3047, 1e-05
        %v3064 = vadd.f32 %v3048, 1e-05
        %v3065 = vadd.f32 %v3049, 1e-05
        %v3066 = vadd.f32 %v3050, 1e-05
        %v3067 = vrsqrt.pop %v3059
        %v3068 = vrsqrt.pop %v3060
        %v3069 = vrsqrt.pop %v3061
        %v3070 = vrsqrt.pop %v3062
        %v3071 = vrsqrt.pop %v3063
        %v3072 = vrsqrt.pop %v3064
        %v3073 = vrsqrt.pop %v3065
        %v3074 = vrsqrt.pop %v3066
        %v3075 = vmul.f32 %v3051, %v3067
        %v3076 = vmul.f32 %v3052, %v3068
        %v3077 = vmul.f32 %v3053, %v3069
        %v3078 = vmul.f32 %v3054, %v3070
        %v3079 = vmul.f32 %v3055, %v3071
        %v3080 = vmul.f32 %v3056, %v3072
        %v3081 = vmul.f32 %v3057, %v3073
        %v3082 = vmul.f32 %v3058, %v3074
        %v3084 = vlaneseq
        %v3085 = vshrl.u32 %v3084, 7
        %v3086 = vsub.s32 0, %v3085
        %v3087 = vrot.slane %v2761, %v3086
        %v3089 = vmul.f32 %v3075, %v3087
        %v3090 = vmul.f32 %v3076, %v3087
        %v3091 = vmul.f32 %v3077, %v3087
        %v3092 = vmul.f32 %v3078, %v3087
        %v3093 = vmul.f32 %v3079, %v3087
        %v3094 = vmul.f32 %v3080, %v3087
        %v3095 = vmul.f32 %v3081, %v3087
        %v3096 = vmul.f32 %v3082, %v3087
        %v3098 = vlaneseq
        %v3099 = vshrl.u32 %v3098, 7
        %v3100 = vsub.s32 0, %v3099
        %v3101 = vrot.slane %v2780, %v3100
        %3103 = vmatprep.subr.mxu0 0.0
        %3104 = vmatpush1.msra.mxu0 %v2763
        %3105 = vmatprep.subr.mxu0 0.0
        %3106 = vmatpush1.msra.mxu0 %v2764
        %3107 = vmatprep.subr.mxu0 0.0
        %3108 = vmatpush1.msra.mxu0 %v2765
        %3109 = vmatprep.subr.mxu0 0.0
        %3110 = vmatpush1.msra.mxu0 %v2766
        %3111 = vmatprep.subr.mxu0 0.0
        %3112 = vmatpush1.msra.mxu0 %v2767
        %3113 = vmatprep.subr.mxu0 0.0
        %3114 = vmatpush1.msra.mxu0 %v2768
        %3115 = vmatprep.subr.mxu0 0.0
        %3116 = vmatpush1.msra.mxu0 %v2769
        %3117 = vmatprep.subr.mxu0 0.0
        %3118 = vmatpush1.msra.mxu0 %v2770
        %3119 = vmatprep.subr.mxu0 0.0
        %3120 = vmatpush1.msra.mxu0 %v2771
        %3121 = vmatprep.subr.mxu0 0.0
        %3122 = vmatpush1.msra.mxu0 %v2772
        %3123 = vmatprep.subr.mxu0 0.0
        %3124 = vmatpush1.msra.mxu0 %v2773
        %3125 = vmatprep.subr.mxu0 0.0
        %3126 = vmatpush1.msra.mxu0 %v2774
        %3127 = vmatprep.subr.mxu0 0.0
        %3128 = vmatpush1.msra.mxu0 %v2775
        %3129 = vmatprep.subr.mxu0 0.0
        %3130 = vmatpush1.msra.mxu0 %v2776
        %3131 = vmatprep.subr.mxu0 0.0
        %3132 = vmatpush1.msra.mxu0 %v2777
        %3133 = vmatprep.subr.mxu0 0.0
        %3134 = vmatpush1.msra.mxu0 %v2778
        %3135 = vmatprep.subr.mxu0 0.0
        %3136 = vmatpush1.msra.mxu0 0.0
        %3137 = vmatprep.subr.mxu0 0.0
        %3138 = vmatpush1.msra.mxu0 0.0
        %3139 = vmatprep.subr.mxu0 0.0
        %3140 = vmatpush1.msra.mxu0 0.0
        %3141 = vmatprep.subr.mxu0 0.0
        %3142 = vmatpush1.msra.mxu0 0.0
        %3143 = vmatprep.subr.mxu0 0.0
        %3144 = vmatpush1.msra.mxu0 0.0
        %3145 = vmatprep.subr.mxu0 0.0
        %3146 = vmatpush1.msra.mxu0 0.0
        %3147 = vmatprep.subr.mxu0 0.0
        %3148 = vmatpush1.msra.mxu0 0.0
        %3149 = vmatprep.subr.mxu0 0.0
        %3150 = vmatpush1.msra.mxu0 0.0
        %3151 = vmatprep.subr.mxu0 0.0
        %3152 = vmatpush1.msra.mxu0 0.0
        %3153 = vmatprep.subr.mxu0 0.0
        %3154 = vmatpush1.msra.mxu0 0.0
        %3155 = vmatprep.subr.mxu0 0.0
        %3156 = vmatpush1.msra.mxu0 0.0
        %3157 = vmatprep.subr.mxu0 0.0
        %3158 = vmatpush1.msra.mxu0 0.0
        %3159 = vmatprep.subr.mxu0 0.0
        %3160 = vmatpush1.msra.mxu0 0.0
        %3161 = vmatprep.subr.mxu0 0.0
        %3162 = vmatpush1.msra.mxu0 0.0
        %3163 = vmatprep.subr.mxu0 0.0
        %3164 = vmatpush1.msra.mxu0 0.0
        %3165 = vmatprep.subr.mxu0 0.0
        %3166 = vmatpush1.msra.mxu0 0.0
        %3167 = vmatprep.mubr.f32.mxu0 0.0
        %3168 = vmatmul.mubr.f32.gmra.mrb[0].mxu0 %v3089
        %v3169 = vpop.f32.mrb[0].mxu0
        %v3170 = vadd.f32 %v3101, %v3169
        %v3171 = vpop.f32.mrb[0].mxu0
        %3172 = vmatprep.mubr.f32.mxu0 0.0
        %3173 = vmatmul.mubr.f32.gmra.mrb[0].mxu0 %v3090
        %v3174 = vpop.f32.mrb[0].mxu0
        %v3175 = vadd.f32 %v3101, %v3174
        %v3176 = vpop.f32.mrb[0].mxu0
        %3177 = vmatprep.mubr.f32.mxu0 0.0
        %3178 = vmatmul.mubr.f32.gmra.mrb[0].mxu0 %v3091
        %v3179 = vpop.f32.mrb[0].mxu0
        %v3180 = vadd.f32 %v3101, %v3179
        %v3181 = vpop.f32.mrb[0].mxu0
        %3182 = vmatprep.mubr.f32.mxu0 0.0
        %3183 = vmatmul.mubr.f32.gmra.mrb[0].mxu0 %v3092
        %v3184 = vpop.f32.mrb[0].mxu0
        %v3185 = vadd.f32 %v3101, %v3184
        %v3186 = vpop.f32.mrb[0].mxu0
        %3187 = vmatprep.mubr.f32.mxu0 0.0
        %3188 = vmatmul.mubr.f32.gmra.mrb[0].mxu0 %v3093
        %v3189 = vpop.f32.mrb[0].mxu0
        %v3190 = vadd.f32 %v3101, %v3189
        %v3191 = vpop.f32.mrb[0].mxu0
        %3192 = vmatprep.mubr.f32.mxu0 0.0
        %3193 = vmatmul.mubr.f32.gmra.mrb[0].mxu0 %v3094
        %v3194 = vpop.f32.mrb[0].mxu0
        %v3195 = vadd.f32 %v3101, %v3194
        %v3196 = vpop.f32.mrb[0].mxu0
        %3197 = vmatprep.mubr.f32.mxu0 0.0
        %3198 = vmatmul.mubr.f32.gmra.mrb[0].mxu0 %v3095
        %v3199 = vpop.f32.mrb[0].mxu0
        %v3200 = vadd.f32 %v3101, %v3199
        %v3201 = vpop.f32.mrb[0].mxu0
        %3202 = vmatprep.mubr.f32.mxu0 0.0
        %3203 = vmatmul.mubr.f32.gmra.mrb[0].mxu0 %v3096
        %v3204 = vpop.f32.mrb[0].mxu0
        %v3205 = vadd.f32 %v3101, %v3204
        %v3206 = vpop.f32.mrb[0].mxu0
        %3207 = vdwg.mxu0
        %v3208 = vxor.u32 %v3170, 2147483648
        %v3209 = vxor.u32 %v3175, 2147483648
        %v3210 = vxor.u32 %v3180, 2147483648
        %v3211 = vxor.u32 %v3185, 2147483648
        %v3212 = vxor.u32 %v3190, 2147483648
        %v3213 = vxor.u32 %v3195, 2147483648
        %v3214 = vxor.u32 %v3200, 2147483648
        %v3215 = vxor.u32 %v3205, 2147483648
        %v3216 = vmul.f32 %v3208, 1.442695
        %v3217 = vpow.pop %v3216
        %v3218 = vmul.f32 %v3209, 1.442695
        %v3219 = vpow.pop %v3218
        %v3220 = vmul.f32 %v3210, 1.442695
        %v3221 = vpow.pop %v3220
        %v3222 = vmul.f32 %v3211, 1.442695
        %v3223 = vpow.pop %v3222
        %v3224 = vmul.f32 %v3212, 1.442695
        %v3225 = vpow.pop %v3224
        %v3226 = vmul.f32 %v3213, 1.442695
        %v3227 = vpow.pop %v3226
        %v3228 = vmul.f32 %v3214, 1.442695
        %v3229 = vpow.pop %v3228
        %v3230 = vmul.f32 %v3215, 1.442695
        %v3231 = vpow.pop %v3230
        %v3232 = vadd.f32 %v3217, 1.0
        %v3233 = vadd.f32 %v3219, 1.0
        %v3234 = vadd.f32 %v3221, 1.0
        %v3235 = vadd.f32 %v3223, 1.0
        %v3236 = vadd.f32 %v3225, 1.0
        %v3237 = vadd.f32 %v3227, 1.0
        %v3238 = vadd.f32 %v3229, 1.0
        %v3239 = vadd.f32 %v3231, 1.0
        %v3240 = vrcp.pop %v3232
        %v3241 = vmul.f32 1.0, %v3240
        %v3242 = vrcp.pop %v3233
        %v3243 = vmul.f32 1.0, %v3242
        %v3244 = vrcp.pop %v3234
        %v3245 = vmul.f32 1.0, %v3244
        %v3246 = vrcp.pop %v3235
        %v3247 = vmul.f32 1.0, %v3246
        %v3248 = vrcp.pop %v3236
        %v3249 = vmul.f32 1.0, %v3248
        %v3250 = vrcp.pop %v3237
        %v3251 = vmul.f32 1.0, %v3250
        %v3252 = vrcp.pop %v3238
        %v3253 = vmul.f32 1.0, %v3252
        %v3254 = vrcp.pop %v3239
        %v3255 = vmul.f32 1.0, %v3254
        %v3256 = vmul.f32 %v3170, %v3241
        %v3257 = vmul.f32 %v3175, %v3243
        %v3258 = vmul.f32 %v3180, %v3245
        %v3259 = vmul.f32 %v3185, %v3247
        %v3260 = vmul.f32 %v3190, %v3249
        %v3261 = vmul.f32 %v3195, %v3251
        %v3262 = vmul.f32 %v3200, %v3253
        %v3263 = vmul.f32 %v3205, %v3255
        %3264 = vmatprep.subr.mxu0 0.0
        %3265 = vmatpush1.msra.mxu0 %v2799
        %3266 = vmatprep.subr.mxu0 0.0
        %3267 = vmatpush1.msra.mxu0 %v2800
        %3268 = vmatprep.subr.mxu0 0.0
        %3269 = vmatpush1.msra.mxu0 %v2801
        %3270 = vmatprep.subr.mxu0 0.0
        %3271 = vmatpush1.msra.mxu0 %v2802
        %3272 = vmatprep.subr.mxu0 0.0
        %3273 = vmatpush1.msra.mxu0 %v2803
        %3274 = vmatprep.subr.mxu0 0.0
        %3275 = vmatpush1.msra.mxu0 %v2804
        %3276 = vmatprep.subr.mxu0 0.0
        %3277 = vmatpush1.msra.mxu0 %v2805
        %3278 = vmatprep.subr.mxu0 0.0
        %3279 = vmatpush1.msra.mxu0 %v2806
        %3280 = vmatprep.subr.mxu0 0.0
        %3281 = vmatpush1.msra.mxu0 %v2807
        %3282 = vmatprep.subr.mxu0 0.0
        %3283 = vmatpush1.msra.mxu0 %v2808
        %3284 = vmatprep.subr.mxu0 0.0
        %3285 = vmatpush1.msra.mxu0 %v2809
        %3286 = vmatprep.subr.mxu0 0.0
        %3287 = vmatpush1.msra.mxu0 %v2810
        %3288 = vmatprep.subr.mxu0 0.0
        %3289 = vmatpush1.msra.mxu0 %v2811
        %3290 = vmatprep.subr.mxu0 0.0
        %3291 = vmatpush1.msra.mxu0 %v2812
        %3292 = vmatprep.subr.mxu0 0.0
        %3293 = vmatpush1.msra.mxu0 %v2813
        %3294 = vmatprep.subr.mxu0 0.0
        %3295 = vmatpush1.msra.mxu0 %v2814
        %3296 = vmatprep.subr.mxu0 0.0
        %3297 = vmatpush1.msra.mxu0 0.0
        %3298 = vmatprep.subr.mxu0 0.0
        %3299 = vmatpush1.msra.mxu0 0.0
        %3300 = vmatprep.subr.mxu0 0.0
        %3301 = vmatpush1.msra.mxu0 0.0
        %3302 = vmatprep.subr.mxu0 0.0
        %3303 = vmatpush1.msra.mxu0 0.0
        %3304 = vmatprep.subr.mxu0 0.0
        %3305 = vmatpush1.msra.mxu0 0.0
        %3306 = vmatprep.subr.mxu0 0.0
        %3307 = vmatpush1.msra.mxu0 0.0
        %3308 = vmatprep.subr.mxu0 0.0
        %3309 = vmatpush1.msra.mxu0 0.0
        %3310 = vmatprep.subr.mxu0 0.0
        %3311 = vmatpush1.msra.mxu0 0.0
        %3312 = vmatprep.subr.mxu0 0.0
        %3313 = vmatpush1.msra.mxu0 0.0
        %3314 = vmatprep.subr.mxu0 0.0
        %3315 = vmatpush1.msra.mxu0 0.0
        %3316 = vmatprep.subr.mxu0 0.0
        %3317 = vmatpush1.msra.mxu0 0.0
        %3318 = vmatprep.subr.mxu0 0.0
        %3319 = vmatpush1.msra.mxu0 0.0
        %3320 = vmatprep.subr.mxu0 0.0
        %3321 = vmatpush1.msra.mxu0 0.0
        %3322 = vmatprep.subr.mxu0 0.0
        %3323 = vmatpush1.msra.mxu0 0.0
        %3324 = vmatprep.subr.mxu0 0.0
        %3325 = vmatpush1.msra.mxu0 0.0
        %3326 = vmatprep.subr.mxu0 0.0
        %3327 = vmatpush1.msra.mxu0 0.0
        %3328 = vmatprep.mubr.f32.mxu0 0.0
        %3329 = vmatmul.mubr.f32.gmra.mrb[0].mxu0 %v3089
        %v3330 = vpop.f32.mrb[0].mxu0
        %v3331 = vadd.f32 0.0, %v3330
        %v3332 = vpop.f32.mrb[0].mxu0
        %3333 = vmatprep.mubr.f32.mxu0 0.0
        %3334 = vmatmul.mubr.f32.gmra.mrb[0].mxu0 %v3090
        %v3335 = vpop.f32.mrb[0].mxu0
        %v3336 = vadd.f32 0.0, %v3335
        %v3337 = vpop.f32.mrb[0].mxu0
        %3338 = vmatprep.mubr.f32.mxu0 0.0
        %3339 = vmatmul.mubr.f32.gmra.mrb[0].mxu0 %v3091
        %v3340 = vpop.f32.mrb[0].mxu0
        %v3341 = vadd.f32 0.0, %v3340
        %v3342 = vpop.f32.mrb[0].mxu0
        %3343 = vmatprep.mubr.f32.mxu0 0.0
        %3344 = vmatmul.mubr.f32.gmra.mrb[0].mxu0 %v3092
        %v3345 = vpop.f32.mrb[0].mxu0
        %v3346 = vadd.f32 0.0, %v3345
        %v3347 = vpop.f32.mrb[0].mxu0
        %3348 = vmatprep.mubr.f32.mxu0 0.0
        %3349 = vmatmul.mubr.f32.gmra.mrb[0].mxu0 %v3093
        %v3350 = vpop.f32.mrb[0].mxu0
        %v3351 = vadd.f32 0.0, %v3350
        %v3352 = vpop.f32.mrb[0].mxu0
        %3353 = vmatprep.mubr.f32.mxu0 0.0
        %3354 = vmatmul.mubr.f32.gmra.mrb[0].mxu0 %v3094
        %v3355 = vpop.f32.mrb[0].mxu0
        %v3356 = vadd.f32 0.0, %v3355
        %v3357 = vpop.f32.mrb[0].mxu0
        %3358 = vmatprep.mubr.f32.mxu0 0.0
        %3359 = vmatmul.mubr.f32.gmra.mrb[0].mxu0 %v3095
        %v3360 = vpop.f32.mrb[0].mxu0
        %v3361 = vadd.f32 0.0, %v3360
        %v3362 = vpop.f32.mrb[0].mxu0
        %3363 = vmatprep.mubr.f32.mxu0 0.0
        %3364 = vmatmul.mubr.f32.gmra.mrb[0].mxu0 %v3096
        %v3365 = vpop.f32.mrb[0].mxu0
        %v3366 = vadd.f32 0.0, %v3365
        %v3367 = vpop.f32.mrb[0].mxu0
        %3368 = vdwg.mxu0
        %3369 = vmatprep.subr.mxu0 0.0
        %3370 = vmatpush1.msra.mxu0 %v2782
        %3371 = vmatprep.subr.mxu0 0.0
        %3372 = vmatpush1.msra.mxu0 %v2783
        %3373 = vmatprep.subr.mxu0 0.0
        %3374 = vmatpush1.msra.mxu0 %v2784
        %3375 = vmatprep.subr.mxu0 0.0
        %3376 = vmatpush1.msra.mxu0 %v2785
        %3377 = vmatprep.subr.mxu0 0.0
        %3378 = vmatpush1.msra.mxu0 %v2786
        %3379 = vmatprep.subr.mxu0 0.0
        %3380 = vmatpush1.msra.mxu0 %v2787
        %3381 = vmatprep.subr.mxu0 0.0
        %3382 = vmatpush1.msra.mxu0 %v2788
        %3383 = vmatprep.subr.mxu0 0.0
        %3384 = vmatpush1.msra.mxu0 %v2789
        %3385 = vmatprep.subr.mxu0 0.0
        %3386 = vmatpush1.msra.mxu0 %v2790
        %3387 = vmatprep.subr.mxu0 0.0
        %3388 = vmatpush1.msra.mxu0 %v2791
        %3389 = vmatprep.subr.mxu0 0.0
        %3390 = vmatpush1.msra.mxu0 %v2792
        %3391 = vmatprep.subr.mxu0 0.0
        %3392 = vmatpush1.msra.mxu0 %v2793
        %3393 = vmatprep.subr.mxu0 0.0
        %3394 = vmatpush1.msra.mxu0 %v2794
        %3395 = vmatprep.subr.mxu0 0.0
        %3396 = vmatpush1.msra.mxu0 %v2795
        %3397 = vmatprep.subr.mxu0 0.0
        %3398 = vmatpush1.msra.mxu0 %v2796
        %3399 = vmatprep.subr.mxu0 0.0
        %3400 = vmatpush1.msra.mxu0 %v2797
        %3401 = vmatprep.subr.mxu0 0.0
        %3402 = vmatpush1.msra.mxu0 0.0
        %3403 = vmatprep.subr.mxu0 0.0
        %3404 = vmatpush1.msra.mxu0 0.0
        %3405 = vmatprep.subr.mxu0 0.0
        %3406 = vmatpush1.msra.mxu0 0.0
        %3407 = vmatprep.subr.mxu0 0.0
        %3408 = vmatpush1.msra.mxu0 0.0
        %3409 = vmatprep.subr.mxu0 0.0
        %3410 = vmatpush1.msra.mxu0 0.0
        %3411 = vmatprep.subr.mxu0 0.0
        %3412 = vmatpush1.msra.mxu0 0.0
        %3413 = vmatprep.subr.mxu0 0.0
        %3414 = vmatpush1.msra.mxu0 0.0
        %3415 = vmatprep.subr.mxu0 0.0
        %3416 = vmatpush1.msra.mxu0 0.0
        %3417 = vmatprep.subr.mxu0 0.0
        %3418 = vmatpush1.msra.mxu0 0.0
        %3419 = vmatprep.subr.mxu0 0.0
        %3420 = vmatpush1.msra.mxu0 0.0
        %3421 = vmatprep.subr.mxu0 0.0
        %3422 = vmatpush1.msra.mxu0 0.0
        %3423 = vmatprep.subr.mxu0 0.0
        %3424 = vmatpush1.msra.mxu0 0.0
        %3425 = vmatprep.subr.mxu0 0.0
        %3426 = vmatpush1.msra.mxu0 0.0
        %3427 = vmatprep.subr.mxu0 0.0
        %3428 = vmatpush1.msra.mxu0 0.0
        %3429 = vmatprep.subr.mxu0 0.0
        %3430 = vmatpush1.msra.mxu0 0.0
        %3431 = vmatprep.subr.mxu0 0.0
        %3432 = vmatpush1.msra.mxu0 0.0
        %3433 = vmatprep.mubr.f32.mxu0 0.0
        %3434 = vmatmul.mubr.f32.gmra.mrb[0].mxu0 %v3256
        %v3435 = vpop.f32.mrb[0].mxu0
        %v3436 = vadd.f32 %v3331, %v3435
        %v3437 = vpop.f32.mrb[0].mxu0
        %3438 = vmatprep.mubr.f32.mxu0 0.0
        %3439 = vmatmul.mubr.f32.gmra.mrb[0].mxu0 %v3257
        %v3440 = vpop.f32.mrb[0].mxu0
        %v3441 = vadd.f32 %v3336, %v3440
        %v3442 = vpop.f32.mrb[0].mxu0
        %3443 = vmatprep.mubr.f32.mxu0 0.0
        %3444 = vmatmul.mubr.f32.gmra.mrb[0].mxu0 %v3258
        %v3445 = vpop.f32.mrb[0].mxu0
        %v3446 = vadd.f32 %v3341, %v3445
        %v3447 = vpop.f32.mrb[0].mxu0
        %3448 = vmatprep.mubr.f32.mxu0 0.0
        %3449 = vmatmul.mubr.f32.gmra.mrb[0].mxu0 %v3259
        %v3450 = vpop.f32.mrb[0].mxu0
        %v3451 = vadd.f32 %v3346, %v3450
        %v3452 = vpop.f32.mrb[0].mxu0
        %3453 = vmatprep.mubr.f32.mxu0 0.0
        %3454 = vmatmul.mubr.f32.gmra.mrb[0].mxu0 %v3260
        %v3455 = vpop.f32.mrb[0].mxu0
        %v3456 = vadd.f32 %v3351, %v3455
        %v3457 = vpop.f32.mrb[0].mxu0
        %3458 = vmatprep.mubr.f32.mxu0 0.0
        %3459 = vmatmul.mubr.f32.gmra.mrb[0].mxu0 %v3261
        %v3460 = vpop.f32.mrb[0].mxu0
        %v3461 = vadd.f32 %v3356, %v3460
        %v3462 = vpop.f32.mrb[0].mxu0
        %3463 = vmatprep.mubr.f32.mxu0 0.0
        %3464 = vmatmul.mubr.f32.gmra.mrb[0].mxu0 %v3262
        %v3465 = vpop.f32.mrb[0].mxu0
        %v3466 = vadd.f32 %v3361, %v3465
        %v3467 = vpop.f32.mrb[0].mxu0
        %3468 = vmatprep.mubr.f32.mxu0 0.0
        %3469 = vmatmul.mubr.f32.gmra.mrb[0].mxu0 %v3263
        %v3470 = vpop.f32.mrb[0].mxu0
        %v3471 = vadd.f32 %v3366, %v3470
        %v3472 = vpop.f32.mrb[0].mxu0
        %3473 = vdwg.mxu0
        %v3475 = vlaneseq
        %v3476 = vshrl.u32 %v3475, 7
        %v3477 = vsub.s32 0, %v3476
        %v3478 = vrot.slane %v2816, %v3477
        %v3480 = vadd.f32 %v3436, %v3478
        %v3481 = vadd.f32 %v3441, %v3478
        %v3482 = vadd.f32 %v3446, %v3478
        %v3483 = vadd.f32 %v3451, %v3478
        %v3484 = vadd.f32 %v3456, %v3478
        %v3485 = vadd.f32 %v3461, %v3478
        %v3486 = vadd.f32 %v3466, %v3478
        %v3487 = vadd.f32 %v3471, %v3478
        %v3488 = vadd.f32 %v3480, %v2752
        %v3489 = vadd.f32 %v3481, %v2753
        %v3490 = vadd.f32 %v3482, %v2754
        %v3491 = vadd.f32 %v3483, %v2755
        %v3492 = vadd.f32 %v3484, %v2756
        %v3493 = vadd.f32 %v3485, %v2757
        %v3494 = vadd.f32 %v3486, %v2758
        %v3495 = vadd.f32 %v3487, %v2759
        %s3496 = scalar_lea.vmem %s2, 2
        %v3497 = vld [vmem:[%s3496] sm:$0x1]
        %s3498 = scalar_lea.vmem %s3, 256
        %v3499 = vld [vmem:[%s3498] sm:$0xff]
        %v3500 = vld [vmem:[%s3498 + $0x8] sm:$0xff]
        %v3501 = vld [vmem:[%s3498 + $0x10] sm:$0xff]
        %v3502 = vld [vmem:[%s3498 + $0x18] sm:$0xff]
        %v3503 = vld [vmem:[%s3498 + $0x20] sm:$0xff]
        %v3504 = vld [vmem:[%s3498 + $0x28] sm:$0xff]
        %v3505 = vld [vmem:[%s3498 + $0x30] sm:$0xff]
        %v3506 = vld [vmem:[%s3498 + $0x38] sm:$0xff]
        %v3507 = vld [vmem:[%s3498 + $0x40] sm:$0xff]
        %v3508 = vld [vmem:[%s3498 + $0x48] sm:$0xff]
        %v3509 = vld [vmem:[%s3498 + $0x50] sm:$0xff]
        %v3510 = vld [vmem:[%s3498 + $0x58] sm:$0xff]
        %v3511 = vld [vmem:[%s3498 + $0x60] sm:$0xff]
        %v3512 = vld [vmem:[%s3498 + $0x68] sm:$0xff]
        %v3513 = vld [vmem:[%s3498 + $0x70] sm:$0xff]
        %v3514 = vld [vmem:[%s3498 + $0x78] sm:$0xff]
        %s3515 = scalar_lea.vmem %s4, 2
        %v3516 = vld [vmem:[%s3515] sm:$0x1]
        %s3517 = scalar_lea.vmem %s5, 256
        %v3518 = vld [vmem:[%s3517] sm:$0xff]
        %v3519 = vld [vmem:[%s3517 + $0x8] sm:$0xff]
        %v3520 = vld [vmem:[%s3517 + $0x10] sm:$0xff]
        %v3521 = vld [vmem:[%s3517 + $0x18] sm:$0xff]
        %v3522 = vld [vmem:[%s3517 + $0x20] sm:$0xff]
        %v3523 = vld [vmem:[%s3517 + $0x28] sm:$0xff]
        %v3524 = vld [vmem:[%s3517 + $0x30] sm:$0xff]
        %v3525 = vld [vmem:[%s3517 + $0x38] sm:$0xff]
        %v3526 = vld [vmem:[%s3517 + $0x40] sm:$0xff]
        %v3527 = vld [vmem:[%s3517 + $0x48] sm:$0xff]
        %v3528 = vld [vmem:[%s3517 + $0x50] sm:$0xff]
        %v3529 = vld [vmem:[%s3517 + $0x58] sm:$0xff]
        %v3530 = vld [vmem:[%s3517 + $0x60] sm:$0xff]
        %v3531 = vld [vmem:[%s3517 + $0x68] sm:$0xff]
        %v3532 = vld [vmem:[%s3517 + $0x70] sm:$0xff]
        %v3533 = vld [vmem:[%s3517 + $0x78] sm:$0xff]
        %s3534 = scalar_lea.vmem %s6, 256
        %v3535 = vld [vmem:[%s3534] sm:$0xff]
        %v3536 = vld [vmem:[%s3534 + $0x8] sm:$0xff]
        %v3537 = vld [vmem:[%s3534 + $0x10] sm:$0xff]
        %v3538 = vld [vmem:[%s3534 + $0x18] sm:$0xff]
        %v3539 = vld [vmem:[%s3534 + $0x20] sm:$0xff]
        %v3540 = vld [vmem:[%s3534 + $0x28] sm:$0xff]
        %v3541 = vld [vmem:[%s3534 + $0x30] sm:$0xff]
        %v3542 = vld [vmem:[%s3534 + $0x38] sm:$0xff]
        %v3543 = vld [vmem:[%s3534 + $0x40] sm:$0xff]
        %v3544 = vld [vmem:[%s3534 + $0x48] sm:$0xff]
        %v3545 = vld [vmem:[%s3534 + $0x50] sm:$0xff]
        %v3546 = vld [vmem:[%s3534 + $0x58] sm:$0xff]
        %v3547 = vld [vmem:[%s3534 + $0x60] sm:$0xff]
        %v3548 = vld [vmem:[%s3534 + $0x68] sm:$0xff]
        %v3549 = vld [vmem:[%s3534 + $0x70] sm:$0xff]
        %v3550 = vld [vmem:[%s3534 + $0x78] sm:$0xff]
        %s3551 = scalar_lea.vmem %s7, 2
        %v3552 = vld [vmem:[%s3551] sm:$0x1]
        %3553 = vmatprep.subr.mxu0 0.0
        %3554 = vmatpush1.msra.mxu0 %v509
        %3555 = vmatprep.subr.mxu0 0.0
        %3556 = vmatpush1.msra.mxu0 %v510
        %3557 = vmatprep.subr.mxu0 0.0
        %3558 = vmatpush1.msra.mxu0 %v511
        %3559 = vmatprep.subr.mxu0 0.0
        %3560 = vmatpush1.msra.mxu0 %v512
        %3561 = vmatprep.subr.mxu0 0.0
        %3562 = vmatpush1.msra.mxu0 %v513
        %3563 = vmatprep.subr.mxu0 0.0
        %3564 = vmatpush1.msra.mxu0 %v514
        %3565 = vmatprep.subr.mxu0 0.0
        %3566 = vmatpush1.msra.mxu0 %v515
        %3567 = vmatprep.subr.mxu0 0.0
        %3568 = vmatpush1.msra.mxu0 %v516
        %3569 = vmatprep.subr.mxu0 0.0
        %3570 = vmatpush1.msra.mxu0 %v517
        %3571 = vmatprep.subr.mxu0 0.0
        %3572 = vmatpush1.msra.mxu0 %v518
        %3573 = vmatprep.subr.mxu0 0.0
        %3574 = vmatpush1.msra.mxu0 %v519
        %3575 = vmatprep.subr.mxu0 0.0
        %3576 = vmatpush1.msra.mxu0 %v520
        %3577 = vmatprep.subr.mxu0 0.0
        %3578 = vmatpush1.msra.mxu0 %v521
        %3579 = vmatprep.subr.mxu0 0.0
        %3580 = vmatpush1.msra.mxu0 %v522
        %3581 = vmatprep.subr.mxu0 0.0
        %3582 = vmatpush1.msra.mxu0 %v523
        %3583 = vmatprep.subr.mxu0 0.0
        %3584 = vmatpush1.msra.mxu0 %v524
        %3585 = vmatprep.subr.mxu0 0.0
        %3586 = vmatpush1.msra.mxu0 0.0
        %3587 = vmatprep.subr.mxu0 0.0
        %3588 = vmatpush1.msra.mxu0 0.0
        %3589 = vmatprep.subr.mxu0 0.0
        %3590 = vmatpush1.msra.mxu0 0.0
        %3591 = vmatprep.subr.mxu0 0.0
        %3592 = vmatpush1.msra.mxu0 0.0
        %3593 = vmatprep.subr.mxu0 0.0
        %3594 = vmatpush1.msra.mxu0 0.0
        %3595 = vmatprep.subr.mxu0 0.0
        %3596 = vmatpush1.msra.mxu0 0.0
        %3597 = vmatprep.subr.mxu0 0.0
        %3598 = vmatpush1.msra.mxu0 0.0
        %3599 = vmatprep.subr.mxu0 0.0
        %3600 = vmatpush1.msra.mxu0 0.0
        %3601 = vmatprep.subr.mxu0 0.0
        %3602 = vmatpush1.msra.mxu0 0.0
        %3603 = vmatprep.subr.mxu0 0.0
        %3604 = vmatpush1.msra.mxu0 0.0
        %3605 = vmatprep.subr.mxu0 0.0
        %3606 = vmatpush1.msra.mxu0 0.0
        %3607 = vmatprep.subr.mxu0 0.0
        %3608 = vmatpush1.msra.mxu0 0.0
        %3609 = vmatprep.subr.mxu0 0.0
        %3610 = vmatpush1.msra.mxu0 0.0
        %3611 = vmatprep.subr.mxu0 0.0
        %3612 = vmatpush1.msra.mxu0 0.0
        %3613 = vmatprep.subr.mxu0 0.0
        %3614 = vmatpush1.msra.mxu0 0.0
        %3615 = vmatprep.subr.mxu0 0.0
        %3616 = vmatpush1.msra.mxu0 0.0
        %3617 = vmatprep.mubr.f32.mxu0 0.0
        %3618 = vmatmul.mubr.f32.gmra.mrb[0].mxu0 %v3488
        %v3619 = vpop.f32.mrb[0].mxu0
        %v3620 = vadd.f32 0.0, %v3619
        %v3621 = vpop.f32.mrb[0].mxu0
        %3622 = vmatprep.mubr.f32.mxu0 0.0
        %3623 = vmatmul.mubr.f32.gmra.mrb[0].mxu0 %v3489
        %v3624 = vpop.f32.mrb[0].mxu0
        %v3625 = vadd.f32 0.0, %v3624
        %v3626 = vpop.f32.mrb[0].mxu0
        %3627 = vmatprep.mubr.f32.mxu0 0.0
        %3628 = vmatmul.mubr.f32.gmra.mrb[0].mxu0 %v3490
        %v3629 = vpop.f32.mrb[0].mxu0
        %v3630 = vadd.f32 0.0, %v3629
        %v3631 = vpop.f32.mrb[0].mxu0
        %3632 = vmatprep.mubr.f32.mxu0 0.0
        %3633 = vmatmul.mubr.f32.gmra.mrb[0].mxu0 %v3491
        %v3634 = vpop.f32.mrb[0].mxu0
        %v3635 = vadd.f32 0.0, %v3634
        %v3636 = vpop.f32.mrb[0].mxu0
        %3637 = vmatprep.mubr.f32.mxu0 0.0
        %3638 = vmatmul.mubr.f32.gmra.mrb[0].mxu0 %v3492
        %v3639 = vpop.f32.mrb[0].mxu0
        %v3640 = vadd.f32 0.0, %v3639
        %v3641 = vpop.f32.mrb[0].mxu0
        %3642 = vmatprep.mubr.f32.mxu0 0.0
        %3643 = vmatmul.mubr.f32.gmra.mrb[0].mxu0 %v3493
        %v3644 = vpop.f32.mrb[0].mxu0
        %v3645 = vadd.f32 0.0, %v3644
        %v3646 = vpop.f32.mrb[0].mxu0
        %3647 = vmatprep.mubr.f32.mxu0 0.0
        %3648 = vmatmul.mubr.f32.gmra.mrb[0].mxu0 %v3494
        %v3649 = vpop.f32.mrb[0].mxu0
        %v3650 = vadd.f32 0.0, %v3649
        %v3651 = vpop.f32.mrb[0].mxu0
        %3652 = vmatprep.mubr.f32.mxu0 0.0
        %3653 = vmatmul.mubr.f32.gmra.mrb[0].mxu0 %v3495
        %v3654 = vpop.f32.mrb[0].mxu0
        %v3655 = vadd.f32 0.0, %v3654
        %v3656 = vpop.f32.mrb[0].mxu0
        %3657 = vdwg.mxu0
        %v3658 = vmul.f32 %v3488, %v3488
        %v3659 = vmul.f32 %v3489, %v3489
        %v3660 = vmul.f32 %v3490, %v3490
        %v3661 = vmul.f32 %v3491, %v3491
        %v3662 = vmul.f32 %v3492, %v3492
        %v3663 = vmul.f32 %v3493, %v3493
        %v3664 = vmul.f32 %v3494, %v3494
        %v3665 = vmul.f32 %v3495, %v3495
        %3666 = vmatprep.subr.mxu0 0.0
        %3667 = vmatpush1.msra.mxu0 %v509
        %3668 = vmatprep.subr.mxu0 0.0
        %3669 = vmatpush1.msra.mxu0 %v510
        %3670 = vmatprep.subr.mxu0 0.0
        %3671 = vmatpush1.msra.mxu0 %v511
        %3672 = vmatprep.subr.mxu0 0.0
        %3673 = vmatpush1.msra.mxu0 %v512
        %3674 = vmatprep.subr.mxu0 0.0
        %3675 = vmatpush1.msra.mxu0 %v513
        %3676 = vmatprep.subr.mxu0 0.0
        %3677 = vmatpush1.msra.mxu0 %v514
        %3678 = vmatprep.subr.mxu0 0.0
        %3679 = vmatpush1.msra.mxu0 %v515
        %3680 = vmatprep.subr.mxu0 0.0
        %3681 = vmatpush1.msra.mxu0 %v516
        %3682 = vmatprep.subr.mxu0 0.0
        %3683 = vmatpush1.msra.mxu0 %v517
        %3684 = vmatprep.subr.mxu0 0.0
        %3685 = vmatpush1.msra.mxu0 %v518
        %3686 = vmatprep.subr.mxu0 0.0
        %3687 = vmatpush1.msra.mxu0 %v519
        %3688 = vmatprep.subr.mxu0 0.0
        %3689 = vmatpush1.msra.mxu0 %v520
        %3690 = vmatprep.subr.mxu0 0.0
        %3691 = vmatpush1.msra.mxu0 %v521
        %3692 = vmatprep.subr.mxu0 0.0
        %3693 = vmatpush1.msra.mxu0 %v522
        %3694 = vmatprep.subr.mxu0 0.0
        %3695 = vmatpush1.msra.mxu0 %v523
        %3696 = vmatprep.subr.mxu0 0.0
        %3697 = vmatpush1.msra.mxu0 %v524
        %3698 = vmatprep.subr.mxu0 0.0
        %3699 = vmatpush1.msra.mxu0 0.0
        %3700 = vmatprep.subr.mxu0 0.0
        %3701 = vmatpush1.msra.mxu0 0.0
        %3702 = vmatprep.subr.mxu0 0.0
        %3703 = vmatpush1.msra.mxu0 0.0
        %3704 = vmatprep.subr.mxu0 0.0
        %3705 = vmatpush1.msra.mxu0 0.0
        %3706 = vmatprep.subr.mxu0 0.0
        %3707 = vmatpush1.msra.mxu0 0.0
        %3708 = vmatprep.subr.mxu0 0.0
        %3709 = vmatpush1.msra.mxu0 0.0
        %3710 = vmatprep.subr.mxu0 0.0
        %3711 = vmatpush1.msra.mxu0 0.0
        %3712 = vmatprep.subr.mxu0 0.0
        %3713 = vmatpush1.msra.mxu0 0.0
        %3714 = vmatprep.subr.mxu0 0.0
        %3715 = vmatpush1.msra.mxu0 0.0
        %3716 = vmatprep.subr.mxu0 0.0
        %3717 = vmatpush1.msra.mxu0 0.0
        %3718 = vmatprep.subr.mxu0 0.0
        %3719 = vmatpush1.msra.mxu0 0.0
        %3720 = vmatprep.subr.mxu0 0.0
        %3721 = vmatpush1.msra.mxu0 0.0
        %3722 = vmatprep.subr.mxu0 0.0
        %3723 = vmatpush1.msra.mxu0 0.0
        %3724 = vmatprep.subr.mxu0 0.0
        %3725 = vmatpush1.msra.mxu0 0.0
        %3726 = vmatprep.subr.mxu0 0.0
        %3727 = vmatpush1.msra.mxu0 0.0
        %3728 = vmatprep.subr.mxu0 0.0
        %3729 = vmatpush1.msra.mxu0 0.0
        %3730 = vmatprep.mubr.f32.mxu0 0.0
        %3731 = vmatmul.mubr.f32.gmra.mrb[0].mxu0 %v3658
        %v3732 = vpop.f32.mrb[0].mxu0
        %v3733 = vadd.f32 0.0, %v3732
        %v3734 = vpop.f32.mrb[0].mxu0
        %3735 = vmatprep.mubr.f32.mxu0 0.0
        %3736 = vmatmul.mubr.f32.gmra.mrb[0].mxu0 %v3659
        %v3737 = vpop.f32.mrb[0].mxu0
        %v3738 = vadd.f32 0.0, %v3737
        %v3739 = vpop.f32.mrb[0].mxu0
        %3740 = vmatprep.mubr.f32.mxu0 0.0
        %3741 = vmatmul.mubr.f32.gmra.mrb[0].mxu0 %v3660
        %v3742 = vpop.f32.mrb[0].mxu0
        %v3743 = vadd.f32 0.0, %v3742
        %v3744 = vpop.f32.mrb[0].mxu0
        %3745 = vmatprep.mubr.f32.mxu0 0.0
        %3746 = vmatmul.mubr.f32.gmra.mrb[0].mxu0 %v3661
        %v3747 = vpop.f32.mrb[0].mxu0
        %v3748 = vadd.f32 0.0, %v3747
        %v3749 = vpop.f32.mrb[0].mxu0
        %3750 = vmatprep.mubr.f32.mxu0 0.0
        %3751 = vmatmul.mubr.f32.gmra.mrb[0].mxu0 %v3662
        %v3752 = vpop.f32.mrb[0].mxu0
        %v3753 = vadd.f32 0.0, %v3752
        %v3754 = vpop.f32.mrb[0].mxu0
        %3755 = vmatprep.mubr.f32.mxu0 0.0
        %3756 = vmatmul.mubr.f32.gmra.mrb[0].mxu0 %v3663
        %v3757 = vpop.f32.mrb[0].mxu0
        %v3758 = vadd.f32 0.0, %v3757
        %v3759 = vpop.f32.mrb[0].mxu0
        %3760 = vmatprep.mubr.f32.mxu0 0.0
        %3761 = vmatmul.mubr.f32.gmra.mrb[0].mxu0 %v3664
        %v3762 = vpop.f32.mrb[0].mxu0
        %v3763 = vadd.f32 0.0, %v3762
        %v3764 = vpop.f32.mrb[0].mxu0
        %3765 = vmatprep.mubr.f32.mxu0 0.0
        %3766 = vmatmul.mubr.f32.gmra.mrb[0].mxu0 %v3665
        %v3767 = vpop.f32.mrb[0].mxu0
        %v3768 = vadd.f32 0.0, %v3767
        %v3769 = vpop.f32.mrb[0].mxu0
        %3770 = vdwg.mxu0
        %v3771 = vmul.f32 %v3620, %v3620
        %v3772 = vmul.f32 %v3625, %v3625
        %v3773 = vmul.f32 %v3630, %v3630
        %v3774 = vmul.f32 %v3635, %v3635
        %v3775 = vmul.f32 %v3640, %v3640
        %v3776 = vmul.f32 %v3645, %v3645
        %v3777 = vmul.f32 %v3650, %v3650
        %v3778 = vmul.f32 %v3655, %v3655
        %v3779 = vsub.f32 %v3733, %v3771
        %v3780 = vsub.f32 %v3738, %v3772
        %v3781 = vsub.f32 %v3743, %v3773
        %v3782 = vsub.f32 %v3748, %v3774
        %v3783 = vsub.f32 %v3753, %v3775
        %v3784 = vsub.f32 %v3758, %v3776
        %v3785 = vsub.f32 %v3763, %v3777
        %v3786 = vsub.f32 %v3768, %v3778
        %v3787 = vsub.f32 %v3488, %v3620
        %v3788 = vsub.f32 %v3489, %v3625
        %v3789 = vsub.f32 %v3490, %v3630
        %v3790 = vsub.f32 %v3491, %v3635
        %v3791 = vsub.f32 %v3492, %v3640
        %v3792 = vsub.f32 %v3493, %v3645
        %v3793 = vsub.f32 %v3494, %v3650
        %v3794 = vsub.f32 %v3495, %v3655
        %v3795 = vadd.f32 %v3779, 1e-05
        %v3796 = vadd.f32 %v3780, 1e-05
        %v3797 = vadd.f32 %v3781, 1e-05
        %v3798 = vadd.f32 %v3782, 1e-05
        %v3799 = vadd.f32 %v3783, 1e-05
        %v3800 = vadd.f32 %v3784, 1e-05
        %v3801 = vadd.f32 %v3785, 1e-05
        %v3802 = vadd.f32 %v3786, 1e-05
        %v3803 = vrsqrt.pop %v3795
        %v3804 = vrsqrt.pop %v3796
        %v3805 = vrsqrt.pop %v3797
        %v3806 = vrsqrt.pop %v3798
        %v3807 = vrsqrt.pop %v3799
        %v3808 = vrsqrt.pop %v3800
        %v3809 = vrsqrt.pop %v3801
        %v3810 = vrsqrt.pop %v3802
        %v3811 = vmul.f32 %v3787, %v3803
        %v3812 = vmul.f32 %v3788, %v3804
        %v3813 = vmul.f32 %v3789, %v3805
        %v3814 = vmul.f32 %v3790, %v3806
        %v3815 = vmul.f32 %v3791, %v3807
        %v3816 = vmul.f32 %v3792, %v3808
        %v3817 = vmul.f32 %v3793, %v3809
        %v3818 = vmul.f32 %v3794, %v3810
        %v3820 = vlaneseq
        %v3821 = vshrl.u32 %v3820, 7
        %v3822 = vsub.s32 0, %v3821
        %v3823 = vrot.slane %v3497, %v3822
        %v3825 = vmul.f32 %v3811, %v3823
        %v3826 = vmul.f32 %v3812, %v3823
        %v3827 = vmul.f32 %v3813, %v3823
        %v3828 = vmul.f32 %v3814, %v3823
        %v3829 = vmul.f32 %v3815, %v3823
        %v3830 = vmul.f32 %v3816, %v3823
        %v3831 = vmul.f32 %v3817, %v3823
        %v3832 = vmul.f32 %v3818, %v3823
        %v3834 = vlaneseq
        %v3835 = vshrl.u32 %v3834, 7
        %v3836 = vsub.s32 0, %v3835
        %v3837 = vrot.slane %v3516, %v3836
        %3839 = vmatprep.subr.mxu0 0.0
        %3840 = vmatpush1.msra.mxu0 %v3499
        %3841 = vmatprep.subr.mxu0 0.0
        %3842 = vmatpush1.msra.mxu0 %v3500
        %3843 = vmatprep.subr.mxu0 0.0
        %3844 = vmatpush1.msra.mxu0 %v3501
        %3845 = vmatprep.subr.mxu0 0.0
        %3846 = vmatpush1.msra.mxu0 %v3502
        %3847 = vmatprep.subr.mxu0 0.0
        %3848 = vmatpush1.msra.mxu0 %v3503
        %3849 = vmatprep.subr.mxu0 0.0
        %3850 = vmatpush1.msra.mxu0 %v3504
        %3851 = vmatprep.subr.mxu0 0.0
        %3852 = vmatpush1.msra.mxu0 %v3505
        %3853 = vmatprep.subr.mxu0 0.0
        %3854 = vmatpush1.msra.mxu0 %v3506
        %3855 = vmatprep.subr.mxu0 0.0
        %3856 = vmatpush1.msra.mxu0 %v3507
        %3857 = vmatprep.subr.mxu0 0.0
        %3858 = vmatpush1.msra.mxu0 %v3508
        %3859 = vmatprep.subr.mxu0 0.0
        %3860 = vmatpush1.msra.mxu0 %v3509
        %3861 = vmatprep.subr.mxu0 0.0
        %3862 = vmatpush1.msra.mxu0 %v3510
        %3863 = vmatprep.subr.mxu0 0.0
        %3864 = vmatpush1.msra.mxu0 %v3511
        %3865 = vmatprep.subr.mxu0 0.0
        %3866 = vmatpush1.msra.mxu0 %v3512
        %3867 = vmatprep.subr.mxu0 0.0
        %3868 = vmatpush1.msra.mxu0 %v3513
        %3869 = vmatprep.subr.mxu0 0.0
        %3870 = vmatpush1.msra.mxu0 %v3514
        %3871 = vmatprep.subr.mxu0 0.0
        %3872 = vmatpush1.msra.mxu0 0.0
        %3873 = vmatprep.subr.mxu0 0.0
        %3874 = vmatpush1.msra.mxu0 0.0
        %3875 = vmatprep.subr.mxu0 0.0
        %3876 = vmatpush1.msra.mxu0 0.0
        %3877 = vmatprep.subr.mxu0 0.0
        %3878 = vmatpush1.msra.mxu0 0.0
        %3879 = vmatprep.subr.mxu0 0.0
        %3880 = vmatpush1.msra.mxu0 0.0
        %3881 = vmatprep.subr.mxu0 0.0
        %3882 = vmatpush1.msra.mxu0 0.0
        %3883 = vmatprep.subr.mxu0 0.0
        %3884 = vmatpush1.msra.mxu0 0.0
        %3885 = vmatprep.subr.mxu0 0.0
        %3886 = vmatpush1.msra.mxu0 0.0
        %3887 = vmatprep.subr.mxu0 0.0
        %3888 = vmatpush1.msra.mxu0 0.0
        %3889 = vmatprep.subr.mxu0 0.0
        %3890 = vmatpush1.msra.mxu0 0.0
        %3891 = vmatprep.subr.mxu0 0.0
        %3892 = vmatpush1.msra.mxu0 0.0
        %3893 = vmatprep.subr.mxu0 0.0
        %3894 = vmatpush1.msra.mxu0 0.0
        %3895 = vmatprep.subr.mxu0 0.0
        %3896 = vmatpush1.msra.mxu0 0.0
        %3897 = vmatprep.subr.mxu0 0.0
        %3898 = vmatpush1.msra.mxu0 0.0
        %3899 = vmatprep.subr.mxu0 0.0
        %3900 = vmatpush1.msra.mxu0 0.0
        %3901 = vmatprep.subr.mxu0 0.0
        %3902 = vmatpush1.msra.mxu0 0.0
        %3903 = vmatprep.mubr.f32.mxu0 0.0
        %3904 = vmatmul.mubr.f32.gmra.mrb[0].mxu0 %v3825
        %v3905 = vpop.f32.mrb[0].mxu0
        %v3906 = vadd.f32 %v3837, %v3905
        %v3907 = vpop.f32.mrb[0].mxu0
        %3908 = vmatprep.mubr.f32.mxu0 0.0
        %3909 = vmatmul.mubr.f32.gmra.mrb[0].mxu0 %v3826
        %v3910 = vpop.f32.mrb[0].mxu0
        %v3911 = vadd.f32 %v3837, %v3910
        %v3912 = vpop.f32.mrb[0].mxu0
        %3913 = vmatprep.mubr.f32.mxu0 0.0
        %3914 = vmatmul.mubr.f32.gmra.mrb[0].mxu0 %v3827
        %v3915 = vpop.f32.mrb[0].mxu0
        %v3916 = vadd.f32 %v3837, %v3915
        %v3917 = vpop.f32.mrb[0].mxu0
        %3918 = vmatprep.mubr.f32.mxu0 0.0
        %3919 = vmatmul.mubr.f32.gmra.mrb[0].mxu0 %v3828
        %v3920 = vpop.f32.mrb[0].mxu0
        %v3921 = vadd.f32 %v3837, %v3920
        %v3922 = vpop.f32.mrb[0].mxu0
        %3923 = vmatprep.mubr.f32.mxu0 0.0
        %3924 = vmatmul.mubr.f32.gmra.mrb[0].mxu0 %v3829
        %v3925 = vpop.f32.mrb[0].mxu0
        %v3926 = vadd.f32 %v3837, %v3925
        %v3927 = vpop.f32.mrb[0].mxu0
        %3928 = vmatprep.mubr.f32.mxu0 0.0
        %3929 = vmatmul.mubr.f32.gmra.mrb[0].mxu0 %v3830
        %v3930 = vpop.f32.mrb[0].mxu0
        %v3931 = vadd.f32 %v3837, %v3930
        %v3932 = vpop.f32.mrb[0].mxu0
        %3933 = vmatprep.mubr.f32.mxu0 0.0
        %3934 = vmatmul.mubr.f32.gmra.mrb[0].mxu0 %v3831
        %v3935 = vpop.f32.mrb[0].mxu0
        %v3936 = vadd.f32 %v3837, %v3935
        %v3937 = vpop.f32.mrb[0].mxu0
        %3938 = vmatprep.mubr.f32.mxu0 0.0
        %3939 = vmatmul.mubr.f32.gmra.mrb[0].mxu0 %v3832
        %v3940 = vpop.f32.mrb[0].mxu0
        %v3941 = vadd.f32 %v3837, %v3940
        %v3942 = vpop.f32.mrb[0].mxu0
        %3943 = vdwg.mxu0
        %v3944 = vxor.u32 %v3906, 2147483648
        %v3945 = vxor.u32 %v3911, 2147483648
        %v3946 = vxor.u32 %v3916, 2147483648
        %v3947 = vxor.u32 %v3921, 2147483648
        %v3948 = vxor.u32 %v3926, 2147483648
        %v3949 = vxor.u32 %v3931, 2147483648
        %v3950 = vxor.u32 %v3936, 2147483648
        %v3951 = vxor.u32 %v3941, 2147483648
        %v3952 = vmul.f32 %v3944, 1.442695
        %v3953 = vpow.pop %v3952
        %v3954 = vmul.f32 %v3945, 1.442695
        %v3955 = vpow.pop %v3954
        %v3956 = vmul.f32 %v3946, 1.442695
        %v3957 = vpow.pop %v3956
        %v3958 = vmul.f32 %v3947, 1.442695
        %v3959 = vpow.pop %v3958
        %v3960 = vmul.f32 %v3948, 1.442695
        %v3961 = vpow.pop %v3960
        %v3962 = vmul.f32 %v3949, 1.442695
        %v3963 = vpow.pop %v3962
        %v3964 = vmul.f32 %v3950, 1.442695
        %v3965 = vpow.pop %v3964
        %v3966 = vmul.f32 %v3951, 1.442695
        %v3967 = vpow.pop %v3966
        %v3968 = vadd.f32 %v3953, 1.0
        %v3969 = vadd.f32 %v3955, 1.0
        %v3970 = vadd.f32 %v3957, 1.0
        %v3971 = vadd.f32 %v3959, 1.0
        %v3972 = vadd.f32 %v3961, 1.0
        %v3973 = vadd.f32 %v3963, 1.0
        %v3974 = vadd.f32 %v3965, 1.0
        %v3975 = vadd.f32 %v3967, 1.0
        %v3976 = vrcp.pop %v3968
        %v3977 = vmul.f32 1.0, %v3976
        %v3978 = vrcp.pop %v3969
        %v3979 = vmul.f32 1.0, %v3978
        %v3980 = vrcp.pop %v3970
        %v3981 = vmul.f32 1.0, %v3980
        %v3982 = vrcp.pop %v3971
        %v3983 = vmul.f32 1.0, %v3982
        %v3984 = vrcp.pop %v3972
        %v3985 = vmul.f32 1.0, %v3984
        %v3986 = vrcp.pop %v3973
        %v3987 = vmul.f32 1.0, %v3986
        %v3988 = vrcp.pop %v3974
        %v3989 = vmul.f32 1.0, %v3988
        %v3990 = vrcp.pop %v3975
        %v3991 = vmul.f32 1.0, %v3990
        %v3992 = vmul.f32 %v3906, %v3977
        %v3993 = vmul.f32 %v3911, %v3979
        %v3994 = vmul.f32 %v3916, %v3981
        %v3995 = vmul.f32 %v3921, %v3983
        %v3996 = vmul.f32 %v3926, %v3985
        %v3997 = vmul.f32 %v3931, %v3987
        %v3998 = vmul.f32 %v3936, %v3989
        %v3999 = vmul.f32 %v3941, %v3991
        %4000 = vmatprep.subr.mxu0 0.0
        %4001 = vmatpush1.msra.mxu0 %v3535
        %4002 = vmatprep.subr.mxu0 0.0
        %4003 = vmatpush1.msra.mxu0 %v3536
        %4004 = vmatprep.subr.mxu0 0.0
        %4005 = vmatpush1.msra.mxu0 %v3537
        %4006 = vmatprep.subr.mxu0 0.0
        %4007 = vmatpush1.msra.mxu0 %v3538
        %4008 = vmatprep.subr.mxu0 0.0
        %4009 = vmatpush1.msra.mxu0 %v3539
        %4010 = vmatprep.subr.mxu0 0.0
        %4011 = vmatpush1.msra.mxu0 %v3540
        %4012 = vmatprep.subr.mxu0 0.0
        %4013 = vmatpush1.msra.mxu0 %v3541
        %4014 = vmatprep.subr.mxu0 0.0
        %4015 = vmatpush1.msra.mxu0 %v3542
        %4016 = vmatprep.subr.mxu0 0.0
        %4017 = vmatpush1.msra.mxu0 %v3543
        %4018 = vmatprep.subr.mxu0 0.0
        %4019 = vmatpush1.msra.mxu0 %v3544
        %4020 = vmatprep.subr.mxu0 0.0
        %4021 = vmatpush1.msra.mxu0 %v3545
        %4022 = vmatprep.subr.mxu0 0.0
        %4023 = vmatpush1.msra.mxu0 %v3546
        %4024 = vmatprep.subr.mxu0 0.0
        %4025 = vmatpush1.msra.mxu0 %v3547
        %4026 = vmatprep.subr.mxu0 0.0
        %4027 = vmatpush1.msra.mxu0 %v3548
        %4028 = vmatprep.subr.mxu0 0.0
        %4029 = vmatpush1.msra.mxu0 %v3549
        %4030 = vmatprep.subr.mxu0 0.0
        %4031 = vmatpush1.msra.mxu0 %v3550
        %4032 = vmatprep.subr.mxu0 0.0
        %4033 = vmatpush1.msra.mxu0 0.0
        %4034 = vmatprep.subr.mxu0 0.0
        %4035 = vmatpush1.msra.mxu0 0.0
        %4036 = vmatprep.subr.mxu0 0.0
        %4037 = vmatpush1.msra.mxu0 0.0
        %4038 = vmatprep.subr.mxu0 0.0
        %4039 = vmatpush1.msra.mxu0 0.0
        %4040 = vmatprep.subr.mxu0 0.0
        %4041 = vmatpush1.msra.mxu0 0.0
        %4042 = vmatprep.subr.mxu0 0.0
        %4043 = vmatpush1.msra.mxu0 0.0
        %4044 = vmatprep.subr.mxu0 0.0
        %4045 = vmatpush1.msra.mxu0 0.0
        %4046 = vmatprep.subr.mxu0 0.0
        %4047 = vmatpush1.msra.mxu0 0.0
        %4048 = vmatprep.subr.mxu0 0.0
        %4049 = vmatpush1.msra.mxu0 0.0
        %4050 = vmatprep.subr.mxu0 0.0
        %4051 = vmatpush1.msra.mxu0 0.0
        %4052 = vmatprep.subr.mxu0 0.0
        %4053 = vmatpush1.msra.mxu0 0.0
        %4054 = vmatprep.subr.mxu0 0.0
        %4055 = vmatpush1.msra.mxu0 0.0
        %4056 = vmatprep.subr.mxu0 0.0
        %4057 = vmatpush1.msra.mxu0 0.0
        %4058 = vmatprep.subr.mxu0 0.0
        %4059 = vmatpush1.msra.mxu0 0.0
        %4060 = vmatprep.subr.mxu0 0.0
        %4061 = vmatpush1.msra.mxu0 0.0
        %4062 = vmatprep.subr.mxu0 0.0
        %4063 = vmatpush1.msra.mxu0 0.0
        %4064 = vmatprep.mubr.f32.mxu0 0.0
        %4065 = vmatmul.mubr.f32.gmra.mrb[0].mxu0 %v3825
        %v4066 = vpop.f32.mrb[0].mxu0
        %v4067 = vadd.f32 0.0, %v4066
        %v4068 = vpop.f32.mrb[0].mxu0
        %4069 = vmatprep.mubr.f32.mxu0 0.0
        %4070 = vmatmul.mubr.f32.gmra.mrb[0].mxu0 %v3826
        %v4071 = vpop.f32.mrb[0].mxu0
        %v4072 = vadd.f32 0.0, %v4071
        %v4073 = vpop.f32.mrb[0].mxu0
        %4074 = vmatprep.mubr.f32.mxu0 0.0
        %4075 = vmatmul.mubr.f32.gmra.mrb[0].mxu0 %v3827
        %v4076 = vpop.f32.mrb[0].mxu0
        %v4077 = vadd.f32 0.0, %v4076
        %v4078 = vpop.f32.mrb[0].mxu0
        %4079 = vmatprep.mubr.f32.mxu0 0.0
        %4080 = vmatmul.mubr.f32.gmra.mrb[0].mxu0 %v3828
        %v4081 = vpop.f32.mrb[0].mxu0
        %v4082 = vadd.f32 0.0, %v4081
        %v4083 = vpop.f32.mrb[0].mxu0
        %4084 = vmatprep.mubr.f32.mxu0 0.0
        %4085 = vmatmul.mubr.f32.gmra.mrb[0].mxu0 %v3829
        %v4086 = vpop.f32.mrb[0].mxu0
        %v4087 = vadd.f32 0.0, %v4086
        %v4088 = vpop.f32.mrb[0].mxu0
        %4089 = vmatprep.mubr.f32.mxu0 0.0
        %4090 = vmatmul.mubr.f32.gmra.mrb[0].mxu0 %v3830
        %v4091 = vpop.f32.mrb[0].mxu0
        %v4092 = vadd.f32 0.0, %v4091
        %v4093 = vpop.f32.mrb[0].mxu0
        %4094 = vmatprep.mubr.f32.mxu0 0.0
        %4095 = vmatmul.mubr.f32.gmra.mrb[0].mxu0 %v3831
        %v4096 = vpop.f32.mrb[0].mxu0
        %v4097 = vadd.f32 0.0, %v4096
        %v4098 = vpop.f32.mrb[0].mxu0
        %4099 = vmatprep.mubr.f32.mxu0 0.0
        %4100 = vmatmul.mubr.f32.gmra.mrb[0].mxu0 %v3832
        %v4101 = vpop.f32.mrb[0].mxu0
        %v4102 = vadd.f32 0.0, %v4101
        %v4103 = vpop.f32.mrb[0].mxu0
        %4104 = vdwg.mxu0
        %4105 = vmatprep.subr.mxu0 0.0
        %4106 = vmatpush1.msra.mxu0 %v3518
        %4107 = vmatprep.subr.mxu0 0.0
        %4108 = vmatpush1.msra.mxu0 %v3519
        %4109 = vmatprep.subr.mxu0 0.0
        %4110 = vmatpush1.msra.mxu0 %v3520
        %4111 = vmatprep.subr.mxu0 0.0
        %4112 = vmatpush1.msra.mxu0 %v3521
        %4113 = vmatprep.subr.mxu0 0.0
        %4114 = vmatpush1.msra.mxu0 %v3522
        %4115 = vmatprep.subr.mxu0 0.0
        %4116 = vmatpush1.msra.mxu0 %v3523
        %4117 = vmatprep.subr.mxu0 0.0
        %4118 = vmatpush1.msra.mxu0 %v3524
        %4119 = vmatprep.subr.mxu0 0.0
        %4120 = vmatpush1.msra.mxu0 %v3525
        %4121 = vmatprep.subr.mxu0 0.0
        %4122 = vmatpush1.msra.mxu0 %v3526
        %4123 = vmatprep.subr.mxu0 0.0
        %4124 = vmatpush1.msra.mxu0 %v3527
        %4125 = vmatprep.subr.mxu0 0.0
        %4126 = vmatpush1.msra.mxu0 %v3528
        %4127 = vmatprep.subr.mxu0 0.0
        %4128 = vmatpush1.msra.mxu0 %v3529
        %4129 = vmatprep.subr.mxu0 0.0
        %4130 = vmatpush1.msra.mxu0 %v3530
        %4131 = vmatprep.subr.mxu0 0.0
        %4132 = vmatpush1.msra.mxu0 %v3531
        %4133 = vmatprep.subr.mxu0 0.0
        %4134 = vmatpush1.msra.mxu0 %v3532
        %4135 = vmatprep.subr.mxu0 0.0
        %4136 = vmatpush1.msra.mxu0 %v3533
        %4137 = vmatprep.subr.mxu0 0.0
        %4138 = vmatpush1.msra.mxu0 0.0
        %4139 = vmatprep.subr.mxu0 0.0
        %4140 = vmatpush1.msra.mxu0 0.0
        %4141 = vmatprep.subr.mxu0 0.0
        %4142 = vmatpush1.msra.mxu0 0.0
        %4143 = vmatprep.subr.mxu0 0.0
        %4144 = vmatpush1.msra.mxu0 0.0
        %4145 = vmatprep.subr.mxu0 0.0
        %4146 = vmatpush1.msra.mxu0 0.0
        %4147 = vmatprep.subr.mxu0 0.0
        %4148 = vmatpush1.msra.mxu0 0.0
        %4149 = vmatprep.subr.mxu0 0.0
        %4150 = vmatpush1.msra.mxu0 0.0
        %4151 = vmatprep.subr.mxu0 0.0
        %4152 = vmatpush1.msra.mxu0 0.0
        %4153 = vmatprep.subr.mxu0 0.0
        %4154 = vmatpush1.msra.mxu0 0.0
        %4155 = vmatprep.subr.mxu0 0.0
        %4156 = vmatpush1.msra.mxu0 0.0
        %4157 = vmatprep.subr.mxu0 0.0
        %4158 = vmatpush1.msra.mxu0 0.0
        %4159 = vmatprep.subr.mxu0 0.0
        %4160 = vmatpush1.msra.mxu0 0.0
        %4161 = vmatprep.subr.mxu0 0.0
        %4162 = vmatpush1.msra.mxu0 0.0
        %4163 = vmatprep.subr.mxu0 0.0
        %4164 = vmatpush1.msra.mxu0 0.0
        %4165 = vmatprep.subr.mxu0 0.0
        %4166 = vmatpush1.msra.mxu0 0.0
        %4167 = vmatprep.subr.mxu0 0.0
        %4168 = vmatpush1.msra.mxu0 0.0
        %4169 = vmatprep.mubr.f32.mxu0 0.0
        %4170 = vmatmul.mubr.f32.gmra.mrb[0].mxu0 %v3992
        %v4171 = vpop.f32.mrb[0].mxu0
        %v4172 = vadd.f32 %v4067, %v4171
        %v4173 = vpop.f32.mrb[0].mxu0
        %4174 = vmatprep.mubr.f32.mxu0 0.0
        %4175 = vmatmul.mubr.f32.gmra.mrb[0].mxu0 %v3993
        %v4176 = vpop.f32.mrb[0].mxu0
        %v4177 = vadd.f32 %v4072, %v4176
        %v4178 = vpop.f32.mrb[0].mxu0
        %4179 = vmatprep.mubr.f32.mxu0 0.0
        %4180 = vmatmul.mubr.f32.gmra.mrb[0].mxu0 %v3994
        %v4181 = vpop.f32.mrb[0].mxu0
        %v4182 = vadd.f32 %v4077, %v4181
        %v4183 = vpop.f32.mrb[0].mxu0
        %4184 = vmatprep.mubr.f32.mxu0 0.0
        %4185 = vmatmul.mubr.f32.gmra.mrb[0].mxu0 %v3995
        %v4186 = vpop.f32.mrb[0].mxu0
        %v4187 = vadd.f32 %v4082, %v4186
        %v4188 = vpop.f32.mrb[0].mxu0
        %4189 = vmatprep.mubr.f32.mxu0 0.0
        %4190 = vmatmul.mubr.f32.gmra.mrb[0].mxu0 %v3996
        %v4191 = vpop.f32.mrb[0].mxu0
        %v4192 = vadd.f32 %v4087, %v4191
        %v4193 = vpop.f32.mrb[0].mxu0
        %4194 = vmatprep.mubr.f32.mxu0 0.0
        %4195 = vmatmul.mubr.f32.gmra.mrb[0].mxu0 %v3997
        %v4196 = vpop.f32.mrb[0].mxu0
        %v4197 = vadd.f32 %v4092, %v4196
        %v4198 = vpop.f32.mrb[0].mxu0
        %4199 = vmatprep.mubr.f32.mxu0 0.0
        %4200 = vmatmul.mubr.f32.gmra.mrb[0].mxu0 %v3998
        %v4201 = vpop.f32.mrb[0].mxu0
        %v4202 = vadd.f32 %v4097, %v4201
        %v4203 = vpop.f32.mrb[0].mxu0
        %4204 = vmatprep.mubr.f32.mxu0 0.0
        %4205 = vmatmul.mubr.f32.gmra.mrb[0].mxu0 %v3999
        %v4206 = vpop.f32.mrb[0].mxu0
        %v4207 = vadd.f32 %v4102, %v4206
        %v4208 = vpop.f32.mrb[0].mxu0
        %4209 = vdwg.mxu0
        %v4211 = vlaneseq
        %v4212 = vshrl.u32 %v4211, 7
        %v4213 = vsub.s32 0, %v4212
        %v4214 = vrot.slane %v3552, %v4213
        %v4216 = vadd.f32 %v4172, %v4214
        %v4217 = vadd.f32 %v4177, %v4214
        %v4218 = vadd.f32 %v4182, %v4214
        %v4219 = vadd.f32 %v4187, %v4214
        %v4220 = vadd.f32 %v4192, %v4214
        %v4221 = vadd.f32 %v4197, %v4214
        %v4222 = vadd.f32 %v4202, %v4214
        %v4223 = vadd.f32 %v4207, %v4214
        %v4224 = vadd.f32 %v4216, %v3488
        %v4225 = vadd.f32 %v4217, %v3489
        %v4226 = vadd.f32 %v4218, %v3490
        %v4227 = vadd.f32 %v4219, %v3491
        %v4228 = vadd.f32 %v4220, %v3492
        %v4229 = vadd.f32 %v4221, %v3493
        %v4230 = vadd.f32 %v4222, %v3494
        %v4231 = vadd.f32 %v4223, %v3495
        %4232 = vst [vmem:[#allocation2 + $0x18] sm:$0xff] %v4224
        %4233 = vst [vmem:[#allocation2 + $0x20] sm:$0xff] %v4225
        %4234 = vst [vmem:[#allocation2 + $0x28] sm:$0xff] %v4226
        %4235 = vst [vmem:[#allocation2 + $0x30] sm:$0xff] %v4227
        %4236 = vst [vmem:[#allocation2 + $0x38] sm:$0xff] %v4228
        %4237 = vst [vmem:[#allocation2 + $0x40] sm:$0xff] %v4229
        %4238 = vst [vmem:[#allocation2 + $0x48] sm:$0xff] %v4230
        %4239 = vst [vmem:[#allocation2 + $0x50] sm:$0xff] %v4231
        %4240 = vst.msk [vmem:[#allocation2 + $0x7] sm:$0xff] %vm1464, 0.0
        %4241 = vst.msk [vmem:[#allocation2 + $0xf] sm:$0xff] %vm1464, 0.0
        %4242 = vst.msk [vmem:[#allocation2 + $0x17] sm:$0x1] %vm1467, 0.0
        %4246 = vrot.lane.b32.xlu0 %v4229, 32
        %v4247 = vpop.permute.xlu0 %4246
        %4248 = vrot.lane.b32.xlu0 %v4230, 32
        %v4249 = vpop.permute.xlu0 %4248
        %4250 = vrot.lane.b32.xlu0 %v4231, 32
        %v4251 = vpop.permute.xlu0 %4250
        %4255 = vst.msk [vmem:[#allocation2] sm:$0x80] %vm1481, %v4247
        %4256 = vst.msk [vmem:[#allocation2 + $0x8] sm:$0xff] %vm1483, %v4249
        %4257 = vst.msk [vmem:[#allocation2 + $0x10] sm:$0xff] %vm1483, %v4251
        %4258 = vst.msk [vmem:[#allocation2 + $0x58] sm:$0xff] %vm1486, 0.0
        %4259 = vst.msk [vmem:[#allocation2 + $0x60] sm:$0xff] %vm1486, 0.0
        %4260 = vst.msk [vmem:[#allocation2 + $0x68] sm:$0x1] %vm1489, 0.0
        %4264 = vrot.lane.b32.xlu0 %v4224, 96
        %v4265 = vpop.permute.xlu0 %4264
        %4266 = vrot.lane.b32.xlu0 %v4225, 96
        %v4267 = vpop.permute.xlu0 %4266
        %4268 = vrot.lane.b32.xlu0 %v4226, 96
        %v4269 = vpop.permute.xlu0 %4268
        %4273 = vst.msk [vmem:[#allocation2 + $0x58] sm:$0xff] %vm1503, %v4265
        %4274 = vst.msk [vmem:[#allocation2 + $0x60] sm:$0xff] %vm1503, %v4267
        %4275 = vst.msk [vmem:[#allocation2 + $0x68] sm:$0x1] %vm1506, %v4269
        %v4276 = vld [vmem:[#allocation2 + $0x7] sm:$0xff]
        %v4277 = vld [vmem:[#allocation2 + $0xf] sm:$0xff]
        %v4278 = vld [vmem:[#allocation2 + $0x17] sm:$0xff]
        %v4279 = vld [vmem:[#allocation2 + $0x1f] sm:$0xff]
        %v4280 = vld [vmem:[#allocation2 + $0x27] sm:$0xff]
        %v4281 = vld [vmem:[#allocation2 + $0x2f] sm:$0xff]
        %v4282 = vld [vmem:[#allocation2 + $0x37] sm:$0xff]
        %v4283 = vld [vmem:[#allocation2 + $0x3f] sm:$0xff]
        %v4284 = vmul.f32 %v4276, %v670
        %v4285 = vmul.f32 %v4277, %v671
        %v4286 = vmul.f32 %v4278, %v672
        %v4287 = vmul.f32 %v4279, %v673
        %v4288 = vmul.f32 %v4280, %v674
        %v4289 = vmul.f32 %v4281, %v675
        %v4290 = vmul.f32 %v4282, %v676
        %v4291 = vmul.f32 %v4283, %v677
        %v4292 = vld [vmem:[#allocation2 + $0x8] sm:$0xff]
        %v4293 = vld [vmem:[#allocation2 + $0x10] sm:$0xff]
        %v4294 = vld [vmem:[#allocation2 + $0x18] sm:$0xff]
        %v4295 = vld [vmem:[#allocation2 + $0x20] sm:$0xff]
        %v4296 = vld [vmem:[#allocation2 + $0x28] sm:$0xff]
        %v4297 = vld [vmem:[#allocation2 + $0x30] sm:$0xff]
        %v4298 = vld [vmem:[#allocation2 + $0x38] sm:$0xff]
        %v4299 = vld [vmem:[#allocation2 + $0x40] sm:$0xff]
        %v4300 = vld [vmem:[#allocation2 + $0x9] sm:$0xff]
        %v4301 = vld [vmem:[#allocation2 + $0x11] sm:$0xff]
        %v4302 = vld [vmem:[#allocation2 + $0x19] sm:$0xff]
        %v4303 = vld [vmem:[#allocation2 + $0x21] sm:$0xff]
        %v4304 = vld [vmem:[#allocation2 + $0x29] sm:$0xff]
        %v4305 = vld [vmem:[#allocation2 + $0x31] sm:$0xff]
        %v4306 = vld [vmem:[#allocation2 + $0x39] sm:$0xff]
        %v4307 = vld [vmem:[#allocation2 + $0x41] sm:$0xff]
        %v4308 = vmul.f32 %v4300, %v718
        %v4309 = vmul.f32 %v4301, %v719
        %v4310 = vmul.f32 %v4302, %v720
        %v4311 = vmul.f32 %v4303, %v721
        %v4312 = vmul.f32 %v4304, %v722
        %v4313 = vmul.f32 %v4305, %v723
        %v4314 = vmul.f32 %v4306, %v724
        %v4315 = vmul.f32 %v4307, %v725
        %v4316 = vld [vmem:[#allocation2 + $0x47] sm:$0xff]
        %v4317 = vld [vmem:[#allocation2 + $0x4f] sm:$0xff]
        %v4318 = vmul.f32 %v4278, %v670
        %v4319 = vmul.f32 %v4279, %v671
        %v4320 = vmul.f32 %v4280, %v672
        %v4321 = vmul.f32 %v4281, %v673
        %v4322 = vmul.f32 %v4282, %v674
        %v4323 = vmul.f32 %v4283, %v675
        %v4324 = vmul.f32 %v4316, %v676
        %v4325 = vmul.f32 %v4317, %v677
        %v4326 = vld [vmem:[#allocation2 + $0x48] sm:$0xff]
        %v4327 = vld [vmem:[#allocation2 + $0x50] sm:$0xff]
        %v4328 = vld [vmem:[#allocation2 + $0x49] sm:$0xff]
        %v4329 = vld [vmem:[#allocation2 + $0x51] sm:$0xff]
        %v4330 = vmul.f32 %v4302, %v718
        %v4331 = vmul.f32 %v4303, %v719
        %v4332 = vmul.f32 %v4304, %v720
        %v4333 = vmul.f32 %v4305, %v721
        %v4334 = vmul.f32 %v4306, %v722
        %v4335 = vmul.f32 %v4307, %v723
        %v4336 = vmul.f32 %v4328, %v724
        %v4337 = vmul.f32 %v4329, %v725
        %v4338 = vld [vmem:[#allocation2 + $0x57] sm:$0xff]
        %v4339 = vld [vmem:[#allocation2 + $0x5f] sm:$0xff]
        %v4340 = vmul.f32 %v4280, %v670
        %v4341 = vmul.f32 %v4281, %v671
        %v4342 = vmul.f32 %v4282, %v672
        %v4343 = vmul.f32 %v4283, %v673
        %v4344 = vmul.f32 %v4316, %v674
        %v4345 = vmul.f32 %v4317, %v675
        %v4346 = vmul.f32 %v4338, %v676
        %v4347 = vmul.f32 %v4339, %v677
        %v4348 = vld [vmem:[#allocation2 + $0x58] sm:$0xff]
        %v4349 = vld [vmem:[#allocation2 + $0x60] sm:$0xff]
        %v4350 = vld [vmem:[#allocation2 + $0x59] sm:$0xff]
        %v4351 = vld [vmem:[#allocation2 + $0x61] sm:$0xff]
        %v4352 = vmul.f32 %v4304, %v718
        %v4353 = vmul.f32 %v4305, %v719
        %v4354 = vmul.f32 %v4306, %v720
        %v4355 = vmul.f32 %v4307, %v721
        %v4356 = vmul.f32 %v4328, %v722
        %v4357 = vmul.f32 %v4329, %v723
        %v4358 = vmul.f32 %v4350, %v724
        %v4359 = vmul.f32 %v4351, %v725
        %s4360 = scalar_lea.vmem %s8, 1152
        %v4361 = vld [vmem:[%s4360] sm:$0xff]
        %v4362 = vld [vmem:[%s4360 + $0x8] sm:$0xff]
        %v4363 = vld [vmem:[%s4360 + $0x10] sm:$0xff]
        %v4364 = vld [vmem:[%s4360 + $0x18] sm:$0xff]
        %v4365 = vld [vmem:[%s4360 + $0x20] sm:$0xff]
        %v4366 = vld [vmem:[%s4360 + $0x28] sm:$0xff]
        %v4367 = vld [vmem:[%s4360 + $0x30] sm:$0xff]
        %v4368 = vld [vmem:[%s4360 + $0x38] sm:$0xff]
        %v4369 = vld [vmem:[%s4360 + $0x40] sm:$0xff]
        %v4370 = vld [vmem:[%s4360 + $0x48] sm:$0xff]
        %v4371 = vld [vmem:[%s4360 + $0x50] sm:$0xff]
        %v4372 = vld [vmem:[%s4360 + $0x58] sm:$0xff]
        %v4373 = vld [vmem:[%s4360 + $0x60] sm:$0xff]
        %v4374 = vld [vmem:[%s4360 + $0x68] sm:$0xff]
        %v4375 = vld [vmem:[%s4360 + $0x70] sm:$0xff]
        %v4376 = vld [vmem:[%s4360 + $0x78] sm:$0xff]
        %s4377 = scalar_lea.vmem %s8, 1280
        %v4378 = vld [vmem:[%s4377] sm:$0xff]
        %v4379 = vld [vmem:[%s4377 + $0x8] sm:$0xff]
        %v4380 = vld [vmem:[%s4377 + $0x10] sm:$0xff]
        %v4381 = vld [vmem:[%s4377 + $0x18] sm:$0xff]
        %v4382 = vld [vmem:[%s4377 + $0x20] sm:$0xff]
        %v4383 = vld [vmem:[%s4377 + $0x28] sm:$0xff]
        %v4384 = vld [vmem:[%s4377 + $0x30] sm:$0xff]
        %v4385 = vld [vmem:[%s4377 + $0x38] sm:$0xff]
        %v4386 = vld [vmem:[%s4377 + $0x40] sm:$0xff]
        %v4387 = vld [vmem:[%s4377 + $0x48] sm:$0xff]
        %v4388 = vld [vmem:[%s4377 + $0x50] sm:$0xff]
        %v4389 = vld [vmem:[%s4377 + $0x58] sm:$0xff]
        %v4390 = vld [vmem:[%s4377 + $0x60] sm:$0xff]
        %v4391 = vld [vmem:[%s4377 + $0x68] sm:$0xff]
        %v4392 = vld [vmem:[%s4377 + $0x70] sm:$0xff]
        %v4393 = vld [vmem:[%s4377 + $0x78] sm:$0xff]
        %4394 = vmatprep.subr.mxu0 0.0
        %4395 = vmatpush1.msra.mxu0 %v4378
        %4396 = vmatprep.subr.mxu0 0.0
        %4397 = vmatpush1.msra.mxu0 %v4379
        %4398 = vmatprep.subr.mxu0 0.0
        %4399 = vmatpush1.msra.mxu0 %v4380
        %4400 = vmatprep.subr.mxu0 0.0
        %4401 = vmatpush1.msra.mxu0 %v4381
        %4402 = vmatprep.subr.mxu0 0.0
        %4403 = vmatpush1.msra.mxu0 %v4382
        %4404 = vmatprep.subr.mxu0 0.0
        %4405 = vmatpush1.msra.mxu0 %v4383
        %4406 = vmatprep.subr.mxu0 0.0
        %4407 = vmatpush1.msra.mxu0 %v4384
        %4408 = vmatprep.subr.mxu0 0.0
        %4409 = vmatpush1.msra.mxu0 %v4385
        %4410 = vmatprep.subr.mxu0 0.0
        %4411 = vmatpush1.msra.mxu0 %v4386
        %4412 = vmatprep.subr.mxu0 0.0
        %4413 = vmatpush1.msra.mxu0 %v4387
        %4414 = vmatprep.subr.mxu0 0.0
        %4415 = vmatpush1.msra.mxu0 %v4388
        %4416 = vmatprep.subr.mxu0 0.0
        %4417 = vmatpush1.msra.mxu0 %v4389
        %4418 = vmatprep.subr.mxu0 0.0
        %4419 = vmatpush1.msra.mxu0 %v4390
        %4420 = vmatprep.subr.mxu0 0.0
        %4421 = vmatpush1.msra.mxu0 %v4391
        %4422 = vmatprep.subr.mxu0 0.0
        %4423 = vmatpush1.msra.mxu0 %v4392
        %4424 = vmatprep.subr.mxu0 0.0
        %4425 = vmatpush1.msra.mxu0 %v4393
        %4426 = vmatprep.subr.mxu0 0.0
        %4427 = vmatpush1.msra.mxu0 0.0
        %4428 = vmatprep.subr.mxu0 0.0
        %4429 = vmatpush1.msra.mxu0 0.0
        %4430 = vmatprep.subr.mxu0 0.0
        %4431 = vmatpush1.msra.mxu0 0.0
        %4432 = vmatprep.subr.mxu0 0.0
        %4433 = vmatpush1.msra.mxu0 0.0
        %4434 = vmatprep.subr.mxu0 0.0
        %4435 = vmatpush1.msra.mxu0 0.0
        %4436 = vmatprep.subr.mxu0 0.0
        %4437 = vmatpush1.msra.mxu0 0.0
        %4438 = vmatprep.subr.mxu0 0.0
        %4439 = vmatpush1.msra.mxu0 0.0
        %4440 = vmatprep.subr.mxu0 0.0
        %4441 = vmatpush1.msra.mxu0 0.0
        %4442 = vmatprep.subr.mxu0 0.0
        %4443 = vmatpush1.msra.mxu0 0.0
        %4444 = vmatprep.subr.mxu0 0.0
        %4445 = vmatpush1.msra.mxu0 0.0
        %4446 = vmatprep.subr.mxu0 0.0
        %4447 = vmatpush1.msra.mxu0 0.0
        %4448 = vmatprep.subr.mxu0 0.0
        %4449 = vmatpush1.msra.mxu0 0.0
        %4450 = vmatprep.subr.mxu0 0.0
        %4451 = vmatpush1.msra.mxu0 0.0
        %4452 = vmatprep.subr.mxu0 0.0
        %4453 = vmatpush1.msra.mxu0 0.0
        %4454 = vmatprep.subr.mxu0 0.0
        %4455 = vmatpush1.msra.mxu0 0.0
        %4456 = vmatprep.subr.mxu0 0.0
        %4457 = vmatpush1.msra.mxu0 0.0
        %4458 = vmatprep.mubr.f32.mxu0 0.0
        %4459 = vmatmul.mubr.f32.gmra.mrb[0].mxu0 %v4292
        %v4460 = vpop.f32.mrb[0].mxu0
        %v4461 = vadd.f32 0.0, %v4460
        %v4462 = vpop.f32.mrb[0].mxu0
        %4463 = vmatprep.mubr.f32.mxu0 0.0
        %4464 = vmatmul.mubr.f32.gmra.mrb[0].mxu0 %v4293
        %v4465 = vpop.f32.mrb[0].mxu0
        %v4466 = vadd.f32 0.0, %v4465
        %v4467 = vpop.f32.mrb[0].mxu0
        %4468 = vmatprep.mubr.f32.mxu0 0.0
        %4469 = vmatmul.mubr.f32.gmra.mrb[0].mxu0 %v4294
        %v4470 = vpop.f32.mrb[0].mxu0
        %v4471 = vadd.f32 0.0, %v4470
        %v4472 = vpop.f32.mrb[0].mxu0
        %4473 = vmatprep.mubr.f32.mxu0 0.0
        %4474 = vmatmul.mubr.f32.gmra.mrb[0].mxu0 %v4295
        %v4475 = vpop.f32.mrb[0].mxu0
        %v4476 = vadd.f32 0.0, %v4475
        %v4477 = vpop.f32.mrb[0].mxu0
        %4478 = vmatprep.mubr.f32.mxu0 0.0
        %4479 = vmatmul.mubr.f32.gmra.mrb[0].mxu0 %v4296
        %v4480 = vpop.f32.mrb[0].mxu0
        %v4481 = vadd.f32 0.0, %v4480
        %v4482 = vpop.f32.mrb[0].mxu0
        %4483 = vmatprep.mubr.f32.mxu0 0.0
        %4484 = vmatmul.mubr.f32.gmra.mrb[0].mxu0 %v4297
        %v4485 = vpop.f32.mrb[0].mxu0
        %v4486 = vadd.f32 0.0, %v4485
        %v4487 = vpop.f32.mrb[0].mxu0
        %4488 = vmatprep.mubr.f32.mxu0 0.0
        %4489 = vmatmul.mubr.f32.gmra.mrb[0].mxu0 %v4298
        %v4490 = vpop.f32.mrb[0].mxu0
        %v4491 = vadd.f32 0.0, %v4490
        %v4492 = vpop.f32.mrb[0].mxu0
        %4493 = vmatprep.mubr.f32.mxu0 0.0
        %4494 = vmatmul.mubr.f32.gmra.mrb[0].mxu0 %v4299
        %v4495 = vpop.f32.mrb[0].mxu0
        %v4496 = vadd.f32 0.0, %v4495
        %v4497 = vpop.f32.mrb[0].mxu0
        %4498 = vdwg.mxu0
        %4499 = vmatprep.subr.mxu0 0.0
        %4500 = vmatpush1.msra.mxu0 %v4361
        %4501 = vmatprep.subr.mxu0 0.0
        %4502 = vmatpush1.msra.mxu0 %v4362
        %4503 = vmatprep.subr.mxu0 0.0
        %4504 = vmatpush1.msra.mxu0 %v4363
        %4505 = vmatprep.subr.mxu0 0.0
        %4506 = vmatpush1.msra.mxu0 %v4364
        %4507 = vmatprep.subr.mxu0 0.0
        %4508 = vmatpush1.msra.mxu0 %v4365
        %4509 = vmatprep.subr.mxu0 0.0
        %4510 = vmatpush1.msra.mxu0 %v4366
        %4511 = vmatprep.subr.mxu0 0.0
        %4512 = vmatpush1.msra.mxu0 %v4367
        %4513 = vmatprep.subr.mxu0 0.0
        %4514 = vmatpush1.msra.mxu0 %v4368
        %4515 = vmatprep.subr.mxu0 0.0
        %4516 = vmatpush1.msra.mxu0 %v4369
        %4517 = vmatprep.subr.mxu0 0.0
        %4518 = vmatpush1.msra.mxu0 %v4370
        %4519 = vmatprep.subr.mxu0 0.0
        %4520 = vmatpush1.msra.mxu0 %v4371
        %4521 = vmatprep.subr.mxu0 0.0
        %4522 = vmatpush1.msra.mxu0 %v4372
        %4523 = vmatprep.subr.mxu0 0.0
        %4524 = vmatpush1.msra.mxu0 %v4373
        %4525 = vmatprep.subr.mxu0 0.0
        %4526 = vmatpush1.msra.mxu0 %v4374
        %4527 = vmatprep.subr.mxu0 0.0
        %4528 = vmatpush1.msra.mxu0 %v4375
        %4529 = vmatprep.subr.mxu0 0.0
        %4530 = vmatpush1.msra.mxu0 %v4376
        %4531 = vmatprep.subr.mxu0 0.0
        %4532 = vmatpush1.msra.mxu0 0.0
        %4533 = vmatprep.subr.mxu0 0.0
        %4534 = vmatpush1.msra.mxu0 0.0
        %4535 = vmatprep.subr.mxu0 0.0
        %4536 = vmatpush1.msra.mxu0 0.0
        %4537 = vmatprep.subr.mxu0 0.0
        %4538 = vmatpush1.msra.mxu0 0.0
        %4539 = vmatprep.subr.mxu0 0.0
        %4540 = vmatpush1.msra.mxu0 0.0
        %4541 = vmatprep.subr.mxu0 0.0
        %4542 = vmatpush1.msra.mxu0 0.0
        %4543 = vmatprep.subr.mxu0 0.0
        %4544 = vmatpush1.msra.mxu0 0.0
        %4545 = vmatprep.subr.mxu0 0.0
        %4546 = vmatpush1.msra.mxu0 0.0
        %4547 = vmatprep.subr.mxu0 0.0
        %4548 = vmatpush1.msra.mxu0 0.0
        %4549 = vmatprep.subr.mxu0 0.0
        %4550 = vmatpush1.msra.mxu0 0.0
        %4551 = vmatprep.subr.mxu0 0.0
        %4552 = vmatpush1.msra.mxu0 0.0
        %4553 = vmatprep.subr.mxu0 0.0
        %4554 = vmatpush1.msra.mxu0 0.0
        %4555 = vmatprep.subr.mxu0 0.0
        %4556 = vmatpush1.msra.mxu0 0.0
        %4557 = vmatprep.subr.mxu0 0.0
        %4558 = vmatpush1.msra.mxu0 0.0
        %4559 = vmatprep.subr.mxu0 0.0
        %4560 = vmatpush1.msra.mxu0 0.0
        %4561 = vmatprep.subr.mxu0 0.0
        %4562 = vmatpush1.msra.mxu0 0.0
        %4563 = vmatprep.mubr.f32.mxu0 0.0
        %4564 = vmatmul.mubr.f32.gmra.mrb[0].mxu0 %v4284
        %v4565 = vpop.f32.mrb[0].mxu0
        %v4566 = vadd.f32 %v4461, %v4565
        %v4567 = vpop.f32.mrb[0].mxu0
        %4568 = vmatprep.mubr.f32.mxu0 0.0
        %4569 = vmatmul.mubr.f32.gmra.mrb[0].mxu0 %v4285
        %v4570 = vpop.f32.mrb[0].mxu0
        %v4571 = vadd.f32 %v4466, %v4570
        %v4572 = vpop.f32.mrb[0].mxu0
        %4573 = vmatprep.mubr.f32.mxu0 0.0
        %4574 = vmatmul.mubr.f32.gmra.mrb[0].mxu0 %v4286
        %v4575 = vpop.f32.mrb[0].mxu0
        %v4576 = vadd.f32 %v4471, %v4575
        %v4577 = vpop.f32.mrb[0].mxu0
        %4578 = vmatprep.mubr.f32.mxu0 0.0
        %4579 = vmatmul.mubr.f32.gmra.mrb[0].mxu0 %v4287
        %v4580 = vpop.f32.mrb[0].mxu0
        %v4581 = vadd.f32 %v4476, %v4580
        %v4582 = vpop.f32.mrb[0].mxu0
        %4583 = vmatprep.mubr.f32.mxu0 0.0
        %4584 = vmatmul.mubr.f32.gmra.mrb[0].mxu0 %v4288
        %v4585 = vpop.f32.mrb[0].mxu0
        %v4586 = vadd.f32 %v4481, %v4585
        %v4587 = vpop.f32.mrb[0].mxu0
        %4588 = vmatprep.mubr.f32.mxu0 0.0
        %4589 = vmatmul.mubr.f32.gmra.mrb[0].mxu0 %v4289
        %v4590 = vpop.f32.mrb[0].mxu0
        %v4591 = vadd.f32 %v4486, %v4590
        %v4592 = vpop.f32.mrb[0].mxu0
        %4593 = vmatprep.mubr.f32.mxu0 0.0
        %4594 = vmatmul.mubr.f32.gmra.mrb[0].mxu0 %v4290
        %v4595 = vpop.f32.mrb[0].mxu0
        %v4596 = vadd.f32 %v4491, %v4595
        %v4597 = vpop.f32.mrb[0].mxu0
        %4598 = vmatprep.mubr.f32.mxu0 0.0
        %4599 = vmatmul.mubr.f32.gmra.mrb[0].mxu0 %v4291
        %v4600 = vpop.f32.mrb[0].mxu0
        %v4601 = vadd.f32 %v4496, %v4600
        %v4602 = vpop.f32.mrb[0].mxu0
        %4603 = vdwg.mxu0
        %s4604 = scalar_lea.vmem %s8, 1408
        %v4605 = vld [vmem:[%s4604] sm:$0xff]
        %v4606 = vld [vmem:[%s4604 + $0x8] sm:$0xff]
        %v4607 = vld [vmem:[%s4604 + $0x10] sm:$0xff]
        %v4608 = vld [vmem:[%s4604 + $0x18] sm:$0xff]
        %v4609 = vld [vmem:[%s4604 + $0x20] sm:$0xff]
        %v4610 = vld [vmem:[%s4604 + $0x28] sm:$0xff]
        %v4611 = vld [vmem:[%s4604 + $0x30] sm:$0xff]
        %v4612 = vld [vmem:[%s4604 + $0x38] sm:$0xff]
        %v4613 = vld [vmem:[%s4604 + $0x40] sm:$0xff]
        %v4614 = vld [vmem:[%s4604 + $0x48] sm:$0xff]
        %v4615 = vld [vmem:[%s4604 + $0x50] sm:$0xff]
        %v4616 = vld [vmem:[%s4604 + $0x58] sm:$0xff]
        %v4617 = vld [vmem:[%s4604 + $0x60] sm:$0xff]
        %v4618 = vld [vmem:[%s4604 + $0x68] sm:$0xff]
        %v4619 = vld [vmem:[%s4604 + $0x70] sm:$0xff]
        %v4620 = vld [vmem:[%s4604 + $0x78] sm:$0xff]
        %4621 = vmatprep.subr.mxu0 0.0
        %4622 = vmatpush1.msra.mxu0 %v4605
        %4623 = vmatprep.subr.mxu0 0.0
        %4624 = vmatpush1.msra.mxu0 %v4606
        %4625 = vmatprep.subr.mxu0 0.0
        %4626 = vmatpush1.msra.mxu0 %v4607
        %4627 = vmatprep.subr.mxu0 0.0
        %4628 = vmatpush1.msra.mxu0 %v4608
        %4629 = vmatprep.subr.mxu0 0.0
        %4630 = vmatpush1.msra.mxu0 %v4609
        %4631 = vmatprep.subr.mxu0 0.0
        %4632 = vmatpush1.msra.mxu0 %v4610
        %4633 = vmatprep.subr.mxu0 0.0
        %4634 = vmatpush1.msra.mxu0 %v4611
        %4635 = vmatprep.subr.mxu0 0.0
        %4636 = vmatpush1.msra.mxu0 %v4612
        %4637 = vmatprep.subr.mxu0 0.0
        %4638 = vmatpush1.msra.mxu0 %v4613
        %4639 = vmatprep.subr.mxu0 0.0
        %4640 = vmatpush1.msra.mxu0 %v4614
        %4641 = vmatprep.subr.mxu0 0.0
        %4642 = vmatpush1.msra.mxu0 %v4615
        %4643 = vmatprep.subr.mxu0 0.0
        %4644 = vmatpush1.msra.mxu0 %v4616
        %4645 = vmatprep.subr.mxu0 0.0
        %4646 = vmatpush1.msra.mxu0 %v4617
        %4647 = vmatprep.subr.mxu0 0.0
        %4648 = vmatpush1.msra.mxu0 %v4618
        %4649 = vmatprep.subr.mxu0 0.0
        %4650 = vmatpush1.msra.mxu0 %v4619
        %4651 = vmatprep.subr.mxu0 0.0
        %4652 = vmatpush1.msra.mxu0 %v4620
        %4653 = vmatprep.subr.mxu0 0.0
        %4654 = vmatpush1.msra.mxu0 0.0
        %4655 = vmatprep.subr.mxu0 0.0
        %4656 = vmatpush1.msra.mxu0 0.0
        %4657 = vmatprep.subr.mxu0 0.0
        %4658 = vmatpush1.msra.mxu0 0.0
        %4659 = vmatprep.subr.mxu0 0.0
        %4660 = vmatpush1.msra.mxu0 0.0
        %4661 = vmatprep.subr.mxu0 0.0
        %4662 = vmatpush1.msra.mxu0 0.0
        %4663 = vmatprep.subr.mxu0 0.0
        %4664 = vmatpush1.msra.mxu0 0.0
        %4665 = vmatprep.subr.mxu0 0.0
        %4666 = vmatpush1.msra.mxu0 0.0
        %4667 = vmatprep.subr.mxu0 0.0
        %4668 = vmatpush1.msra.mxu0 0.0
        %4669 = vmatprep.subr.mxu0 0.0
        %4670 = vmatpush1.msra.mxu0 0.0
        %4671 = vmatprep.subr.mxu0 0.0
        %4672 = vmatpush1.msra.mxu0 0.0
        %4673 = vmatprep.subr.mxu0 0.0
        %4674 = vmatpush1.msra.mxu0 0.0
        %4675 = vmatprep.subr.mxu0 0.0
        %4676 = vmatpush1.msra.mxu0 0.0
        %4677 = vmatprep.subr.mxu0 0.0
        %4678 = vmatpush1.msra.mxu0 0.0
        %4679 = vmatprep.subr.mxu0 0.0
        %4680 = vmatpush1.msra.mxu0 0.0
        %4681 = vmatprep.subr.mxu0 0.0
        %4682 = vmatpush1.msra.mxu0 0.0
        %4683 = vmatprep.subr.mxu0 0.0
        %4684 = vmatpush1.msra.mxu0 0.0
        %4685 = vmatprep.mubr.f32.mxu0 0.0
        %4686 = vmatmul.mubr.f32.gmra.mrb[0].mxu0 %v4308
        %v4687 = vpop.f32.mrb[0].mxu0
        %v4688 = vadd.f32 0.0, %v4687
        %v4689 = vpop.f32.mrb[0].mxu0
        %4690 = vmatprep.mubr.f32.mxu0 0.0
        %4691 = vmatmul.mubr.f32.gmra.mrb[0].mxu0 %v4309
        %v4692 = vpop.f32.mrb[0].mxu0
        %v4693 = vadd.f32 0.0, %v4692
        %v4694 = vpop.f32.mrb[0].mxu0
        %4695 = vmatprep.mubr.f32.mxu0 0.0
        %4696 = vmatmul.mubr.f32.gmra.mrb[0].mxu0 %v4310
        %v4697 = vpop.f32.mrb[0].mxu0
        %v4698 = vadd.f32 0.0, %v4697
        %v4699 = vpop.f32.mrb[0].mxu0
        %4700 = vmatprep.mubr.f32.mxu0 0.0
        %4701 = vmatmul.mubr.f32.gmra.mrb[0].mxu0 %v4311
        %v4702 = vpop.f32.mrb[0].mxu0
        %v4703 = vadd.f32 0.0, %v4702
        %v4704 = vpop.f32.mrb[0].mxu0
        %4705 = vmatprep.mubr.f32.mxu0 0.0
        %4706 = vmatmul.mubr.f32.gmra.mrb[0].mxu0 %v4312
        %v4707 = vpop.f32.mrb[0].mxu0
        %v4708 = vadd.f32 0.0, %v4707
        %v4709 = vpop.f32.mrb[0].mxu0
        %4710 = vmatprep.mubr.f32.mxu0 0.0
        %4711 = vmatmul.mubr.f32.gmra.mrb[0].mxu0 %v4313
        %v4712 = vpop.f32.mrb[0].mxu0
        %v4713 = vadd.f32 0.0, %v4712
        %v4714 = vpop.f32.mrb[0].mxu0
        %4715 = vmatprep.mubr.f32.mxu0 0.0
        %4716 = vmatmul.mubr.f32.gmra.mrb[0].mxu0 %v4314
        %v4717 = vpop.f32.mrb[0].mxu0
        %v4718 = vadd.f32 0.0, %v4717
        %v4719 = vpop.f32.mrb[0].mxu0
        %4720 = vmatprep.mubr.f32.mxu0 0.0
        %4721 = vmatmul.mubr.f32.gmra.mrb[0].mxu0 %v4315
        %v4722 = vpop.f32.mrb[0].mxu0
        %v4723 = vadd.f32 0.0, %v4722
        %v4724 = vpop.f32.mrb[0].mxu0
        %4725 = vdwg.mxu0
        %v4726 = vadd.f32 %v4566, %v4688
        %v4727 = vadd.f32 %v4571, %v4693
        %v4728 = vadd.f32 %v4576, %v4698
        %v4729 = vadd.f32 %v4581, %v4703
        %v4730 = vadd.f32 %v4586, %v4708
        %v4731 = vadd.f32 %v4591, %v4713
        %v4732 = vadd.f32 %v4596, %v4718
        %v4733 = vadd.f32 %v4601, %v4723
        %s4734 = scalar_lea.vmem %s8, 1536
        %v4735 = vld [vmem:[%s4734] sm:$0xff]
        %v4736 = vld [vmem:[%s4734 + $0x8] sm:$0xff]
        %v4737 = vld [vmem:[%s4734 + $0x10] sm:$0xff]
        %v4738 = vld [vmem:[%s4734 + $0x18] sm:$0xff]
        %v4739 = vld [vmem:[%s4734 + $0x20] sm:$0xff]
        %v4740 = vld [vmem:[%s4734 + $0x28] sm:$0xff]
        %v4741 = vld [vmem:[%s4734 + $0x30] sm:$0xff]
        %v4742 = vld [vmem:[%s4734 + $0x38] sm:$0xff]
        %v4743 = vld [vmem:[%s4734 + $0x40] sm:$0xff]
        %v4744 = vld [vmem:[%s4734 + $0x48] sm:$0xff]
        %v4745 = vld [vmem:[%s4734 + $0x50] sm:$0xff]
        %v4746 = vld [vmem:[%s4734 + $0x58] sm:$0xff]
        %v4747 = vld [vmem:[%s4734 + $0x60] sm:$0xff]
        %v4748 = vld [vmem:[%s4734 + $0x68] sm:$0xff]
        %v4749 = vld [vmem:[%s4734 + $0x70] sm:$0xff]
        %v4750 = vld [vmem:[%s4734 + $0x78] sm:$0xff]
        %4751 = vmatprep.subr.mxu0 0.0
        %4752 = vmatpush1.msra.mxu0 %v4735
        %4753 = vmatprep.subr.mxu0 0.0
        %4754 = vmatpush1.msra.mxu0 %v4736
        %4755 = vmatprep.subr.mxu0 0.0
        %4756 = vmatpush1.msra.mxu0 %v4737
        %4757 = vmatprep.subr.mxu0 0.0
        %4758 = vmatpush1.msra.mxu0 %v4738
        %4759 = vmatprep.subr.mxu0 0.0
        %4760 = vmatpush1.msra.mxu0 %v4739
        %4761 = vmatprep.subr.mxu0 0.0
        %4762 = vmatpush1.msra.mxu0 %v4740
        %4763 = vmatprep.subr.mxu0 0.0
        %4764 = vmatpush1.msra.mxu0 %v4741
        %4765 = vmatprep.subr.mxu0 0.0
        %4766 = vmatpush1.msra.mxu0 %v4742
        %4767 = vmatprep.subr.mxu0 0.0
        %4768 = vmatpush1.msra.mxu0 %v4743
        %4769 = vmatprep.subr.mxu0 0.0
        %4770 = vmatpush1.msra.mxu0 %v4744
        %4771 = vmatprep.subr.mxu0 0.0
        %4772 = vmatpush1.msra.mxu0 %v4745
        %4773 = vmatprep.subr.mxu0 0.0
        %4774 = vmatpush1.msra.mxu0 %v4746
        %4775 = vmatprep.subr.mxu0 0.0
        %4776 = vmatpush1.msra.mxu0 %v4747
        %4777 = vmatprep.subr.mxu0 0.0
        %4778 = vmatpush1.msra.mxu0 %v4748
        %4779 = vmatprep.subr.mxu0 0.0
        %4780 = vmatpush1.msra.mxu0 %v4749
        %4781 = vmatprep.subr.mxu0 0.0
        %4782 = vmatpush1.msra.mxu0 %v4750
        %4783 = vmatprep.subr.mxu0 0.0
        %4784 = vmatpush1.msra.mxu0 0.0
        %4785 = vmatprep.subr.mxu0 0.0
        %4786 = vmatpush1.msra.mxu0 0.0
        %4787 = vmatprep.subr.mxu0 0.0
        %4788 = vmatpush1.msra.mxu0 0.0
        %4789 = vmatprep.subr.mxu0 0.0
        %4790 = vmatpush1.msra.mxu0 0.0
        %4791 = vmatprep.subr.mxu0 0.0
        %4792 = vmatpush1.msra.mxu0 0.0
        %4793 = vmatprep.subr.mxu0 0.0
        %4794 = vmatpush1.msra.mxu0 0.0
        %4795 = vmatprep.subr.mxu0 0.0
        %4796 = vmatpush1.msra.mxu0 0.0
        %4797 = vmatprep.subr.mxu0 0.0
        %4798 = vmatpush1.msra.mxu0 0.0
        %4799 = vmatprep.subr.mxu0 0.0
        %4800 = vmatpush1.msra.mxu0 0.0
        %4801 = vmatprep.subr.mxu0 0.0
        %4802 = vmatpush1.msra.mxu0 0.0
        %4803 = vmatprep.subr.mxu0 0.0
        %4804 = vmatpush1.msra.mxu0 0.0
        %4805 = vmatprep.subr.mxu0 0.0
        %4806 = vmatpush1.msra.mxu0 0.0
        %4807 = vmatprep.subr.mxu0 0.0
        %4808 = vmatpush1.msra.mxu0 0.0
        %4809 = vmatprep.subr.mxu0 0.0
        %4810 = vmatpush1.msra.mxu0 0.0
        %4811 = vmatprep.subr.mxu0 0.0
        %4812 = vmatpush1.msra.mxu0 0.0
        %4813 = vmatprep.subr.mxu0 0.0
        %4814 = vmatpush1.msra.mxu0 0.0
        %4815 = vmatprep.mubr.f32.mxu0 0.0
        %4816 = vmatmul.mubr.f32.gmra.mrb[0].mxu0 %v4318
        %v4817 = vpop.f32.mrb[0].mxu0
        %v4818 = vadd.f32 0.0, %v4817
        %v4819 = vpop.f32.mrb[0].mxu0
        %4820 = vmatprep.mubr.f32.mxu0 0.0
        %4821 = vmatmul.mubr.f32.gmra.mrb[0].mxu0 %v4319
        %v4822 = vpop.f32.mrb[0].mxu0
        %v4823 = vadd.f32 0.0, %v4822
        %v4824 = vpop.f32.mrb[0].mxu0
        %4825 = vmatprep.mubr.f32.mxu0 0.0
        %4826 = vmatmul.mubr.f32.gmra.mrb[0].mxu0 %v4320
        %v4827 = vpop.f32.mrb[0].mxu0
        %v4828 = vadd.f32 0.0, %v4827
        %v4829 = vpop.f32.mrb[0].mxu0
        %4830 = vmatprep.mubr.f32.mxu0 0.0
        %4831 = vmatmul.mubr.f32.gmra.mrb[0].mxu0 %v4321
        %v4832 = vpop.f32.mrb[0].mxu0
        %v4833 = vadd.f32 0.0, %v4832
        %v4834 = vpop.f32.mrb[0].mxu0
        %4835 = vmatprep.mubr.f32.mxu0 0.0
        %4836 = vmatmul.mubr.f32.gmra.mrb[0].mxu0 %v4322
        %v4837 = vpop.f32.mrb[0].mxu0
        %v4838 = vadd.f32 0.0, %v4837
        %v4839 = vpop.f32.mrb[0].mxu0
        %4840 = vmatprep.mubr.f32.mxu0 0.0
        %4841 = vmatmul.mubr.f32.gmra.mrb[0].mxu0 %v4323
        %v4842 = vpop.f32.mrb[0].mxu0
        %v4843 = vadd.f32 0.0, %v4842
        %v4844 = vpop.f32.mrb[0].mxu0
        %4845 = vmatprep.mubr.f32.mxu0 0.0
        %4846 = vmatmul.mubr.f32.gmra.mrb[0].mxu0 %v4324
        %v4847 = vpop.f32.mrb[0].mxu0
        %v4848 = vadd.f32 0.0, %v4847
        %v4849 = vpop.f32.mrb[0].mxu0
        %4850 = vmatprep.mubr.f32.mxu0 0.0
        %4851 = vmatmul.mubr.f32.gmra.mrb[0].mxu0 %v4325
        %v4852 = vpop.f32.mrb[0].mxu0
        %v4853 = vadd.f32 0.0, %v4852
        %v4854 = vpop.f32.mrb[0].mxu0
        %4855 = vdwg.mxu0
        %v4856 = vadd.f32 %v4726, %v4818
        %v4857 = vadd.f32 %v4727, %v4823
        %v4858 = vadd.f32 %v4728, %v4828
        %v4859 = vadd.f32 %v4729, %v4833
        %v4860 = vadd.f32 %v4730, %v4838
        %v4861 = vadd.f32 %v4731, %v4843
        %v4862 = vadd.f32 %v4732, %v4848
        %v4863 = vadd.f32 %v4733, %v4853
        %s4864 = scalar_lea.vmem %s8, 1664
        %v4865 = vld [vmem:[%s4864] sm:$0xff]
        %v4866 = vld [vmem:[%s4864 + $0x8] sm:$0xff]
        %v4867 = vld [vmem:[%s4864 + $0x10] sm:$0xff]
        %v4868 = vld [vmem:[%s4864 + $0x18] sm:$0xff]
        %v4869 = vld [vmem:[%s4864 + $0x20] sm:$0xff]
        %v4870 = vld [vmem:[%s4864 + $0x28] sm:$0xff]
        %v4871 = vld [vmem:[%s4864 + $0x30] sm:$0xff]
        %v4872 = vld [vmem:[%s4864 + $0x38] sm:$0xff]
        %v4873 = vld [vmem:[%s4864 + $0x40] sm:$0xff]
        %v4874 = vld [vmem:[%s4864 + $0x48] sm:$0xff]
        %v4875 = vld [vmem:[%s4864 + $0x50] sm:$0xff]
        %v4876 = vld [vmem:[%s4864 + $0x58] sm:$0xff]
        %v4877 = vld [vmem:[%s4864 + $0x60] sm:$0xff]
        %v4878 = vld [vmem:[%s4864 + $0x68] sm:$0xff]
        %v4879 = vld [vmem:[%s4864 + $0x70] sm:$0xff]
        %v4880 = vld [vmem:[%s4864 + $0x78] sm:$0xff]
        %4881 = vmatprep.subr.mxu0 0.0
        %4882 = vmatpush1.msra.mxu0 %v4865
        %4883 = vmatprep.subr.mxu0 0.0
        %4884 = vmatpush1.msra.mxu0 %v4866
        %4885 = vmatprep.subr.mxu0 0.0
        %4886 = vmatpush1.msra.mxu0 %v4867
        %4887 = vmatprep.subr.mxu0 0.0
        %4888 = vmatpush1.msra.mxu0 %v4868
        %4889 = vmatprep.subr.mxu0 0.0
        %4890 = vmatpush1.msra.mxu0 %v4869
        %4891 = vmatprep.subr.mxu0 0.0
        %4892 = vmatpush1.msra.mxu0 %v4870
        %4893 = vmatprep.subr.mxu0 0.0
        %4894 = vmatpush1.msra.mxu0 %v4871
        %4895 = vmatprep.subr.mxu0 0.0
        %4896 = vmatpush1.msra.mxu0 %v4872
        %4897 = vmatprep.subr.mxu0 0.0
        %4898 = vmatpush1.msra.mxu0 %v4873
        %4899 = vmatprep.subr.mxu0 0.0
        %4900 = vmatpush1.msra.mxu0 %v4874
        %4901 = vmatprep.subr.mxu0 0.0
        %4902 = vmatpush1.msra.mxu0 %v4875
        %4903 = vmatprep.subr.mxu0 0.0
        %4904 = vmatpush1.msra.mxu0 %v4876
        %4905 = vmatprep.subr.mxu0 0.0
        %4906 = vmatpush1.msra.mxu0 %v4877
        %4907 = vmatprep.subr.mxu0 0.0
        %4908 = vmatpush1.msra.mxu0 %v4878
        %4909 = vmatprep.subr.mxu0 0.0
        %4910 = vmatpush1.msra.mxu0 %v4879
        %4911 = vmatprep.subr.mxu0 0.0
        %4912 = vmatpush1.msra.mxu0 %v4880
        %4913 = vmatprep.subr.mxu0 0.0
        %4914 = vmatpush1.msra.mxu0 0.0
        %4915 = vmatprep.subr.mxu0 0.0
        %4916 = vmatpush1.msra.mxu0 0.0
        %4917 = vmatprep.subr.mxu0 0.0
        %4918 = vmatpush1.msra.mxu0 0.0
        %4919 = vmatprep.subr.mxu0 0.0
        %4920 = vmatpush1.msra.mxu0 0.0
        %4921 = vmatprep.subr.mxu0 0.0
        %4922 = vmatpush1.msra.mxu0 0.0
        %4923 = vmatprep.subr.mxu0 0.0
        %4924 = vmatpush1.msra.mxu0 0.0
        %4925 = vmatprep.subr.mxu0 0.0
        %4926 = vmatpush1.msra.mxu0 0.0
        %4927 = vmatprep.subr.mxu0 0.0
        %4928 = vmatpush1.msra.mxu0 0.0
        %4929 = vmatprep.subr.mxu0 0.0
        %4930 = vmatpush1.msra.mxu0 0.0
        %4931 = vmatprep.subr.mxu0 0.0
        %4932 = vmatpush1.msra.mxu0 0.0
        %4933 = vmatprep.subr.mxu0 0.0
        %4934 = vmatpush1.msra.mxu0 0.0
        %4935 = vmatprep.subr.mxu0 0.0
        %4936 = vmatpush1.msra.mxu0 0.0
        %4937 = vmatprep.subr.mxu0 0.0
        %4938 = vmatpush1.msra.mxu0 0.0
        %4939 = vmatprep.subr.mxu0 0.0
        %4940 = vmatpush1.msra.mxu0 0.0
        %4941 = vmatprep.subr.mxu0 0.0
        %4942 = vmatpush1.msra.mxu0 0.0
        %4943 = vmatprep.subr.mxu0 0.0
        %4944 = vmatpush1.msra.mxu0 0.0
        %4945 = vmatprep.mubr.f32.mxu0 0.0
        %4946 = vmatmul.mubr.f32.gmra.mrb[0].mxu0 %v4294
        %v4947 = vpop.f32.mrb[0].mxu0
        %v4948 = vadd.f32 0.0, %v4947
        %v4949 = vpop.f32.mrb[0].mxu0
        %4950 = vmatprep.mubr.f32.mxu0 0.0
        %4951 = vmatmul.mubr.f32.gmra.mrb[0].mxu0 %v4295
        %v4952 = vpop.f32.mrb[0].mxu0
        %v4953 = vadd.f32 0.0, %v4952
        %v4954 = vpop.f32.mrb[0].mxu0
        %4955 = vmatprep.mubr.f32.mxu0 0.0
        %4956 = vmatmul.mubr.f32.gmra.mrb[0].mxu0 %v4296
        %v4957 = vpop.f32.mrb[0].mxu0
        %v4958 = vadd.f32 0.0, %v4957
        %v4959 = vpop.f32.mrb[0].mxu0
        %4960 = vmatprep.mubr.f32.mxu0 0.0
        %4961 = vmatmul.mubr.f32.gmra.mrb[0].mxu0 %v4297
        %v4962 = vpop.f32.mrb[0].mxu0
        %v4963 = vadd.f32 0.0, %v4962
        %v4964 = vpop.f32.mrb[0].mxu0
        %4965 = vmatprep.mubr.f32.mxu0 0.0
        %4966 = vmatmul.mubr.f32.gmra.mrb[0].mxu0 %v4298
        %v4967 = vpop.f32.mrb[0].mxu0
        %v4968 = vadd.f32 0.0, %v4967
        %v4969 = vpop.f32.mrb[0].mxu0
        %4970 = vmatprep.mubr.f32.mxu0 0.0
        %4971 = vmatmul.mubr.f32.gmra.mrb[0].mxu0 %v4299
        %v4972 = vpop.f32.mrb[0].mxu0
        %v4973 = vadd.f32 0.0, %v4972
        %v4974 = vpop.f32.mrb[0].mxu0
        %4975 = vmatprep.mubr.f32.mxu0 0.0
        %4976 = vmatmul.mubr.f32.gmra.mrb[0].mxu0 %v4326
        %v4977 = vpop.f32.mrb[0].mxu0
        %v4978 = vadd.f32 0.0, %v4977
        %v4979 = vpop.f32.mrb[0].mxu0
        %4980 = vmatprep.mubr.f32.mxu0 0.0
        %4981 = vmatmul.mubr.f32.gmra.mrb[0].mxu0 %v4327
        %v4982 = vpop.f32.mrb[0].mxu0
        %v4983 = vadd.f32 0.0, %v4982
        %v4984 = vpop.f32.mrb[0].mxu0
        %4985 = vdwg.mxu0
        %v4986 = vadd.f32 %v4856, %v4948
        %v4987 = vadd.f32 %v4857, %v4953
        %v4988 = vadd.f32 %v4858, %v4958
        %v4989 = vadd.f32 %v4859, %v4963
        %v4990 = vadd.f32 %v4860, %v4968
        %v4991 = vadd.f32 %v4861, %v4973
        %v4992 = vadd.f32 %v4862, %v4978
        %v4993 = vadd.f32 %v4863, %v4983
        %s4994 = scalar_lea.vmem %s8, 1792
        %v4995 = vld [vmem:[%s4994] sm:$0xff]
        %v4996 = vld [vmem:[%s4994 + $0x8] sm:$0xff]
        %v4997 = vld [vmem:[%s4994 + $0x10] sm:$0xff]
        %v4998 = vld [vmem:[%s4994 + $0x18] sm:$0xff]
        %v4999 = vld [vmem:[%s4994 + $0x20] sm:$0xff]
        %v5000 = vld [vmem:[%s4994 + $0x28] sm:$0xff]
        %v5001 = vld [vmem:[%s4994 + $0x30] sm:$0xff]
        %v5002 = vld [vmem:[%s4994 + $0x38] sm:$0xff]
        %v5003 = vld [vmem:[%s4994 + $0x40] sm:$0xff]
        %v5004 = vld [vmem:[%s4994 + $0x48] sm:$0xff]
        %v5005 = vld [vmem:[%s4994 + $0x50] sm:$0xff]
        %v5006 = vld [vmem:[%s4994 + $0x58] sm:$0xff]
        %v5007 = vld [vmem:[%s4994 + $0x60] sm:$0xff]
        %v5008 = vld [vmem:[%s4994 + $0x68] sm:$0xff]
        %v5009 = vld [vmem:[%s4994 + $0x70] sm:$0xff]
        %v5010 = vld [vmem:[%s4994 + $0x78] sm:$0xff]
        %5011 = vmatprep.subr.mxu0 0.0
        %5012 = vmatpush1.msra.mxu0 %v4995
        %5013 = vmatprep.subr.mxu0 0.0
        %5014 = vmatpush1.msra.mxu0 %v4996
        %5015 = vmatprep.subr.mxu0 0.0
        %5016 = vmatpush1.msra.mxu0 %v4997
        %5017 = vmatprep.subr.mxu0 0.0
        %5018 = vmatpush1.msra.mxu0 %v4998
        %5019 = vmatprep.subr.mxu0 0.0
        %5020 = vmatpush1.msra.mxu0 %v4999
        %5021 = vmatprep.subr.mxu0 0.0
        %5022 = vmatpush1.msra.mxu0 %v5000
        %5023 = vmatprep.subr.mxu0 0.0
        %5024 = vmatpush1.msra.mxu0 %v5001
        %5025 = vmatprep.subr.mxu0 0.0
        %5026 = vmatpush1.msra.mxu0 %v5002
        %5027 = vmatprep.subr.mxu0 0.0
        %5028 = vmatpush1.msra.mxu0 %v5003
        %5029 = vmatprep.subr.mxu0 0.0
        %5030 = vmatpush1.msra.mxu0 %v5004
        %5031 = vmatprep.subr.mxu0 0.0
        %5032 = vmatpush1.msra.mxu0 %v5005
        %5033 = vmatprep.subr.mxu0 0.0
        %5034 = vmatpush1.msra.mxu0 %v5006
        %5035 = vmatprep.subr.mxu0 0.0
        %5036 = vmatpush1.msra.mxu0 %v5007
        %5037 = vmatprep.subr.mxu0 0.0
        %5038 = vmatpush1.msra.mxu0 %v5008
        %5039 = vmatprep.subr.mxu0 0.0
        %5040 = vmatpush1.msra.mxu0 %v5009
        %5041 = vmatprep.subr.mxu0 0.0
        %5042 = vmatpush1.msra.mxu0 %v5010
        %5043 = vmatprep.subr.mxu0 0.0
        %5044 = vmatpush1.msra.mxu0 0.0
        %5045 = vmatprep.subr.mxu0 0.0
        %5046 = vmatpush1.msra.mxu0 0.0
        %5047 = vmatprep.subr.mxu0 0.0
        %5048 = vmatpush1.msra.mxu0 0.0
        %5049 = vmatprep.subr.mxu0 0.0
        %5050 = vmatpush1.msra.mxu0 0.0
        %5051 = vmatprep.subr.mxu0 0.0
        %5052 = vmatpush1.msra.mxu0 0.0
        %5053 = vmatprep.subr.mxu0 0.0
        %5054 = vmatpush1.msra.mxu0 0.0
        %5055 = vmatprep.subr.mxu0 0.0
        %5056 = vmatpush1.msra.mxu0 0.0
        %5057 = vmatprep.subr.mxu0 0.0
        %5058 = vmatpush1.msra.mxu0 0.0
        %5059 = vmatprep.subr.mxu0 0.0
        %5060 = vmatpush1.msra.mxu0 0.0
        %5061 = vmatprep.subr.mxu0 0.0
        %5062 = vmatpush1.msra.mxu0 0.0
        %5063 = vmatprep.subr.mxu0 0.0
        %5064 = vmatpush1.msra.mxu0 0.0
        %5065 = vmatprep.subr.mxu0 0.0
        %5066 = vmatpush1.msra.mxu0 0.0
        %5067 = vmatprep.subr.mxu0 0.0
        %5068 = vmatpush1.msra.mxu0 0.0
        %5069 = vmatprep.subr.mxu0 0.0
        %5070 = vmatpush1.msra.mxu0 0.0
        %5071 = vmatprep.subr.mxu0 0.0
        %5072 = vmatpush1.msra.mxu0 0.0
        %5073 = vmatprep.subr.mxu0 0.0
        %5074 = vmatpush1.msra.mxu0 0.0
        %5075 = vmatprep.mubr.f32.mxu0 0.0
        %5076 = vmatmul.mubr.f32.gmra.mrb[0].mxu0 %v4330
        %v5077 = vpop.f32.mrb[0].mxu0
        %v5078 = vadd.f32 0.0, %v5077
        %v5079 = vpop.f32.mrb[0].mxu0
        %5080 = vmatprep.mubr.f32.mxu0 0.0
        %5081 = vmatmul.mubr.f32.gmra.mrb[0].mxu0 %v4331
        %v5082 = vpop.f32.mrb[0].mxu0
        %v5083 = vadd.f32 0.0, %v5082
        %v5084 = vpop.f32.mrb[0].mxu0
        %5085 = vmatprep.mubr.f32.mxu0 0.0
        %5086 = vmatmul.mubr.f32.gmra.mrb[0].mxu0 %v4332
        %v5087 = vpop.f32.mrb[0].mxu0
        %v5088 = vadd.f32 0.0, %v5087
        %v5089 = vpop.f32.mrb[0].mxu0
        %5090 = vmatprep.mubr.f32.mxu0 0.0
        %5091 = vmatmul.mubr.f32.gmra.mrb[0].mxu0 %v4333
        %v5092 = vpop.f32.mrb[0].mxu0
        %v5093 = vadd.f32 0.0, %v5092
        %v5094 = vpop.f32.mrb[0].mxu0
        %5095 = vmatprep.mubr.f32.mxu0 0.0
        %5096 = vmatmul.mubr.f32.gmra.mrb[0].mxu0 %v4334
        %v5097 = vpop.f32.mrb[0].mxu0
        %v5098 = vadd.f32 0.0, %v5097
        %v5099 = vpop.f32.mrb[0].mxu0
        %5100 = vmatprep.mubr.f32.mxu0 0.0
        %5101 = vmatmul.mubr.f32.gmra.mrb[0].mxu0 %v4335
        %v5102 = vpop.f32.mrb[0].mxu0
        %v5103 = vadd.f32 0.0, %v5102
        %v5104 = vpop.f32.mrb[0].mxu0
        %5105 = vmatprep.mubr.f32.mxu0 0.0
        %5106 = vmatmul.mubr.f32.gmra.mrb[0].mxu0 %v4336
        %v5107 = vpop.f32.mrb[0].mxu0
        %v5108 = vadd.f32 0.0, %v5107
        %v5109 = vpop.f32.mrb[0].mxu0
        %5110 = vmatprep.mubr.f32.mxu0 0.0
        %5111 = vmatmul.mubr.f32.gmra.mrb[0].mxu0 %v4337
        %v5112 = vpop.f32.mrb[0].mxu0
        %v5113 = vadd.f32 0.0, %v5112
        %v5114 = vpop.f32.mrb[0].mxu0
        %5115 = vdwg.mxu0
        %v5116 = vadd.f32 %v4986, %v5078
        %v5117 = vadd.f32 %v4987, %v5083
        %v5118 = vadd.f32 %v4988, %v5088
        %v5119 = vadd.f32 %v4989, %v5093
        %v5120 = vadd.f32 %v4990, %v5098
        %v5121 = vadd.f32 %v4991, %v5103
        %v5122 = vadd.f32 %v4992, %v5108
        %v5123 = vadd.f32 %v4993, %v5113
        %s5124 = scalar_lea.vmem %s8, 1920
        %v5125 = vld [vmem:[%s5124] sm:$0xff]
        %v5126 = vld [vmem:[%s5124 + $0x8] sm:$0xff]
        %v5127 = vld [vmem:[%s5124 + $0x10] sm:$0xff]
        %v5128 = vld [vmem:[%s5124 + $0x18] sm:$0xff]
        %v5129 = vld [vmem:[%s5124 + $0x20] sm:$0xff]
        %v5130 = vld [vmem:[%s5124 + $0x28] sm:$0xff]
        %v5131 = vld [vmem:[%s5124 + $0x30] sm:$0xff]
        %v5132 = vld [vmem:[%s5124 + $0x38] sm:$0xff]
        %v5133 = vld [vmem:[%s5124 + $0x40] sm:$0xff]
        %v5134 = vld [vmem:[%s5124 + $0x48] sm:$0xff]
        %v5135 = vld [vmem:[%s5124 + $0x50] sm:$0xff]
        %v5136 = vld [vmem:[%s5124 + $0x58] sm:$0xff]
        %v5137 = vld [vmem:[%s5124 + $0x60] sm:$0xff]
        %v5138 = vld [vmem:[%s5124 + $0x68] sm:$0xff]
        %v5139 = vld [vmem:[%s5124 + $0x70] sm:$0xff]
        %v5140 = vld [vmem:[%s5124 + $0x78] sm:$0xff]
        %5141 = vmatprep.subr.mxu0 0.0
        %5142 = vmatpush1.msra.mxu0 %v5125
        %5143 = vmatprep.subr.mxu0 0.0
        %5144 = vmatpush1.msra.mxu0 %v5126
        %5145 = vmatprep.subr.mxu0 0.0
        %5146 = vmatpush1.msra.mxu0 %v5127
        %5147 = vmatprep.subr.mxu0 0.0
        %5148 = vmatpush1.msra.mxu0 %v5128
        %5149 = vmatprep.subr.mxu0 0.0
        %5150 = vmatpush1.msra.mxu0 %v5129
        %5151 = vmatprep.subr.mxu0 0.0
        %5152 = vmatpush1.msra.mxu0 %v5130
        %5153 = vmatprep.subr.mxu0 0.0
        %5154 = vmatpush1.msra.mxu0 %v5131
        %5155 = vmatprep.subr.mxu0 0.0
        %5156 = vmatpush1.msra.mxu0 %v5132
        %5157 = vmatprep.subr.mxu0 0.0
        %5158 = vmatpush1.msra.mxu0 %v5133
        %5159 = vmatprep.subr.mxu0 0.0
        %5160 = vmatpush1.msra.mxu0 %v5134
        %5161 = vmatprep.subr.mxu0 0.0
        %5162 = vmatpush1.msra.mxu0 %v5135
        %5163 = vmatprep.subr.mxu0 0.0
        %5164 = vmatpush1.msra.mxu0 %v5136
        %5165 = vmatprep.subr.mxu0 0.0
        %5166 = vmatpush1.msra.mxu0 %v5137
        %5167 = vmatprep.subr.mxu0 0.0
        %5168 = vmatpush1.msra.mxu0 %v5138
        %5169 = vmatprep.subr.mxu0 0.0
        %5170 = vmatpush1.msra.mxu0 %v5139
        %5171 = vmatprep.subr.mxu0 0.0
        %5172 = vmatpush1.msra.mxu0 %v5140
        %5173 = vmatprep.subr.mxu0 0.0
        %5174 = vmatpush1.msra.mxu0 0.0
        %5175 = vmatprep.subr.mxu0 0.0
        %5176 = vmatpush1.msra.mxu0 0.0
        %5177 = vmatprep.subr.mxu0 0.0
        %5178 = vmatpush1.msra.mxu0 0.0
        %5179 = vmatprep.subr.mxu0 0.0
        %5180 = vmatpush1.msra.mxu0 0.0
        %5181 = vmatprep.subr.mxu0 0.0
        %5182 = vmatpush1.msra.mxu0 0.0
        %5183 = vmatprep.subr.mxu0 0.0
        %5184 = vmatpush1.msra.mxu0 0.0
        %5185 = vmatprep.subr.mxu0 0.0
        %5186 = vmatpush1.msra.mxu0 0.0
        %5187 = vmatprep.subr.mxu0 0.0
        %5188 = vmatpush1.msra.mxu0 0.0
        %5189 = vmatprep.subr.mxu0 0.0
        %5190 = vmatpush1.msra.mxu0 0.0
        %5191 = vmatprep.subr.mxu0 0.0
        %5192 = vmatpush1.msra.mxu0 0.0
        %5193 = vmatprep.subr.mxu0 0.0
        %5194 = vmatpush1.msra.mxu0 0.0
        %5195 = vmatprep.subr.mxu0 0.0
        %5196 = vmatpush1.msra.mxu0 0.0
        %5197 = vmatprep.subr.mxu0 0.0
        %5198 = vmatpush1.msra.mxu0 0.0
        %5199 = vmatprep.subr.mxu0 0.0
        %5200 = vmatpush1.msra.mxu0 0.0
        %5201 = vmatprep.subr.mxu0 0.0
        %5202 = vmatpush1.msra.mxu0 0.0
        %5203 = vmatprep.subr.mxu0 0.0
        %5204 = vmatpush1.msra.mxu0 0.0
        %5205 = vmatprep.mubr.f32.mxu0 0.0
        %5206 = vmatmul.mubr.f32.gmra.mrb[0].mxu0 %v4340
        %v5207 = vpop.f32.mrb[0].mxu0
        %v5208 = vadd.f32 0.0, %v5207
        %v5209 = vpop.f32.mrb[0].mxu0
        %5210 = vmatprep.mubr.f32.mxu0 0.0
        %5211 = vmatmul.mubr.f32.gmra.mrb[0].mxu0 %v4341
        %v5212 = vpop.f32.mrb[0].mxu0
        %v5213 = vadd.f32 0.0, %v5212
        %v5214 = vpop.f32.mrb[0].mxu0
        %5215 = vmatprep.mubr.f32.mxu0 0.0
        %5216 = vmatmul.mubr.f32.gmra.mrb[0].mxu0 %v4342
        %v5217 = vpop.f32.mrb[0].mxu0
        %v5218 = vadd.f32 0.0, %v5217
        %v5219 = vpop.f32.mrb[0].mxu0
        %5220 = vmatprep.mubr.f32.mxu0 0.0
        %5221 = vmatmul.mubr.f32.gmra.mrb[0].mxu0 %v4343
        %v5222 = vpop.f32.mrb[0].mxu0
        %v5223 = vadd.f32 0.0, %v5222
        %v5224 = vpop.f32.mrb[0].mxu0
        %5225 = vmatprep.mubr.f32.mxu0 0.0
        %5226 = vmatmul.mubr.f32.gmra.mrb[0].mxu0 %v4344
        %v5227 = vpop.f32.mrb[0].mxu0
        %v5228 = vadd.f32 0.0, %v5227
        %v5229 = vpop.f32.mrb[0].mxu0
        %5230 = vmatprep.mubr.f32.mxu0 0.0
        %5231 = vmatmul.mubr.f32.gmra.mrb[0].mxu0 %v4345
        %v5232 = vpop.f32.mrb[0].mxu0
        %v5233 = vadd.f32 0.0, %v5232
        %v5234 = vpop.f32.mrb[0].mxu0
        %5235 = vmatprep.mubr.f32.mxu0 0.0
        %5236 = vmatmul.mubr.f32.gmra.mrb[0].mxu0 %v4346
        %v5237 = vpop.f32.mrb[0].mxu0
        %v5238 = vadd.f32 0.0, %v5237
        %v5239 = vpop.f32.mrb[0].mxu0
        %5240 = vmatprep.mubr.f32.mxu0 0.0
        %5241 = vmatmul.mubr.f32.gmra.mrb[0].mxu0 %v4347
        %v5242 = vpop.f32.mrb[0].mxu0
        %v5243 = vadd.f32 0.0, %v5242
        %v5244 = vpop.f32.mrb[0].mxu0
        %5245 = vdwg.mxu0
        %v5246 = vadd.f32 %v5116, %v5208
        %v5247 = vadd.f32 %v5117, %v5213
        %v5248 = vadd.f32 %v5118, %v5218
        %v5249 = vadd.f32 %v5119, %v5223
        %v5250 = vadd.f32 %v5120, %v5228
        %v5251 = vadd.f32 %v5121, %v5233
        %v5252 = vadd.f32 %v5122, %v5238
        %v5253 = vadd.f32 %v5123, %v5243
        %s5254 = scalar_lea.vmem %s8, 2048
        %v5255 = vld [vmem:[%s5254] sm:$0xff]
        %v5256 = vld [vmem:[%s5254 + $0x8] sm:$0xff]
        %v5257 = vld [vmem:[%s5254 + $0x10] sm:$0xff]
        %v5258 = vld [vmem:[%s5254 + $0x18] sm:$0xff]
        %v5259 = vld [vmem:[%s5254 + $0x20] sm:$0xff]
        %v5260 = vld [vmem:[%s5254 + $0x28] sm:$0xff]
        %v5261 = vld [vmem:[%s5254 + $0x30] sm:$0xff]
        %v5262 = vld [vmem:[%s5254 + $0x38] sm:$0xff]
        %v5263 = vld [vmem:[%s5254 + $0x40] sm:$0xff]
        %v5264 = vld [vmem:[%s5254 + $0x48] sm:$0xff]
        %v5265 = vld [vmem:[%s5254 + $0x50] sm:$0xff]
        %v5266 = vld [vmem:[%s5254 + $0x58] sm:$0xff]
        %v5267 = vld [vmem:[%s5254 + $0x60] sm:$0xff]
        %v5268 = vld [vmem:[%s5254 + $0x68] sm:$0xff]
        %v5269 = vld [vmem:[%s5254 + $0x70] sm:$0xff]
        %v5270 = vld [vmem:[%s5254 + $0x78] sm:$0xff]
        %5271 = vmatprep.subr.mxu0 0.0
        %5272 = vmatpush1.msra.mxu0 %v5255
        %5273 = vmatprep.subr.mxu0 0.0
        %5274 = vmatpush1.msra.mxu0 %v5256
        %5275 = vmatprep.subr.mxu0 0.0
        %5276 = vmatpush1.msra.mxu0 %v5257
        %5277 = vmatprep.subr.mxu0 0.0
        %5278 = vmatpush1.msra.mxu0 %v5258
        %5279 = vmatprep.subr.mxu0 0.0
        %5280 = vmatpush1.msra.mxu0 %v5259
        %5281 = vmatprep.subr.mxu0 0.0
        %5282 = vmatpush1.msra.mxu0 %v5260
        %5283 = vmatprep.subr.mxu0 0.0
        %5284 = vmatpush1.msra.mxu0 %v5261
        %5285 = vmatprep.subr.mxu0 0.0
        %5286 = vmatpush1.msra.mxu0 %v5262
        %5287 = vmatprep.subr.mxu0 0.0
        %5288 = vmatpush1.msra.mxu0 %v5263
        %5289 = vmatprep.subr.mxu0 0.0
        %5290 = vmatpush1.msra.mxu0 %v5264
        %5291 = vmatprep.subr.mxu0 0.0
        %5292 = vmatpush1.msra.mxu0 %v5265
        %5293 = vmatprep.subr.mxu0 0.0
        %5294 = vmatpush1.msra.mxu0 %v5266
        %5295 = vmatprep.subr.mxu0 0.0
        %5296 = vmatpush1.msra.mxu0 %v5267
        %5297 = vmatprep.subr.mxu0 0.0
        %5298 = vmatpush1.msra.mxu0 %v5268
        %5299 = vmatprep.subr.mxu0 0.0
        %5300 = vmatpush1.msra.mxu0 %v5269
        %5301 = vmatprep.subr.mxu0 0.0
        %5302 = vmatpush1.msra.mxu0 %v5270
        %5303 = vmatprep.subr.mxu0 0.0
        %5304 = vmatpush1.msra.mxu0 0.0
        %5305 = vmatprep.subr.mxu0 0.0
        %5306 = vmatpush1.msra.mxu0 0.0
        %5307 = vmatprep.subr.mxu0 0.0
        %5308 = vmatpush1.msra.mxu0 0.0
        %5309 = vmatprep.subr.mxu0 0.0
        %5310 = vmatpush1.msra.mxu0 0.0
        %5311 = vmatprep.subr.mxu0 0.0
        %5312 = vmatpush1.msra.mxu0 0.0
        %5313 = vmatprep.subr.mxu0 0.0
        %5314 = vmatpush1.msra.mxu0 0.0
        %5315 = vmatprep.subr.mxu0 0.0
        %5316 = vmatpush1.msra.mxu0 0.0
        %5317 = vmatprep.subr.mxu0 0.0
        %5318 = vmatpush1.msra.mxu0 0.0
        %5319 = vmatprep.subr.mxu0 0.0
        %5320 = vmatpush1.msra.mxu0 0.0
        %5321 = vmatprep.subr.mxu0 0.0
        %5322 = vmatpush1.msra.mxu0 0.0
        %5323 = vmatprep.subr.mxu0 0.0
        %5324 = vmatpush1.msra.mxu0 0.0
        %5325 = vmatprep.subr.mxu0 0.0
        %5326 = vmatpush1.msra.mxu0 0.0
        %5327 = vmatprep.subr.mxu0 0.0
        %5328 = vmatpush1.msra.mxu0 0.0
        %5329 = vmatprep.subr.mxu0 0.0
        %5330 = vmatpush1.msra.mxu0 0.0
        %5331 = vmatprep.subr.mxu0 0.0
        %5332 = vmatpush1.msra.mxu0 0.0
        %5333 = vmatprep.subr.mxu0 0.0
        %5334 = vmatpush1.msra.mxu0 0.0
        %5335 = vmatprep.mubr.f32.mxu0 0.0
        %5336 = vmatmul.mubr.f32.gmra.mrb[0].mxu0 %v4296
        %v5337 = vpop.f32.mrb[0].mxu0
        %v5338 = vadd.f32 0.0, %v5337
        %v5339 = vpop.f32.mrb[0].mxu0
        %5340 = vmatprep.mubr.f32.mxu0 0.0
        %5341 = vmatmul.mubr.f32.gmra.mrb[0].mxu0 %v4297
        %v5342 = vpop.f32.mrb[0].mxu0
        %v5343 = vadd.f32 0.0, %v5342
        %v5344 = vpop.f32.mrb[0].mxu0
        %5345 = vmatprep.mubr.f32.mxu0 0.0
        %5346 = vmatmul.mubr.f32.gmra.mrb[0].mxu0 %v4298
        %v5347 = vpop.f32.mrb[0].mxu0
        %v5348 = vadd.f32 0.0, %v5347
        %v5349 = vpop.f32.mrb[0].mxu0
        %5350 = vmatprep.mubr.f32.mxu0 0.0
        %5351 = vmatmul.mubr.f32.gmra.mrb[0].mxu0 %v4299
        %v5352 = vpop.f32.mrb[0].mxu0
        %v5353 = vadd.f32 0.0, %v5352
        %v5354 = vpop.f32.mrb[0].mxu0
        %5355 = vmatprep.mubr.f32.mxu0 0.0
        %5356 = vmatmul.mubr.f32.gmra.mrb[0].mxu0 %v4326
        %v5357 = vpop.f32.mrb[0].mxu0
        %v5358 = vadd.f32 0.0, %v5357
        %v5359 = vpop.f32.mrb[0].mxu0
        %5360 = vmatprep.mubr.f32.mxu0 0.0
        %5361 = vmatmul.mubr.f32.gmra.mrb[0].mxu0 %v4327
        %v5362 = vpop.f32.mrb[0].mxu0
        %v5363 = vadd.f32 0.0, %v5362
        %v5364 = vpop.f32.mrb[0].mxu0
        %5365 = vmatprep.mubr.f32.mxu0 0.0
        %5366 = vmatmul.mubr.f32.gmra.mrb[0].mxu0 %v4348
        %v5367 = vpop.f32.mrb[0].mxu0
        %v5368 = vadd.f32 0.0, %v5367
        %v5369 = vpop.f32.mrb[0].mxu0
        %5370 = vmatprep.mubr.f32.mxu0 0.0
        %5371 = vmatmul.mubr.f32.gmra.mrb[0].mxu0 %v4349
        %v5372 = vpop.f32.mrb[0].mxu0
        %v5373 = vadd.f32 0.0, %v5372
        %v5374 = vpop.f32.mrb[0].mxu0
        %5375 = vdwg.mxu0
        %v5376 = vadd.f32 %v5246, %v5338
        %v5377 = vadd.f32 %v5247, %v5343
        %v5378 = vadd.f32 %v5248, %v5348
        %v5379 = vadd.f32 %v5249, %v5353
        %v5380 = vadd.f32 %v5250, %v5358
        %v5381 = vadd.f32 %v5251, %v5363
        %v5382 = vadd.f32 %v5252, %v5368
        %v5383 = vadd.f32 %v5253, %v5373
        %s5384 = scalar_lea.vmem %s8, 2176
        %v5385 = vld [vmem:[%s5384] sm:$0xff]
        %v5386 = vld [vmem:[%s5384 + $0x8] sm:$0xff]
        %v5387 = vld [vmem:[%s5384 + $0x10] sm:$0xff]
        %v5388 = vld [vmem:[%s5384 + $0x18] sm:$0xff]
        %v5389 = vld [vmem:[%s5384 + $0x20] sm:$0xff]
        %v5390 = vld [vmem:[%s5384 + $0x28] sm:$0xff]
        %v5391 = vld [vmem:[%s5384 + $0x30] sm:$0xff]
        %v5392 = vld [vmem:[%s5384 + $0x38] sm:$0xff]
        %v5393 = vld [vmem:[%s5384 + $0x40] sm:$0xff]
        %v5394 = vld [vmem:[%s5384 + $0x48] sm:$0xff]
        %v5395 = vld [vmem:[%s5384 + $0x50] sm:$0xff]
        %v5396 = vld [vmem:[%s5384 + $0x58] sm:$0xff]
        %v5397 = vld [vmem:[%s5384 + $0x60] sm:$0xff]
        %v5398 = vld [vmem:[%s5384 + $0x68] sm:$0xff]
        %v5399 = vld [vmem:[%s5384 + $0x70] sm:$0xff]
        %v5400 = vld [vmem:[%s5384 + $0x78] sm:$0xff]
        %5401 = vmatprep.subr.mxu0 0.0
        %5402 = vmatpush1.msra.mxu0 %v5385
        %5403 = vmatprep.subr.mxu0 0.0
        %5404 = vmatpush1.msra.mxu0 %v5386
        %5405 = vmatprep.subr.mxu0 0.0
        %5406 = vmatpush1.msra.mxu0 %v5387
        %5407 = vmatprep.subr.mxu0 0.0
        %5408 = vmatpush1.msra.mxu0 %v5388
        %5409 = vmatprep.subr.mxu0 0.0
        %5410 = vmatpush1.msra.mxu0 %v5389
        %5411 = vmatprep.subr.mxu0 0.0
        %5412 = vmatpush1.msra.mxu0 %v5390
        %5413 = vmatprep.subr.mxu0 0.0
        %5414 = vmatpush1.msra.mxu0 %v5391
        %5415 = vmatprep.subr.mxu0 0.0
        %5416 = vmatpush1.msra.mxu0 %v5392
        %5417 = vmatprep.subr.mxu0 0.0
        %5418 = vmatpush1.msra.mxu0 %v5393
        %5419 = vmatprep.subr.mxu0 0.0
        %5420 = vmatpush1.msra.mxu0 %v5394
        %5421 = vmatprep.subr.mxu0 0.0
        %5422 = vmatpush1.msra.mxu0 %v5395
        %5423 = vmatprep.subr.mxu0 0.0
        %5424 = vmatpush1.msra.mxu0 %v5396
        %5425 = vmatprep.subr.mxu0 0.0
        %5426 = vmatpush1.msra.mxu0 %v5397
        %5427 = vmatprep.subr.mxu0 0.0
        %5428 = vmatpush1.msra.mxu0 %v5398
        %5429 = vmatprep.subr.mxu0 0.0
        %5430 = vmatpush1.msra.mxu0 %v5399
        %5431 = vmatprep.subr.mxu0 0.0
        %5432 = vmatpush1.msra.mxu0 %v5400
        %5433 = vmatprep.subr.mxu0 0.0
        %5434 = vmatpush1.msra.mxu0 0.0
        %5435 = vmatprep.subr.mxu0 0.0
        %5436 = vmatpush1.msra.mxu0 0.0
        %5437 = vmatprep.subr.mxu0 0.0
        %5438 = vmatpush1.msra.mxu0 0.0
        %5439 = vmatprep.subr.mxu0 0.0
        %5440 = vmatpush1.msra.mxu0 0.0
        %5441 = vmatprep.subr.mxu0 0.0
        %5442 = vmatpush1.msra.mxu0 0.0
        %5443 = vmatprep.subr.mxu0 0.0
        %5444 = vmatpush1.msra.mxu0 0.0
        %5445 = vmatprep.subr.mxu0 0.0
        %5446 = vmatpush1.msra.mxu0 0.0
        %5447 = vmatprep.subr.mxu0 0.0
        %5448 = vmatpush1.msra.mxu0 0.0
        %5449 = vmatprep.subr.mxu0 0.0
        %5450 = vmatpush1.msra.mxu0 0.0
        %5451 = vmatprep.subr.mxu0 0.0
        %5452 = vmatpush1.msra.mxu0 0.0
        %5453 = vmatprep.subr.mxu0 0.0
        %5454 = vmatpush1.msra.mxu0 0.0
        %5455 = vmatprep.subr.mxu0 0.0
        %5456 = vmatpush1.msra.mxu0 0.0
        %5457 = vmatprep.subr.mxu0 0.0
        %5458 = vmatpush1.msra.mxu0 0.0
        %5459 = vmatprep.subr.mxu0 0.0
        %5460 = vmatpush1.msra.mxu0 0.0
        %5461 = vmatprep.subr.mxu0 0.0
        %5462 = vmatpush1.msra.mxu0 0.0
        %5463 = vmatprep.subr.mxu0 0.0
        %5464 = vmatpush1.msra.mxu0 0.0
        %5465 = vmatprep.mubr.f32.mxu0 0.0
        %5466 = vmatmul.mubr.f32.gmra.mrb[0].mxu0 %v4352
        %v5467 = vpop.f32.mrb[0].mxu0
        %v5468 = vadd.f32 0.0, %v5467
        %v5469 = vpop.f32.mrb[0].mxu0
        %5470 = vmatprep.mubr.f32.mxu0 0.0
        %5471 = vmatmul.mubr.f32.gmra.mrb[0].mxu0 %v4353
        %v5472 = vpop.f32.mrb[0].mxu0
        %v5473 = vadd.f32 0.0, %v5472
        %v5474 = vpop.f32.mrb[0].mxu0
        %5475 = vmatprep.mubr.f32.mxu0 0.0
        %5476 = vmatmul.mubr.f32.gmra.mrb[0].mxu0 %v4354
        %v5477 = vpop.f32.mrb[0].mxu0
        %v5478 = vadd.f32 0.0, %v5477
        %v5479 = vpop.f32.mrb[0].mxu0
        %5480 = vmatprep.mubr.f32.mxu0 0.0
        %5481 = vmatmul.mubr.f32.gmra.mrb[0].mxu0 %v4355
        %v5482 = vpop.f32.mrb[0].mxu0
        %v5483 = vadd.f32 0.0, %v5482
        %v5484 = vpop.f32.mrb[0].mxu0
        %5485 = vmatprep.mubr.f32.mxu0 0.0
        %5486 = vmatmul.mubr.f32.gmra.mrb[0].mxu0 %v4356
        %v5487 = vpop.f32.mrb[0].mxu0
        %v5488 = vadd.f32 0.0, %v5487
        %v5489 = vpop.f32.mrb[0].mxu0
        %5490 = vmatprep.mubr.f32.mxu0 0.0
        %5491 = vmatmul.mubr.f32.gmra.mrb[0].mxu0 %v4357
        %v5492 = vpop.f32.mrb[0].mxu0
        %v5493 = vadd.f32 0.0, %v5492
        %v5494 = vpop.f32.mrb[0].mxu0
        %5495 = vmatprep.mubr.f32.mxu0 0.0
        %5496 = vmatmul.mubr.f32.gmra.mrb[0].mxu0 %v4358
        %v5497 = vpop.f32.mrb[0].mxu0
        %v5498 = vadd.f32 0.0, %v5497
        %v5499 = vpop.f32.mrb[0].mxu0
        %5500 = vmatprep.mubr.f32.mxu0 0.0
        %5501 = vmatmul.mubr.f32.gmra.mrb[0].mxu0 %v4359
        %v5502 = vpop.f32.mrb[0].mxu0
        %v5503 = vadd.f32 0.0, %v5502
        %v5504 = vpop.f32.mrb[0].mxu0
        %5505 = vdwg.mxu0
        %v5506 = vadd.f32 %v5376, %v5468
        %v5507 = vadd.f32 %v5377, %v5473
        %v5508 = vadd.f32 %v5378, %v5478
        %v5509 = vadd.f32 %v5379, %v5483
        %v5510 = vadd.f32 %v5380, %v5488
        %v5511 = vadd.f32 %v5381, %v5493
        %v5512 = vadd.f32 %v5382, %v5498
        %v5513 = vadd.f32 %v5383, %v5503
        %s5514 = scalar_lea.vmem %s9, 1
        %v5515 = vld [vmem:[%s5514] sm:$0x1]
        %v5517 = vlaneseq
        %v5518 = vshrl.u32 %v5517, 7
        %v5519 = vsub.s32 0, %v5518
        %v5520 = vrot.slane %v5515, %v5519
        %v5522 = vadd.f32 %v5506, %v5520
        %v5523 = vadd.f32 %v5507, %v5520
        %v5524 = vadd.f32 %v5508, %v5520
        %v5525 = vadd.f32 %v5509, %v5520
        %v5526 = vadd.f32 %v5510, %v5520
        %v5527 = vadd.f32 %v5511, %v5520
        %v5528 = vadd.f32 %v5512, %v5520
        %v5529 = vadd.f32 %v5513, %v5520
        %s5530 = scalar_lea.vmem %s2, 3
        %v5531 = vld [vmem:[%s5530] sm:$0x1]
        %s5532 = scalar_lea.vmem %s3, 384
        %v5533 = vld [vmem:[%s5532] sm:$0xff]
        %v5534 = vld [vmem:[%s5532 + $0x8] sm:$0xff]
        %v5535 = vld [vmem:[%s5532 + $0x10] sm:$0xff]
        %v5536 = vld [vmem:[%s5532 + $0x18] sm:$0xff]
        %v5537 = vld [vmem:[%s5532 + $0x20] sm:$0xff]
        %v5538 = vld [vmem:[%s5532 + $0x28] sm:$0xff]
        %v5539 = vld [vmem:[%s5532 + $0x30] sm:$0xff]
        %v5540 = vld [vmem:[%s5532 + $0x38] sm:$0xff]
        %v5541 = vld [vmem:[%s5532 + $0x40] sm:$0xff]
        %v5542 = vld [vmem:[%s5532 + $0x48] sm:$0xff]
        %v5543 = vld [vmem:[%s5532 + $0x50] sm:$0xff]
        %v5544 = vld [vmem:[%s5532 + $0x58] sm:$0xff]
        %v5545 = vld [vmem:[%s5532 + $0x60] sm:$0xff]
        %v5546 = vld [vmem:[%s5532 + $0x68] sm:$0xff]
        %v5547 = vld [vmem:[%s5532 + $0x70] sm:$0xff]
        %v5548 = vld [vmem:[%s5532 + $0x78] sm:$0xff]
        %s5549 = scalar_lea.vmem %s4, 3
        %v5550 = vld [vmem:[%s5549] sm:$0x1]
        %s5551 = scalar_lea.vmem %s5, 384
        %v5552 = vld [vmem:[%s5551] sm:$0xff]
        %v5553 = vld [vmem:[%s5551 + $0x8] sm:$0xff]
        %v5554 = vld [vmem:[%s5551 + $0x10] sm:$0xff]
        %v5555 = vld [vmem:[%s5551 + $0x18] sm:$0xff]
        %v5556 = vld [vmem:[%s5551 + $0x20] sm:$0xff]
        %v5557 = vld [vmem:[%s5551 + $0x28] sm:$0xff]
        %v5558 = vld [vmem:[%s5551 + $0x30] sm:$0xff]
        %v5559 = vld [vmem:[%s5551 + $0x38] sm:$0xff]
        %v5560 = vld [vmem:[%s5551 + $0x40] sm:$0xff]
        %v5561 = vld [vmem:[%s5551 + $0x48] sm:$0xff]
        %v5562 = vld [vmem:[%s5551 + $0x50] sm:$0xff]
        %v5563 = vld [vmem:[%s5551 + $0x58] sm:$0xff]
        %v5564 = vld [vmem:[%s5551 + $0x60] sm:$0xff]
        %v5565 = vld [vmem:[%s5551 + $0x68] sm:$0xff]
        %v5566 = vld [vmem:[%s5551 + $0x70] sm:$0xff]
        %v5567 = vld [vmem:[%s5551 + $0x78] sm:$0xff]
        %s5568 = scalar_lea.vmem %s6, 384
        %v5569 = vld [vmem:[%s5568] sm:$0xff]
        %v5570 = vld [vmem:[%s5568 + $0x8] sm:$0xff]
        %v5571 = vld [vmem:[%s5568 + $0x10] sm:$0xff]
        %v5572 = vld [vmem:[%s5568 + $0x18] sm:$0xff]
        %v5573 = vld [vmem:[%s5568 + $0x20] sm:$0xff]
        %v5574 = vld [vmem:[%s5568 + $0x28] sm:$0xff]
        %v5575 = vld [vmem:[%s5568 + $0x30] sm:$0xff]
        %v5576 = vld [vmem:[%s5568 + $0x38] sm:$0xff]
        %v5577 = vld [vmem:[%s5568 + $0x40] sm:$0xff]
        %v5578 = vld [vmem:[%s5568 + $0x48] sm:$0xff]
        %v5579 = vld [vmem:[%s5568 + $0x50] sm:$0xff]
        %v5580 = vld [vmem:[%s5568 + $0x58] sm:$0xff]
        %v5581 = vld [vmem:[%s5568 + $0x60] sm:$0xff]
        %v5582 = vld [vmem:[%s5568 + $0x68] sm:$0xff]
        %v5583 = vld [vmem:[%s5568 + $0x70] sm:$0xff]
        %v5584 = vld [vmem:[%s5568 + $0x78] sm:$0xff]
        %s5585 = scalar_lea.vmem %s7, 3
        %v5586 = vld [vmem:[%s5585] sm:$0x1]
        %5587 = vmatprep.subr.mxu0 0.0
        %5588 = vmatpush1.msra.mxu0 %v509
        %5589 = vmatprep.subr.mxu0 0.0
        %5590 = vmatpush1.msra.mxu0 %v510
        %5591 = vmatprep.subr.mxu0 0.0
        %5592 = vmatpush1.msra.mxu0 %v511
        %5593 = vmatprep.subr.mxu0 0.0
        %5594 = vmatpush1.msra.mxu0 %v512
        %5595 = vmatprep.subr.mxu0 0.0
        %5596 = vmatpush1.msra.mxu0 %v513
        %5597 = vmatprep.subr.mxu0 0.0
        %5598 = vmatpush1.msra.mxu0 %v514
        %5599 = vmatprep.subr.mxu0 0.0
        %5600 = vmatpush1.msra.mxu0 %v515
        %5601 = vmatprep.subr.mxu0 0.0
        %5602 = vmatpush1.msra.mxu0 %v516
        %5603 = vmatprep.subr.mxu0 0.0
        %5604 = vmatpush1.msra.mxu0 %v517
        %5605 = vmatprep.subr.mxu0 0.0
        %5606 = vmatpush1.msra.mxu0 %v518
        %5607 = vmatprep.subr.mxu0 0.0
        %5608 = vmatpush1.msra.mxu0 %v519
        %5609 = vmatprep.subr.mxu0 0.0
        %5610 = vmatpush1.msra.mxu0 %v520
        %5611 = vmatprep.subr.mxu0 0.0
        %5612 = vmatpush1.msra.mxu0 %v521
        %5613 = vmatprep.subr.mxu0 0.0
        %5614 = vmatpush1.msra.mxu0 %v522
        %5615 = vmatprep.subr.mxu0 0.0
        %5616 = vmatpush1.msra.mxu0 %v523
        %5617 = vmatprep.subr.mxu0 0.0
        %5618 = vmatpush1.msra.mxu0 %v524
        %5619 = vmatprep.subr.mxu0 0.0
        %5620 = vmatpush1.msra.mxu0 0.0
        %5621 = vmatprep.subr.mxu0 0.0
        %5622 = vmatpush1.msra.mxu0 0.0
        %5623 = vmatprep.subr.mxu0 0.0
        %5624 = vmatpush1.msra.mxu0 0.0
        %5625 = vmatprep.subr.mxu0 0.0
        %5626 = vmatpush1.msra.mxu0 0.0
        %5627 = vmatprep.subr.mxu0 0.0
        %5628 = vmatpush1.msra.mxu0 0.0
        %5629 = vmatprep.subr.mxu0 0.0
        %5630 = vmatpush1.msra.mxu0 0.0
        %5631 = vmatprep.subr.mxu0 0.0
        %5632 = vmatpush1.msra.mxu0 0.0
        %5633 = vmatprep.subr.mxu0 0.0
        %5634 = vmatpush1.msra.mxu0 0.0
        %5635 = vmatprep.subr.mxu0 0.0
        %5636 = vmatpush1.msra.mxu0 0.0
        %5637 = vmatprep.subr.mxu0 0.0
        %5638 = vmatpush1.msra.mxu0 0.0
        %5639 = vmatprep.subr.mxu0 0.0
        %5640 = vmatpush1.msra.mxu0 0.0
        %5641 = vmatprep.subr.mxu0 0.0
        %5642 = vmatpush1.msra.mxu0 0.0
        %5643 = vmatprep.subr.mxu0 0.0
        %5644 = vmatpush1.msra.mxu0 0.0
        %5645 = vmatprep.subr.mxu0 0.0
        %5646 = vmatpush1.msra.mxu0 0.0
        %5647 = vmatprep.subr.mxu0 0.0
        %5648 = vmatpush1.msra.mxu0 0.0
        %5649 = vmatprep.subr.mxu0 0.0
        %5650 = vmatpush1.msra.mxu0 0.0
        %5651 = vmatprep.mubr.f32.mxu0 0.0
        %5652 = vmatmul.mubr.f32.gmra.mrb[0].mxu0 %v5522
        %v5653 = vpop.f32.mrb[0].mxu0
        %v5654 = vadd.f32 0.0, %v5653
        %v5655 = vpop.f32.mrb[0].mxu0
        %5656 = vmatprep.mubr.f32.mxu0 0.0
        %5657 = vmatmul.mubr.f32.gmra.mrb[0].mxu0 %v5523
        %v5658 = vpop.f32.mrb[0].mxu0
        %v5659 = vadd.f32 0.0, %v5658
        %v5660 = vpop.f32.mrb[0].mxu0
        %5661 = vmatprep.mubr.f32.mxu0 0.0
        %5662 = vmatmul.mubr.f32.gmra.mrb[0].mxu0 %v5524
        %v5663 = vpop.f32.mrb[0].mxu0
        %v5664 = vadd.f32 0.0, %v5663
        %v5665 = vpop.f32.mrb[0].mxu0
        %5666 = vmatprep.mubr.f32.mxu0 0.0
        %5667 = vmatmul.mubr.f32.gmra.mrb[0].mxu0 %v5525
        %v5668 = vpop.f32.mrb[0].mxu0
        %v5669 = vadd.f32 0.0, %v5668
        %v5670 = vpop.f32.mrb[0].mxu0
        %5671 = vmatprep.mubr.f32.mxu0 0.0
        %5672 = vmatmul.mubr.f32.gmra.mrb[0].mxu0 %v5526
        %v5673 = vpop.f32.mrb[0].mxu0
        %v5674 = vadd.f32 0.0, %v5673
        %v5675 = vpop.f32.mrb[0].mxu0
        %5676 = vmatprep.mubr.f32.mxu0 0.0
        %5677 = vmatmul.mubr.f32.gmra.mrb[0].mxu0 %v5527
        %v5678 = vpop.f32.mrb[0].mxu0
        %v5679 = vadd.f32 0.0, %v5678
        %v5680 = vpop.f32.mrb[0].mxu0
        %5681 = vmatprep.mubr.f32.mxu0 0.0
        %5682 = vmatmul.mubr.f32.gmra.mrb[0].mxu0 %v5528
        %v5683 = vpop.f32.mrb[0].mxu0
        %v5684 = vadd.f32 0.0, %v5683
        %v5685 = vpop.f32.mrb[0].mxu0
        %5686 = vmatprep.mubr.f32.mxu0 0.0
        %5687 = vmatmul.mubr.f32.gmra.mrb[0].mxu0 %v5529
        %v5688 = vpop.f32.mrb[0].mxu0
        %v5689 = vadd.f32 0.0, %v5688
        %v5690 = vpop.f32.mrb[0].mxu0
        %5691 = vdwg.mxu0
        %v5692 = vmul.f32 %v5522, %v5522
        %v5693 = vmul.f32 %v5523, %v5523
        %v5694 = vmul.f32 %v5524, %v5524
        %v5695 = vmul.f32 %v5525, %v5525
        %v5696 = vmul.f32 %v5526, %v5526
        %v5697 = vmul.f32 %v5527, %v5527
        %v5698 = vmul.f32 %v5528, %v5528
        %v5699 = vmul.f32 %v5529, %v5529
        %5700 = vmatprep.subr.mxu0 0.0
        %5701 = vmatpush1.msra.mxu0 %v509
        %5702 = vmatprep.subr.mxu0 0.0
        %5703 = vmatpush1.msra.mxu0 %v510
        %5704 = vmatprep.subr.mxu0 0.0
        %5705 = vmatpush1.msra.mxu0 %v511
        %5706 = vmatprep.subr.mxu0 0.0
        %5707 = vmatpush1.msra.mxu0 %v512
        %5708 = vmatprep.subr.mxu0 0.0
        %5709 = vmatpush1.msra.mxu0 %v513
        %5710 = vmatprep.subr.mxu0 0.0
        %5711 = vmatpush1.msra.mxu0 %v514
        %5712 = vmatprep.subr.mxu0 0.0
        %5713 = vmatpush1.msra.mxu0 %v515
        %5714 = vmatprep.subr.mxu0 0.0
        %5715 = vmatpush1.msra.mxu0 %v516
        %5716 = vmatprep.subr.mxu0 0.0
        %5717 = vmatpush1.msra.mxu0 %v517
        %5718 = vmatprep.subr.mxu0 0.0
        %5719 = vmatpush1.msra.mxu0 %v518
        %5720 = vmatprep.subr.mxu0 0.0
        %5721 = vmatpush1.msra.mxu0 %v519
        %5722 = vmatprep.subr.mxu0 0.0
        %5723 = vmatpush1.msra.mxu0 %v520
        %5724 = vmatprep.subr.mxu0 0.0
        %5725 = vmatpush1.msra.mxu0 %v521
        %5726 = vmatprep.subr.mxu0 0.0
        %5727 = vmatpush1.msra.mxu0 %v522
        %5728 = vmatprep.subr.mxu0 0.0
        %5729 = vmatpush1.msra.mxu0 %v523
        %5730 = vmatprep.subr.mxu0 0.0
        %5731 = vmatpush1.msra.mxu0 %v524
        %5732 = vmatprep.subr.mxu0 0.0
        %5733 = vmatpush1.msra.mxu0 0.0
        %5734 = vmatprep.subr.mxu0 0.0
        %5735 = vmatpush1.msra.mxu0 0.0
        %5736 = vmatprep.subr.mxu0 0.0
        %5737 = vmatpush1.msra.mxu0 0.0
        %5738 = vmatprep.subr.mxu0 0.0
        %5739 = vmatpush1.msra.mxu0 0.0
        %5740 = vmatprep.subr.mxu0 0.0
        %5741 = vmatpush1.msra.mxu0 0.0
        %5742 = vmatprep.subr.mxu0 0.0
        %5743 = vmatpush1.msra.mxu0 0.0
        %5744 = vmatprep.subr.mxu0 0.0
        %5745 = vmatpush1.msra.mxu0 0.0
        %5746 = vmatprep.subr.mxu0 0.0
        %5747 = vmatpush1.msra.mxu0 0.0
        %5748 = vmatprep.subr.mxu0 0.0
        %5749 = vmatpush1.msra.mxu0 0.0
        %5750 = vmatprep.subr.mxu0 0.0
        %5751 = vmatpush1.msra.mxu0 0.0
        %5752 = vmatprep.subr.mxu0 0.0
        %5753 = vmatpush1.msra.mxu0 0.0
        %5754 = vmatprep.subr.mxu0 0.0
        %5755 = vmatpush1.msra.mxu0 0.0
        %5756 = vmatprep.subr.mxu0 0.0
        %5757 = vmatpush1.msra.mxu0 0.0
        %5758 = vmatprep.subr.mxu0 0.0
        %5759 = vmatpush1.msra.mxu0 0.0
        %5760 = vmatprep.subr.mxu0 0.0
        %5761 = vmatpush1.msra.mxu0 0.0
        %5762 = vmatprep.subr.mxu0 0.0
        %5763 = vmatpush1.msra.mxu0 0.0
        %5764 = vmatprep.mubr.f32.mxu0 0.0
        %5765 = vmatmul.mubr.f32.gmra.mrb[0].mxu0 %v5692
        %v5766 = vpop.f32.mrb[0].mxu0
        %v5767 = vadd.f32 0.0, %v5766
        %v5768 = vpop.f32.mrb[0].mxu0
        %5769 = vmatprep.mubr.f32.mxu0 0.0
        %5770 = vmatmul.mubr.f32.gmra.mrb[0].mxu0 %v5693
        %v5771 = vpop.f32.mrb[0].mxu0
        %v5772 = vadd.f32 0.0, %v5771
        %v5773 = vpop.f32.mrb[0].mxu0
        %5774 = vmatprep.mubr.f32.mxu0 0.0
        %5775 = vmatmul.mubr.f32.gmra.mrb[0].mxu0 %v5694
        %v5776 = vpop.f32.mrb[0].mxu0
        %v5777 = vadd.f32 0.0, %v5776
        %v5778 = vpop.f32.mrb[0].mxu0
        %5779 = vmatprep.mubr.f32.mxu0 0.0
        %5780 = vmatmul.mubr.f32.gmra.mrb[0].mxu0 %v5695
        %v5781 = vpop.f32.mrb[0].mxu0
        %v5782 = vadd.f32 0.0, %v5781
        %v5783 = vpop.f32.mrb[0].mxu0
        %5784 = vmatprep.mubr.f32.mxu0 0.0
        %5785 = vmatmul.mubr.f32.gmra.mrb[0].mxu0 %v5696
        %v5786 = vpop.f32.mrb[0].mxu0
        %v5787 = vadd.f32 0.0, %v5786
        %v5788 = vpop.f32.mrb[0].mxu0
        %5789 = vmatprep.mubr.f32.mxu0 0.0
        %5790 = vmatmul.mubr.f32.gmra.mrb[0].mxu0 %v5697
        %v5791 = vpop.f32.mrb[0].mxu0
        %v5792 = vadd.f32 0.0, %v5791
        %v5793 = vpop.f32.mrb[0].mxu0
        %5794 = vmatprep.mubr.f32.mxu0 0.0
        %5795 = vmatmul.mubr.f32.gmra.mrb[0].mxu0 %v5698
        %v5796 = vpop.f32.mrb[0].mxu0
        %v5797 = vadd.f32 0.0, %v5796
        %v5798 = vpop.f32.mrb[0].mxu0
        %5799 = vmatprep.mubr.f32.mxu0 0.0
        %5800 = vmatmul.mubr.f32.gmra.mrb[0].mxu0 %v5699
        %v5801 = vpop.f32.mrb[0].mxu0
        %v5802 = vadd.f32 0.0, %v5801
        %v5803 = vpop.f32.mrb[0].mxu0
        %5804 = vdwg.mxu0
        %v5805 = vmul.f32 %v5654, %v5654
        %v5806 = vmul.f32 %v5659, %v5659
        %v5807 = vmul.f32 %v5664, %v5664
        %v5808 = vmul.f32 %v5669, %v5669
        %v5809 = vmul.f32 %v5674, %v5674
        %v5810 = vmul.f32 %v5679, %v5679
        %v5811 = vmul.f32 %v5684, %v5684
        %v5812 = vmul.f32 %v5689, %v5689
        %v5813 = vsub.f32 %v5767, %v5805
        %v5814 = vsub.f32 %v5772, %v5806
        %v5815 = vsub.f32 %v5777, %v5807
        %v5816 = vsub.f32 %v5782, %v5808
        %v5817 = vsub.f32 %v5787, %v5809
        %v5818 = vsub.f32 %v5792, %v5810
        %v5819 = vsub.f32 %v5797, %v5811
        %v5820 = vsub.f32 %v5802, %v5812
        %v5821 = vsub.f32 %v5522, %v5654
        %v5822 = vsub.f32 %v5523, %v5659
        %v5823 = vsub.f32 %v5524, %v5664
        %v5824 = vsub.f32 %v5525, %v5669
        %v5825 = vsub.f32 %v5526, %v5674
        %v5826 = vsub.f32 %v5527, %v5679
        %v5827 = vsub.f32 %v5528, %v5684
        %v5828 = vsub.f32 %v5529, %v5689
        %v5829 = vadd.f32 %v5813, 1e-05
        %v5830 = vadd.f32 %v5814, 1e-05
        %v5831 = vadd.f32 %v5815, 1e-05
        %v5832 = vadd.f32 %v5816, 1e-05
        %v5833 = vadd.f32 %v5817, 1e-05
        %v5834 = vadd.f32 %v5818, 1e-05
        %v5835 = vadd.f32 %v5819, 1e-05
        %v5836 = vadd.f32 %v5820, 1e-05
        %v5837 = vrsqrt.pop %v5829
        %v5838 = vrsqrt.pop %v5830
        %v5839 = vrsqrt.pop %v5831
        %v5840 = vrsqrt.pop %v5832
        %v5841 = vrsqrt.pop %v5833
        %v5842 = vrsqrt.pop %v5834
        %v5843 = vrsqrt.pop %v5835
        %v5844 = vrsqrt.pop %v5836
        %v5845 = vmul.f32 %v5821, %v5837
        %v5846 = vmul.f32 %v5822, %v5838
        %v5847 = vmul.f32 %v5823, %v5839
        %v5848 = vmul.f32 %v5824, %v5840
        %v5849 = vmul.f32 %v5825, %v5841
        %v5850 = vmul.f32 %v5826, %v5842
        %v5851 = vmul.f32 %v5827, %v5843
        %v5852 = vmul.f32 %v5828, %v5844
        %v5854 = vlaneseq
        %v5855 = vshrl.u32 %v5854, 7
        %v5856 = vsub.s32 0, %v5855
        %v5857 = vrot.slane %v5531, %v5856
        %v5859 = vmul.f32 %v5845, %v5857
        %v5860 = vmul.f32 %v5846, %v5857
        %v5861 = vmul.f32 %v5847, %v5857
        %v5862 = vmul.f32 %v5848, %v5857
        %v5863 = vmul.f32 %v5849, %v5857
        %v5864 = vmul.f32 %v5850, %v5857
        %v5865 = vmul.f32 %v5851, %v5857
        %v5866 = vmul.f32 %v5852, %v5857
        %v5868 = vlaneseq
        %v5869 = vshrl.u32 %v5868, 7
        %v5870 = vsub.s32 0, %v5869
        %v5871 = vrot.slane %v5550, %v5870
        %5873 = vmatprep.subr.mxu0 0.0
        %5874 = vmatpush1.msra.mxu0 %v5533
        %5875 = vmatprep.subr.mxu0 0.0
        %5876 = vmatpush1.msra.mxu0 %v5534
        %5877 = vmatprep.subr.mxu0 0.0
        %5878 = vmatpush1.msra.mxu0 %v5535
        %5879 = vmatprep.subr.mxu0 0.0
        %5880 = vmatpush1.msra.mxu0 %v5536
        %5881 = vmatprep.subr.mxu0 0.0
        %5882 = vmatpush1.msra.mxu0 %v5537
        %5883 = vmatprep.subr.mxu0 0.0
        %5884 = vmatpush1.msra.mxu0 %v5538
        %5885 = vmatprep.subr.mxu0 0.0
        %5886 = vmatpush1.msra.mxu0 %v5539
        %5887 = vmatprep.subr.mxu0 0.0
        %5888 = vmatpush1.msra.mxu0 %v5540
        %5889 = vmatprep.subr.mxu0 0.0
        %5890 = vmatpush1.msra.mxu0 %v5541
        %5891 = vmatprep.subr.mxu0 0.0
        %5892 = vmatpush1.msra.mxu0 %v5542
        %5893 = vmatprep.subr.mxu0 0.0
        %5894 = vmatpush1.msra.mxu0 %v5543
        %5895 = vmatprep.subr.mxu0 0.0
        %5896 = vmatpush1.msra.mxu0 %v5544
        %5897 = vmatprep.subr.mxu0 0.0
        %5898 = vmatpush1.msra.mxu0 %v5545
        %5899 = vmatprep.subr.mxu0 0.0
        %5900 = vmatpush1.msra.mxu0 %v5546
        %5901 = vmatprep.subr.mxu0 0.0
        %5902 = vmatpush1.msra.mxu0 %v5547
        %5903 = vmatprep.subr.mxu0 0.0
        %5904 = vmatpush1.msra.mxu0 %v5548
        %5905 = vmatprep.subr.mxu0 0.0
        %5906 = vmatpush1.msra.mxu0 0.0
        %5907 = vmatprep.subr.mxu0 0.0
        %5908 = vmatpush1.msra.mxu0 0.0
        %5909 = vmatprep.subr.mxu0 0.0
        %5910 = vmatpush1.msra.mxu0 0.0
        %5911 = vmatprep.subr.mxu0 0.0
        %5912 = vmatpush1.msra.mxu0 0.0
        %5913 = vmatprep.subr.mxu0 0.0
        %5914 = vmatpush1.msra.mxu0 0.0
        %5915 = vmatprep.subr.mxu0 0.0
        %5916 = vmatpush1.msra.mxu0 0.0
        %5917 = vmatprep.subr.mxu0 0.0
        %5918 = vmatpush1.msra.mxu0 0.0
        %5919 = vmatprep.subr.mxu0 0.0
        %5920 = vmatpush1.msra.mxu0 0.0
        %5921 = vmatprep.subr.mxu0 0.0
        %5922 = vmatpush1.msra.mxu0 0.0
        %5923 = vmatprep.subr.mxu0 0.0
        %5924 = vmatpush1.msra.mxu0 0.0
        %5925 = vmatprep.subr.mxu0 0.0
        %5926 = vmatpush1.msra.mxu0 0.0
        %5927 = vmatprep.subr.mxu0 0.0
        %5928 = vmatpush1.msra.mxu0 0.0
        %5929 = vmatprep.subr.mxu0 0.0
        %5930 = vmatpush1.msra.mxu0 0.0
        %5931 = vmatprep.subr.mxu0 0.0
        %5932 = vmatpush1.msra.mxu0 0.0
        %5933 = vmatprep.subr.mxu0 0.0
        %5934 = vmatpush1.msra.mxu0 0.0
        %5935 = vmatprep.subr.mxu0 0.0
        %5936 = vmatpush1.msra.mxu0 0.0
        %5937 = vmatprep.mubr.f32.mxu0 0.0
        %5938 = vmatmul.mubr.f32.gmra.mrb[0].mxu0 %v5859
        %v5939 = vpop.f32.mrb[0].mxu0
        %v5940 = vadd.f32 %v5871, %v5939
        %v5941 = vpop.f32.mrb[0].mxu0
        %5942 = vmatprep.mubr.f32.mxu0 0.0
        %5943 = vmatmul.mubr.f32.gmra.mrb[0].mxu0 %v5860
        %v5944 = vpop.f32.mrb[0].mxu0
        %v5945 = vadd.f32 %v5871, %v5944
        %v5946 = vpop.f32.mrb[0].mxu0
        %5947 = vmatprep.mubr.f32.mxu0 0.0
        %5948 = vmatmul.mubr.f32.gmra.mrb[0].mxu0 %v5861
        %v5949 = vpop.f32.mrb[0].mxu0
        %v5950 = vadd.f32 %v5871, %v5949
        %v5951 = vpop.f32.mrb[0].mxu0
        %5952 = vmatprep.mubr.f32.mxu0 0.0
        %5953 = vmatmul.mubr.f32.gmra.mrb[0].mxu0 %v5862
        %v5954 = vpop.f32.mrb[0].mxu0
        %v5955 = vadd.f32 %v5871, %v5954
        %v5956 = vpop.f32.mrb[0].mxu0
        %5957 = vmatprep.mubr.f32.mxu0 0.0
        %5958 = vmatmul.mubr.f32.gmra.mrb[0].mxu0 %v5863
        %v5959 = vpop.f32.mrb[0].mxu0
        %v5960 = vadd.f32 %v5871, %v5959
        %v5961 = vpop.f32.mrb[0].mxu0
        %5962 = vmatprep.mubr.f32.mxu0 0.0
        %5963 = vmatmul.mubr.f32.gmra.mrb[0].mxu0 %v5864
        %v5964 = vpop.f32.mrb[0].mxu0
        %v5965 = vadd.f32 %v5871, %v5964
        %v5966 = vpop.f32.mrb[0].mxu0
        %5967 = vmatprep.mubr.f32.mxu0 0.0
        %5968 = vmatmul.mubr.f32.gmra.mrb[0].mxu0 %v5865
        %v5969 = vpop.f32.mrb[0].mxu0
        %v5970 = vadd.f32 %v5871, %v5969
        %v5971 = vpop.f32.mrb[0].mxu0
        %5972 = vmatprep.mubr.f32.mxu0 0.0
        %5973 = vmatmul.mubr.f32.gmra.mrb[0].mxu0 %v5866
        %v5974 = vpop.f32.mrb[0].mxu0
        %v5975 = vadd.f32 %v5871, %v5974
        %v5976 = vpop.f32.mrb[0].mxu0
        %5977 = vdwg.mxu0
        %v5978 = vxor.u32 %v5940, 2147483648
        %v5979 = vxor.u32 %v5945, 2147483648
        %v5980 = vxor.u32 %v5950, 2147483648
        %v5981 = vxor.u32 %v5955, 2147483648
        %v5982 = vxor.u32 %v5960, 2147483648
        %v5983 = vxor.u32 %v5965, 2147483648
        %v5984 = vxor.u32 %v5970, 2147483648
        %v5985 = vxor.u32 %v5975, 2147483648
        %v5986 = vmul.f32 %v5978, 1.442695
        %v5987 = vpow.pop %v5986
        %v5988 = vmul.f32 %v5979, 1.442695
        %v5989 = vpow.pop %v5988
        %v5990 = vmul.f32 %v5980, 1.442695
        %v5991 = vpow.pop %v5990
        %v5992 = vmul.f32 %v5981, 1.442695
        %v5993 = vpow.pop %v5992
        %v5994 = vmul.f32 %v5982, 1.442695
        %v5995 = vpow.pop %v5994
        %v5996 = vmul.f32 %v5983, 1.442695
        %v5997 = vpow.pop %v5996
        %v5998 = vmul.f32 %v5984, 1.442695
        %v5999 = vpow.pop %v5998
        %v6000 = vmul.f32 %v5985, 1.442695
        %v6001 = vpow.pop %v6000
        %v6002 = vadd.f32 %v5987, 1.0
        %v6003 = vadd.f32 %v5989, 1.0
        %v6004 = vadd.f32 %v5991, 1.0
        %v6005 = vadd.f32 %v5993, 1.0
        %v6006 = vadd.f32 %v5995, 1.0
        %v6007 = vadd.f32 %v5997, 1.0
        %v6008 = vadd.f32 %v5999, 1.0
        %v6009 = vadd.f32 %v6001, 1.0
        %v6010 = vrcp.pop %v6002
        %v6011 = vmul.f32 1.0, %v6010
        %v6012 = vrcp.pop %v6003
        %v6013 = vmul.f32 1.0, %v6012
        %v6014 = vrcp.pop %v6004
        %v6015 = vmul.f32 1.0, %v6014
        %v6016 = vrcp.pop %v6005
        %v6017 = vmul.f32 1.0, %v6016
        %v6018 = vrcp.pop %v6006
        %v6019 = vmul.f32 1.0, %v6018
        %v6020 = vrcp.pop %v6007
        %v6021 = vmul.f32 1.0, %v6020
        %v6022 = vrcp.pop %v6008
        %v6023 = vmul.f32 1.0, %v6022
        %v6024 = vrcp.pop %v6009
        %v6025 = vmul.f32 1.0, %v6024
        %v6026 = vmul.f32 %v5940, %v6011
        %v6027 = vmul.f32 %v5945, %v6013
        %v6028 = vmul.f32 %v5950, %v6015
        %v6029 = vmul.f32 %v5955, %v6017
        %v6030 = vmul.f32 %v5960, %v6019
        %v6031 = vmul.f32 %v5965, %v6021
        %v6032 = vmul.f32 %v5970, %v6023
        %v6033 = vmul.f32 %v5975, %v6025
        %6034 = vmatprep.subr.mxu0 0.0
        %6035 = vmatpush1.msra.mxu0 %v5569
        %6036 = vmatprep.subr.mxu0 0.0
        %6037 = vmatpush1.msra.mxu0 %v5570
        %6038 = vmatprep.subr.mxu0 0.0
        %6039 = vmatpush1.msra.mxu0 %v5571
        %6040 = vmatprep.subr.mxu0 0.0
        %6041 = vmatpush1.msra.mxu0 %v5572
        %6042 = vmatprep.subr.mxu0 0.0
        %6043 = vmatpush1.msra.mxu0 %v5573
        %6044 = vmatprep.subr.mxu0 0.0
        %6045 = vmatpush1.msra.mxu0 %v5574
        %6046 = vmatprep.subr.mxu0 0.0
        %6047 = vmatpush1.msra.mxu0 %v5575
        %6048 = vmatprep.subr.mxu0 0.0
        %6049 = vmatpush1.msra.mxu0 %v5576
        %6050 = vmatprep.subr.mxu0 0.0
        %6051 = vmatpush1.msra.mxu0 %v5577
        %6052 = vmatprep.subr.mxu0 0.0
        %6053 = vmatpush1.msra.mxu0 %v5578
        %6054 = vmatprep.subr.mxu0 0.0
        %6055 = vmatpush1.msra.mxu0 %v5579
        %6056 = vmatprep.subr.mxu0 0.0
        %6057 = vmatpush1.msra.mxu0 %v5580
        %6058 = vmatprep.subr.mxu0 0.0
        %6059 = vmatpush1.msra.mxu0 %v5581
        %6060 = vmatprep.subr.mxu0 0.0
        %6061 = vmatpush1.msra.mxu0 %v5582
        %6062 = vmatprep.subr.mxu0 0.0
        %6063 = vmatpush1.msra.mxu0 %v5583
        %6064 = vmatprep.subr.mxu0 0.0
        %6065 = vmatpush1.msra.mxu0 %v5584
        %6066 = vmatprep.subr.mxu0 0.0
        %6067 = vmatpush1.msra.mxu0 0.0
        %6068 = vmatprep.subr.mxu0 0.0
        %6069 = vmatpush1.msra.mxu0 0.0
        %6070 = vmatprep.subr.mxu0 0.0
        %6071 = vmatpush1.msra.mxu0 0.0
        %6072 = vmatprep.subr.mxu0 0.0
        %6073 = vmatpush1.msra.mxu0 0.0
        %6074 = vmatprep.subr.mxu0 0.0
        %6075 = vmatpush1.msra.mxu0 0.0
        %6076 = vmatprep.subr.mxu0 0.0
        %6077 = vmatpush1.msra.mxu0 0.0
        %6078 = vmatprep.subr.mxu0 0.0
        %6079 = vmatpush1.msra.mxu0 0.0
        %6080 = vmatprep.subr.mxu0 0.0
        %6081 = vmatpush1.msra.mxu0 0.0
        %6082 = vmatprep.subr.mxu0 0.0
        %6083 = vmatpush1.msra.mxu0 0.0
        %6084 = vmatprep.subr.mxu0 0.0
        %6085 = vmatpush1.msra.mxu0 0.0
        %6086 = vmatprep.subr.mxu0 0.0
        %6087 = vmatpush1.msra.mxu0 0.0
        %6088 = vmatprep.subr.mxu0 0.0
        %6089 = vmatpush1.msra.mxu0 0.0
        %6090 = vmatprep.subr.mxu0 0.0
        %6091 = vmatpush1.msra.mxu0 0.0
        %6092 = vmatprep.subr.mxu0 0.0
        %6093 = vmatpush1.msra.mxu0 0.0
        %6094 = vmatprep.subr.mxu0 0.0
        %6095 = vmatpush1.msra.mxu0 0.0
        %6096 = vmatprep.subr.mxu0 0.0
        %6097 = vmatpush1.msra.mxu0 0.0
        %6098 = vmatprep.mubr.f32.mxu0 0.0
        %6099 = vmatmul.mubr.f32.gmra.mrb[0].mxu0 %v5859
        %v6100 = vpop.f32.mrb[0].mxu0
        %v6101 = vadd.f32 0.0, %v6100
        %v6102 = vpop.f32.mrb[0].mxu0
        %6103 = vmatprep.mubr.f32.mxu0 0.0
        %6104 = vmatmul.mubr.f32.gmra.mrb[0].mxu0 %v5860
        %v6105 = vpop.f32.mrb[0].mxu0
        %v6106 = vadd.f32 0.0, %v6105
        %v6107 = vpop.f32.mrb[0].mxu0
        %6108 = vmatprep.mubr.f32.mxu0 0.0
        %6109 = vmatmul.mubr.f32.gmra.mrb[0].mxu0 %v5861
        %v6110 = vpop.f32.mrb[0].mxu0
        %v6111 = vadd.f32 0.0, %v6110
        %v6112 = vpop.f32.mrb[0].mxu0
        %6113 = vmatprep.mubr.f32.mxu0 0.0
        %6114 = vmatmul.mubr.f32.gmra.mrb[0].mxu0 %v5862
        %v6115 = vpop.f32.mrb[0].mxu0
        %v6116 = vadd.f32 0.0, %v6115
        %v6117 = vpop.f32.mrb[0].mxu0
        %6118 = vmatprep.mubr.f32.mxu0 0.0
        %6119 = vmatmul.mubr.f32.gmra.mrb[0].mxu0 %v5863
        %v6120 = vpop.f32.mrb[0].mxu0
        %v6121 = vadd.f32 0.0, %v6120
        %v6122 = vpop.f32.mrb[0].mxu0
        %6123 = vmatprep.mubr.f32.mxu0 0.0
        %6124 = vmatmul.mubr.f32.gmra.mrb[0].mxu0 %v5864
        %v6125 = vpop.f32.mrb[0].mxu0
        %v6126 = vadd.f32 0.0, %v6125
        %v6127 = vpop.f32.mrb[0].mxu0
        %6128 = vmatprep.mubr.f32.mxu0 0.0
        %6129 = vmatmul.mubr.f32.gmra.mrb[0].mxu0 %v5865
        %v6130 = vpop.f32.mrb[0].mxu0
        %v6131 = vadd.f32 0.0, %v6130
        %v6132 = vpop.f32.mrb[0].mxu0
        %6133 = vmatprep.mubr.f32.mxu0 0.0
        %6134 = vmatmul.mubr.f32.gmra.mrb[0].mxu0 %v5866
        %v6135 = vpop.f32.mrb[0].mxu0
        %v6136 = vadd.f32 0.0, %v6135
        %v6137 = vpop.f32.mrb[0].mxu0
        %6138 = vdwg.mxu0
        %6139 = vmatprep.subr.mxu0 0.0
        %6140 = vmatpush1.msra.mxu0 %v5552
        %6141 = vmatprep.subr.mxu0 0.0
        %6142 = vmatpush1.msra.mxu0 %v5553
        %6143 = vmatprep.subr.mxu0 0.0
        %6144 = vmatpush1.msra.mxu0 %v5554
        %6145 = vmatprep.subr.mxu0 0.0
        %6146 = vmatpush1.msra.mxu0 %v5555
        %6147 = vmatprep.subr.mxu0 0.0
        %6148 = vmatpush1.msra.mxu0 %v5556
        %6149 = vmatprep.subr.mxu0 0.0
        %6150 = vmatpush1.msra.mxu0 %v5557
        %6151 = vmatprep.subr.mxu0 0.0
        %6152 = vmatpush1.msra.mxu0 %v5558
        %6153 = vmatprep.subr.mxu0 0.0
        %6154 = vmatpush1.msra.mxu0 %v5559
        %6155 = vmatprep.subr.mxu0 0.0
        %6156 = vmatpush1.msra.mxu0 %v5560
        %6157 = vmatprep.subr.mxu0 0.0
        %6158 = vmatpush1.msra.mxu0 %v5561
        %6159 = vmatprep.subr.mxu0 0.0
        %6160 = vmatpush1.msra.mxu0 %v5562
        %6161 = vmatprep.subr.mxu0 0.0
        %6162 = vmatpush1.msra.mxu0 %v5563
        %6163 = vmatprep.subr.mxu0 0.0
        %6164 = vmatpush1.msra.mxu0 %v5564
        %6165 = vmatprep.subr.mxu0 0.0
        %6166 = vmatpush1.msra.mxu0 %v5565
        %6167 = vmatprep.subr.mxu0 0.0
        %6168 = vmatpush1.msra.mxu0 %v5566
        %6169 = vmatprep.subr.mxu0 0.0
        %6170 = vmatpush1.msra.mxu0 %v5567
        %6171 = vmatprep.subr.mxu0 0.0
        %6172 = vmatpush1.msra.mxu0 0.0
        %6173 = vmatprep.subr.mxu0 0.0
        %6174 = vmatpush1.msra.mxu0 0.0
        %6175 = vmatprep.subr.mxu0 0.0
        %6176 = vmatpush1.msra.mxu0 0.0
        %6177 = vmatprep.subr.mxu0 0.0
        %6178 = vmatpush1.msra.mxu0 0.0
        %6179 = vmatprep.subr.mxu0 0.0
        %6180 = vmatpush1.msra.mxu0 0.0
        %6181 = vmatprep.subr.mxu0 0.0
        %6182 = vmatpush1.msra.mxu0 0.0
        %6183 = vmatprep.subr.mxu0 0.0
        %6184 = vmatpush1.msra.mxu0 0.0
        %6185 = vmatprep.subr.mxu0 0.0
        %6186 = vmatpush1.msra.mxu0 0.0
        %6187 = vmatprep.subr.mxu0 0.0
        %6188 = vmatpush1.msra.mxu0 0.0
        %6189 = vmatprep.subr.mxu0 0.0
        %6190 = vmatpush1.msra.mxu0 0.0
        %6191 = vmatprep.subr.mxu0 0.0
        %6192 = vmatpush1.msra.mxu0 0.0
        %6193 = vmatprep.subr.mxu0 0.0
        %6194 = vmatpush1.msra.mxu0 0.0
        %6195 = vmatprep.subr.mxu0 0.0
        %6196 = vmatpush1.msra.mxu0 0.0
        %6197 = vmatprep.subr.mxu0 0.0
        %6198 = vmatpush1.msra.mxu0 0.0
        %6199 = vmatprep.subr.mxu0 0.0
        %6200 = vmatpush1.msra.mxu0 0.0
        %6201 = vmatprep.subr.mxu0 0.0
        %6202 = vmatpush1.msra.mxu0 0.0
        %6203 = vmatprep.mubr.f32.mxu0 0.0
        %6204 = vmatmul.mubr.f32.gmra.mrb[0].mxu0 %v6026
        %v6205 = vpop.f32.mrb[0].mxu0
        %v6206 = vadd.f32 %v6101, %v6205
        %v6207 = vpop.f32.mrb[0].mxu0
        %6208 = vmatprep.mubr.f32.mxu0 0.0
        %6209 = vmatmul.mubr.f32.gmra.mrb[0].mxu0 %v6027
        %v6210 = vpop.f32.mrb[0].mxu0
        %v6211 = vadd.f32 %v6106, %v6210
        %v6212 = vpop.f32.mrb[0].mxu0
        %6213 = vmatprep.mubr.f32.mxu0 0.0
        %6214 = vmatmul.mubr.f32.gmra.mrb[0].mxu0 %v6028
        %v6215 = vpop.f32.mrb[0].mxu0
        %v6216 = vadd.f32 %v6111, %v6215
        %v6217 = vpop.f32.mrb[0].mxu0
        %6218 = vmatprep.mubr.f32.mxu0 0.0
        %6219 = vmatmul.mubr.f32.gmra.mrb[0].mxu0 %v6029
        %v6220 = vpop.f32.mrb[0].mxu0
        %v6221 = vadd.f32 %v6116, %v6220
        %v6222 = vpop.f32.mrb[0].mxu0
        %6223 = vmatprep.mubr.f32.mxu0 0.0
        %6224 = vmatmul.mubr.f32.gmra.mrb[0].mxu0 %v6030
        %v6225 = vpop.f32.mrb[0].mxu0
        %v6226 = vadd.f32 %v6121, %v6225
        %v6227 = vpop.f32.mrb[0].mxu0
        %6228 = vmatprep.mubr.f32.mxu0 0.0
        %6229 = vmatmul.mubr.f32.gmra.mrb[0].mxu0 %v6031
        %v6230 = vpop.f32.mrb[0].mxu0
        %v6231 = vadd.f32 %v6126, %v6230
        %v6232 = vpop.f32.mrb[0].mxu0
        %6233 = vmatprep.mubr.f32.mxu0 0.0
        %6234 = vmatmul.mubr.f32.gmra.mrb[0].mxu0 %v6032
        %v6235 = vpop.f32.mrb[0].mxu0
        %v6236 = vadd.f32 %v6131, %v6235
        %v6237 = vpop.f32.mrb[0].mxu0
        %6238 = vmatprep.mubr.f32.mxu0 0.0
        %6239 = vmatmul.mubr.f32.gmra.mrb[0].mxu0 %v6033
        %v6240 = vpop.f32.mrb[0].mxu0
        %v6241 = vadd.f32 %v6136, %v6240
        %v6242 = vpop.f32.mrb[0].mxu0
        %6243 = vdwg.mxu0
        %v6245 = vlaneseq
        %v6246 = vshrl.u32 %v6245, 7
        %v6247 = vsub.s32 0, %v6246
        %v6248 = vrot.slane %v5586, %v6247
        %v6250 = vadd.f32 %v6206, %v6248
        %v6251 = vadd.f32 %v6211, %v6248
        %v6252 = vadd.f32 %v6216, %v6248
        %v6253 = vadd.f32 %v6221, %v6248
        %v6254 = vadd.f32 %v6226, %v6248
        %v6255 = vadd.f32 %v6231, %v6248
        %v6256 = vadd.f32 %v6236, %v6248
        %v6257 = vadd.f32 %v6241, %v6248
        %v6258 = vadd.f32 %v6250, %v5522
        %v6259 = vadd.f32 %v6251, %v5523
        %v6260 = vadd.f32 %v6252, %v5524
        %v6261 = vadd.f32 %v6253, %v5525
        %v6262 = vadd.f32 %v6254, %v5526
        %v6263 = vadd.f32 %v6255, %v5527
        %v6264 = vadd.f32 %v6256, %v5528
        %v6265 = vadd.f32 %v6257, %v5529
        %v6266 = vadd.f32 %v6258, %v501
        %v6267 = vadd.f32 %v6259, %v502
        %v6268 = vadd.f32 %v6260, %v503
        %v6269 = vadd.f32 %v6261, %v504
        %v6270 = vadd.f32 %v6262, %v505
        %v6271 = vadd.f32 %v6263, %v506
        %v6272 = vadd.f32 %v6264, %v507
        %v6273 = vadd.f32 %v6265, %v508
        %6274 = vst [vmem:[#allocation2 + $0x18] sm:$0xff] %v6266
        %6275 = vst [vmem:[#allocation2 + $0x20] sm:$0xff] %v6267
        %6276 = vst [vmem:[#allocation2 + $0x28] sm:$0xff] %v6268
        %6277 = vst [vmem:[#allocation2 + $0x30] sm:$0xff] %v6269
        %6278 = vst [vmem:[#allocation2 + $0x38] sm:$0xff] %v6270
        %6279 = vst [vmem:[#allocation2 + $0x40] sm:$0xff] %v6271
        %6280 = vst [vmem:[#allocation2 + $0x48] sm:$0xff] %v6272
        %6281 = vst [vmem:[#allocation2 + $0x50] sm:$0xff] %v6273
        %6282 = vst.msk [vmem:[#allocation2 + $0x7] sm:$0xff] %vm1464, 0.0
        %6283 = vst.msk [vmem:[#allocation2 + $0xf] sm:$0xff] %vm1464, 0.0
        %6284 = vst.msk [vmem:[#allocation2 + $0x17] sm:$0x1] %vm1467, 0.0
        %6288 = vrot.lane.b32.xlu0 %v6271, 32
        %v6289 = vpop.permute.xlu0 %6288
        %6290 = vrot.lane.b32.xlu0 %v6272, 32
        %v6291 = vpop.permute.xlu0 %6290
        %6292 = vrot.lane.b32.xlu0 %v6273, 32
        %v6293 = vpop.permute.xlu0 %6292
        %6297 = vst.msk [vmem:[#allocation2] sm:$0x80] %vm1481, %v6289
        %6298 = vst.msk [vmem:[#allocation2 + $0x8] sm:$0xff] %vm1483, %v6291
        %6299 = vst.msk [vmem:[#allocation2 + $0x10] sm:$0xff] %vm1483, %v6293
        %6300 = vst.msk [vmem:[#allocation2 + $0x58] sm:$0xff] %vm1486, 0.0
        %6301 = vst.msk [vmem:[#allocation2 + $0x60] sm:$0xff] %vm1486, 0.0
        %6302 = vst.msk [vmem:[#allocation2 + $0x68] sm:$0x1] %vm1489, 0.0
        %6306 = vrot.lane.b32.xlu0 %v6266, 96
        %v6307 = vpop.permute.xlu0 %6306
        %6308 = vrot.lane.b32.xlu0 %v6267, 96
        %v6309 = vpop.permute.xlu0 %6308
        %6310 = vrot.lane.b32.xlu0 %v6268, 96
        %v6311 = vpop.permute.xlu0 %6310
        %6315 = vst.msk [vmem:[#allocation2 + $0x58] sm:$0xff] %vm1503, %v6307
        %6316 = vst.msk [vmem:[#allocation2 + $0x60] sm:$0xff] %vm1503, %v6309
        %6317 = vst.msk [vmem:[#allocation2 + $0x68] sm:$0x1] %vm1506, %v6311
        %v6318 = vld [vmem:[#allocation2 + $0x7] sm:$0xff]
        %v6319 = vld [vmem:[#allocation2 + $0xf] sm:$0xff]
        %v6320 = vld [vmem:[#allocation2 + $0x17] sm:$0xff]
        %v6321 = vld [vmem:[#allocation2 + $0x1f] sm:$0xff]
        %v6322 = vld [vmem:[#allocation2 + $0x27] sm:$0xff]
        %v6323 = vld [vmem:[#allocation2 + $0x2f] sm:$0xff]
        %v6324 = vld [vmem:[#allocation2 + $0x37] sm:$0xff]
        %v6325 = vld [vmem:[#allocation2 + $0x3f] sm:$0xff]
        %v6326 = vmul.f32 %v6318, %v670
        %v6327 = vmul.f32 %v6319, %v671
        %v6328 = vmul.f32 %v6320, %v672
        %v6329 = vmul.f32 %v6321, %v673
        %v6330 = vmul.f32 %v6322, %v674
        %v6331 = vmul.f32 %v6323, %v675
        %v6332 = vmul.f32 %v6324, %v676
        %v6333 = vmul.f32 %v6325, %v677
        %v6334 = vld [vmem:[#allocation2 + $0x8] sm:$0xff]
        %v6335 = vld [vmem:[#allocation2 + $0x10] sm:$0xff]
        %v6336 = vld [vmem:[#allocation2 + $0x18] sm:$0xff]
        %v6337 = vld [vmem:[#allocation2 + $0x20] sm:$0xff]
        %v6338 = vld [vmem:[#allocation2 + $0x28] sm:$0xff]
        %v6339 = vld [vmem:[#allocation2 + $0x30] sm:$0xff]
        %v6340 = vld [vmem:[#allocation2 + $0x38] sm:$0xff]
        %v6341 = vld [vmem:[#allocation2 + $0x40] sm:$0xff]
        %v6342 = vld [vmem:[#allocation2 + $0x9] sm:$0xff]
        %v6343 = vld [vmem:[#allocation2 + $0x11] sm:$0xff]
        %v6344 = vld [vmem:[#allocation2 + $0x19] sm:$0xff]
        %v6345 = vld [vmem:[#allocation2 + $0x21] sm:$0xff]
        %v6346 = vld [vmem:[#allocation2 + $0x29] sm:$0xff]
        %v6347 = vld [vmem:[#allocation2 + $0x31] sm:$0xff]
        %v6348 = vld [vmem:[#allocation2 + $0x39] sm:$0xff]
        %v6349 = vld [vmem:[#allocation2 + $0x41] sm:$0xff]
        %v6350 = vmul.f32 %v6342, %v718
        %v6351 = vmul.f32 %v6343, %v719
        %v6352 = vmul.f32 %v6344, %v720
        %v6353 = vmul.f32 %v6345, %v721
        %v6354 = vmul.f32 %v6346, %v722
        %v6355 = vmul.f32 %v6347, %v723
        %v6356 = vmul.f32 %v6348, %v724
        %v6357 = vmul.f32 %v6349, %v725
        %v6358 = vld [vmem:[#allocation2 + $0x47] sm:$0xff]
        %v6359 = vld [vmem:[#allocation2 + $0x4f] sm:$0xff]
        %v6360 = vmul.f32 %v6320, %v670
        %v6361 = vmul.f32 %v6321, %v671
        %v6362 = vmul.f32 %v6322, %v672
        %v6363 = vmul.f32 %v6323, %v673
        %v6364 = vmul.f32 %v6324, %v674
        %v6365 = vmul.f32 %v6325, %v675
        %v6366 = vmul.f32 %v6358, %v676
        %v6367 = vmul.f32 %v6359, %v677
        %v6368 = vld [vmem:[#allocation2 + $0x48] sm:$0xff]
        %v6369 = vld [vmem:[#allocation2 + $0x50] sm:$0xff]
        %v6370 = vld [vmem:[#allocation2 + $0x49] sm:$0xff]
        %v6371 = vld [vmem:[#allocation2 + $0x51] sm:$0xff]
        %v6372 = vmul.f32 %v6344, %v718
        %v6373 = vmul.f32 %v6345, %v719
        %v6374 = vmul.f32 %v6346, %v720
        %v6375 = vmul.f32 %v6347, %v721
        %v6376 = vmul.f32 %v6348, %v722
        %v6377 = vmul.f32 %v6349, %v723
        %v6378 = vmul.f32 %v6370, %v724
        %v6379 = vmul.f32 %v6371, %v725
        %v6380 = vld [vmem:[#allocation2 + $0x57] sm:$0xff]
        %v6381 = vld [vmem:[#allocation2 + $0x5f] sm:$0xff]
        %v6382 = vmul.f32 %v6322, %v670
        %v6383 = vmul.f32 %v6323, %v671
        %v6384 = vmul.f32 %v6324, %v672
        %v6385 = vmul.f32 %v6325, %v673
        %v6386 = vmul.f32 %v6358, %v674
        %v6387 = vmul.f32 %v6359, %v675
        %v6388 = vmul.f32 %v6380, %v676
        %v6389 = vmul.f32 %v6381, %v677
        %v6390 = vld [vmem:[#allocation2 + $0x58] sm:$0xff]
        %v6391 = vld [vmem:[#allocation2 + $0x60] sm:$0xff]
        %v6392 = vld [vmem:[#allocation2 + $0x59] sm:$0xff]
        %v6393 = vld [vmem:[#allocation2 + $0x61] sm:$0xff]
        %v6394 = vmul.f32 %v6346, %v718
        %v6395 = vmul.f32 %v6347, %v719
        %v6396 = vmul.f32 %v6348, %v720
        %v6397 = vmul.f32 %v6349, %v721
        %v6398 = vmul.f32 %v6370, %v722
        %v6399 = vmul.f32 %v6371, %v723
        %v6400 = vmul.f32 %v6392, %v724
        %v6401 = vmul.f32 %v6393, %v725
        %v6402 = vld [vmem:[%s10] sm:$0xff]
        %v6403 = vld [vmem:[%s10 + $0x8] sm:$0xff]
        %v6404 = vld [vmem:[%s10 + $0x10] sm:$0xff]
        %v6405 = vld [vmem:[%s10 + $0x18] sm:$0xff]
        %v6406 = vld [vmem:[%s10 + $0x20] sm:$0xff]
        %v6407 = vld [vmem:[%s10 + $0x28] sm:$0xff]
        %v6408 = vld [vmem:[%s10 + $0x30] sm:$0xff]
        %v6409 = vld [vmem:[%s10 + $0x38] sm:$0xff]
        %v6410 = vld [vmem:[%s10 + $0x40] sm:$0xff]
        %v6411 = vld [vmem:[%s10 + $0x48] sm:$0xff]
        %v6412 = vld [vmem:[%s10 + $0x50] sm:$0xff]
        %v6413 = vld [vmem:[%s10 + $0x58] sm:$0xff]
        %v6414 = vld [vmem:[%s10 + $0x60] sm:$0xff]
        %v6415 = vld [vmem:[%s10 + $0x68] sm:$0xff]
        %v6416 = vld [vmem:[%s10 + $0x70] sm:$0xff]
        %v6417 = vld [vmem:[%s10 + $0x78] sm:$0xff]
        %v6418 = vld [vmem:[%s10 + $0x80] sm:$0xff]
        %v6419 = vld [vmem:[%s10 + $0x88] sm:$0xff]
        %v6420 = vld [vmem:[%s10 + $0x90] sm:$0xff]
        %v6421 = vld [vmem:[%s10 + $0x98] sm:$0xff]
        %v6422 = vld [vmem:[%s10 + $0xa0] sm:$0xff]
        %v6423 = vld [vmem:[%s10 + $0xa8] sm:$0xff]
        %v6424 = vld [vmem:[%s10 + $0xb0] sm:$0xff]
        %v6425 = vld [vmem:[%s10 + $0xb8] sm:$0xff]
        %v6426 = vld [vmem:[%s10 + $0xc0] sm:$0xff]
        %v6427 = vld [vmem:[%s10 + $0xc8] sm:$0xff]
        %v6428 = vld [vmem:[%s10 + $0xd0] sm:$0xff]
        %v6429 = vld [vmem:[%s10 + $0xd8] sm:$0xff]
        %v6430 = vld [vmem:[%s10 + $0xe0] sm:$0xff]
        %v6431 = vld [vmem:[%s10 + $0xe8] sm:$0xff]
        %v6432 = vld [vmem:[%s10 + $0xf0] sm:$0xff]
        %v6433 = vld [vmem:[%s10 + $0xf8] sm:$0xff]
        %s6434 = scalar_lea.vmem %s10, 256
        %v6435 = vld [vmem:[%s6434] sm:$0xff]
        %v6436 = vld [vmem:[%s6434 + $0x8] sm:$0xff]
        %v6437 = vld [vmem:[%s6434 + $0x10] sm:$0xff]
        %v6438 = vld [vmem:[%s6434 + $0x18] sm:$0xff]
        %v6439 = vld [vmem:[%s6434 + $0x20] sm:$0xff]
        %v6440 = vld [vmem:[%s6434 + $0x28] sm:$0xff]
        %v6441 = vld [vmem:[%s6434 + $0x30] sm:$0xff]
        %v6442 = vld [vmem:[%s6434 + $0x38] sm:$0xff]
        %v6443 = vld [vmem:[%s6434 + $0x40] sm:$0xff]
        %v6444 = vld [vmem:[%s6434 + $0x48] sm:$0xff]
        %v6445 = vld [vmem:[%s6434 + $0x50] sm:$0xff]
        %v6446 = vld [vmem:[%s6434 + $0x58] sm:$0xff]
        %v6447 = vld [vmem:[%s6434 + $0x60] sm:$0xff]
        %v6448 = vld [vmem:[%s6434 + $0x68] sm:$0xff]
        %v6449 = vld [vmem:[%s6434 + $0x70] sm:$0xff]
        %v6450 = vld [vmem:[%s6434 + $0x78] sm:$0xff]
        %v6451 = vld [vmem:[%s6434 + $0x80] sm:$0xff]
        %v6452 = vld [vmem:[%s6434 + $0x88] sm:$0xff]
        %v6453 = vld [vmem:[%s6434 + $0x90] sm:$0xff]
        %v6454 = vld [vmem:[%s6434 + $0x98] sm:$0xff]
        %v6455 = vld [vmem:[%s6434 + $0xa0] sm:$0xff]
        %v6456 = vld [vmem:[%s6434 + $0xa8] sm:$0xff]
        %v6457 = vld [vmem:[%s6434 + $0xb0] sm:$0xff]
        %v6458 = vld [vmem:[%s6434 + $0xb8] sm:$0xff]
        %v6459 = vld [vmem:[%s6434 + $0xc0] sm:$0xff]
        %v6460 = vld [vmem:[%s6434 + $0xc8] sm:$0xff]
        %v6461 = vld [vmem:[%s6434 + $0xd0] sm:$0xff]
        %v6462 = vld [vmem:[%s6434 + $0xd8] sm:$0xff]
        %v6463 = vld [vmem:[%s6434 + $0xe0] sm:$0xff]
        %v6464 = vld [vmem:[%s6434 + $0xe8] sm:$0xff]
        %v6465 = vld [vmem:[%s6434 + $0xf0] sm:$0xff]
        %v6466 = vld [vmem:[%s6434 + $0xf8] sm:$0xff]
        %6467 = vmatprep.subr.mxu0 %v6436
        %6468 = vmatpush1.msra.mxu0 %v6435
        %6469 = vmatprep.subr.mxu0 %v6438
        %6470 = vmatpush1.msra.mxu0 %v6437
        %6471 = vmatprep.subr.mxu0 %v6440
        %6472 = vmatpush1.msra.mxu0 %v6439
        %6473 = vmatprep.subr.mxu0 %v6442
        %6474 = vmatpush1.msra.mxu0 %v6441
        %6475 = vmatprep.subr.mxu0 %v6444
        %6476 = vmatpush1.msra.mxu0 %v6443
        %6477 = vmatprep.subr.mxu0 %v6446
        %6478 = vmatpush1.msra.mxu0 %v6445
        %6479 = vmatprep.subr.mxu0 %v6448
        %6480 = vmatpush1.msra.mxu0 %v6447
        %6481 = vmatprep.subr.mxu0 %v6450
        %6482 = vmatpush1.msra.mxu0 %v6449
        %6483 = vmatprep.subr.mxu0 %v6452
        %6484 = vmatpush1.msra.mxu0 %v6451
        %6485 = vmatprep.subr.mxu0 %v6454
        %6486 = vmatpush1.msra.mxu0 %v6453
        %6487 = vmatprep.subr.mxu0 %v6456
        %6488 = vmatpush1.msra.mxu0 %v6455
        %6489 = vmatprep.subr.mxu0 %v6458
        %6490 = vmatpush1.msra.mxu0 %v6457
        %6491 = vmatprep.subr.mxu0 %v6460
        %6492 = vmatpush1.msra.mxu0 %v6459
        %6493 = vmatprep.subr.mxu0 %v6462
        %6494 = vmatpush1.msra.mxu0 %v6461
        %6495 = vmatprep.subr.mxu0 %v6464
        %6496 = vmatpush1.msra.mxu0 %v6463
        %6497 = vmatprep.subr.mxu0 %v6466
        %6498 = vmatpush1.msra.mxu0 %v6465
        %6499 = vmatprep.subr.mxu0 0.0
        %6500 = vmatpush1.msra.mxu0 0.0
        %6501 = vmatprep.subr.mxu0 0.0
        %6502 = vmatpush1.msra.mxu0 0.0
        %6503 = vmatprep.subr.mxu0 0.0
        %6504 = vmatpush1.msra.mxu0 0.0
        %6505 = vmatprep.subr.mxu0 0.0
        %6506 = vmatpush1.msra.mxu0 0.0
        %6507 = vmatprep.subr.mxu0 0.0
        %6508 = vmatpush1.msra.mxu0 0.0
        %6509 = vmatprep.subr.mxu0 0.0
        %6510 = vmatpush1.msra.mxu0 0.0
        %6511 = vmatprep.subr.mxu0 0.0
        %6512 = vmatpush1.msra.mxu0 0.0
        %6513 = vmatprep.subr.mxu0 0.0
        %6514 = vmatpush1.msra.mxu0 0.0
        %6515 = vmatprep.subr.mxu0 0.0
        %6516 = vmatpush1.msra.mxu0 0.0
        %6517 = vmatprep.subr.mxu0 0.0
        %6518 = vmatpush1.msra.mxu0 0.0
        %6519 = vmatprep.subr.mxu0 0.0
        %6520 = vmatpush1.msra.mxu0 0.0
        %6521 = vmatprep.subr.mxu0 0.0
        %6522 = vmatpush1.msra.mxu0 0.0
        %6523 = vmatprep.subr.mxu0 0.0
        %6524 = vmatpush1.msra.mxu0 0.0
        %6525 = vmatprep.subr.mxu0 0.0
        %6526 = vmatpush1.msra.mxu0 0.0
        %6527 = vmatprep.subr.mxu0 0.0
        %6528 = vmatpush1.msra.mxu0 0.0
        %6529 = vmatprep.subr.mxu0 0.0
        %6530 = vmatpush1.msra.mxu0 0.0
        %6531 = vmatprep.mubr.f32.mxu0 0.0
        %6532 = vmatmul.mubr.f32.gmra.mrb[0].mxu0 %v6334
        %v6533 = vpop.f32.mrb[0].mxu0
        %v6534 = vadd.f32 0.0, %v6533
        %v6535 = vpop.f32.mrb[0].mxu0
        %v6536 = vadd.f32 0.0, %v6535
        %6537 = vmatprep.mubr.f32.mxu0 0.0
        %6538 = vmatmul.mubr.f32.gmra.mrb[0].mxu0 %v6335
        %v6539 = vpop.f32.mrb[0].mxu0
        %v6540 = vadd.f32 0.0, %v6539
        %v6541 = vpop.f32.mrb[0].mxu0
        %v6542 = vadd.f32 0.0, %v6541
        %6543 = vmatprep.mubr.f32.mxu0 0.0
        %6544 = vmatmul.mubr.f32.gmra.mrb[0].mxu0 %v6336
        %v6545 = vpop.f32.mrb[0].mxu0
        %v6546 = vadd.f32 0.0, %v6545
        %v6547 = vpop.f32.mrb[0].mxu0
        %v6548 = vadd.f32 0.0, %v6547
        %6549 = vmatprep.mubr.f32.mxu0 0.0
        %6550 = vmatmul.mubr.f32.gmra.mrb[0].mxu0 %v6337
        %v6551 = vpop.f32.mrb[0].mxu0
        %v6552 = vadd.f32 0.0, %v6551
        %v6553 = vpop.f32.mrb[0].mxu0
        %v6554 = vadd.f32 0.0, %v6553
        %6555 = vmatprep.mubr.f32.mxu0 0.0
        %6556 = vmatmul.mubr.f32.gmra.mrb[0].mxu0 %v6338
        %v6557 = vpop.f32.mrb[0].mxu0
        %v6558 = vadd.f32 0.0, %v6557
        %v6559 = vpop.f32.mrb[0].mxu0
        %v6560 = vadd.f32 0.0, %v6559
        %6561 = vmatprep.mubr.f32.mxu0 0.0
        %6562 = vmatmul.mubr.f32.gmra.mrb[0].mxu0 %v6339
        %v6563 = vpop.f32.mrb[0].mxu0
        %v6564 = vadd.f32 0.0, %v6563
        %v6565 = vpop.f32.mrb[0].mxu0
        %v6566 = vadd.f32 0.0, %v6565
        %6567 = vmatprep.mubr.f32.mxu0 0.0
        %6568 = vmatmul.mubr.f32.gmra.mrb[0].mxu0 %v6340
        %v6569 = vpop.f32.mrb[0].mxu0
        %v6570 = vadd.f32 0.0, %v6569
        %v6571 = vpop.f32.mrb[0].mxu0
        %v6572 = vadd.f32 0.0, %v6571
        %6573 = vmatprep.mubr.f32.mxu0 0.0
        %6574 = vmatmul.mubr.f32.gmra.mrb[0].mxu0 %v6341
        %v6575 = vpop.f32.mrb[0].mxu0
        %v6576 = vadd.f32 0.0, %v6575
        %v6577 = vpop.f32.mrb[0].mxu0
        %v6578 = vadd.f32 0.0, %v6577
        %6579 = vdwg.mxu0
        %6580 = vmatprep.subr.mxu0 %v6403
        %6581 = vmatpush1.msra.mxu0 %v6402
        %6582 = vmatprep.subr.mxu0 %v6405
        %6583 = vmatpush1.msra.mxu0 %v6404
        %6584 = vmatprep.subr.mxu0 %v6407
        %6585 = vmatpush1.msra.mxu0 %v6406
        %6586 = vmatprep.subr.mxu0 %v6409
        %6587 = vmatpush1.msra.mxu0 %v6408
        %6588 = vmatprep.subr.mxu0 %v6411
        %6589 = vmatpush1.msra.mxu0 %v6410
        %6590 = vmatprep.subr.mxu0 %v6413
        %6591 = vmatpush1.msra.mxu0 %v6412
        %6592 = vmatprep.subr.mxu0 %v6415
        %6593 = vmatpush1.msra.mxu0 %v6414
        %6594 = vmatprep.subr.mxu0 %v6417
        %6595 = vmatpush1.msra.mxu0 %v6416
        %6596 = vmatprep.subr.mxu0 %v6419
        %6597 = vmatpush1.msra.mxu0 %v6418
        %6598 = vmatprep.subr.mxu0 %v6421
        %6599 = vmatpush1.msra.mxu0 %v6420
        %6600 = vmatprep.subr.mxu0 %v6423
        %6601 = vmatpush1.msra.mxu0 %v6422
        %6602 = vmatprep.subr.mxu0 %v6425
        %6603 = vmatpush1.msra.mxu0 %v6424
        %6604 = vmatprep.subr.mxu0 %v6427
        %6605 = vmatpush1.msra.mxu0 %v6426
        %6606 = vmatprep.subr.mxu0 %v6429
        %6607 = vmatpush1.msra.mxu0 %v6428
        %6608 = vmatprep.subr.mxu0 %v6431
        %6609 = vmatpush1.msra.mxu0 %v6430
        %6610 = vmatprep.subr.mxu0 %v6433
        %6611 = vmatpush1.msra.mxu0 %v6432
        %6612 = vmatprep.subr.mxu0 0.0
        %6613 = vmatpush1.msra.mxu0 0.0
        %6614 = vmatprep.subr.mxu0 0.0
        %6615 = vmatpush1.msra.mxu0 0.0
        %6616 = vmatprep.subr.mxu0 0.0
        %6617 = vmatpush1.msra.mxu0 0.0
        %6618 = vmatprep.subr.mxu0 0.0
        %6619 = vmatpush1.msra.mxu0 0.0
        %6620 = vmatprep.subr.mxu0 0.0
        %6621 = vmatpush1.msra.mxu0 0.0
        %6622 = vmatprep.subr.mxu0 0.0
        %6623 = vmatpush1.msra.mxu0 0.0
        %6624 = vmatprep.subr.mxu0 0.0
        %6625 = vmatpush1.msra.mxu0 0.0
        %6626 = vmatprep.subr.mxu0 0.0
        %6627 = vmatpush1.msra.mxu0 0.0
        %6628 = vmatprep.subr.mxu0 0.0
        %6629 = vmatpush1.msra.mxu0 0.0
        %6630 = vmatprep.subr.mxu0 0.0
        %6631 = vmatpush1.msra.mxu0 0.0
        %6632 = vmatprep.subr.mxu0 0.0
        %6633 = vmatpush1.msra.mxu0 0.0
        %6634 = vmatprep.subr.mxu0 0.0
        %6635 = vmatpush1.msra.mxu0 0.0
        %6636 = vmatprep.subr.mxu0 0.0
        %6637 = vmatpush1.msra.mxu0 0.0
        %6638 = vmatprep.subr.mxu0 0.0
        %6639 = vmatpush1.msra.mxu0 0.0
        %6640 = vmatprep.subr.mxu0 0.0
        %6641 = vmatpush1.msra.mxu0 0.0
        %6642 = vmatprep.subr.mxu0 0.0
        %6643 = vmatpush1.msra.mxu0 0.0
        %6644 = vmatprep.mubr.f32.mxu0 0.0
        %6645 = vmatmul.mubr.f32.gmra.mrb[0].mxu0 %v6326
        %v6646 = vpop.f32.mrb[0].mxu0
        %v6647 = vadd.f32 %v6534, %v6646
        %v6648 = vpop.f32.mrb[0].mxu0
        %v6649 = vadd.f32 %v6536, %v6648
        %6650 = vmatprep.mubr.f32.mxu0 0.0
        %6651 = vmatmul.mubr.f32.gmra.mrb[0].mxu0 %v6327
        %v6652 = vpop.f32.mrb[0].mxu0
        %v6653 = vadd.f32 %v6540, %v6652
        %v6654 = vpop.f32.mrb[0].mxu0
        %v6655 = vadd.f32 %v6542, %v6654
        %6656 = vmatprep.mubr.f32.mxu0 0.0
        %6657 = vmatmul.mubr.f32.gmra.mrb[0].mxu0 %v6328
        %v6658 = vpop.f32.mrb[0].mxu0
        %v6659 = vadd.f32 %v6546, %v6658
        %v6660 = vpop.f32.mrb[0].mxu0
        %v6661 = vadd.f32 %v6548, %v6660
        %6662 = vmatprep.mubr.f32.mxu0 0.0
        %6663 = vmatmul.mubr.f32.gmra.mrb[0].mxu0 %v6329
        %v6664 = vpop.f32.mrb[0].mxu0
        %v6665 = vadd.f32 %v6552, %v6664
        %v6666 = vpop.f32.mrb[0].mxu0
        %v6667 = vadd.f32 %v6554, %v6666
        %6668 = vmatprep.mubr.f32.mxu0 0.0
        %6669 = vmatmul.mubr.f32.gmra.mrb[0].mxu0 %v6330
        %v6670 = vpop.f32.mrb[0].mxu0
        %v6671 = vadd.f32 %v6558, %v6670
        %v6672 = vpop.f32.mrb[0].mxu0
        %v6673 = vadd.f32 %v6560, %v6672
        %6674 = vmatprep.mubr.f32.mxu0 0.0
        %6675 = vmatmul.mubr.f32.gmra.mrb[0].mxu0 %v6331
        %v6676 = vpop.f32.mrb[0].mxu0
        %v6677 = vadd.f32 %v6564, %v6676
        %v6678 = vpop.f32.mrb[0].mxu0
        %v6679 = vadd.f32 %v6566, %v6678
        %6680 = vmatprep.mubr.f32.mxu0 0.0
        %6681 = vmatmul.mubr.f32.gmra.mrb[0].mxu0 %v6332
        %v6682 = vpop.f32.mrb[0].mxu0
        %v6683 = vadd.f32 %v6570, %v6682
        %v6684 = vpop.f32.mrb[0].mxu0
        %v6685 = vadd.f32 %v6572, %v6684
        %6686 = vmatprep.mubr.f32.mxu0 0.0
        %6687 = vmatmul.mubr.f32.gmra.mrb[0].mxu0 %v6333
        %v6688 = vpop.f32.mrb[0].mxu0
        %v6689 = vadd.f32 %v6576, %v6688
        %v6690 = vpop.f32.mrb[0].mxu0
        %v6691 = vadd.f32 %v6578, %v6690
        %6692 = vdwg.mxu0
        %s6693 = scalar_lea.vmem %s10, 512
        %v6694 = vld [vmem:[%s6693] sm:$0xff]
        %v6695 = vld [vmem:[%s6693 + $0x8] sm:$0xff]
        %v6696 = vld [vmem:[%s6693 + $0x10] sm:$0xff]
        %v6697 = vld [vmem:[%s6693 + $0x18] sm:$0xff]
        %v6698 = vld [vmem:[%s6693 + $0x20] sm:$0xff]
        %v6699 = vld [vmem:[%s6693 + $0x28] sm:$0xff]
        %v6700 = vld [vmem:[%s6693 + $0x30] sm:$0xff]
        %v6701 = vld [vmem:[%s6693 + $0x38] sm:$0xff]
        %v6702 = vld [vmem:[%s6693 + $0x40] sm:$0xff]
        %v6703 = vld [vmem:[%s6693 + $0x48] sm:$0xff]
        %v6704 = vld [vmem:[%s6693 + $0x50] sm:$0xff]
        %v6705 = vld [vmem:[%s6693 + $0x58] sm:$0xff]
        %v6706 = vld [vmem:[%s6693 + $0x60] sm:$0xff]
        %v6707 = vld [vmem:[%s6693 + $0x68] sm:$0xff]
        %v6708 = vld [vmem:[%s6693 + $0x70] sm:$0xff]
        %v6709 = vld [vmem:[%s6693 + $0x78] sm:$0xff]
        %v6710 = vld [vmem:[%s6693 + $0x80] sm:$0xff]
        %v6711 = vld [vmem:[%s6693 + $0x88] sm:$0xff]
        %v6712 = vld [vmem:[%s6693 + $0x90] sm:$0xff]
        %v6713 = vld [vmem:[%s6693 + $0x98] sm:$0xff]
        %v6714 = vld [vmem:[%s6693 + $0xa0] sm:$0xff]
        %v6715 = vld [vmem:[%s6693 + $0xa8] sm:$0xff]
        %v6716 = vld [vmem:[%s6693 + $0xb0] sm:$0xff]
        %v6717 = vld [vmem:[%s6693 + $0xb8] sm:$0xff]
        %v6718 = vld [vmem:[%s6693 + $0xc0] sm:$0xff]
        %v6719 = vld [vmem:[%s6693 + $0xc8] sm:$0xff]
        %v6720 = vld [vmem:[%s6693 + $0xd0] sm:$0xff]
        %v6721 = vld [vmem:[%s6693 + $0xd8] sm:$0xff]
        %v6722 = vld [vmem:[%s6693 + $0xe0] sm:$0xff]
        %v6723 = vld [vmem:[%s6693 + $0xe8] sm:$0xff]
        %v6724 = vld [vmem:[%s6693 + $0xf0] sm:$0xff]
        %v6725 = vld [vmem:[%s6693 + $0xf8] sm:$0xff]
        %6726 = vmatprep.subr.mxu0 %v6695
        %6727 = vmatpush1.msra.mxu0 %v6694
        %6728 = vmatprep.subr.mxu0 %v6697
        %6729 = vmatpush1.msra.mxu0 %v6696
        %6730 = vmatprep.subr.mxu0 %v6699
        %6731 = vmatpush1.msra.mxu0 %v6698
        %6732 = vmatprep.subr.mxu0 %v6701
        %6733 = vmatpush1.msra.mxu0 %v6700
        %6734 = vmatprep.subr.mxu0 %v6703
        %6735 = vmatpush1.msra.mxu0 %v6702
        %6736 = vmatprep.subr.mxu0 %v6705
        %6737 = vmatpush1.msra.mxu0 %v6704
        %6738 = vmatprep.subr.mxu0 %v6707
        %6739 = vmatpush1.msra.mxu0 %v6706
        %6740 = vmatprep.subr.mxu0 %v6709
        %6741 = vmatpush1.msra.mxu0 %v6708
        %6742 = vmatprep.subr.mxu0 %v6711
        %6743 = vmatpush1.msra.mxu0 %v6710
        %6744 = vmatprep.subr.mxu0 %v6713
        %6745 = vmatpush1.msra.mxu0 %v6712
        %6746 = vmatprep.subr.mxu0 %v6715
        %6747 = vmatpush1.msra.mxu0 %v6714
        %6748 = vmatprep.subr.mxu0 %v6717
        %6749 = vmatpush1.msra.mxu0 %v6716
        %6750 = vmatprep.subr.mxu0 %v6719
        %6751 = vmatpush1.msra.mxu0 %v6718
        %6752 = vmatprep.subr.mxu0 %v6721
        %6753 = vmatpush1.msra.mxu0 %v6720
        %6754 = vmatprep.subr.mxu0 %v6723
        %6755 = vmatpush1.msra.mxu0 %v6722
        %6756 = vmatprep.subr.mxu0 %v6725
        %6757 = vmatpush1.msra.mxu0 %v6724
        %6758 = vmatprep.subr.mxu0 0.0
        %6759 = vmatpush1.msra.mxu0 0.0
        %6760 = vmatprep.subr.mxu0 0.0
        %6761 = vmatpush1.msra.mxu0 0.0
        %6762 = vmatprep.subr.mxu0 0.0
        %6763 = vmatpush1.msra.mxu0 0.0
        %6764 = vmatprep.subr.mxu0 0.0
        %6765 = vmatpush1.msra.mxu0 0.0
        %6766 = vmatprep.subr.mxu0 0.0
        %6767 = vmatpush1.msra.mxu0 0.0
        %6768 = vmatprep.subr.mxu0 0.0
        %6769 = vmatpush1.msra.mxu0 0.0
        %6770 = vmatprep.subr.mxu0 0.0
        %6771 = vmatpush1.msra.mxu0 0.0
        %6772 = vmatprep.subr.mxu0 0.0
        %6773 = vmatpush1.msra.mxu0 0.0
        %6774 = vmatprep.subr.mxu0 0.0
        %6775 = vmatpush1.msra.mxu0 0.0
        %6776 = vmatprep.subr.mxu0 0.0
        %6777 = vmatpush1.msra.mxu0 0.0
        %6778 = vmatprep.subr.mxu0 0.0
        %6779 = vmatpush1.msra.mxu0 0.0
        %6780 = vmatprep.subr.mxu0 0.0
        %6781 = vmatpush1.msra.mxu0 0.0
        %6782 = vmatprep.subr.mxu0 0.0
        %6783 = vmatpush1.msra.mxu0 0.0
        %6784 = vmatprep.subr.mxu0 0.0
        %6785 = vmatpush1.msra.mxu0 0.0
        %6786 = vmatprep.subr.mxu0 0.0
        %6787 = vmatpush1.msra.mxu0 0.0
        %6788 = vmatprep.subr.mxu0 0.0
        %6789 = vmatpush1.msra.mxu0 0.0
        %6790 = vmatprep.mubr.f32.mxu0 0.0
        %6791 = vmatmul.mubr.f32.gmra.mrb[0].mxu0 %v6350
        %v6792 = vpop.f32.mrb[0].mxu0
        %v6793 = vadd.f32 0.0, %v6792
        %v6794 = vpop.f32.mrb[0].mxu0
        %v6795 = vadd.f32 0.0, %v6794
        %6796 = vmatprep.mubr.f32.mxu0 0.0
        %6797 = vmatmul.mubr.f32.gmra.mrb[0].mxu0 %v6351
        %v6798 = vpop.f32.mrb[0].mxu0
        %v6799 = vadd.f32 0.0, %v6798
        %v6800 = vpop.f32.mrb[0].mxu0
        %v6801 = vadd.f32 0.0, %v6800
        %6802 = vmatprep.mubr.f32.mxu0 0.0
        %6803 = vmatmul.mubr.f32.gmra.mrb[0].mxu0 %v6352
        %v6804 = vpop.f32.mrb[0].mxu0
        %v6805 = vadd.f32 0.0, %v6804
        %v6806 = vpop.f32.mrb[0].mxu0
        %v6807 = vadd.f32 0.0, %v6806
        %6808 = vmatprep.mubr.f32.mxu0 0.0
        %6809 = vmatmul.mubr.f32.gmra.mrb[0].mxu0 %v6353
        %v6810 = vpop.f32.mrb[0].mxu0
        %v6811 = vadd.f32 0.0, %v6810
        %v6812 = vpop.f32.mrb[0].mxu0
        %v6813 = vadd.f32 0.0, %v6812
        %6814 = vmatprep.mubr.f32.mxu0 0.0
        %6815 = vmatmul.mubr.f32.gmra.mrb[0].mxu0 %v6354
        %v6816 = vpop.f32.mrb[0].mxu0
        %v6817 = vadd.f32 0.0, %v6816
        %v6818 = vpop.f32.mrb[0].mxu0
        %v6819 = vadd.f32 0.0, %v6818
        %6820 = vmatprep.mubr.f32.mxu0 0.0
        %6821 = vmatmul.mubr.f32.gmra.mrb[0].mxu0 %v6355
        %v6822 = vpop.f32.mrb[0].mxu0
        %v6823 = vadd.f32 0.0, %v6822
        %v6824 = vpop.f32.mrb[0].mxu0
        %v6825 = vadd.f32 0.0, %v6824
        %6826 = vmatprep.mubr.f32.mxu0 0.0
        %6827 = vmatmul.mubr.f32.gmra.mrb[0].mxu0 %v6356
        %v6828 = vpop.f32.mrb[0].mxu0
        %v6829 = vadd.f32 0.0, %v6828
        %v6830 = vpop.f32.mrb[0].mxu0
        %v6831 = vadd.f32 0.0, %v6830
        %6832 = vmatprep.mubr.f32.mxu0 0.0
        %6833 = vmatmul.mubr.f32.gmra.mrb[0].mxu0 %v6357
        %v6834 = vpop.f32.mrb[0].mxu0
        %v6835 = vadd.f32 0.0, %v6834
        %v6836 = vpop.f32.mrb[0].mxu0
        %v6837 = vadd.f32 0.0, %v6836
        %6838 = vdwg.mxu0
        %v6839 = vadd.f32 %v6647, %v6793
        %v6840 = vadd.f32 %v6649, %v6795
        %v6841 = vadd.f32 %v6653, %v6799
        %v6842 = vadd.f32 %v6655, %v6801
        %v6843 = vadd.f32 %v6659, %v6805
        %v6844 = vadd.f32 %v6661, %v6807
        %v6845 = vadd.f32 %v6665, %v6811
        %v6846 = vadd.f32 %v6667, %v6813
        %v6847 = vadd.f32 %v6671, %v6817
        %v6848 = vadd.f32 %v6673, %v6819
        %v6849 = vadd.f32 %v6677, %v6823
        %v6850 = vadd.f32 %v6679, %v6825
        %v6851 = vadd.f32 %v6683, %v6829
        %v6852 = vadd.f32 %v6685, %v6831
        %v6853 = vadd.f32 %v6689, %v6835
        %v6854 = vadd.f32 %v6691, %v6837
        %s6855 = scalar_lea.vmem %s10, 768
        %v6856 = vld [vmem:[%s6855] sm:$0xff]
        %v6857 = vld [vmem:[%s6855 + $0x8] sm:$0xff]
        %v6858 = vld [vmem:[%s6855 + $0x10] sm:$0xff]
        %v6859 = vld [vmem:[%s6855 + $0x18] sm:$0xff]
        %v6860 = vld [vmem:[%s6855 + $0x20] sm:$0xff]
        %v6861 = vld [vmem:[%s6855 + $0x28] sm:$0xff]
        %v6862 = vld [vmem:[%s6855 + $0x30] sm:$0xff]
        %v6863 = vld [vmem:[%s6855 + $0x38] sm:$0xff]
        %v6864 = vld [vmem:[%s6855 + $0x40] sm:$0xff]
        %v6865 = vld [vmem:[%s6855 + $0x48] sm:$0xff]
        %v6866 = vld [vmem:[%s6855 + $0x50] sm:$0xff]
        %v6867 = vld [vmem:[%s6855 + $0x58] sm:$0xff]
        %v6868 = vld [vmem:[%s6855 + $0x60] sm:$0xff]
        %v6869 = vld [vmem:[%s6855 + $0x68] sm:$0xff]
        %v6870 = vld [vmem:[%s6855 + $0x70] sm:$0xff]
        %v6871 = vld [vmem:[%s6855 + $0x78] sm:$0xff]
        %v6872 = vld [vmem:[%s6855 + $0x80] sm:$0xff]
        %v6873 = vld [vmem:[%s6855 + $0x88] sm:$0xff]
        %v6874 = vld [vmem:[%s6855 + $0x90] sm:$0xff]
        %v6875 = vld [vmem:[%s6855 + $0x98] sm:$0xff]
        %v6876 = vld [vmem:[%s6855 + $0xa0] sm:$0xff]
        %v6877 = vld [vmem:[%s6855 + $0xa8] sm:$0xff]
        %v6878 = vld [vmem:[%s6855 + $0xb0] sm:$0xff]
        %v6879 = vld [vmem:[%s6855 + $0xb8] sm:$0xff]
        %v6880 = vld [vmem:[%s6855 + $0xc0] sm:$0xff]
        %v6881 = vld [vmem:[%s6855 + $0xc8] sm:$0xff]
        %v6882 = vld [vmem:[%s6855 + $0xd0] sm:$0xff]
        %v6883 = vld [vmem:[%s6855 + $0xd8] sm:$0xff]
        %v6884 = vld [vmem:[%s6855 + $0xe0] sm:$0xff]
        %v6885 = vld [vmem:[%s6855 + $0xe8] sm:$0xff]
        %v6886 = vld [vmem:[%s6855 + $0xf0] sm:$0xff]
        %v6887 = vld [vmem:[%s6855 + $0xf8] sm:$0xff]
        %6888 = vmatprep.subr.mxu0 %v6857
        %6889 = vmatpush1.msra.mxu0 %v6856
        %6890 = vmatprep.subr.mxu0 %v6859
        %6891 = vmatpush1.msra.mxu0 %v6858
        %6892 = vmatprep.subr.mxu0 %v6861
        %6893 = vmatpush1.msra.mxu0 %v6860
        %6894 = vmatprep.subr.mxu0 %v6863
        %6895 = vmatpush1.msra.mxu0 %v6862
        %6896 = vmatprep.subr.mxu0 %v6865
        %6897 = vmatpush1.msra.mxu0 %v6864
        %6898 = vmatprep.subr.mxu0 %v6867
        %6899 = vmatpush1.msra.mxu0 %v6866
        %6900 = vmatprep.subr.mxu0 %v6869
        %6901 = vmatpush1.msra.mxu0 %v6868
        %6902 = vmatprep.subr.mxu0 %v6871
        %6903 = vmatpush1.msra.mxu0 %v6870
        %6904 = vmatprep.subr.mxu0 %v6873
        %6905 = vmatpush1.msra.mxu0 %v6872
        %6906 = vmatprep.subr.mxu0 %v6875
        %6907 = vmatpush1.msra.mxu0 %v6874
        %6908 = vmatprep.subr.mxu0 %v6877
        %6909 = vmatpush1.msra.mxu0 %v6876
        %6910 = vmatprep.subr.mxu0 %v6879
        %6911 = vmatpush1.msra.mxu0 %v6878
        %6912 = vmatprep.subr.mxu0 %v6881
        %6913 = vmatpush1.msra.mxu0 %v6880
        %6914 = vmatprep.subr.mxu0 %v6883
        %6915 = vmatpush1.msra.mxu0 %v6882
        %6916 = vmatprep.subr.mxu0 %v6885
        %6917 = vmatpush1.msra.mxu0 %v6884
        %6918 = vmatprep.subr.mxu0 %v6887
        %6919 = vmatpush1.msra.mxu0 %v6886
        %6920 = vmatprep.subr.mxu0 0.0
        %6921 = vmatpush1.msra.mxu0 0.0
        %6922 = vmatprep.subr.mxu0 0.0
        %6923 = vmatpush1.msra.mxu0 0.0
        %6924 = vmatprep.subr.mxu0 0.0
        %6925 = vmatpush1.msra.mxu0 0.0
        %6926 = vmatprep.subr.mxu0 0.0
        %6927 = vmatpush1.msra.mxu0 0.0
        %6928 = vmatprep.subr.mxu0 0.0
        %6929 = vmatpush1.msra.mxu0 0.0
        %6930 = vmatprep.subr.mxu0 0.0
        %6931 = vmatpush1.msra.mxu0 0.0
        %6932 = vmatprep.subr.mxu0 0.0
        %6933 = vmatpush1.msra.mxu0 0.0
        %6934 = vmatprep.subr.mxu0 0.0
        %6935 = vmatpush1.msra.mxu0 0.0
        %6936 = vmatprep.subr.mxu0 0.0
        %6937 = vmatpush1.msra.mxu0 0.0
        %6938 = vmatprep.subr.mxu0 0.0
        %6939 = vmatpush1.msra.mxu0 0.0
        %6940 = vmatprep.subr.mxu0 0.0
        %6941 = vmatpush1.msra.mxu0 0.0
        %6942 = vmatprep.subr.mxu0 0.0
        %6943 = vmatpush1.msra.mxu0 0.0
        %6944 = vmatprep.subr.mxu0 0.0
        %6945 = vmatpush1.msra.mxu0 0.0
        %6946 = vmatprep.subr.mxu0 0.0
        %6947 = vmatpush1.msra.mxu0 0.0
        %6948 = vmatprep.subr.mxu0 0.0
        %6949 = vmatpush1.msra.mxu0 0.0
        %6950 = vmatprep.subr.mxu0 0.0
        %6951 = vmatpush1.msra.mxu0 0.0
        %6952 = vmatprep.mubr.f32.mxu0 0.0
        %6953 = vmatmul.mubr.f32.gmra.mrb[0].mxu0 %v6360
        %v6954 = vpop.f32.mrb[0].mxu0
        %v6955 = vadd.f32 0.0, %v6954
        %v6956 = vpop.f32.mrb[0].mxu0
        %v6957 = vadd.f32 0.0, %v6956
        %6958 = vmatprep.mubr.f32.mxu0 0.0
        %6959 = vmatmul.mubr.f32.gmra.mrb[0].mxu0 %v6361
        %v6960 = vpop.f32.mrb[0].mxu0
        %v6961 = vadd.f32 0.0, %v6960
        %v6962 = vpop.f32.mrb[0].mxu0
        %v6963 = vadd.f32 0.0, %v6962
        %6964 = vmatprep.mubr.f32.mxu0 0.0
        %6965 = vmatmul.mubr.f32.gmra.mrb[0].mxu0 %v6362
        %v6966 = vpop.f32.mrb[0].mxu0
        %v6967 = vadd.f32 0.0, %v6966
        %v6968 = vpop.f32.mrb[0].mxu0
        %v6969 = vadd.f32 0.0, %v6968
        %6970 = vmatprep.mubr.f32.mxu0 0.0
        %6971 = vmatmul.mubr.f32.gmra.mrb[0].mxu0 %v6363
        %v6972 = vpop.f32.mrb[0].mxu0
        %v6973 = vadd.f32 0.0, %v6972
        %v6974 = vpop.f32.mrb[0].mxu0
        %v6975 = vadd.f32 0.0, %v6974
        %6976 = vmatprep.mubr.f32.mxu0 0.0
        %6977 = vmatmul.mubr.f32.gmra.mrb[0].mxu0 %v6364
        %v6978 = vpop.f32.mrb[0].mxu0
        %v6979 = vadd.f32 0.0, %v6978
        %v6980 = vpop.f32.mrb[0].mxu0
        %v6981 = vadd.f32 0.0, %v6980
        %6982 = vmatprep.mubr.f32.mxu0 0.0
        %6983 = vmatmul.mubr.f32.gmra.mrb[0].mxu0 %v6365
        %v6984 = vpop.f32.mrb[0].mxu0
        %v6985 = vadd.f32 0.0, %v6984
        %v6986 = vpop.f32.mrb[0].mxu0
        %v6987 = vadd.f32 0.0, %v6986
        %6988 = vmatprep.mubr.f32.mxu0 0.0
        %6989 = vmatmul.mubr.f32.gmra.mrb[0].mxu0 %v6366
        %v6990 = vpop.f32.mrb[0].mxu0
        %v6991 = vadd.f32 0.0, %v6990
        %v6992 = vpop.f32.mrb[0].mxu0
        %v6993 = vadd.f32 0.0, %v6992
        %6994 = vmatprep.mubr.f32.mxu0 0.0
        %6995 = vmatmul.mubr.f32.gmra.mrb[0].mxu0 %v6367
        %v6996 = vpop.f32.mrb[0].mxu0
        %v6997 = vadd.f32 0.0, %v6996
        %v6998 = vpop.f32.mrb[0].mxu0
        %v6999 = vadd.f32 0.0, %v6998
        %7000 = vdwg.mxu0
        %v7001 = vadd.f32 %v6839, %v6955
        %v7002 = vadd.f32 %v6840, %v6957
        %v7003 = vadd.f32 %v6841, %v6961
        %v7004 = vadd.f32 %v6842, %v6963
        %v7005 = vadd.f32 %v6843, %v6967
        %v7006 = vadd.f32 %v6844, %v6969
        %v7007 = vadd.f32 %v6845, %v6973
        %v7008 = vadd.f32 %v6846, %v6975
        %v7009 = vadd.f32 %v6847, %v6979
        %v7010 = vadd.f32 %v6848, %v6981
        %v7011 = vadd.f32 %v6849, %v6985
        %v7012 = vadd.f32 %v6850, %v6987
        %v7013 = vadd.f32 %v6851, %v6991
        %v7014 = vadd.f32 %v6852, %v6993
        %v7015 = vadd.f32 %v6853, %v6997
        %v7016 = vadd.f32 %v6854, %v6999
        %s7017 = scalar_lea.vmem %s10, 1024
        %v7018 = vld [vmem:[%s7017] sm:$0xff]
        %v7019 = vld [vmem:[%s7017 + $0x8] sm:$0xff]
        %v7020 = vld [vmem:[%s7017 + $0x10] sm:$0xff]
        %v7021 = vld [vmem:[%s7017 + $0x18] sm:$0xff]
        %v7022 = vld [vmem:[%s7017 + $0x20] sm:$0xff]
        %v7023 = vld [vmem:[%s7017 + $0x28] sm:$0xff]
        %v7024 = vld [vmem:[%s7017 + $0x30] sm:$0xff]
        %v7025 = vld [vmem:[%s7017 + $0x38] sm:$0xff]
        %v7026 = vld [vmem:[%s7017 + $0x40] sm:$0xff]
        %v7027 = vld [vmem:[%s7017 + $0x48] sm:$0xff]
        %v7028 = vld [vmem:[%s7017 + $0x50] sm:$0xff]
        %v7029 = vld [vmem:[%s7017 + $0x58] sm:$0xff]
        %v7030 = vld [vmem:[%s7017 + $0x60] sm:$0xff]
        %v7031 = vld [vmem:[%s7017 + $0x68] sm:$0xff]
        %v7032 = vld [vmem:[%s7017 + $0x70] sm:$0xff]
        %v7033 = vld [vmem:[%s7017 + $0x78] sm:$0xff]
        %v7034 = vld [vmem:[%s7017 + $0x80] sm:$0xff]
        %v7035 = vld [vmem:[%s7017 + $0x88] sm:$0xff]
        %v7036 = vld [vmem:[%s7017 + $0x90] sm:$0xff]
        %v7037 = vld [vmem:[%s7017 + $0x98] sm:$0xff]
        %v7038 = vld [vmem:[%s7017 + $0xa0] sm:$0xff]
        %v7039 = vld [vmem:[%s7017 + $0xa8] sm:$0xff]
        %v7040 = vld [vmem:[%s7017 + $0xb0] sm:$0xff]
        %v7041 = vld [vmem:[%s7017 + $0xb8] sm:$0xff]
        %v7042 = vld [vmem:[%s7017 + $0xc0] sm:$0xff]
        %v7043 = vld [vmem:[%s7017 + $0xc8] sm:$0xff]
        %v7044 = vld [vmem:[%s7017 + $0xd0] sm:$0xff]
        %v7045 = vld [vmem:[%s7017 + $0xd8] sm:$0xff]
        %v7046 = vld [vmem:[%s7017 + $0xe0] sm:$0xff]
        %v7047 = vld [vmem:[%s7017 + $0xe8] sm:$0xff]
        %v7048 = vld [vmem:[%s7017 + $0xf0] sm:$0xff]
        %v7049 = vld [vmem:[%s7017 + $0xf8] sm:$0xff]
        %7050 = vmatprep.subr.mxu0 %v7019
        %7051 = vmatpush1.msra.mxu0 %v7018
        %7052 = vmatprep.subr.mxu0 %v7021
        %7053 = vmatpush1.msra.mxu0 %v7020
        %7054 = vmatprep.subr.mxu0 %v7023
        %7055 = vmatpush1.msra.mxu0 %v7022
        %7056 = vmatprep.subr.mxu0 %v7025
        %7057 = vmatpush1.msra.mxu0 %v7024
        %7058 = vmatprep.subr.mxu0 %v7027
        %7059 = vmatpush1.msra.mxu0 %v7026
        %7060 = vmatprep.subr.mxu0 %v7029
        %7061 = vmatpush1.msra.mxu0 %v7028
        %7062 = vmatprep.subr.mxu0 %v7031
        %7063 = vmatpush1.msra.mxu0 %v7030
        %7064 = vmatprep.subr.mxu0 %v7033
        %7065 = vmatpush1.msra.mxu0 %v7032
        %7066 = vmatprep.subr.mxu0 %v7035
        %7067 = vmatpush1.msra.mxu0 %v7034
        %7068 = vmatprep.subr.mxu0 %v7037
        %7069 = vmatpush1.msra.mxu0 %v7036
        %7070 = vmatprep.subr.mxu0 %v7039
        %7071 = vmatpush1.msra.mxu0 %v7038
        %7072 = vmatprep.subr.mxu0 %v7041
        %7073 = vmatpush1.msra.mxu0 %v7040
        %7074 = vmatprep.subr.mxu0 %v7043
        %7075 = vmatpush1.msra.mxu0 %v7042
        %7076 = vmatprep.subr.mxu0 %v7045
        %7077 = vmatpush1.msra.mxu0 %v7044
        %7078 = vmatprep.subr.mxu0 %v7047
        %7079 = vmatpush1.msra.mxu0 %v7046
        %7080 = vmatprep.subr.mxu0 %v7049
        %7081 = vmatpush1.msra.mxu0 %v7048
        %7082 = vmatprep.subr.mxu0 0.0
        %7083 = vmatpush1.msra.mxu0 0.0
        %7084 = vmatprep.subr.mxu0 0.0
        %7085 = vmatpush1.msra.mxu0 0.0
        %7086 = vmatprep.subr.mxu0 0.0
        %7087 = vmatpush1.msra.mxu0 0.0
        %7088 = vmatprep.subr.mxu0 0.0
        %7089 = vmatpush1.msra.mxu0 0.0
        %7090 = vmatprep.subr.mxu0 0.0
        %7091 = vmatpush1.msra.mxu0 0.0
        %7092 = vmatprep.subr.mxu0 0.0
        %7093 = vmatpush1.msra.mxu0 0.0
        %7094 = vmatprep.subr.mxu0 0.0
        %7095 = vmatpush1.msra.mxu0 0.0
        %7096 = vmatprep.subr.mxu0 0.0
        %7097 = vmatpush1.msra.mxu0 0.0
        %7098 = vmatprep.subr.mxu0 0.0
        %7099 = vmatpush1.msra.mxu0 0.0
        %7100 = vmatprep.subr.mxu0 0.0
        %7101 = vmatpush1.msra.mxu0 0.0
        %7102 = vmatprep.subr.mxu0 0.0
        %7103 = vmatpush1.msra.mxu0 0.0
        %7104 = vmatprep.subr.mxu0 0.0
        %7105 = vmatpush1.msra.mxu0 0.0
        %7106 = vmatprep.subr.mxu0 0.0
        %7107 = vmatpush1.msra.mxu0 0.0
        %7108 = vmatprep.subr.mxu0 0.0
        %7109 = vmatpush1.msra.mxu0 0.0
        %7110 = vmatprep.subr.mxu0 0.0
        %7111 = vmatpush1.msra.mxu0 0.0
        %7112 = vmatprep.subr.mxu0 0.0
        %7113 = vmatpush1.msra.mxu0 0.0
        %7114 = vmatprep.mubr.f32.mxu0 0.0
        %7115 = vmatmul.mubr.f32.gmra.mrb[0].mxu0 %v6336
        %v7116 = vpop.f32.mrb[0].mxu0
        %v7117 = vadd.f32 0.0, %v7116
        %v7118 = vpop.f32.mrb[0].mxu0
        %v7119 = vadd.f32 0.0, %v7118
        %7120 = vmatprep.mubr.f32.mxu0 0.0
        %7121 = vmatmul.mubr.f32.gmra.mrb[0].mxu0 %v6337
        %v7122 = vpop.f32.mrb[0].mxu0
        %v7123 = vadd.f32 0.0, %v7122
        %v7124 = vpop.f32.mrb[0].mxu0
        %v7125 = vadd.f32 0.0, %v7124
        %7126 = vmatprep.mubr.f32.mxu0 0.0
        %7127 = vmatmul.mubr.f32.gmra.mrb[0].mxu0 %v6338
        %v7128 = vpop.f32.mrb[0].mxu0
        %v7129 = vadd.f32 0.0, %v7128
        %v7130 = vpop.f32.mrb[0].mxu0
        %v7131 = vadd.f32 0.0, %v7130
        %7132 = vmatprep.mubr.f32.mxu0 0.0
        %7133 = vmatmul.mubr.f32.gmra.mrb[0].mxu0 %v6339
        %v7134 = vpop.f32.mrb[0].mxu0
        %v7135 = vadd.f32 0.0, %v7134
        %v7136 = vpop.f32.mrb[0].mxu0
        %v7137 = vadd.f32 0.0, %v7136
        %7138 = vmatprep.mubr.f32.mxu0 0.0
        %7139 = vmatmul.mubr.f32.gmra.mrb[0].mxu0 %v6340
        %v7140 = vpop.f32.mrb[0].mxu0
        %v7141 = vadd.f32 0.0, %v7140
        %v7142 = vpop.f32.mrb[0].mxu0
        %v7143 = vadd.f32 0.0, %v7142
        %7144 = vmatprep.mubr.f32.mxu0 0.0
        %7145 = vmatmul.mubr.f32.gmra.mrb[0].mxu0 %v6341
        %v7146 = vpop.f32.mrb[0].mxu0
        %v7147 = vadd.f32 0.0, %v7146
        %v7148 = vpop.f32.mrb[0].mxu0
        %v7149 = vadd.f32 0.0, %v7148
        %7150 = vmatprep.mubr.f32.mxu0 0.0
        %7151 = vmatmul.mubr.f32.gmra.mrb[0].mxu0 %v6368
        %v7152 = vpop.f32.mrb[0].mxu0
        %v7153 = vadd.f32 0.0, %v7152
        %v7154 = vpop.f32.mrb[0].mxu0
        %v7155 = vadd.f32 0.0, %v7154
        %7156 = vmatprep.mubr.f32.mxu0 0.0
        %7157 = vmatmul.mubr.f32.gmra.mrb[0].mxu0 %v6369
        %v7158 = vpop.f32.mrb[0].mxu0
        %v7159 = vadd.f32 0.0, %v7158
        %v7160 = vpop.f32.mrb[0].mxu0
        %v7161 = vadd.f32 0.0, %v7160
        %7162 = vdwg.mxu0
        %v7163 = vadd.f32 %v7001, %v7117
        %v7164 = vadd.f32 %v7002, %v7119
        %v7165 = vadd.f32 %v7003, %v7123
        %v7166 = vadd.f32 %v7004, %v7125
        %v7167 = vadd.f32 %v7005, %v7129
        %v7168 = vadd.f32 %v7006, %v7131
        %v7169 = vadd.f32 %v7007, %v7135
        %v7170 = vadd.f32 %v7008, %v7137
        %v7171 = vadd.f32 %v7009, %v7141
        %v7172 = vadd.f32 %v7010, %v7143
        %v7173 = vadd.f32 %v7011, %v7147
        %v7174 = vadd.f32 %v7012, %v7149
        %v7175 = vadd.f32 %v7013, %v7153
        %v7176 = vadd.f32 %v7014, %v7155
        %v7177 = vadd.f32 %v7015, %v7159
        %v7178 = vadd.f32 %v7016, %v7161
        %s7179 = scalar_lea.vmem %s10, 1280
        %v7180 = vld [vmem:[%s7179] sm:$0xff]
        %v7181 = vld [vmem:[%s7179 + $0x8] sm:$0xff]
        %v7182 = vld [vmem:[%s7179 + $0x10] sm:$0xff]
        %v7183 = vld [vmem:[%s7179 + $0x18] sm:$0xff]
        %v7184 = vld [vmem:[%s7179 + $0x20] sm:$0xff]
        %v7185 = vld [vmem:[%s7179 + $0x28] sm:$0xff]
        %v7186 = vld [vmem:[%s7179 + $0x30] sm:$0xff]
        %v7187 = vld [vmem:[%s7179 + $0x38] sm:$0xff]
        %v7188 = vld [vmem:[%s7179 + $0x40] sm:$0xff]
        %v7189 = vld [vmem:[%s7179 + $0x48] sm:$0xff]
        %v7190 = vld [vmem:[%s7179 + $0x50] sm:$0xff]
        %v7191 = vld [vmem:[%s7179 + $0x58] sm:$0xff]
        %v7192 = vld [vmem:[%s7179 + $0x60] sm:$0xff]
        %v7193 = vld [vmem:[%s7179 + $0x68] sm:$0xff]
        %v7194 = vld [vmem:[%s7179 + $0x70] sm:$0xff]
        %v7195 = vld [vmem:[%s7179 + $0x78] sm:$0xff]
        %v7196 = vld [vmem:[%s7179 + $0x80] sm:$0xff]
        %v7197 = vld [vmem:[%s7179 + $0x88] sm:$0xff]
        %v7198 = vld [vmem:[%s7179 + $0x90] sm:$0xff]
        %v7199 = vld [vmem:[%s7179 + $0x98] sm:$0xff]
        %v7200 = vld [vmem:[%s7179 + $0xa0] sm:$0xff]
        %v7201 = vld [vmem:[%s7179 + $0xa8] sm:$0xff]
        %v7202 = vld [vmem:[%s7179 + $0xb0] sm:$0xff]
        %v7203 = vld [vmem:[%s7179 + $0xb8] sm:$0xff]
        %v7204 = vld [vmem:[%s7179 + $0xc0] sm:$0xff]
        %v7205 = vld [vmem:[%s7179 + $0xc8] sm:$0xff]
        %v7206 = vld [vmem:[%s7179 + $0xd0] sm:$0xff]
        %v7207 = vld [vmem:[%s7179 + $0xd8] sm:$0xff]
        %v7208 = vld [vmem:[%s7179 + $0xe0] sm:$0xff]
        %v7209 = vld [vmem:[%s7179 + $0xe8] sm:$0xff]
        %v7210 = vld [vmem:[%s7179 + $0xf0] sm:$0xff]
        %v7211 = vld [vmem:[%s7179 + $0xf8] sm:$0xff]
        %7212 = vmatprep.subr.mxu0 %v7181
        %7213 = vmatpush1.msra.mxu0 %v7180
        %7214 = vmatprep.subr.mxu0 %v7183
        %7215 = vmatpush1.msra.mxu0 %v7182
        %7216 = vmatprep.subr.mxu0 %v7185
        %7217 = vmatpush1.msra.mxu0 %v7184
        %7218 = vmatprep.subr.mxu0 %v7187
        %7219 = vmatpush1.msra.mxu0 %v7186
        %7220 = vmatprep.subr.mxu0 %v7189
        %7221 = vmatpush1.msra.mxu0 %v7188
        %7222 = vmatprep.subr.mxu0 %v7191
        %7223 = vmatpush1.msra.mxu0 %v7190
        %7224 = vmatprep.subr.mxu0 %v7193
        %7225 = vmatpush1.msra.mxu0 %v7192
        %7226 = vmatprep.subr.mxu0 %v7195
        %7227 = vmatpush1.msra.mxu0 %v7194
        %7228 = vmatprep.subr.mxu0 %v7197
        %7229 = vmatpush1.msra.mxu0 %v7196
        %7230 = vmatprep.subr.mxu0 %v7199
        %7231 = vmatpush1.msra.mxu0 %v7198
        %7232 = vmatprep.subr.mxu0 %v7201
        %7233 = vmatpush1.msra.mxu0 %v7200
        %7234 = vmatprep.subr.mxu0 %v7203
        %7235 = vmatpush1.msra.mxu0 %v7202
        %7236 = vmatprep.subr.mxu0 %v7205
        %7237 = vmatpush1.msra.mxu0 %v7204
        %7238 = vmatprep.subr.mxu0 %v7207
        %7239 = vmatpush1.msra.mxu0 %v7206
        %7240 = vmatprep.subr.mxu0 %v7209
        %7241 = vmatpush1.msra.mxu0 %v7208
        %7242 = vmatprep.subr.mxu0 %v7211
        %7243 = vmatpush1.msra.mxu0 %v7210
        %7244 = vmatprep.subr.mxu0 0.0
        %7245 = vmatpush1.msra.mxu0 0.0
        %7246 = vmatprep.subr.mxu0 0.0
        %7247 = vmatpush1.msra.mxu0 0.0
        %7248 = vmatprep.subr.mxu0 0.0
        %7249 = vmatpush1.msra.mxu0 0.0
        %7250 = vmatprep.subr.mxu0 0.0
        %7251 = vmatpush1.msra.mxu0 0.0
        %7252 = vmatprep.subr.mxu0 0.0
        %7253 = vmatpush1.msra.mxu0 0.0
        %7254 = vmatprep.subr.mxu0 0.0
        %7255 = vmatpush1.msra.mxu0 0.0
        %7256 = vmatprep.subr.mxu0 0.0
        %7257 = vmatpush1.msra.mxu0 0.0
        %7258 = vmatprep.subr.mxu0 0.0
        %7259 = vmatpush1.msra.mxu0 0.0
        %7260 = vmatprep.subr.mxu0 0.0
        %7261 = vmatpush1.msra.mxu0 0.0
        %7262 = vmatprep.subr.mxu0 0.0
        %7263 = vmatpush1.msra.mxu0 0.0
        %7264 = vmatprep.subr.mxu0 0.0
        %7265 = vmatpush1.msra.mxu0 0.0
        %7266 = vmatprep.subr.mxu0 0.0
        %7267 = vmatpush1.msra.mxu0 0.0
        %7268 = vmatprep.subr.mxu0 0.0
        %7269 = vmatpush1.msra.mxu0 0.0
        %7270 = vmatprep.subr.mxu0 0.0
        %7271 = vmatpush1.msra.mxu0 0.0
        %7272 = vmatprep.subr.mxu0 0.0
        %7273 = vmatpush1.msra.mxu0 0.0
        %7274 = vmatprep.subr.mxu0 0.0
        %7275 = vmatpush1.msra.mxu0 0.0
        %7276 = vmatprep.mubr.f32.mxu0 0.0
        %7277 = vmatmul.mubr.f32.gmra.mrb[0].mxu0 %v6372
        %v7278 = vpop.f32.mrb[0].mxu0
        %v7279 = vadd.f32 0.0, %v7278
        %v7280 = vpop.f32.mrb[0].mxu0
        %v7281 = vadd.f32 0.0, %v7280
        %7282 = vmatprep.mubr.f32.mxu0 0.0
        %7283 = vmatmul.mubr.f32.gmra.mrb[0].mxu0 %v6373
        %v7284 = vpop.f32.mrb[0].mxu0
        %v7285 = vadd.f32 0.0, %v7284
        %v7286 = vpop.f32.mrb[0].mxu0
        %v7287 = vadd.f32 0.0, %v7286
        %7288 = vmatprep.mubr.f32.mxu0 0.0
        %7289 = vmatmul.mubr.f32.gmra.mrb[0].mxu0 %v6374
        %v7290 = vpop.f32.mrb[0].mxu0
        %v7291 = vadd.f32 0.0, %v7290
        %v7292 = vpop.f32.mrb[0].mxu0
        %v7293 = vadd.f32 0.0, %v7292
        %7294 = vmatprep.mubr.f32.mxu0 0.0
        %7295 = vmatmul.mubr.f32.gmra.mrb[0].mxu0 %v6375
        %v7296 = vpop.f32.mrb[0].mxu0
        %v7297 = vadd.f32 0.0, %v7296
        %v7298 = vpop.f32.mrb[0].mxu0
        %v7299 = vadd.f32 0.0, %v7298
        %7300 = vmatprep.mubr.f32.mxu0 0.0
        %7301 = vmatmul.mubr.f32.gmra.mrb[0].mxu0 %v6376
        %v7302 = vpop.f32.mrb[0].mxu0
        %v7303 = vadd.f32 0.0, %v7302
        %v7304 = vpop.f32.mrb[0].mxu0
        %v7305 = vadd.f32 0.0, %v7304
        %7306 = vmatprep.mubr.f32.mxu0 0.0
        %7307 = vmatmul.mubr.f32.gmra.mrb[0].mxu0 %v6377
        %v7308 = vpop.f32.mrb[0].mxu0
        %v7309 = vadd.f32 0.0, %v7308
        %v7310 = vpop.f32.mrb[0].mxu0
        %v7311 = vadd.f32 0.0, %v7310
        %7312 = vmatprep.mubr.f32.mxu0 0.0
        %7313 = vmatmul.mubr.f32.gmra.mrb[0].mxu0 %v6378
        %v7314 = vpop.f32.mrb[0].mxu0
        %v7315 = vadd.f32 0.0, %v7314
        %v7316 = vpop.f32.mrb[0].mxu0
        %v7317 = vadd.f32 0.0, %v7316
        %7318 = vmatprep.mubr.f32.mxu0 0.0
        %7319 = vmatmul.mubr.f32.gmra.mrb[0].mxu0 %v6379
        %v7320 = vpop.f32.mrb[0].mxu0
        %v7321 = vadd.f32 0.0, %v7320
        %v7322 = vpop.f32.mrb[0].mxu0
        %v7323 = vadd.f32 0.0, %v7322
        %7324 = vdwg.mxu0
        %v7325 = vadd.f32 %v7163, %v7279
        %v7326 = vadd.f32 %v7164, %v7281
        %v7327 = vadd.f32 %v7165, %v7285
        %v7328 = vadd.f32 %v7166, %v7287
        %v7329 = vadd.f32 %v7167, %v7291
        %v7330 = vadd.f32 %v7168, %v7293
        %v7331 = vadd.f32 %v7169, %v7297
        %v7332 = vadd.f32 %v7170, %v7299
        %v7333 = vadd.f32 %v7171, %v7303
        %v7334 = vadd.f32 %v7172, %v7305
        %v7335 = vadd.f32 %v7173, %v7309
        %v7336 = vadd.f32 %v7174, %v7311
        %v7337 = vadd.f32 %v7175, %v7315
        %v7338 = vadd.f32 %v7176, %v7317
        %v7339 = vadd.f32 %v7177, %v7321
        %v7340 = vadd.f32 %v7178, %v7323
        %s7341 = scalar_lea.vmem %s10, 1536
        %v7342 = vld [vmem:[%s7341] sm:$0xff]
        %v7343 = vld [vmem:[%s7341 + $0x8] sm:$0xff]
        %v7344 = vld [vmem:[%s7341 + $0x10] sm:$0xff]
        %v7345 = vld [vmem:[%s7341 + $0x18] sm:$0xff]
        %v7346 = vld [vmem:[%s7341 + $0x20] sm:$0xff]
        %v7347 = vld [vmem:[%s7341 + $0x28] sm:$0xff]
        %v7348 = vld [vmem:[%s7341 + $0x30] sm:$0xff]
        %v7349 = vld [vmem:[%s7341 + $0x38] sm:$0xff]
        %v7350 = vld [vmem:[%s7341 + $0x40] sm:$0xff]
        %v7351 = vld [vmem:[%s7341 + $0x48] sm:$0xff]
        %v7352 = vld [vmem:[%s7341 + $0x50] sm:$0xff]
        %v7353 = vld [vmem:[%s7341 + $0x58] sm:$0xff]
        %v7354 = vld [vmem:[%s7341 + $0x60] sm:$0xff]
        %v7355 = vld [vmem:[%s7341 + $0x68] sm:$0xff]
        %v7356 = vld [vmem:[%s7341 + $0x70] sm:$0xff]
        %v7357 = vld [vmem:[%s7341 + $0x78] sm:$0xff]
        %v7358 = vld [vmem:[%s7341 + $0x80] sm:$0xff]
        %v7359 = vld [vmem:[%s7341 + $0x88] sm:$0xff]
        %v7360 = vld [vmem:[%s7341 + $0x90] sm:$0xff]
        %v7361 = vld [vmem:[%s7341 + $0x98] sm:$0xff]
        %v7362 = vld [vmem:[%s7341 + $0xa0] sm:$0xff]
        %v7363 = vld [vmem:[%s7341 + $0xa8] sm:$0xff]
        %v7364 = vld [vmem:[%s7341 + $0xb0] sm:$0xff]
        %v7365 = vld [vmem:[%s7341 + $0xb8] sm:$0xff]
        %v7366 = vld [vmem:[%s7341 + $0xc0] sm:$0xff]
        %v7367 = vld [vmem:[%s7341 + $0xc8] sm:$0xff]
        %v7368 = vld [vmem:[%s7341 + $0xd0] sm:$0xff]
        %v7369 = vld [vmem:[%s7341 + $0xd8] sm:$0xff]
        %v7370 = vld [vmem:[%s7341 + $0xe0] sm:$0xff]
        %v7371 = vld [vmem:[%s7341 + $0xe8] sm:$0xff]
        %v7372 = vld [vmem:[%s7341 + $0xf0] sm:$0xff]
        %v7373 = vld [vmem:[%s7341 + $0xf8] sm:$0xff]
        %7374 = vmatprep.subr.mxu0 %v7343
        %7375 = vmatpush1.msra.mxu0 %v7342
        %7376 = vmatprep.subr.mxu0 %v7345
        %7377 = vmatpush1.msra.mxu0 %v7344
        %7378 = vmatprep.subr.mxu0 %v7347
        %7379 = vmatpush1.msra.mxu0 %v7346
        %7380 = vmatprep.subr.mxu0 %v7349
        %7381 = vmatpush1.msra.mxu0 %v7348
        %7382 = vmatprep.subr.mxu0 %v7351
        %7383 = vmatpush1.msra.mxu0 %v7350
        %7384 = vmatprep.subr.mxu0 %v7353
        %7385 = vmatpush1.msra.mxu0 %v7352
        %7386 = vmatprep.subr.mxu0 %v7355
        %7387 = vmatpush1.msra.mxu0 %v7354
        %7388 = vmatprep.subr.mxu0 %v7357
        %7389 = vmatpush1.msra.mxu0 %v7356
        %7390 = vmatprep.subr.mxu0 %v7359
        %7391 = vmatpush1.msra.mxu0 %v7358
        %7392 = vmatprep.subr.mxu0 %v7361
        %7393 = vmatpush1.msra.mxu0 %v7360
        %7394 = vmatprep.subr.mxu0 %v7363
        %7395 = vmatpush1.msra.mxu0 %v7362
        %7396 = vmatprep.subr.mxu0 %v7365
        %7397 = vmatpush1.msra.mxu0 %v7364
        %7398 = vmatprep.subr.mxu0 %v7367
        %7399 = vmatpush1.msra.mxu0 %v7366
        %7400 = vmatprep.subr.mxu0 %v7369
        %7401 = vmatpush1.msra.mxu0 %v7368
        %7402 = vmatprep.subr.mxu0 %v7371
        %7403 = vmatpush1.msra.mxu0 %v7370
        %7404 = vmatprep.subr.mxu0 %v7373
        %7405 = vmatpush1.msra.mxu0 %v7372
        %7406 = vmatprep.subr.mxu0 0.0
        %7407 = vmatpush1.msra.mxu0 0.0
        %7408 = vmatprep.subr.mxu0 0.0
        %7409 = vmatpush1.msra.mxu0 0.0
        %7410 = vmatprep.subr.mxu0 0.0
        %7411 = vmatpush1.msra.mxu0 0.0
        %7412 = vmatprep.subr.mxu0 0.0
        %7413 = vmatpush1.msra.mxu0 0.0
        %7414 = vmatprep.subr.mxu0 0.0
        %7415 = vmatpush1.msra.mxu0 0.0
        %7416 = vmatprep.subr.mxu0 0.0
        %7417 = vmatpush1.msra.mxu0 0.0
        %7418 = vmatprep.subr.mxu0 0.0
        %7419 = vmatpush1.msra.mxu0 0.0
        %7420 = vmatprep.subr.mxu0 0.0
        %7421 = vmatpush1.msra.mxu0 0.0
        %7422 = vmatprep.subr.mxu0 0.0
        %7423 = vmatpush1.msra.mxu0 0.0
        %7424 = vmatprep.subr.mxu0 0.0
        %7425 = vmatpush1.msra.mxu0 0.0
        %7426 = vmatprep.subr.mxu0 0.0
        %7427 = vmatpush1.msra.mxu0 0.0
        %7428 = vmatprep.subr.mxu0 0.0
        %7429 = vmatpush1.msra.mxu0 0.0
        %7430 = vmatprep.subr.mxu0 0.0
        %7431 = vmatpush1.msra.mxu0 0.0
        %7432 = vmatprep.subr.mxu0 0.0
        %7433 = vmatpush1.msra.mxu0 0.0
        %7434 = vmatprep.subr.mxu0 0.0
        %7435 = vmatpush1.msra.mxu0 0.0
        %7436 = vmatprep.subr.mxu0 0.0
        %7437 = vmatpush1.msra.mxu0 0.0
        %7438 = vmatprep.mubr.f32.mxu0 0.0
        %7439 = vmatmul.mubr.f32.gmra.mrb[0].mxu0 %v6382
        %v7440 = vpop.f32.mrb[0].mxu0
        %v7441 = vadd.f32 0.0, %v7440
        %v7442 = vpop.f32.mrb[0].mxu0
        %v7443 = vadd.f32 0.0, %v7442
        %7444 = vmatprep.mubr.f32.mxu0 0.0
        %7445 = vmatmul.mubr.f32.gmra.mrb[0].mxu0 %v6383
        %v7446 = vpop.f32.mrb[0].mxu0
        %v7447 = vadd.f32 0.0, %v7446
        %v7448 = vpop.f32.mrb[0].mxu0
        %v7449 = vadd.f32 0.0, %v7448
        %7450 = vmatprep.mubr.f32.mxu0 0.0
        %7451 = vmatmul.mubr.f32.gmra.mrb[0].mxu0 %v6384
        %v7452 = vpop.f32.mrb[0].mxu0
        %v7453 = vadd.f32 0.0, %v7452
        %v7454 = vpop.f32.mrb[0].mxu0
        %v7455 = vadd.f32 0.0, %v7454
        %7456 = vmatprep.mubr.f32.mxu0 0.0
        %7457 = vmatmul.mubr.f32.gmra.mrb[0].mxu0 %v6385
        %v7458 = vpop.f32.mrb[0].mxu0
        %v7459 = vadd.f32 0.0, %v7458
        %v7460 = vpop.f32.mrb[0].mxu0
        %v7461 = vadd.f32 0.0, %v7460
        %7462 = vmatprep.mubr.f32.mxu0 0.0
        %7463 = vmatmul.mubr.f32.gmra.mrb[0].mxu0 %v6386
        %v7464 = vpop.f32.mrb[0].mxu0
        %v7465 = vadd.f32 0.0, %v7464
        %v7466 = vpop.f32.mrb[0].mxu0
        %v7467 = vadd.f32 0.0, %v7466
        %7468 = vmatprep.mubr.f32.mxu0 0.0
        %7469 = vmatmul.mubr.f32.gmra.mrb[0].mxu0 %v6387
        %v7470 = vpop.f32.mrb[0].mxu0
        %v7471 = vadd.f32 0.0, %v7470
        %v7472 = vpop.f32.mrb[0].mxu0
        %v7473 = vadd.f32 0.0, %v7472
        %7474 = vmatprep.mubr.f32.mxu0 0.0
        %7475 = vmatmul.mubr.f32.gmra.mrb[0].mxu0 %v6388
        %v7476 = vpop.f32.mrb[0].mxu0
        %v7477 = vadd.f32 0.0, %v7476
        %v7478 = vpop.f32.mrb[0].mxu0
        %v7479 = vadd.f32 0.0, %v7478
        %7480 = vmatprep.mubr.f32.mxu0 0.0
        %7481 = vmatmul.mubr.f32.gmra.mrb[0].mxu0 %v6389
        %v7482 = vpop.f32.mrb[0].mxu0
        %v7483 = vadd.f32 0.0, %v7482
        %v7484 = vpop.f32.mrb[0].mxu0
        %v7485 = vadd.f32 0.0, %v7484
        %7486 = vdwg.mxu0
        %v7487 = vadd.f32 %v7325, %v7441
        %v7488 = vadd.f32 %v7326, %v7443
        %v7489 = vadd.f32 %v7327, %v7447
        %v7490 = vadd.f32 %v7328, %v7449
        %v7491 = vadd.f32 %v7329, %v7453
        %v7492 = vadd.f32 %v7330, %v7455
        %v7493 = vadd.f32 %v7331, %v7459
        %v7494 = vadd.f32 %v7332, %v7461
        %v7495 = vadd.f32 %v7333, %v7465
        %v7496 = vadd.f32 %v7334, %v7467
        %v7497 = vadd.f32 %v7335, %v7471
        %v7498 = vadd.f32 %v7336, %v7473
        %v7499 = vadd.f32 %v7337, %v7477
        %v7500 = vadd.f32 %v7338, %v7479
        %v7501 = vadd.f32 %v7339, %v7483
        %v7502 = vadd.f32 %v7340, %v7485
        %s7503 = scalar_lea.vmem %s10, 1792
        %v7504 = vld [vmem:[%s7503] sm:$0xff]
        %v7505 = vld [vmem:[%s7503 + $0x8] sm:$0xff]
        %v7506 = vld [vmem:[%s7503 + $0x10] sm:$0xff]
        %v7507 = vld [vmem:[%s7503 + $0x18] sm:$0xff]
        %v7508 = vld [vmem:[%s7503 + $0x20] sm:$0xff]
        %v7509 = vld [vmem:[%s7503 + $0x28] sm:$0xff]
        %v7510 = vld [vmem:[%s7503 + $0x30] sm:$0xff]
        %v7511 = vld [vmem:[%s7503 + $0x38] sm:$0xff]
        %v7512 = vld [vmem:[%s7503 + $0x40] sm:$0xff]
        %v7513 = vld [vmem:[%s7503 + $0x48] sm:$0xff]
        %v7514 = vld [vmem:[%s7503 + $0x50] sm:$0xff]
        %v7515 = vld [vmem:[%s7503 + $0x58] sm:$0xff]
        %v7516 = vld [vmem:[%s7503 + $0x60] sm:$0xff]
        %v7517 = vld [vmem:[%s7503 + $0x68] sm:$0xff]
        %v7518 = vld [vmem:[%s7503 + $0x70] sm:$0xff]
        %v7519 = vld [vmem:[%s7503 + $0x78] sm:$0xff]
        %v7520 = vld [vmem:[%s7503 + $0x80] sm:$0xff]
        %v7521 = vld [vmem:[%s7503 + $0x88] sm:$0xff]
        %v7522 = vld [vmem:[%s7503 + $0x90] sm:$0xff]
        %v7523 = vld [vmem:[%s7503 + $0x98] sm:$0xff]
        %v7524 = vld [vmem:[%s7503 + $0xa0] sm:$0xff]
        %v7525 = vld [vmem:[%s7503 + $0xa8] sm:$0xff]
        %v7526 = vld [vmem:[%s7503 + $0xb0] sm:$0xff]
        %v7527 = vld [vmem:[%s7503 + $0xb8] sm:$0xff]
        %v7528 = vld [vmem:[%s7503 + $0xc0] sm:$0xff]
        %v7529 = vld [vmem:[%s7503 + $0xc8] sm:$0xff]
        %v7530 = vld [vmem:[%s7503 + $0xd0] sm:$0xff]
        %v7531 = vld [vmem:[%s7503 + $0xd8] sm:$0xff]
        %v7532 = vld [vmem:[%s7503 + $0xe0] sm:$0xff]
        %v7533 = vld [vmem:[%s7503 + $0xe8] sm:$0xff]
        %v7534 = vld [vmem:[%s7503 + $0xf0] sm:$0xff]
        %v7535 = vld [vmem:[%s7503 + $0xf8] sm:$0xff]
        %7536 = vmatprep.subr.mxu0 %v7505
        %7537 = vmatpush1.msra.mxu0 %v7504
        %7538 = vmatprep.subr.mxu0 %v7507
        %7539 = vmatpush1.msra.mxu0 %v7506
        %7540 = vmatprep.subr.mxu0 %v7509
        %7541 = vmatpush1.msra.mxu0 %v7508
        %7542 = vmatprep.subr.mxu0 %v7511
        %7543 = vmatpush1.msra.mxu0 %v7510
        %7544 = vmatprep.subr.mxu0 %v7513
        %7545 = vmatpush1.msra.mxu0 %v7512
        %7546 = vmatprep.subr.mxu0 %v7515
        %7547 = vmatpush1.msra.mxu0 %v7514
        %7548 = vmatprep.subr.mxu0 %v7517
        %7549 = vmatpush1.msra.mxu0 %v7516
        %7550 = vmatprep.subr.mxu0 %v7519
        %7551 = vmatpush1.msra.mxu0 %v7518
        %7552 = vmatprep.subr.mxu0 %v7521
        %7553 = vmatpush1.msra.mxu0 %v7520
        %7554 = vmatprep.subr.mxu0 %v7523
        %7555 = vmatpush1.msra.mxu0 %v7522
        %7556 = vmatprep.subr.mxu0 %v7525
        %7557 = vmatpush1.msra.mxu0 %v7524
        %7558 = vmatprep.subr.mxu0 %v7527
        %7559 = vmatpush1.msra.mxu0 %v7526
        %7560 = vmatprep.subr.mxu0 %v7529
        %7561 = vmatpush1.msra.mxu0 %v7528
        %7562 = vmatprep.subr.mxu0 %v7531
        %7563 = vmatpush1.msra.mxu0 %v7530
        %7564 = vmatprep.subr.mxu0 %v7533
        %7565 = vmatpush1.msra.mxu0 %v7532
        %7566 = vmatprep.subr.mxu0 %v7535
        %7567 = vmatpush1.msra.mxu0 %v7534
        %7568 = vmatprep.subr.mxu0 0.0
        %7569 = vmatpush1.msra.mxu0 0.0
        %7570 = vmatprep.subr.mxu0 0.0
        %7571 = vmatpush1.msra.mxu0 0.0
        %7572 = vmatprep.subr.mxu0 0.0
        %7573 = vmatpush1.msra.mxu0 0.0
        %7574 = vmatprep.subr.mxu0 0.0
        %7575 = vmatpush1.msra.mxu0 0.0
        %7576 = vmatprep.subr.mxu0 0.0
        %7577 = vmatpush1.msra.mxu0 0.0
        %7578 = vmatprep.subr.mxu0 0.0
        %7579 = vmatpush1.msra.mxu0 0.0
        %7580 = vmatprep.subr.mxu0 0.0
        %7581 = vmatpush1.msra.mxu0 0.0
        %7582 = vmatprep.subr.mxu0 0.0
        %7583 = vmatpush1.msra.mxu0 0.0
        %7584 = vmatprep.subr.mxu0 0.0
        %7585 = vmatpush1.msra.mxu0 0.0
        %7586 = vmatprep.subr.mxu0 0.0
        %7587 = vmatpush1.msra.mxu0 0.0
        %7588 = vmatprep.subr.mxu0 0.0
        %7589 = vmatpush1.msra.mxu0 0.0
        %7590 = vmatprep.subr.mxu0 0.0
        %7591 = vmatpush1.msra.mxu0 0.0
        %7592 = vmatprep.subr.mxu0 0.0
        %7593 = vmatpush1.msra.mxu0 0.0
        %7594 = vmatprep.subr.mxu0 0.0
        %7595 = vmatpush1.msra.mxu0 0.0
        %7596 = vmatprep.subr.mxu0 0.0
        %7597 = vmatpush1.msra.mxu0 0.0
        %7598 = vmatprep.subr.mxu0 0.0
        %7599 = vmatpush1.msra.mxu0 0.0
        %7600 = vmatprep.mubr.f32.mxu0 0.0
        %7601 = vmatmul.mubr.f32.gmra.mrb[0].mxu0 %v6338
        %v7602 = vpop.f32.mrb[0].mxu0
        %v7603 = vadd.f32 0.0, %v7602
        %v7604 = vpop.f32.mrb[0].mxu0
        %v7605 = vadd.f32 0.0, %v7604
        %7606 = vmatprep.mubr.f32.mxu0 0.0
        %7607 = vmatmul.mubr.f32.gmra.mrb[0].mxu0 %v6339
        %v7608 = vpop.f32.mrb[0].mxu0
        %v7609 = vadd.f32 0.0, %v7608
        %v7610 = vpop.f32.mrb[0].mxu0
        %v7611 = vadd.f32 0.0, %v7610
        %7612 = vmatprep.mubr.f32.mxu0 0.0
        %7613 = vmatmul.mubr.f32.gmra.mrb[0].mxu0 %v6340
        %v7614 = vpop.f32.mrb[0].mxu0
        %v7615 = vadd.f32 0.0, %v7614
        %v7616 = vpop.f32.mrb[0].mxu0
        %v7617 = vadd.f32 0.0, %v7616
        %7618 = vmatprep.mubr.f32.mxu0 0.0
        %7619 = vmatmul.mubr.f32.gmra.mrb[0].mxu0 %v6341
        %v7620 = vpop.f32.mrb[0].mxu0
        %v7621 = vadd.f32 0.0, %v7620
        %v7622 = vpop.f32.mrb[0].mxu0
        %v7623 = vadd.f32 0.0, %v7622
        %7624 = vmatprep.mubr.f32.mxu0 0.0
        %7625 = vmatmul.mubr.f32.gmra.mrb[0].mxu0 %v6368
        %v7626 = vpop.f32.mrb[0].mxu0
        %v7627 = vadd.f32 0.0, %v7626
        %v7628 = vpop.f32.mrb[0].mxu0
        %v7629 = vadd.f32 0.0, %v7628
        %7630 = vmatprep.mubr.f32.mxu0 0.0
        %7631 = vmatmul.mubr.f32.gmra.mrb[0].mxu0 %v6369
        %v7632 = vpop.f32.mrb[0].mxu0
        %v7633 = vadd.f32 0.0, %v7632
        %v7634 = vpop.f32.mrb[0].mxu0
        %v7635 = vadd.f32 0.0, %v7634
        %7636 = vmatprep.mubr.f32.mxu0 0.0
        %7637 = vmatmul.mubr.f32.gmra.mrb[0].mxu0 %v6390
        %v7638 = vpop.f32.mrb[0].mxu0
        %v7639 = vadd.f32 0.0, %v7638
        %v7640 = vpop.f32.mrb[0].mxu0
        %v7641 = vadd.f32 0.0, %v7640
        %7642 = vmatprep.mubr.f32.mxu0 0.0
        %7643 = vmatmul.mubr.f32.gmra.mrb[0].mxu0 %v6391
        %v7644 = vpop.f32.mrb[0].mxu0
        %v7645 = vadd.f32 0.0, %v7644
        %v7646 = vpop.f32.mrb[0].mxu0
        %v7647 = vadd.f32 0.0, %v7646
        %7648 = vdwg.mxu0
        %v7649 = vadd.f32 %v7487, %v7603
        %v7650 = vadd.f32 %v7488, %v7605
        %v7651 = vadd.f32 %v7489, %v7609
        %v7652 = vadd.f32 %v7490, %v7611
        %v7653 = vadd.f32 %v7491, %v7615
        %v7654 = vadd.f32 %v7492, %v7617
        %v7655 = vadd.f32 %v7493, %v7621
        %v7656 = vadd.f32 %v7494, %v7623
        %v7657 = vadd.f32 %v7495, %v7627
        %v7658 = vadd.f32 %v7496, %v7629
        %v7659 = vadd.f32 %v7497, %v7633
        %v7660 = vadd.f32 %v7498, %v7635
        %v7661 = vadd.f32 %v7499, %v7639
        %v7662 = vadd.f32 %v7500, %v7641
        %v7663 = vadd.f32 %v7501, %v7645
        %v7664 = vadd.f32 %v7502, %v7647
        %s7665 = scalar_lea.vmem %s10, 2048
        %v7666 = vld [vmem:[%s7665] sm:$0xff]
        %v7667 = vld [vmem:[%s7665 + $0x8] sm:$0xff]
        %v7668 = vld [vmem:[%s7665 + $0x10] sm:$0xff]
        %v7669 = vld [vmem:[%s7665 + $0x18] sm:$0xff]
        %v7670 = vld [vmem:[%s7665 + $0x20] sm:$0xff]
        %v7671 = vld [vmem:[%s7665 + $0x28] sm:$0xff]
        %v7672 = vld [vmem:[%s7665 + $0x30] sm:$0xff]
        %v7673 = vld [vmem:[%s7665 + $0x38] sm:$0xff]
        %v7674 = vld [vmem:[%s7665 + $0x40] sm:$0xff]
        %v7675 = vld [vmem:[%s7665 + $0x48] sm:$0xff]
        %v7676 = vld [vmem:[%s7665 + $0x50] sm:$0xff]
        %v7677 = vld [vmem:[%s7665 + $0x58] sm:$0xff]
        %v7678 = vld [vmem:[%s7665 + $0x60] sm:$0xff]
        %v7679 = vld [vmem:[%s7665 + $0x68] sm:$0xff]
        %v7680 = vld [vmem:[%s7665 + $0x70] sm:$0xff]
        %v7681 = vld [vmem:[%s7665 + $0x78] sm:$0xff]
        %v7682 = vld [vmem:[%s7665 + $0x80] sm:$0xff]
        %v7683 = vld [vmem:[%s7665 + $0x88] sm:$0xff]
        %v7684 = vld [vmem:[%s7665 + $0x90] sm:$0xff]
        %v7685 = vld [vmem:[%s7665 + $0x98] sm:$0xff]
        %v7686 = vld [vmem:[%s7665 + $0xa0] sm:$0xff]
        %v7687 = vld [vmem:[%s7665 + $0xa8] sm:$0xff]
        %v7688 = vld [vmem:[%s7665 + $0xb0] sm:$0xff]
        %v7689 = vld [vmem:[%s7665 + $0xb8] sm:$0xff]
        %v7690 = vld [vmem:[%s7665 + $0xc0] sm:$0xff]
        %v7691 = vld [vmem:[%s7665 + $0xc8] sm:$0xff]
        %v7692 = vld [vmem:[%s7665 + $0xd0] sm:$0xff]
        %v7693 = vld [vmem:[%s7665 + $0xd8] sm:$0xff]
        %v7694 = vld [vmem:[%s7665 + $0xe0] sm:$0xff]
        %v7695 = vld [vmem:[%s7665 + $0xe8] sm:$0xff]
        %v7696 = vld [vmem:[%s7665 + $0xf0] sm:$0xff]
        %v7697 = vld [vmem:[%s7665 + $0xf8] sm:$0xff]
        %7698 = vmatprep.subr.mxu0 %v7667
        %7699 = vmatpush1.msra.mxu0 %v7666
        %7700 = vmatprep.subr.mxu0 %v7669
        %7701 = vmatpush1.msra.mxu0 %v7668
        %7702 = vmatprep.subr.mxu0 %v7671
        %7703 = vmatpush1.msra.mxu0 %v7670
        %7704 = vmatprep.subr.mxu0 %v7673
        %7705 = vmatpush1.msra.mxu0 %v7672
        %7706 = vmatprep.subr.mxu0 %v7675
        %7707 = vmatpush1.msra.mxu0 %v7674
        %7708 = vmatprep.subr.mxu0 %v7677
        %7709 = vmatpush1.msra.mxu0 %v7676
        %7710 = vmatprep.subr.mxu0 %v7679
        %7711 = vmatpush1.msra.mxu0 %v7678
        %7712 = vmatprep.subr.mxu0 %v7681
        %7713 = vmatpush1.msra.mxu0 %v7680
        %7714 = vmatprep.subr.mxu0 %v7683
        %7715 = vmatpush1.msra.mxu0 %v7682
        %7716 = vmatprep.subr.mxu0 %v7685
        %7717 = vmatpush1.msra.mxu0 %v7684
        %7718 = vmatprep.subr.mxu0 %v7687
        %7719 = vmatpush1.msra.mxu0 %v7686
        %7720 = vmatprep.subr.mxu0 %v7689
        %7721 = vmatpush1.msra.mxu0 %v7688
        %7722 = vmatprep.subr.mxu0 %v7691
        %7723 = vmatpush1.msra.mxu0 %v7690
        %7724 = vmatprep.subr.mxu0 %v7693
        %7725 = vmatpush1.msra.mxu0 %v7692
        %7726 = vmatprep.subr.mxu0 %v7695
        %7727 = vmatpush1.msra.mxu0 %v7694
        %7728 = vmatprep.subr.mxu0 %v7697
        %7729 = vmatpush1.msra.mxu0 %v7696
        %7730 = vmatprep.subr.mxu0 0.0
        %7731 = vmatpush1.msra.mxu0 0.0
        %7732 = vmatprep.subr.mxu0 0.0
        %7733 = vmatpush1.msra.mxu0 0.0
        %7734 = vmatprep.subr.mxu0 0.0
        %7735 = vmatpush1.msra.mxu0 0.0
        %7736 = vmatprep.subr.mxu0 0.0
        %7737 = vmatpush1.msra.mxu0 0.0
        %7738 = vmatprep.subr.mxu0 0.0
        %7739 = vmatpush1.msra.mxu0 0.0
        %7740 = vmatprep.subr.mxu0 0.0
        %7741 = vmatpush1.msra.mxu0 0.0
        %7742 = vmatprep.subr.mxu0 0.0
        %7743 = vmatpush1.msra.mxu0 0.0
        %7744 = vmatprep.subr.mxu0 0.0
        %7745 = vmatpush1.msra.mxu0 0.0
        %7746 = vmatprep.subr.mxu0 0.0
        %7747 = vmatpush1.msra.mxu0 0.0
        %7748 = vmatprep.subr.mxu0 0.0
        %7749 = vmatpush1.msra.mxu0 0.0
        %7750 = vmatprep.subr.mxu0 0.0
        %7751 = vmatpush1.msra.mxu0 0.0
        %7752 = vmatprep.subr.mxu0 0.0
        %7753 = vmatpush1.msra.mxu0 0.0
        %7754 = vmatprep.subr.mxu0 0.0
        %7755 = vmatpush1.msra.mxu0 0.0
        %7756 = vmatprep.subr.mxu0 0.0
        %7757 = vmatpush1.msra.mxu0 0.0
        %7758 = vmatprep.subr.mxu0 0.0
        %7759 = vmatpush1.msra.mxu0 0.0
        %7760 = vmatprep.subr.mxu0 0.0
        %7761 = vmatpush1.msra.mxu0 0.0
        %7762 = vmatprep.mubr.f32.mxu0 0.0
        %7763 = vmatmul.mubr.f32.gmra.mrb[0].mxu0 %v6394
        %v7764 = vpop.f32.mrb[0].mxu0
        %v7765 = vadd.f32 0.0, %v7764
        %v7766 = vpop.f32.mrb[0].mxu0
        %v7767 = vadd.f32 0.0, %v7766
        %7768 = vmatprep.mubr.f32.mxu0 0.0
        %7769 = vmatmul.mubr.f32.gmra.mrb[0].mxu0 %v6395
        %v7770 = vpop.f32.mrb[0].mxu0
        %v7771 = vadd.f32 0.0, %v7770
        %v7772 = vpop.f32.mrb[0].mxu0
        %v7773 = vadd.f32 0.0, %v7772
        %7774 = vmatprep.mubr.f32.mxu0 0.0
        %7775 = vmatmul.mubr.f32.gmra.mrb[0].mxu0 %v6396
        %v7776 = vpop.f32.mrb[0].mxu0
        %v7777 = vadd.f32 0.0, %v7776
        %v7778 = vpop.f32.mrb[0].mxu0
        %v7779 = vadd.f32 0.0, %v7778
        %7780 = vmatprep.mubr.f32.mxu0 0.0
        %7781 = vmatmul.mubr.f32.gmra.mrb[0].mxu0 %v6397
        %v7782 = vpop.f32.mrb[0].mxu0
        %v7783 = vadd.f32 0.0, %v7782
        %v7784 = vpop.f32.mrb[0].mxu0
        %v7785 = vadd.f32 0.0, %v7784
        %7786 = vmatprep.mubr.f32.mxu0 0.0
        %7787 = vmatmul.mubr.f32.gmra.mrb[0].mxu0 %v6398
        %v7788 = vpop.f32.mrb[0].mxu0
        %v7789 = vadd.f32 0.0, %v7788
        %v7790 = vpop.f32.mrb[0].mxu0
        %v7791 = vadd.f32 0.0, %v7790
        %7792 = vmatprep.mubr.f32.mxu0 0.0
        %7793 = vmatmul.mubr.f32.gmra.mrb[0].mxu0 %v6399
        %v7794 = vpop.f32.mrb[0].mxu0
        %v7795 = vadd.f32 0.0, %v7794
        %v7796 = vpop.f32.mrb[0].mxu0
        %v7797 = vadd.f32 0.0, %v7796
        %7798 = vmatprep.mubr.f32.mxu0 0.0
        %7799 = vmatmul.mubr.f32.gmra.mrb[0].mxu0 %v6400
        %v7800 = vpop.f32.mrb[0].mxu0
        %v7801 = vadd.f32 0.0, %v7800
        %v7802 = vpop.f32.mrb[0].mxu0
        %v7803 = vadd.f32 0.0, %v7802
        %7804 = vmatprep.mubr.f32.mxu0 0.0
        %7805 = vmatmul.mubr.f32.gmra.mrb[0].mxu0 %v6401
        %v7806 = vpop.f32.mrb[0].mxu0
        %v7807 = vadd.f32 0.0, %v7806
        %v7808 = vpop.f32.mrb[0].mxu0
        %v7809 = vadd.f32 0.0, %v7808
        %7810 = vdwg.mxu0
        %v7811 = vadd.f32 %v7649, %v7765
        %v7812 = vadd.f32 %v7650, %v7767
        %v7813 = vadd.f32 %v7651, %v7771
        %v7814 = vadd.f32 %v7652, %v7773
        %v7815 = vadd.f32 %v7653, %v7777
        %v7816 = vadd.f32 %v7654, %v7779
        %v7817 = vadd.f32 %v7655, %v7783
        %v7818 = vadd.f32 %v7656, %v7785
        %v7819 = vadd.f32 %v7657, %v7789
        %v7820 = vadd.f32 %v7658, %v7791
        %v7821 = vadd.f32 %v7659, %v7795
        %v7822 = vadd.f32 %v7660, %v7797
        %v7823 = vadd.f32 %v7661, %v7801
        %v7824 = vadd.f32 %v7662, %v7803
        %v7825 = vadd.f32 %v7663, %v7807
        %v7826 = vadd.f32 %v7664, %v7809
        %v7827 = vld [vmem:[%s11] sm:$0x3]
        %v7829 = vlaneseq
        %v7830 = vshrl.u32 %v7829, 7
        %v7831 = vsub.s32 0, %v7830
        %v7832 = vrot.slane %v7827, %v7831
        %v7833 = vlaneseq
        %v7834 = vshrl.u32 %v7833, 7
        %v7835 = vsub.s32 1, %v7834
        %v7836 = vrot.slane %v7827, %v7835
        %v7839 = vadd.f32 %v7811, %v7832
        %v7840 = vadd.f32 %v7812, %v7836
        %v7841 = vadd.f32 %v7813, %v7832
        %v7842 = vadd.f32 %v7814, %v7836
        %v7843 = vadd.f32 %v7815, %v7832
        %v7844 = vadd.f32 %v7816, %v7836
        %v7845 = vadd.f32 %v7817, %v7832
        %v7846 = vadd.f32 %v7818, %v7836
        %v7847 = vadd.f32 %v7819, %v7832
        %v7848 = vadd.f32 %v7820, %v7836
        %v7849 = vadd.f32 %v7821, %v7832
        %v7850 = vadd.f32 %v7822, %v7836
        %v7851 = vadd.f32 %v7823, %v7832
        %v7852 = vadd.f32 %v7824, %v7836
        %v7853 = vadd.f32 %v7825, %v7832
        %v7854 = vadd.f32 %v7826, %v7836
        %v7855 = vxor.u32 %v7839, 2147483648
        %v7856 = vxor.u32 %v7840, 2147483648
        %v7857 = vxor.u32 %v7841, 2147483648
        %v7858 = vxor.u32 %v7842, 2147483648
        %v7859 = vxor.u32 %v7843, 2147483648
        %v7860 = vxor.u32 %v7844, 2147483648
        %v7861 = vxor.u32 %v7845, 2147483648
        %v7862 = vxor.u32 %v7846, 2147483648
        %v7863 = vxor.u32 %v7847, 2147483648
        %v7864 = vxor.u32 %v7848, 2147483648
        %v7865 = vxor.u32 %v7849, 2147483648
        %v7866 = vxor.u32 %v7850, 2147483648
        %v7867 = vxor.u32 %v7851, 2147483648
        %v7868 = vxor.u32 %v7852, 2147483648
        %v7869 = vxor.u32 %v7853, 2147483648
        %v7870 = vxor.u32 %v7854, 2147483648
        %v7871 = vmul.f32 %v7855, 1.442695
        %v7872 = vpow.pop %v7871
        %v7873 = vmul.f32 %v7856, 1.442695
        %v7874 = vpow.pop %v7873
        %v7875 = vmul.f32 %v7857, 1.442695
        %v7876 = vpow.pop %v7875
        %v7877 = vmul.f32 %v7858, 1.442695
        %v7878 = vpow.pop %v7877
        %v7879 = vmul.f32 %v7859, 1.442695
        %v7880 = vpow.pop %v7879
        %v7881 = vmul.f32 %v7860, 1.442695
        %v7882 = vpow.pop %v7881
        %v7883 = vmul.f32 %v7861, 1.442695
        %v7884 = vpow.pop %v7883
        %v7885 = vmul.f32 %v7862, 1.442695
        %v7886 = vpow.pop %v7885
        %v7887 = vmul.f32 %v7863, 1.442695
        %v7888 = vpow.pop %v7887
        %v7889 = vmul.f32 %v7864, 1.442695
        %v7890 = vpow.pop %v7889
        %v7891 = vmul.f32 %v7865, 1.442695
        %v7892 = vpow.pop %v7891
        %v7893 = vmul.f32 %v7866, 1.442695
        %v7894 = vpow.pop %v7893
        %v7895 = vmul.f32 %v7867, 1.442695
        %v7896 = vpow.pop %v7895
        %v7897 = vmul.f32 %v7868, 1.442695
        %v7898 = vpow.pop %v7897
        %v7899 = vmul.f32 %v7869, 1.442695
        %v7900 = vpow.pop %v7899
        %v7901 = vmul.f32 %v7870, 1.442695
        %v7902 = vpow.pop %v7901
        %v7903 = vadd.f32 %v7872, 1.0
        %v7904 = vadd.f32 %v7874, 1.0
        %v7905 = vadd.f32 %v7876, 1.0
        %v7906 = vadd.f32 %v7878, 1.0
        %v7907 = vadd.f32 %v7880, 1.0
        %v7908 = vadd.f32 %v7882, 1.0
        %v7909 = vadd.f32 %v7884, 1.0
        %v7910 = vadd.f32 %v7886, 1.0
        %v7911 = vadd.f32 %v7888, 1.0
        %v7912 = vadd.f32 %v7890, 1.0
        %v7913 = vadd.f32 %v7892, 1.0
        %v7914 = vadd.f32 %v7894, 1.0
        %v7915 = vadd.f32 %v7896, 1.0
        %v7916 = vadd.f32 %v7898, 1.0
        %v7917 = vadd.f32 %v7900, 1.0
        %v7918 = vadd.f32 %v7902, 1.0
        %v7919 = vrcp.pop %v7903
        %v7920 = vmul.f32 1.0, %v7919
        %v7921 = vrcp.pop %v7904
        %v7922 = vmul.f32 1.0, %v7921
        %v7923 = vrcp.pop %v7905
        %v7924 = vmul.f32 1.0, %v7923
        %v7925 = vrcp.pop %v7906
        %v7926 = vmul.f32 1.0, %v7925
        %v7927 = vrcp.pop %v7907
        %v7928 = vmul.f32 1.0, %v7927
        %v7929 = vrcp.pop %v7908
        %v7930 = vmul.f32 1.0, %v7929
        %v7931 = vrcp.pop %v7909
        %v7932 = vmul.f32 1.0, %v7931
        %v7933 = vrcp.pop %v7910
        %v7934 = vmul.f32 1.0, %v7933
        %v7935 = vrcp.pop %v7911
        %v7936 = vmul.f32 1.0, %v7935
        %v7937 = vrcp.pop %v7912
        %v7938 = vmul.f32 1.0, %v7937
        %v7939 = vrcp.pop %v7913
        %v7940 = vmul.f32 1.0, %v7939
        %v7941 = vrcp.pop %v7914
        %v7942 = vmul.f32 1.0, %v7941
        %v7943 = vrcp.pop %v7915
        %v7944 = vmul.f32 1.0, %v7943
        %v7945 = vrcp.pop %v7916
        %v7946 = vmul.f32 1.0, %v7945
        %v7947 = vrcp.pop %v7917
        %v7948 = vmul.f32 1.0, %v7947
        %v7949 = vrcp.pop %v7918
        %v7950 = vmul.f32 1.0, %v7949
        %v7951 = vmul.f32 %v7839, %v7920
        %v7952 = vmul.f32 %v7840, %v7922
        %v7953 = vmul.f32 %v7841, %v7924
        %v7954 = vmul.f32 %v7842, %v7926
        %v7955 = vmul.f32 %v7843, %v7928
        %v7956 = vmul.f32 %v7844, %v7930
        %v7957 = vmul.f32 %v7845, %v7932
        %v7958 = vmul.f32 %v7846, %v7934
        %v7959 = vmul.f32 %v7847, %v7936
        %v7960 = vmul.f32 %v7848, %v7938
        %v7961 = vmul.f32 %v7849, %v7940
        %v7962 = vmul.f32 %v7850, %v7942
        %v7963 = vmul.f32 %v7851, %v7944
        %v7964 = vmul.f32 %v7852, %v7946
        %v7965 = vmul.f32 %v7853, %v7948
        %v7966 = vmul.f32 %v7854, %v7950
        %v7967 = vld [vmem:[%s12] sm:$0xff]
        %v7968 = vld [vmem:[%s12 + $0x8] sm:$0xff]
        %v7969 = vld [vmem:[%s12 + $0x10] sm:$0xff]
        %v7970 = vld [vmem:[%s12 + $0x18] sm:$0xff]
        %v7971 = vld [vmem:[%s12 + $0x20] sm:$0xff]
        %v7972 = vld [vmem:[%s12 + $0x28] sm:$0xff]
        %v7973 = vld [vmem:[%s12 + $0x30] sm:$0xff]
        %v7974 = vld [vmem:[%s12 + $0x38] sm:$0xff]
        %v7975 = vld [vmem:[%s12 + $0x40] sm:$0xff]
        %v7976 = vld [vmem:[%s12 + $0x48] sm:$0xff]
        %v7977 = vld [vmem:[%s12 + $0x50] sm:$0xff]
        %v7978 = vld [vmem:[%s12 + $0x58] sm:$0xff]
        %v7979 = vld [vmem:[%s12 + $0x60] sm:$0xff]
        %v7980 = vld [vmem:[%s12 + $0x68] sm:$0xff]
        %v7981 = vld [vmem:[%s12 + $0x70] sm:$0xff]
        %v7982 = vld [vmem:[%s12 + $0x78] sm:$0xff]
        %v7983 = vld [vmem:[%s12 + $0x80] sm:$0xff]
        %v7984 = vld [vmem:[%s12 + $0x88] sm:$0xff]
        %v7985 = vld [vmem:[%s12 + $0x90] sm:$0xff]
        %v7986 = vld [vmem:[%s12 + $0x98] sm:$0xff]
        %v7987 = vld [vmem:[%s12 + $0xa0] sm:$0xff]
        %v7988 = vld [vmem:[%s12 + $0xa8] sm:$0xff]
        %v7989 = vld [vmem:[%s12 + $0xb0] sm:$0xff]
        %v7990 = vld [vmem:[%s12 + $0xb8] sm:$0xff]
        %v7991 = vld [vmem:[%s13] sm:$0x1]
        %v7993 = vlaneseq
        %v7994 = vshrl.u32 %v7993, 7
        %v7995 = vsub.s32 0, %v7994
        %v7996 = vrot.slane %v7991, %v7995
        %vm7998 = vcmask 523264
        %v8000 = vsel %vm7998, %v7952, 0
        %v8003 = vsel %vm7998, %v7954, 0
        %v8006 = vsel %vm7998, %v7956, 0
        %v8009 = vsel %vm7998, %v7958, 0
        %v8012 = vsel %vm7998, %v7960, 0
        %v8015 = vsel %vm7998, %v7962, 0
        %v8018 = vsel %vm7998, %v7964, 0
        %v8021 = vsel %vm7998, %v7966, 0
        %8023 = vmatprep.subr.mxu0 0.0
        %8024 = vmatpush1.msra.mxu0 %v7967
        %8025 = vmatprep.subr.mxu0 0.0
        %8026 = vmatpush1.msra.mxu0 %v7968
        %8027 = vmatprep.subr.mxu0 0.0
        %8028 = vmatpush1.msra.mxu0 %v7969
        %8029 = vmatprep.subr.mxu0 0.0
        %8030 = vmatpush1.msra.mxu0 %v7970
        %8031 = vmatprep.subr.mxu0 0.0
        %8032 = vmatpush1.msra.mxu0 %v7971
        %8033 = vmatprep.subr.mxu0 0.0
        %8034 = vmatpush1.msra.mxu0 %v7972
        %8035 = vmatprep.subr.mxu0 0.0
        %8036 = vmatpush1.msra.mxu0 %v7973
        %8037 = vmatprep.subr.mxu0 0.0
        %8038 = vmatpush1.msra.mxu0 %v7974
        %8039 = vmatprep.subr.mxu0 0.0
        %8040 = vmatpush1.msra.mxu0 %v7975
        %8041 = vmatprep.subr.mxu0 0.0
        %8042 = vmatpush1.msra.mxu0 %v7976
        %8043 = vmatprep.subr.mxu0 0.0
        %8044 = vmatpush1.msra.mxu0 %v7977
        %8045 = vmatprep.subr.mxu0 0.0
        %8046 = vmatpush1.msra.mxu0 %v7978
        %8047 = vmatprep.subr.mxu0 0.0
        %8048 = vmatpush1.msra.mxu0 %v7979
        %8049 = vmatprep.subr.mxu0 0.0
        %8050 = vmatpush1.msra.mxu0 %v7980
        %8051 = vmatprep.subr.mxu0 0.0
        %8052 = vmatpush1.msra.mxu0 %v7981
        %8053 = vmatprep.subr.mxu0 0.0
        %8054 = vmatpush1.msra.mxu0 %v7982
        %8055 = vmatprep.subr.mxu0 0.0
        %8056 = vmatpush1.msra.mxu0 %v7983
        %8057 = vmatprep.subr.mxu0 0.0
        %8058 = vmatpush1.msra.mxu0 %v7984
        %8059 = vmatprep.subr.mxu0 0.0
        %8060 = vmatpush1.msra.mxu0 %v7985
        %8061 = vmatprep.subr.mxu0 0.0
        %8062 = vmatpush1.msra.mxu0 %v7986
        %8063 = vmatprep.subr.mxu0 0.0
        %8064 = vmatpush1.msra.mxu0 %v7987
        %8065 = vmatprep.subr.mxu0 0.0
        %8066 = vmatpush1.msra.mxu0 %v7988
        %8067 = vmatprep.subr.mxu0 0.0
        %8068 = vmatpush1.msra.mxu0 %v7989
        %8069 = vmatprep.subr.mxu0 0.0
        %8070 = vmatpush1.msra.mxu0 %v7990
        %8071 = vmatprep.subr.mxu0 0.0
        %8072 = vmatpush1.msra.mxu0 0.0
        %8073 = vmatprep.subr.mxu0 0.0
        %8074 = vmatpush1.msra.mxu0 0.0
        %8075 = vmatprep.subr.mxu0 0.0
        %8076 = vmatpush1.msra.mxu0 0.0
        %8077 = vmatprep.subr.mxu0 0.0
        %8078 = vmatpush1.msra.mxu0 0.0
        %8079 = vmatprep.subr.mxu0 0.0
        %8080 = vmatpush1.msra.mxu0 0.0
        %8081 = vmatprep.subr.mxu0 0.0
        %8082 = vmatpush1.msra.mxu0 0.0
        %8083 = vmatprep.subr.mxu0 0.0
        %8084 = vmatpush1.msra.mxu0 0.0
        %8085 = vmatprep.subr.mxu0 0.0
        %8086 = vmatpush1.msra.mxu0 0.0
        %8087 = vmatprep.mubr.f32.mxu0 %v8000
        %8088 = vmatmul.mubr.f32.gmra.mrb[0].mxu0 %v7951
        %v8089 = vpop.f32.mrb[0].mxu0
        %v8090 = vadd.f32 %v7996, %v8089
        %v8091 = vpop.f32.mrb[0].mxu0
        %8092 = vmatprep.mubr.f32.mxu0 %v8003
        %8093 = vmatmul.mubr.f32.gmra.mrb[0].mxu0 %v7953
        %v8094 = vpop.f32.mrb[0].mxu0
        %v8095 = vadd.f32 %v7996, %v8094
        %v8096 = vpop.f32.mrb[0].mxu0
        %8097 = vmatprep.mubr.f32.mxu0 %v8006
        %8098 = vmatmul.mubr.f32.gmra.mrb[0].mxu0 %v7955
        %v8099 = vpop.f32.mrb[0].mxu0
        %v8100 = vadd.f32 %v7996, %v8099
        %v8101 = vpop.f32.mrb[0].mxu0
        %8102 = vmatprep.mubr.f32.mxu0 %v8009
        %8103 = vmatmul.mubr.f32.gmra.mrb[0].mxu0 %v7957
        %v8104 = vpop.f32.mrb[0].mxu0
        %v8105 = vadd.f32 %v7996, %v8104
        %v8106 = vpop.f32.mrb[0].mxu0
        %8107 = vmatprep.mubr.f32.mxu0 %v8012
        %8108 = vmatmul.mubr.f32.gmra.mrb[0].mxu0 %v7959
        %v8109 = vpop.f32.mrb[0].mxu0
        %v8110 = vadd.f32 %v7996, %v8109
        %v8111 = vpop.f32.mrb[0].mxu0
        %8112 = vmatprep.mubr.f32.mxu0 %v8015
        %8113 = vmatmul.mubr.f32.gmra.mrb[0].mxu0 %v7961
        %v8114 = vpop.f32.mrb[0].mxu0
        %v8115 = vadd.f32 %v7996, %v8114
        %v8116 = vpop.f32.mrb[0].mxu0
        %8117 = vmatprep.mubr.f32.mxu0 %v8018
        %8118 = vmatmul.mubr.f32.gmra.mrb[0].mxu0 %v7963
        %v8119 = vpop.f32.mrb[0].mxu0
        %v8120 = vadd.f32 %v7996, %v8119
        %v8121 = vpop.f32.mrb[0].mxu0
        %8122 = vmatprep.mubr.f32.mxu0 %v8021
        %8123 = vmatmul.mubr.f32.gmra.mrb[0].mxu0 %v7965
        %v8124 = vpop.f32.mrb[0].mxu0
        %v8125 = vadd.f32 %v7996, %v8124
        %v8126 = vpop.f32.mrb[0].mxu0
        %8127 = vdwg.mxu0
        %v8128 = vadd.f32 %v8090, %v6266
        %v8129 = vadd.f32 %v8095, %v6267
        %v8130 = vadd.f32 %v8100, %v6268
        %v8131 = vadd.f32 %v8105, %v6269
        %v8132 = vadd.f32 %v8110, %v6270
        %v8133 = vadd.f32 %v8115, %v6271
        %v8134 = vadd.f32 %v8120, %v6272
        %v8135 = vadd.f32 %v8125, %v6273
        %8136 = vst [vmem:[%s500] sm:$0xff] %v8128
        %8137 = vst [vmem:[%s500 + $0x8] sm:$0xff] %v8129
        %8138 = vst [vmem:[%s500 + $0x10] sm:$0xff] %v8130
        %8139 = vst [vmem:[%s500 + $0x18] sm:$0xff] %v8131
        %8140 = vst [vmem:[%s500 + $0x20] sm:$0xff] %v8132
        %8141 = vst [vmem:[%s500 + $0x28] sm:$0xff] %v8133
        %8142 = vst [vmem:[%s500 + $0x30] sm:$0xff] %v8134
        %8143 = vst [vmem:[%s500 + $0x38] sm:$0xff] %v8135
        %s8144 = sand.u32 %s339, 1
        %s8145 = scalar_lea.sflag [#allocation5], %s8144
        %s8146 = sand.u32 %s339, 1
        %s8147 = smul.addr %s8146, 64
        %s8148 = scalar_lea.vmem [#allocation8], %s8147
        // Predicated region
        $region85: #{tpu_custom_call.1} parent=75 // pred_check
          %p8149 = pneg %p349
        $region86: #{tpu_custom_call.1} parent=75 // pred_check_branch
          %8151 = sbr.rel (%p8149) target = $region88
        $region87: #{tpu_custom_call.1} parent=75 // pred_region
          %s8153 = ssub.s32 1024, 1024
          %8154 = vsyncadd %s8145, %s8153
          %s8155 = smul.addr %s32, 8
          %s8156 = smul.addr %s8155, 128
          %s8157 = scalar_lea.hbm %s14, %s8156
          %s8158 = sshll.u32 %s8148, 4
          %s8159 = int_to_ptr.vmem [resolvable:$true] %s8158
          %8164 = dma.vmem_to_hbm [thread:$0]  %s8159, 1024, %s8157, %s8145, 128, 128, 8
        $region88: #{tpu_custom_call.1} parent=75 // pred_fallthru
          _
      $region76: #{tpu_custom_call.1} parent=5 // pred_fallthru
        _
      %p8165 = scmp.le.s32.totalorder 2, %s27
      // Predicated region
      $region89: #{tpu_custom_call.1} parent=5 // pred_check
        %p8166 = pneg %p8165
      $region90: #{tpu_custom_call.1} parent=5 // pred_check_branch
        %8168 = sbr.rel (%p8166) target = $region92
      $region91: #{tpu_custom_call.1} parent=5 // pred_region
        %s8169 = ssub.s32 %s27, 2
        // Predicated region
        $region93: #{tpu_custom_call.1} parent=91 // pred_check
          %p8170 = pneg %p355
        $region94: #{tpu_custom_call.1} parent=91 // pred_check_branch
          %8172 = sbr.rel (%p8170) target = $region96
        $region95: #{tpu_custom_call.1} parent=91 // pred_region
          %s8173 = sand.u32 %s340, 1
          %s8174 = scalar_lea.sflag [#allocation5], %s8173
          %s8175 = sand.u32 %s340, 1
          %s8176 = smul.addr %s8175, 64
          %s8177 = scalar_lea.vmem [#allocation8], %s8176
          %8178 = dma.done %s8174, 1024
        $region96: #{tpu_custom_call.1} parent=91 // pred_fallthru
          _
      $region92: #{tpu_custom_call.1} parent=5 // pred_fallthru
        _
    $region6: #{tpu_custom_call.1} parent=1 // loop_footer
      %s31 = sadd.s32 1, %s27
    $region7: #{tpu_custom_call.1} parent=1 // loop_footer_branch
      %26 = sbr.rel target = $region3
    $region8: #{tpu_custom_call.1} parent=1 // loop_exit
      _
    %8179 = vsyncpa [#allocation4], 1
    %s8180 = scalar_lea.sflag [#allocation4], 1
    %8181 = vsyncpa %s8180, 1
    %8182 = vsyncpa [#allocation7], 1
    %8183 = vsyncpa [#allocation5], 1
    %s8184 = scalar_lea.sflag [#allocation5], 1
    %8185 = vsyncpa %s8184, 1

</llo_original>
